<compile_context>
chip_gen: v6e
topology: v6e:2x2x1
jax: 0.10.0
libtpu: 0.0.40
codegen_flags: <defaults>
</compile_context>

<pallas_src>
import jax
import jax.numpy as jnp
from jax.experimental import pallas as pl
from jax.experimental.pallas import tpu as pltpu

# ---- module-consistent hyperparameters (paper: h=8, dm=512, dk=dv=64,
#      dff=2048, 6+6 layers) scaled down but kept lane-dense (multiples of 128)
H = 4            # number of heads
DK = 32          # d_k  (H*DK = 128, lane-dense)
DV = 32          # d_v  (H*DV = 128 = DM, as in the paper where h*dv = dm)
HDK = H * DK     # 128
HDV = H * DV     # 128
DM = 128         # d_model
DFF = 256        # feed-forward hidden
N_ENC = 2        # encoder layers
N_DEC = 2        # decoder layers
L = N_ENC + N_DEC
SEQ = 8          # sequence length
EPS = 1e-5       # nn.LayerNorm default eps
CDT = jnp.bfloat16   # MXU operand dtype (accumulation stays f32)


# --------------------------- fused Pallas kernel -----------------------------

def transformer_kernel(x_ref, y_ref,
                       wqvk_ref, wo_ref,
                       w1_ref, b1_ref, w2_ref, b2_ref,
                       g_ref, beta_ref,
                       o_ref):
    """Entire encoder+decoder stack in one kernel invocation.

    Weight layouts (stacked over layers):
      wqvk : [L, DM, 3*H*DK]  lane order [ q(0:128) | v(128:256) | k(256:384) ]
                              (1/sqrt(dk) folded into the q block)
      wo   : [L, H*DV, DM]
      w1   : [L, DM, DFF]   b1: [L, 1, DFF]
      w2   : [L, DFF, DM]   b2: [L, 1, DM]
      gamma, beta: [L, 1, DM]
    """

    def mha(q, k, v, i):
        # q, k, v: [S, DM] f32 activations.
        wqvk = wqvk_ref[i]          # [DM, 3*HDK] bf16
        wo = wo_ref[i]              # [HDV, DM]   bf16

        # Merged (lane-concatenated) projections — full 128/256/384 lane width.
        if q is k and k is v:                       # self-attention: 1 matmul
            proj = jnp.dot(q.astype(CDT), wqvk,
                           preferred_element_type=jnp.float32)      # [S, 384]
            qp = proj[:, 0:HDK]
            vp = proj[:, HDK:2 * HDK]
            kp = proj[:, 2 * HDK:3 * HDK]
        elif q is v:                                # cross-attention: 2 matmuls
            qv = jnp.dot(q.astype(CDT), wqvk[:, 0:2 * HDK],
                         preferred_element_type=jnp.float32)        # [S, 256]
            qp = qv[:, 0:HDK]
            vp = qv[:, HDK:2 * HDK]
            kp = jnp.dot(k.astype(CDT), wqvk[:, 2 * HDK:3 * HDK],
                         preferred_element_type=jnp.float32)        # [S, 128]
        else:                                       # fully general fallback
            qp = jnp.dot(q.astype(CDT), wqvk[:, 0:HDK],
                         preferred_element_type=jnp.float32)
            vp = jnp.dot(v.astype(CDT), wqvk[:, HDK:2 * HDK],
                         preferred_element_type=jnp.float32)
            kp = jnp.dot(k.astype(CDT), wqvk[:, 2 * HDK:3 * HDK],
                         preferred_element_type=jnp.float32)

        # Per-head attention (inherently K=DK matmuls); scale already folded
        # into wqvk's q block, so no `* 1/sqrt(dk)` on the scores.
        outs = []
        for h in range(H):                          # static unroll, H=4
            sl = slice(h * DK, (h + 1) * DK)
            qh = qp[:, sl]                           # [S, DK]
            kh = kp[:, sl]
            vh = vp[:, sl]
            # q @ k.T without materializing a transpose (contract last dims).
            s = jax.lax.dot_general(
                qh.astype(CDT), kh.astype(CDT),
                (((1,), (1,)), ((), ())),
                preferred_element_type=jnp.float32)  # [S, S]
            s = s - jnp.max(s, axis=-1, keepdims=True)
            e = jnp.exp(s)
            p = e * pl.reciprocal(jnp.sum(e, axis=-1, keepdims=True),
                                  approx=True)
            outs.append(jnp.dot(p.astype(CDT), vh.astype(CDT),
                                preferred_element_type=jnp.float32))  # [S, DV]

        # hstack(heads) @ W_o  — single K=128 matmul (MXU sums heads for free).
        oc = jnp.concatenate(outs, axis=-1)          # [S, H*DV] = [8, 128]
        return jnp.dot(oc.astype(CDT), wo,
                       preferred_element_type=jnp.float32)            # [S, DM]

    def ffn(z, i):
        h1 = jnp.dot(z.astype(CDT), w1_ref[i],
                     preferred_element_type=jnp.float32) + b1_ref[i]
        h1 = jnp.maximum(h1, 0.0)
        return jnp.dot(h1.astype(CDT), w2_ref[i],
                       preferred_element_type=jnp.float32) + b2_ref[i]

    def add_ln(a, b, i):
        z = a + b
        mean = jnp.mean(z, axis=-1, keepdims=True)
        c = z - mean
        var = jnp.mean(c * c, axis=-1, keepdims=True)
        return c * jax.lax.rsqrt(var + EPS) * g_ref[i] + beta_ref[i]

    x = x_ref[...]
    y = y_ref[...]

    # Encoder stack.
    for i in range(N_ENC):
        x = add_ln(x, mha(x, x, x, i), i)
        x = add_ln(x, ffn(x, i), i)

    # Decoder stack (faithful to reference loop body: x = dec(y, x, x)).
    for i in range(N_ENC, N_ENC + N_DEC):
        d = y
        d = add_ln(d, mha(d, d, d, i), i)
        d = add_ln(d, mha(x, d, x, i), i)   # q = enc_key (= x), k = d, v = enc_val (= x)
        d = add_ln(d, ffn(d, i), i)
        x = d

    o_ref[...] = x


# ------------------------------ pallas wrapper --------------------------------

def transformer_forward(x, y, params):
    vspec = pl.BlockSpec(memory_space=pltpu.MemorySpace.VMEM)
    args = (x, y,
            params["wqvk"], params["wo"],
            params["w1"], params["b1"], params["w2"], params["b2"],
            params["gamma"], params["beta"])
    return pl.pallas_call(
        transformer_kernel,
        out_shape=jax.ShapeDtypeStruct((SEQ, DM), jnp.float32),
        in_specs=[vspec] * len(args),
        out_specs=vspec,
        compiler_params=pltpu.CompilerParams(vmem_limit_bytes=32 * 1024 * 1024),
    )(*args)


# ------------------------------ param init -----------------------------------

def init_params(key):
    ks = jax.random.split(key, 8)
    w_scale = 1.0 / (DM ** 0.5)        # scaled randn for numerical sanity (synthetic)
    wo_scale = 1.0 / (HDV ** 0.5)
    b1b = 1.0 / (DM ** 0.5)
    b2b = 1.0 / (DFF ** 0.5)
    qk_scale = 1.0 / (DK ** 0.5)       # softmax scale, folded into W_q

    # Head h's W_q/W_k/W_v occupy columns [h*DK:(h+1)*DK] of their 128-wide block.
    wq = jax.random.normal(ks[0], (L, DM, HDK), jnp.float32) * w_scale * qk_scale
    wv = jax.random.normal(ks[1], (L, DM, HDV), jnp.float32) * w_scale
    wk = jax.random.normal(ks[2], (L, DM, HDK), jnp.float32) * w_scale
    wqvk = jnp.concatenate([wq, wv, wk], axis=-1)          # [L, DM, 3*HDK]

    return {
        "wqvk": wqvk.astype(CDT),
        "wo": (jax.random.normal(ks[3], (L, HDV, DM), jnp.float32)
               * wo_scale).astype(CDT),
        "w1": jax.random.uniform(ks[4], (L, DM, DFF), jnp.float32,
                                 -b1b, b1b).astype(CDT),
        "b1": jax.random.uniform(ks[5], (L, 1, DFF), jnp.float32, -b1b, b1b),
        "w2": jax.random.uniform(ks[6], (L, DFF, DM), jnp.float32,
                                 -b2b, b2b).astype(CDT),
        "b2": jax.random.uniform(ks[7], (L, 1, DM), jnp.float32, -b2b, b2b),
        "gamma": jnp.ones((L, 1, DM), jnp.float32),
        "beta": jnp.zeros((L, 1, DM), jnp.float32),
    }


# ---------------------------------- main --------------------------------------

if __name__ == "__main__":
    root = jax.random.PRNGKey(0)
    kp, kx, ky = jax.random.split(root, 3)

    params = init_params(kp)
    x = jax.random.normal(kx, (SEQ, DM), jnp.float32)   # encoder input  [seq, dm]
    y = jax.random.normal(ky, (SEQ, DM), jnp.float32)   # decoder input  [seq, dm]

    out = jax.jit(transformer_forward)(x, y, params)
    jax.block_until_ready(out)

    assert out.shape == (SEQ, DM)
    assert bool(jnp.all(jnp.isfinite(out)))
    print("KERNEL_OK")
</pallas_src>

<mosaic_0001>
module attributes {stable_mosaic.version = 11 : i64} {
  func.func @transformer_kernel(%arg0: memref<8x128xf32, #tpu.memory_space<vmem>>, %arg1: memref<8x128xf32, #tpu.memory_space<vmem>>, %arg2: memref<4x128x384xbf16, #tpu.memory_space<vmem>>, %arg3: memref<4x128x128xbf16, #tpu.memory_space<vmem>>, %arg4: memref<4x128x256xbf16, #tpu.memory_space<vmem>>, %arg5: memref<4x1x256xf32, #tpu.memory_space<vmem>>, %arg6: memref<4x256x128xbf16, #tpu.memory_space<vmem>>, %arg7: memref<4x1x128xf32, #tpu.memory_space<vmem>>, %arg8: memref<4x1x128xf32, #tpu.memory_space<vmem>>, %arg9: memref<4x1x128xf32, #tpu.memory_space<vmem>>, %arg10: memref<8x128xf32, #tpu.memory_space<vmem>>) attributes {dimension_semantics = [], scalar_prefetch = 0 : i64, scratch_operands = 0 : i64, tpu.core_type = #tpu.core_type<tc>} {
    %c0 = arith.constant 0 : index
    %c0_0 = arith.constant 0 : index
    %0 = vector.load %arg0[%c0, %c0_0] : memref<8x128xf32, #tpu.memory_space<vmem>>, vector<8x128xf32>
    %c0_1 = arith.constant 0 : index
    %c0_2 = arith.constant 0 : index
    %1 = vector.load %arg1[%c0_1, %c0_2] : memref<8x128xf32, #tpu.memory_space<vmem>>, vector<8x128xf32>
    %c0_3 = arith.constant 0 : index
    %c0_4 = arith.constant 0 : index
    %c0_5 = arith.constant 0 : index
    %2 = vector.load %arg2[%c0_3, %c0_4, %c0_5] : memref<4x128x384xbf16, #tpu.memory_space<vmem>>, vector<1x128x384xbf16>
    %3 = vector.shape_cast %2 : vector<1x128x384xbf16> to vector<128x384xbf16>
    %c0_6 = arith.constant 0 : index
    %c0_7 = arith.constant 0 : index
    %c0_8 = arith.constant 0 : index
    %4 = vector.load %arg3[%c0_6, %c0_7, %c0_8] : memref<4x128x128xbf16, #tpu.memory_space<vmem>>, vector<1x128x128xbf16>
    %5 = vector.shape_cast %4 : vector<1x128x128xbf16> to vector<128x128xbf16>
    %6 = arith.truncf %0 : vector<8x128xf32> to vector<8x128xbf16>
    %cst = arith.constant dense<0.000000e+00> : vector<8x384xf32>
    %7 = tpu.matmul %6, %3, %cst {dimension_numbers = #tpu.dot_dimension_numbers<[1], [0], [0], [1], [0, 0, 1, 1], [], []>} : vector<8x128xbf16>, vector<128x384xbf16>, vector<8x384xf32> -> vector<8x384xf32>
    %8 = vector.extract_strided_slice %7 {offsets = [0, 0], sizes = [8, 128], strides = [1, 1]} : vector<8x384xf32> to vector<8x128xf32>
    %9 = vector.extract_strided_slice %7 {offsets = [0, 128], sizes = [8, 128], strides = [1, 1]} : vector<8x384xf32> to vector<8x128xf32>
    %10 = vector.extract_strided_slice %7 {offsets = [0, 256], sizes = [8, 128], strides = [1, 1]} : vector<8x384xf32> to vector<8x128xf32>
    %11 = vector.extract_strided_slice %8 {offsets = [0, 0], sizes = [8, 32], strides = [1, 1]} : vector<8x128xf32> to vector<8x32xf32>
    %12 = vector.extract_strided_slice %10 {offsets = [0, 0], sizes = [8, 32], strides = [1, 1]} : vector<8x128xf32> to vector<8x32xf32>
    %13 = vector.extract_strided_slice %9 {offsets = [0, 0], sizes = [8, 32], strides = [1, 1]} : vector<8x128xf32> to vector<8x32xf32>
    %14 = arith.truncf %11 : vector<8x32xf32> to vector<8x32xbf16>
    %15 = arith.truncf %12 : vector<8x32xf32> to vector<8x32xbf16>
    %cst_9 = arith.constant dense<0.000000e+00> : vector<8x8xf32>
    %16 = tpu.matmul %14, %15, %cst_9 {dimension_numbers = #tpu.dot_dimension_numbers<[1], [1], [0], [0], [0, 0, 1, 0], [], []>} : vector<8x32xbf16>, vector<8x32xbf16>, vector<8x8xf32> -> vector<8x8xf32>
    %cst_10 = arith.constant dense<0xFF800000> : vector<8xf32>
    %17 = vector.multi_reduction <maximumf>, %16, %cst_10 [1] : vector<8x8xf32> to vector<8xf32>
    %18 = vector.shape_cast %17 : vector<8xf32> to vector<8x1xf32>
    %19 = vector.broadcast %18 : vector<8x1xf32> to vector<8x8xf32>
    %20 = arith.subf %16, %19 : vector<8x8xf32>
    %21 = math.exp %20 : vector<8x8xf32>
    %cst_11 = arith.constant dense<0.000000e+00> : vector<8xf32>
    %22 = vector.multi_reduction <add>, %21, %cst_11 [1] : vector<8x8xf32> to vector<8xf32>
    %23 = vector.shape_cast %22 : vector<8xf32> to vector<8x1xf32>
    %24 = tpu.reciprocal %23 {approx = true} : vector<8x1xf32> -> vector<8x1xf32>
    %25 = vector.broadcast %24 : vector<8x1xf32> to vector<8x8xf32>
    %26 = arith.mulf %21, %25 : vector<8x8xf32>
    %27 = arith.truncf %26 : vector<8x8xf32> to vector<8x8xbf16>
    %28 = arith.truncf %13 : vector<8x32xf32> to vector<8x32xbf16>
    %cst_12 = arith.constant dense<0.000000e+00> : vector<8x32xf32>
    %29 = tpu.matmul %27, %28, %cst_12 {dimension_numbers = #tpu.dot_dimension_numbers<[1], [0], [0], [1], [0, 0, 1, 1], [], []>} : vector<8x8xbf16>, vector<8x32xbf16>, vector<8x32xf32> -> vector<8x32xf32>
    %30 = vector.extract_strided_slice %8 {offsets = [0, 32], sizes = [8, 32], strides = [1, 1]} : vector<8x128xf32> to vector<8x32xf32>
    %31 = vector.extract_strided_slice %10 {offsets = [0, 32], sizes = [8, 32], strides = [1, 1]} : vector<8x128xf32> to vector<8x32xf32>
    %32 = vector.extract_strided_slice %9 {offsets = [0, 32], sizes = [8, 32], strides = [1, 1]} : vector<8x128xf32> to vector<8x32xf32>
    %33 = arith.truncf %30 : vector<8x32xf32> to vector<8x32xbf16>
    %34 = arith.truncf %31 : vector<8x32xf32> to vector<8x32xbf16>
    %cst_13 = arith.constant dense<0.000000e+00> : vector<8x8xf32>
    %35 = tpu.matmul %33, %34, %cst_13 {dimension_numbers = #tpu.dot_dimension_numbers<[1], [1], [0], [0], [0, 0, 1, 0], [], []>} : vector<8x32xbf16>, vector<8x32xbf16>, vector<8x8xf32> -> vector<8x8xf32>
    %cst_14 = arith.constant dense<0xFF800000> : vector<8xf32>
    %36 = vector.multi_reduction <maximumf>, %35, %cst_14 [1] : vector<8x8xf32> to vector<8xf32>
    %37 = vector.shape_cast %36 : vector<8xf32> to vector<8x1xf32>
    %38 = vector.broadcast %37 : vector<8x1xf32> to vector<8x8xf32>
    %39 = arith.subf %35, %38 : vector<8x8xf32>
    %40 = math.exp %39 : vector<8x8xf32>
    %cst_15 = arith.constant dense<0.000000e+00> : vector<8xf32>
    %41 = vector.multi_reduction <add>, %40, %cst_15 [1] : vector<8x8xf32> to vector<8xf32>
    %42 = vector.shape_cast %41 : vector<8xf32> to vector<8x1xf32>
    %43 = tpu.reciprocal %42 {approx = true} : vector<8x1xf32> -> vector<8x1xf32>
    %44 = vector.broadcast %43 : vector<8x1xf32> to vector<8x8xf32>
    %45 = arith.mulf %40, %44 : vector<8x8xf32>
    %46 = arith.truncf %45 : vector<8x8xf32> to vector<8x8xbf16>
    %47 = arith.truncf %32 : vector<8x32xf32> to vector<8x32xbf16>
    %cst_16 = arith.constant dense<0.000000e+00> : vector<8x32xf32>
    %48 = tpu.matmul %46, %47, %cst_16 {dimension_numbers = #tpu.dot_dimension_numbers<[1], [0], [0], [1], [0, 0, 1, 1], [], []>} : vector<8x8xbf16>, vector<8x32xbf16>, vector<8x32xf32> -> vector<8x32xf32>
    %49 = vector.extract_strided_slice %8 {offsets = [0, 64], sizes = [8, 32], strides = [1, 1]} : vector<8x128xf32> to vector<8x32xf32>
    %50 = vector.extract_strided_slice %10 {offsets = [0, 64], sizes = [8, 32], strides = [1, 1]} : vector<8x128xf32> to vector<8x32xf32>
    %51 = vector.extract_strided_slice %9 {offsets = [0, 64], sizes = [8, 32], strides = [1, 1]} : vector<8x128xf32> to vector<8x32xf32>
    %52 = arith.truncf %49 : vector<8x32xf32> to vector<8x32xbf16>
    %53 = arith.truncf %50 : vector<8x32xf32> to vector<8x32xbf16>
    %cst_17 = arith.constant dense<0.000000e+00> : vector<8x8xf32>
    %54 = tpu.matmul %52, %53, %cst_17 {dimension_numbers = #tpu.dot_dimension_numbers<[1], [1], [0], [0], [0, 0, 1, 0], [], []>} : vector<8x32xbf16>, vector<8x32xbf16>, vector<8x8xf32> -> vector<8x8xf32>
    %cst_18 = arith.constant dense<0xFF800000> : vector<8xf32>
    %55 = vector.multi_reduction <maximumf>, %54, %cst_18 [1] : vector<8x8xf32> to vector<8xf32>
    %56 = vector.shape_cast %55 : vector<8xf32> to vector<8x1xf32>
    %57 = vector.broadcast %56 : vector<8x1xf32> to vector<8x8xf32>
    %58 = arith.subf %54, %57 : vector<8x8xf32>
    %59 = math.exp %58 : vector<8x8xf32>
    %cst_19 = arith.constant dense<0.000000e+00> : vector<8xf32>
    %60 = vector.multi_reduction <add>, %59, %cst_19 [1] : vector<8x8xf32> to vector<8xf32>
    %61 = vector.shape_cast %60 : vector<8xf32> to vector<8x1xf32>
    %62 = tpu.reciprocal %61 {approx = true} : vector<8x1xf32> -> vector<8x1xf32>
    %63 = vector.broadcast %62 : vector<8x1xf32> to vector<8x8xf32>
    %64 = arith.mulf %59, %63 : vector<8x8xf32>
    %65 = arith.truncf %64 : vector<8x8xf32> to vector<8x8xbf16>
    %66 = arith.truncf %51 : vector<8x32xf32> to vector<8x32xbf16>
    %cst_20 = arith.constant dense<0.000000e+00> : vector<8x32xf32>
    %67 = tpu.matmul %65, %66, %cst_20 {dimension_numbers = #tpu.dot_dimension_numbers<[1], [0], [0], [1], [0, 0, 1, 1], [], []>} : vector<8x8xbf16>, vector<8x32xbf16>, vector<8x32xf32> -> vector<8x32xf32>
    %68 = vector.extract_strided_slice %8 {offsets = [0, 96], sizes = [8, 32], strides = [1, 1]} : vector<8x128xf32> to vector<8x32xf32>
    %69 = vector.extract_strided_slice %10 {offsets = [0, 96], sizes = [8, 32], strides = [1, 1]} : vector<8x128xf32> to vector<8x32xf32>
    %70 = vector.extract_strided_slice %9 {offsets = [0, 96], sizes = [8, 32], strides = [1, 1]} : vector<8x128xf32> to vector<8x32xf32>
    %71 = arith.truncf %68 : vector<8x32xf32> to vector<8x32xbf16>
    %72 = arith.truncf %69 : vector<8x32xf32> to vector<8x32xbf16>
    %cst_21 = arith.constant dense<0.000000e+00> : vector<8x8xf32>
    %73 = tpu.matmul %71, %72, %cst_21 {dimension_numbers = #tpu.dot_dimension_numbers<[1], [1], [0], [0], [0, 0, 1, 0], [], []>} : vector<8x32xbf16>, vector<8x32xbf16>, vector<8x8xf32> -> vector<8x8xf32>
    %cst_22 = arith.constant dense<0xFF800000> : vector<8xf32>
    %74 = vector.multi_reduction <maximumf>, %73, %cst_22 [1] : vector<8x8xf32> to vector<8xf32>
    %75 = vector.shape_cast %74 : vector<8xf32> to vector<8x1xf32>
    %76 = vector.broadcast %75 : vector<8x1xf32> to vector<8x8xf32>
    %77 = arith.subf %73, %76 : vector<8x8xf32>
    %78 = math.exp %77 : vector<8x8xf32>
    %cst_23 = arith.constant dense<0.000000e+00> : vector<8xf32>
    %79 = vector.multi_reduction <add>, %78, %cst_23 [1] : vector<8x8xf32> to vector<8xf32>
    %80 = vector.shape_cast %79 : vector<8xf32> to vector<8x1xf32>
    %81 = tpu.reciprocal %80 {approx = true} : vector<8x1xf32> -> vector<8x1xf32>
    %82 = vector.broadcast %81 : vector<8x1xf32> to vector<8x8xf32>
    %83 = arith.mulf %78, %82 : vector<8x8xf32>
    %84 = arith.truncf %83 : vector<8x8xf32> to vector<8x8xbf16>
    %85 = arith.truncf %70 : vector<8x32xf32> to vector<8x32xbf16>
    %cst_24 = arith.constant dense<0.000000e+00> : vector<8x32xf32>
    %86 = tpu.matmul %84, %85, %cst_24 {dimension_numbers = #tpu.dot_dimension_numbers<[1], [0], [0], [1], [0, 0, 1, 1], [], []>} : vector<8x8xbf16>, vector<8x32xbf16>, vector<8x32xf32> -> vector<8x32xf32>
    %87 = tpu.concatenate %29, %48, %67, %86 in 1 : vector<8x32xf32>, vector<8x32xf32>, vector<8x32xf32>, vector<8x32xf32> -> vector<8x128xf32>
    %88 = arith.truncf %87 : vector<8x128xf32> to vector<8x128xbf16>
    %cst_25 = arith.constant dense<0.000000e+00> : vector<8x128xf32>
    %89 = tpu.matmul %88, %5, %cst_25 {dimension_numbers = #tpu.dot_dimension_numbers<[1], [0], [0], [1], [0, 0, 1, 1], [], []>} : vector<8x128xbf16>, vector<128x128xbf16>, vector<8x128xf32> -> vector<8x128xf32>
    %90 = arith.addf %0, %89 : vector<8x128xf32>
    %cst_26 = arith.constant dense<0.000000e+00> : vector<8xf32>
    %91 = vector.multi_reduction <add>, %90, %cst_26 [1] : vector<8x128xf32> to vector<8xf32>
    %92 = vector.shape_cast %91 : vector<8xf32> to vector<8x1xf32>
    %cst_27 = arith.constant 1.280000e+02 : f32
    %93 = vector.broadcast %cst_27 : f32 to vector<8x1xf32>
    %94 = arith.divf %92, %93 : vector<8x1xf32>
    %95 = vector.broadcast %94 : vector<8x1xf32> to vector<8x128xf32>
    %96 = arith.subf %90, %95 : vector<8x128xf32>
    %97 = arith.mulf %96, %96 : vector<8x128xf32>
    %cst_28 = arith.constant dense<0.000000e+00> : vector<8xf32>
    %98 = vector.multi_reduction <add>, %97, %cst_28 [1] : vector<8x128xf32> to vector<8xf32>
    %99 = vector.shape_cast %98 : vector<8xf32> to vector<8x1xf32>
    %cst_29 = arith.constant 1.280000e+02 : f32
    %100 = vector.broadcast %cst_29 : f32 to vector<8x1xf32>
    %101 = arith.divf %99, %100 : vector<8x1xf32>
    %cst_30 = arith.constant 9.99999974E-6 : f32
    %102 = vector.broadcast %cst_30 : f32 to vector<8x1xf32>
    %103 = arith.addf %101, %102 : vector<8x1xf32>
    %104 = math.rsqrt %103 : vector<8x1xf32>
    %105 = vector.broadcast %104 : vector<8x1xf32> to vector<8x128xf32>
    %106 = arith.mulf %96, %105 : vector<8x128xf32>
    %c0_31 = arith.constant 0 : index
    %c0_32 = arith.constant 0 : index
    %c0_33 = arith.constant 0 : index
    %107 = vector.load %arg8[%c0_31, %c0_32, %c0_33] : memref<4x1x128xf32, #tpu.memory_space<vmem>>, vector<1x1x128xf32>
    %108 = vector.shape_cast %107 : vector<1x1x128xf32> to vector<1x128xf32>
    %109 = vector.broadcast %108 : vector<1x128xf32> to vector<8x128xf32>
    %110 = arith.mulf %106, %109 : vector<8x128xf32>
    %c0_34 = arith.constant 0 : index
    %c0_35 = arith.constant 0 : index
    %c0_36 = arith.constant 0 : index
    %111 = vector.load %arg9[%c0_34, %c0_35, %c0_36] : memref<4x1x128xf32, #tpu.memory_space<vmem>>, vector<1x1x128xf32>
    %112 = vector.shape_cast %111 : vector<1x1x128xf32> to vector<1x128xf32>
    %113 = vector.broadcast %112 : vector<1x128xf32> to vector<8x128xf32>
    %114 = arith.addf %110, %113 : vector<8x128xf32>
    %115 = arith.truncf %114 : vector<8x128xf32> to vector<8x128xbf16>
    %c0_37 = arith.constant 0 : index
    %c0_38 = arith.constant 0 : index
    %c0_39 = arith.constant 0 : index
    %116 = vector.load %arg4[%c0_37, %c0_38, %c0_39] : memref<4x128x256xbf16, #tpu.memory_space<vmem>>, vector<1x128x256xbf16>
    %117 = vector.shape_cast %116 : vector<1x128x256xbf16> to vector<128x256xbf16>
    %cst_40 = arith.constant dense<0.000000e+00> : vector<8x256xf32>
    %118 = tpu.matmul %115, %117, %cst_40 {dimension_numbers = #tpu.dot_dimension_numbers<[1], [0], [0], [1], [0, 0, 1, 1], [], []>} : vector<8x128xbf16>, vector<128x256xbf16>, vector<8x256xf32> -> vector<8x256xf32>
    %c0_41 = arith.constant 0 : index
    %c0_42 = arith.constant 0 : index
    %c0_43 = arith.constant 0 : index
    %119 = vector.load %arg5[%c0_41, %c0_42, %c0_43] : memref<4x1x256xf32, #tpu.memory_space<vmem>>, vector<1x1x256xf32>
    %120 = vector.shape_cast %119 : vector<1x1x256xf32> to vector<1x256xf32>
    %121 = vector.broadcast %120 : vector<1x256xf32> to vector<8x256xf32>
    %122 = arith.addf %118, %121 : vector<8x256xf32>
    %cst_44 = arith.constant 0.000000e+00 : f32
    %123 = vector.broadcast %cst_44 : f32 to vector<8x256xf32>
    %124 = arith.maximumf %122, %123 : vector<8x256xf32>
    %125 = arith.truncf %124 : vector<8x256xf32> to vector<8x256xbf16>
    %c0_45 = arith.constant 0 : index
    %c0_46 = arith.constant 0 : index
    %c0_47 = arith.constant 0 : index
    %126 = vector.load %arg6[%c0_45, %c0_46, %c0_47] : memref<4x256x128xbf16, #tpu.memory_space<vmem>>, vector<1x256x128xbf16>
    %127 = vector.shape_cast %126 : vector<1x256x128xbf16> to vector<256x128xbf16>
    %cst_48 = arith.constant dense<0.000000e+00> : vector<8x128xf32>
    %128 = tpu.matmul %125, %127, %cst_48 {dimension_numbers = #tpu.dot_dimension_numbers<[1], [0], [0], [1], [0, 0, 1, 1], [], []>} : vector<8x256xbf16>, vector<256x128xbf16>, vector<8x128xf32> -> vector<8x128xf32>
    %c0_49 = arith.constant 0 : index
    %c0_50 = arith.constant 0 : index
    %c0_51 = arith.constant 0 : index
    %129 = vector.load %arg7[%c0_49, %c0_50, %c0_51] : memref<4x1x128xf32, #tpu.memory_space<vmem>>, vector<1x1x128xf32>
    %130 = vector.shape_cast %129 : vector<1x1x128xf32> to vector<1x128xf32>
    %131 = vector.broadcast %130 : vector<1x128xf32> to vector<8x128xf32>
    %132 = arith.addf %128, %131 : vector<8x128xf32>
    %133 = arith.addf %114, %132 : vector<8x128xf32>
    %cst_52 = arith.constant dense<0.000000e+00> : vector<8xf32>
    %134 = vector.multi_reduction <add>, %133, %cst_52 [1] : vector<8x128xf32> to vector<8xf32>
    %135 = vector.shape_cast %134 : vector<8xf32> to vector<8x1xf32>
    %cst_53 = arith.constant 1.280000e+02 : f32
    %136 = vector.broadcast %cst_53 : f32 to vector<8x1xf32>
    %137 = arith.divf %135, %136 : vector<8x1xf32>
    %138 = vector.broadcast %137 : vector<8x1xf32> to vector<8x128xf32>
    %139 = arith.subf %133, %138 : vector<8x128xf32>
    %140 = arith.mulf %139, %139 : vector<8x128xf32>
    %cst_54 = arith.constant dense<0.000000e+00> : vector<8xf32>
    %141 = vector.multi_reduction <add>, %140, %cst_54 [1] : vector<8x128xf32> to vector<8xf32>
    %142 = vector.shape_cast %141 : vector<8xf32> to vector<8x1xf32>
    %cst_55 = arith.constant 1.280000e+02 : f32
    %143 = vector.broadcast %cst_55 : f32 to vector<8x1xf32>
    %144 = arith.divf %142, %143 : vector<8x1xf32>
    %cst_56 = arith.constant 9.99999974E-6 : f32
    %145 = vector.broadcast %cst_56 : f32 to vector<8x1xf32>
    %146 = arith.addf %144, %145 : vector<8x1xf32>
    %147 = math.rsqrt %146 : vector<8x1xf32>
    %148 = vector.broadcast %147 : vector<8x1xf32> to vector<8x128xf32>
    %149 = arith.mulf %139, %148 : vector<8x128xf32>
    %c0_57 = arith.constant 0 : index
    %c0_58 = arith.constant 0 : index
    %c0_59 = arith.constant 0 : index
    %150 = vector.load %arg8[%c0_57, %c0_58, %c0_59] : memref<4x1x128xf32, #tpu.memory_space<vmem>>, vector<1x1x128xf32>
    %151 = vector.shape_cast %150 : vector<1x1x128xf32> to vector<1x128xf32>
    %152 = vector.broadcast %151 : vector<1x128xf32> to vector<8x128xf32>
    %153 = arith.mulf %149, %152 : vector<8x128xf32>
    %c0_60 = arith.constant 0 : index
    %c0_61 = arith.constant 0 : index
    %c0_62 = arith.constant 0 : index
    %154 = vector.load %arg9[%c0_60, %c0_61, %c0_62] : memref<4x1x128xf32, #tpu.memory_space<vmem>>, vector<1x1x128xf32>
    %155 = vector.shape_cast %154 : vector<1x1x128xf32> to vector<1x128xf32>
    %156 = vector.broadcast %155 : vector<1x128xf32> to vector<8x128xf32>
    %157 = arith.addf %153, %156 : vector<8x128xf32>
    %c1 = arith.constant 1 : index
    %c0_63 = arith.constant 0 : index
    %c0_64 = arith.constant 0 : index
    %158 = vector.load %arg2[%c1, %c0_63, %c0_64] : memref<4x128x384xbf16, #tpu.memory_space<vmem>>, vector<1x128x384xbf16>
    %159 = vector.shape_cast %158 : vector<1x128x384xbf16> to vector<128x384xbf16>
    %c1_65 = arith.constant 1 : index
    %c0_66 = arith.constant 0 : index
    %c0_67 = arith.constant 0 : index
    %160 = vector.load %arg3[%c1_65, %c0_66, %c0_67] : memref<4x128x128xbf16, #tpu.memory_space<vmem>>, vector<1x128x128xbf16>
    %161 = vector.shape_cast %160 : vector<1x128x128xbf16> to vector<128x128xbf16>
    %162 = arith.truncf %157 : vector<8x128xf32> to vector<8x128xbf16>
    %cst_68 = arith.constant dense<0.000000e+00> : vector<8x384xf32>
    %163 = tpu.matmul %162, %159, %cst_68 {dimension_numbers = #tpu.dot_dimension_numbers<[1], [0], [0], [1], [0, 0, 1, 1], [], []>} : vector<8x128xbf16>, vector<128x384xbf16>, vector<8x384xf32> -> vector<8x384xf32>
    %164 = vector.extract_strided_slice %163 {offsets = [0, 0], sizes = [8, 128], strides = [1, 1]} : vector<8x384xf32> to vector<8x128xf32>
    %165 = vector.extract_strided_slice %163 {offsets = [0, 128], sizes = [8, 128], strides = [1, 1]} : vector<8x384xf32> to vector<8x128xf32>
    %166 = vector.extract_strided_slice %163 {offsets = [0, 256], sizes = [8, 128], strides = [1, 1]} : vector<8x384xf32> to vector<8x128xf32>
    %167 = vector.extract_strided_slice %164 {offsets = [0, 0], sizes = [8, 32], strides = [1, 1]} : vector<8x128xf32> to vector<8x32xf32>
    %168 = vector.extract_strided_slice %166 {offsets = [0, 0], sizes = [8, 32], strides = [1, 1]} : vector<8x128xf32> to vector<8x32xf32>
    %169 = vector.extract_strided_slice %165 {offsets = [0, 0], sizes = [8, 32], strides = [1, 1]} : vector<8x128xf32> to vector<8x32xf32>
    %170 = arith.truncf %167 : vector<8x32xf32> to vector<8x32xbf16>
    %171 = arith.truncf %168 : vector<8x32xf32> to vector<8x32xbf16>
    %cst_69 = arith.constant dense<0.000000e+00> : vector<8x8xf32>
    %172 = tpu.matmul %170, %171, %cst_69 {dimension_numbers = #tpu.dot_dimension_numbers<[1], [1], [0], [0], [0, 0, 1, 0], [], []>} : vector<8x32xbf16>, vector<8x32xbf16>, vector<8x8xf32> -> vector<8x8xf32>
    %cst_70 = arith.constant dense<0xFF800000> : vector<8xf32>
    %173 = vector.multi_reduction <maximumf>, %172, %cst_70 [1] : vector<8x8xf32> to vector<8xf32>
    %174 = vector.shape_cast %173 : vector<8xf32> to vector<8x1xf32>
    %175 = vector.broadcast %174 : vector<8x1xf32> to vector<8x8xf32>
    %176 = arith.subf %172, %175 : vector<8x8xf32>
    %177 = math.exp %176 : vector<8x8xf32>
    %cst_71 = arith.constant dense<0.000000e+00> : vector<8xf32>
    %178 = vector.multi_reduction <add>, %177, %cst_71 [1] : vector<8x8xf32> to vector<8xf32>
    %179 = vector.shape_cast %178 : vector<8xf32> to vector<8x1xf32>
    %180 = tpu.reciprocal %179 {approx = true} : vector<8x1xf32> -> vector<8x1xf32>
    %181 = vector.broadcast %180 : vector<8x1xf32> to vector<8x8xf32>
    %182 = arith.mulf %177, %181 : vector<8x8xf32>
    %183 = arith.truncf %182 : vector<8x8xf32> to vector<8x8xbf16>
    %184 = arith.truncf %169 : vector<8x32xf32> to vector<8x32xbf16>
    %cst_72 = arith.constant dense<0.000000e+00> : vector<8x32xf32>
    %185 = tpu.matmul %183, %184, %cst_72 {dimension_numbers = #tpu.dot_dimension_numbers<[1], [0], [0], [1], [0, 0, 1, 1], [], []>} : vector<8x8xbf16>, vector<8x32xbf16>, vector<8x32xf32> -> vector<8x32xf32>
    %186 = vector.extract_strided_slice %164 {offsets = [0, 32], sizes = [8, 32], strides = [1, 1]} : vector<8x128xf32> to vector<8x32xf32>
    %187 = vector.extract_strided_slice %166 {offsets = [0, 32], sizes = [8, 32], strides = [1, 1]} : vector<8x128xf32> to vector<8x32xf32>
    %188 = vector.extract_strided_slice %165 {offsets = [0, 32], sizes = [8, 32], strides = [1, 1]} : vector<8x128xf32> to vector<8x32xf32>
    %189 = arith.truncf %186 : vector<8x32xf32> to vector<8x32xbf16>
    %190 = arith.truncf %187 : vector<8x32xf32> to vector<8x32xbf16>
    %cst_73 = arith.constant dense<0.000000e+00> : vector<8x8xf32>
    %191 = tpu.matmul %189, %190, %cst_73 {dimension_numbers = #tpu.dot_dimension_numbers<[1], [1], [0], [0], [0, 0, 1, 0], [], []>} : vector<8x32xbf16>, vector<8x32xbf16>, vector<8x8xf32> -> vector<8x8xf32>
    %cst_74 = arith.constant dense<0xFF800000> : vector<8xf32>
    %192 = vector.multi_reduction <maximumf>, %191, %cst_74 [1] : vector<8x8xf32> to vector<8xf32>
    %193 = vector.shape_cast %192 : vector<8xf32> to vector<8x1xf32>
    %194 = vector.broadcast %193 : vector<8x1xf32> to vector<8x8xf32>
    %195 = arith.subf %191, %194 : vector<8x8xf32>
    %196 = math.exp %195 : vector<8x8xf32>
    %cst_75 = arith.constant dense<0.000000e+00> : vector<8xf32>
    %197 = vector.multi_reduction <add>, %196, %cst_75 [1] : vector<8x8xf32> to vector<8xf32>
    %198 = vector.shape_cast %197 : vector<8xf32> to vector<8x1xf32>
    %199 = tpu.reciprocal %198 {approx = true} : vector<8x1xf32> -> vector<8x1xf32>
    %200 = vector.broadcast %199 : vector<8x1xf32> to vector<8x8xf32>
    %201 = arith.mulf %196, %200 : vector<8x8xf32>
    %202 = arith.truncf %201 : vector<8x8xf32> to vector<8x8xbf16>
    %203 = arith.truncf %188 : vector<8x32xf32> to vector<8x32xbf16>
    %cst_76 = arith.constant dense<0.000000e+00> : vector<8x32xf32>
    %204 = tpu.matmul %202, %203, %cst_76 {dimension_numbers = #tpu.dot_dimension_numbers<[1], [0], [0], [1], [0, 0, 1, 1], [], []>} : vector<8x8xbf16>, vector<8x32xbf16>, vector<8x32xf32> -> vector<8x32xf32>
    %205 = vector.extract_strided_slice %164 {offsets = [0, 64], sizes = [8, 32], strides = [1, 1]} : vector<8x128xf32> to vector<8x32xf32>
    %206 = vector.extract_strided_slice %166 {offsets = [0, 64], sizes = [8, 32], strides = [1, 1]} : vector<8x128xf32> to vector<8x32xf32>
    %207 = vector.extract_strided_slice %165 {offsets = [0, 64], sizes = [8, 32], strides = [1, 1]} : vector<8x128xf32> to vector<8x32xf32>
    %208 = arith.truncf %205 : vector<8x32xf32> to vector<8x32xbf16>
    %209 = arith.truncf %206 : vector<8x32xf32> to vector<8x32xbf16>
    %cst_77 = arith.constant dense<0.000000e+00> : vector<8x8xf32>
    %210 = tpu.matmul %208, %209, %cst_77 {dimension_numbers = #tpu.dot_dimension_numbers<[1], [1], [0], [0], [0, 0, 1, 0], [], []>} : vector<8x32xbf16>, vector<8x32xbf16>, vector<8x8xf32> -> vector<8x8xf32>
    %cst_78 = arith.constant dense<0xFF800000> : vector<8xf32>
    %211 = vector.multi_reduction <maximumf>, %210, %cst_78 [1] : vector<8x8xf32> to vector<8xf32>
    %212 = vector.shape_cast %211 : vector<8xf32> to vector<8x1xf32>
    %213 = vector.broadcast %212 : vector<8x1xf32> to vector<8x8xf32>
    %214 = arith.subf %210, %213 : vector<8x8xf32>
    %215 = math.exp %214 : vector<8x8xf32>
    %cst_79 = arith.constant dense<0.000000e+00> : vector<8xf32>
    %216 = vector.multi_reduction <add>, %215, %cst_79 [1] : vector<8x8xf32> to vector<8xf32>
    %217 = vector.shape_cast %216 : vector<8xf32> to vector<8x1xf32>
    %218 = tpu.reciprocal %217 {approx = true} : vector<8x1xf32> -> vector<8x1xf32>
    %219 = vector.broadcast %218 : vector<8x1xf32> to vector<8x8xf32>
    %220 = arith.mulf %215, %219 : vector<8x8xf32>
    %221 = arith.truncf %220 : vector<8x8xf32> to vector<8x8xbf16>
    %222 = arith.truncf %207 : vector<8x32xf32> to vector<8x32xbf16>
    %cst_80 = arith.constant dense<0.000000e+00> : vector<8x32xf32>
    %223 = tpu.matmul %221, %222, %cst_80 {dimension_numbers = #tpu.dot_dimension_numbers<[1], [0], [0], [1], [0, 0, 1, 1], [], []>} : vector<8x8xbf16>, vector<8x32xbf16>, vector<8x32xf32> -> vector<8x32xf32>
    %224 = vector.extract_strided_slice %164 {offsets = [0, 96], sizes = [8, 32], strides = [1, 1]} : vector<8x128xf32> to vector<8x32xf32>
    %225 = vector.extract_strided_slice %166 {offsets = [0, 96], sizes = [8, 32], strides = [1, 1]} : vector<8x128xf32> to vector<8x32xf32>
    %226 = vector.extract_strided_slice %165 {offsets = [0, 96], sizes = [8, 32], strides = [1, 1]} : vector<8x128xf32> to vector<8x32xf32>
    %227 = arith.truncf %224 : vector<8x32xf32> to vector<8x32xbf16>
    %228 = arith.truncf %225 : vector<8x32xf32> to vector<8x32xbf16>
    %cst_81 = arith.constant dense<0.000000e+00> : vector<8x8xf32>
    %229 = tpu.matmul %227, %228, %cst_81 {dimension_numbers = #tpu.dot_dimension_numbers<[1], [1], [0], [0], [0, 0, 1, 0], [], []>} : vector<8x32xbf16>, vector<8x32xbf16>, vector<8x8xf32> -> vector<8x8xf32>
    %cst_82 = arith.constant dense<0xFF800000> : vector<8xf32>
    %230 = vector.multi_reduction <maximumf>, %229, %cst_82 [1] : vector<8x8xf32> to vector<8xf32>
    %231 = vector.shape_cast %230 : vector<8xf32> to vector<8x1xf32>
    %232 = vector.broadcast %231 : vector<8x1xf32> to vector<8x8xf32>
    %233 = arith.subf %229, %232 : vector<8x8xf32>
    %234 = math.exp %233 : vector<8x8xf32>
    %cst_83 = arith.constant dense<0.000000e+00> : vector<8xf32>
    %235 = vector.multi_reduction <add>, %234, %cst_83 [1] : vector<8x8xf32> to vector<8xf32>
    %236 = vector.shape_cast %235 : vector<8xf32> to vector<8x1xf32>
    %237 = tpu.reciprocal %236 {approx = true} : vector<8x1xf32> -> vector<8x1xf32>
    %238 = vector.broadcast %237 : vector<8x1xf32> to vector<8x8xf32>
    %239 = arith.mulf %234, %238 : vector<8x8xf32>
    %240 = arith.truncf %239 : vector<8x8xf32> to vector<8x8xbf16>
    %241 = arith.truncf %226 : vector<8x32xf32> to vector<8x32xbf16>
    %cst_84 = arith.constant dense<0.000000e+00> : vector<8x32xf32>
    %242 = tpu.matmul %240, %241, %cst_84 {dimension_numbers = #tpu.dot_dimension_numbers<[1], [0], [0], [1], [0, 0, 1, 1], [], []>} : vector<8x8xbf16>, vector<8x32xbf16>, vector<8x32xf32> -> vector<8x32xf32>
    %243 = tpu.concatenate %185, %204, %223, %242 in 1 : vector<8x32xf32>, vector<8x32xf32>, vector<8x32xf32>, vector<8x32xf32> -> vector<8x128xf32>
    %244 = arith.truncf %243 : vector<8x128xf32> to vector<8x128xbf16>
    %cst_85 = arith.constant dense<0.000000e+00> : vector<8x128xf32>
    %245 = tpu.matmul %244, %161, %cst_85 {dimension_numbers = #tpu.dot_dimension_numbers<[1], [0], [0], [1], [0, 0, 1, 1], [], []>} : vector<8x128xbf16>, vector<128x128xbf16>, vector<8x128xf32> -> vector<8x128xf32>
    %246 = arith.addf %157, %245 : vector<8x128xf32>
    %cst_86 = arith.constant dense<0.000000e+00> : vector<8xf32>
    %247 = vector.multi_reduction <add>, %246, %cst_86 [1] : vector<8x128xf32> to vector<8xf32>
    %248 = vector.shape_cast %247 : vector<8xf32> to vector<8x1xf32>
    %cst_87 = arith.constant 1.280000e+02 : f32
    %249 = vector.broadcast %cst_87 : f32 to vector<8x1xf32>
    %250 = arith.divf %248, %249 : vector<8x1xf32>
    %251 = vector.broadcast %250 : vector<8x1xf32> to vector<8x128xf32>
    %252 = arith.subf %246, %251 : vector<8x128xf32>
    %253 = arith.mulf %252, %252 : vector<8x128xf32>
    %cst_88 = arith.constant dense<0.000000e+00> : vector<8xf32>
    %254 = vector.multi_reduction <add>, %253, %cst_88 [1] : vector<8x128xf32> to vector<8xf32>
    %255 = vector.shape_cast %254 : vector<8xf32> to vector<8x1xf32>
    %cst_89 = arith.constant 1.280000e+02 : f32
    %256 = vector.broadcast %cst_89 : f32 to vector<8x1xf32>
    %257 = arith.divf %255, %256 : vector<8x1xf32>
    %cst_90 = arith.constant 9.99999974E-6 : f32
    %258 = vector.broadcast %cst_90 : f32 to vector<8x1xf32>
    %259 = arith.addf %257, %258 : vector<8x1xf32>
    %260 = math.rsqrt %259 : vector<8x1xf32>
    %261 = vector.broadcast %260 : vector<8x1xf32> to vector<8x128xf32>
    %262 = arith.mulf %252, %261 : vector<8x128xf32>
    %c1_91 = arith.constant 1 : index
    %c0_92 = arith.constant 0 : index
    %c0_93 = arith.constant 0 : index
    %263 = vector.load %arg8[%c1_91, %c0_92, %c0_93] : memref<4x1x128xf32, #tpu.memory_space<vmem>>, vector<1x1x128xf32>
    %264 = vector.shape_cast %263 : vector<1x1x128xf32> to vector<1x128xf32>
    %265 = vector.broadcast %264 : vector<1x128xf32> to vector<8x128xf32>
    %266 = arith.mulf %262, %265 : vector<8x128xf32>
    %c1_94 = arith.constant 1 : index
    %c0_95 = arith.constant 0 : index
    %c0_96 = arith.constant 0 : index
    %267 = vector.load %arg9[%c1_94, %c0_95, %c0_96] : memref<4x1x128xf32, #tpu.memory_space<vmem>>, vector<1x1x128xf32>
    %268 = vector.shape_cast %267 : vector<1x1x128xf32> to vector<1x128xf32>
    %269 = vector.broadcast %268 : vector<1x128xf32> to vector<8x128xf32>
    %270 = arith.addf %266, %269 : vector<8x128xf32>
    %271 = arith.truncf %270 : vector<8x128xf32> to vector<8x128xbf16>
    %c1_97 = arith.constant 1 : index
    %c0_98 = arith.constant 0 : index
    %c0_99 = arith.constant 0 : index
    %272 = vector.load %arg4[%c1_97, %c0_98, %c0_99] : memref<4x128x256xbf16, #tpu.memory_space<vmem>>, vector<1x128x256xbf16>
    %273 = vector.shape_cast %272 : vector<1x128x256xbf16> to vector<128x256xbf16>
    %cst_100 = arith.constant dense<0.000000e+00> : vector<8x256xf32>
    %274 = tpu.matmul %271, %273, %cst_100 {dimension_numbers = #tpu.dot_dimension_numbers<[1], [0], [0], [1], [0, 0, 1, 1], [], []>} : vector<8x128xbf16>, vector<128x256xbf16>, vector<8x256xf32> -> vector<8x256xf32>
    %c1_101 = arith.constant 1 : index
    %c0_102 = arith.constant 0 : index
    %c0_103 = arith.constant 0 : index
    %275 = vector.load %arg5[%c1_101, %c0_102, %c0_103] : memref<4x1x256xf32, #tpu.memory_space<vmem>>, vector<1x1x256xf32>
    %276 = vector.shape_cast %275 : vector<1x1x256xf32> to vector<1x256xf32>
    %277 = vector.broadcast %276 : vector<1x256xf32> to vector<8x256xf32>
    %278 = arith.addf %274, %277 : vector<8x256xf32>
    %cst_104 = arith.constant 0.000000e+00 : f32
    %279 = vector.broadcast %cst_104 : f32 to vector<8x256xf32>
    %280 = arith.maximumf %278, %279 : vector<8x256xf32>
    %281 = arith.truncf %280 : vector<8x256xf32> to vector<8x256xbf16>
    %c1_105 = arith.constant 1 : index
    %c0_106 = arith.constant 0 : index
    %c0_107 = arith.constant 0 : index
    %282 = vector.load %arg6[%c1_105, %c0_106, %c0_107] : memref<4x256x128xbf16, #tpu.memory_space<vmem>>, vector<1x256x128xbf16>
    %283 = vector.shape_cast %282 : vector<1x256x128xbf16> to vector<256x128xbf16>
    %cst_108 = arith.constant dense<0.000000e+00> : vector<8x128xf32>
    %284 = tpu.matmul %281, %283, %cst_108 {dimension_numbers = #tpu.dot_dimension_numbers<[1], [0], [0], [1], [0, 0, 1, 1], [], []>} : vector<8x256xbf16>, vector<256x128xbf16>, vector<8x128xf32> -> vector<8x128xf32>
    %c1_109 = arith.constant 1 : index
    %c0_110 = arith.constant 0 : index
    %c0_111 = arith.constant 0 : index
    %285 = vector.load %arg7[%c1_109, %c0_110, %c0_111] : memref<4x1x128xf32, #tpu.memory_space<vmem>>, vector<1x1x128xf32>
    %286 = vector.shape_cast %285 : vector<1x1x128xf32> to vector<1x128xf32>
    %287 = vector.broadcast %286 : vector<1x128xf32> to vector<8x128xf32>
    %288 = arith.addf %284, %287 : vector<8x128xf32>
    %289 = arith.addf %270, %288 : vector<8x128xf32>
    %cst_112 = arith.constant dense<0.000000e+00> : vector<8xf32>
    %290 = vector.multi_reduction <add>, %289, %cst_112 [1] : vector<8x128xf32> to vector<8xf32>
    %291 = vector.shape_cast %290 : vector<8xf32> to vector<8x1xf32>
    %cst_113 = arith.constant 1.280000e+02 : f32
    %292 = vector.broadcast %cst_113 : f32 to vector<8x1xf32>
    %293 = arith.divf %291, %292 : vector<8x1xf32>
    %294 = vector.broadcast %293 : vector<8x1xf32> to vector<8x128xf32>
    %295 = arith.subf %289, %294 : vector<8x128xf32>
    %296 = arith.mulf %295, %295 : vector<8x128xf32>
    %cst_114 = arith.constant dense<0.000000e+00> : vector<8xf32>
    %297 = vector.multi_reduction <add>, %296, %cst_114 [1] : vector<8x128xf32> to vector<8xf32>
    %298 = vector.shape_cast %297 : vector<8xf32> to vector<8x1xf32>
    %cst_115 = arith.constant 1.280000e+02 : f32
    %299 = vector.broadcast %cst_115 : f32 to vector<8x1xf32>
    %300 = arith.divf %298, %299 : vector<8x1xf32>
    %cst_116 = arith.constant 9.99999974E-6 : f32
    %301 = vector.broadcast %cst_116 : f32 to vector<8x1xf32>
    %302 = arith.addf %300, %301 : vector<8x1xf32>
    %303 = math.rsqrt %302 : vector<8x1xf32>
    %304 = vector.broadcast %303 : vector<8x1xf32> to vector<8x128xf32>
    %305 = arith.mulf %295, %304 : vector<8x128xf32>
    %c1_117 = arith.constant 1 : index
    %c0_118 = arith.constant 0 : index
    %c0_119 = arith.constant 0 : index
    %306 = vector.load %arg8[%c1_117, %c0_118, %c0_119] : memref<4x1x128xf32, #tpu.memory_space<vmem>>, vector<1x1x128xf32>
    %307 = vector.shape_cast %306 : vector<1x1x128xf32> to vector<1x128xf32>
    %308 = vector.broadcast %307 : vector<1x128xf32> to vector<8x128xf32>
    %309 = arith.mulf %305, %308 : vector<8x128xf32>
    %c1_120 = arith.constant 1 : index
    %c0_121 = arith.constant 0 : index
    %c0_122 = arith.constant 0 : index
    %310 = vector.load %arg9[%c1_120, %c0_121, %c0_122] : memref<4x1x128xf32, #tpu.memory_space<vmem>>, vector<1x1x128xf32>
    %311 = vector.shape_cast %310 : vector<1x1x128xf32> to vector<1x128xf32>
    %312 = vector.broadcast %311 : vector<1x128xf32> to vector<8x128xf32>
    %313 = arith.addf %309, %312 : vector<8x128xf32>
    %c2 = arith.constant 2 : index
    %c0_123 = arith.constant 0 : index
    %c0_124 = arith.constant 0 : index
    %314 = vector.load %arg2[%c2, %c0_123, %c0_124] : memref<4x128x384xbf16, #tpu.memory_space<vmem>>, vector<1x128x384xbf16>
    %315 = vector.shape_cast %314 : vector<1x128x384xbf16> to vector<128x384xbf16>
    %c2_125 = arith.constant 2 : index
    %c0_126 = arith.constant 0 : index
    %c0_127 = arith.constant 0 : index
    %316 = vector.load %arg3[%c2_125, %c0_126, %c0_127] : memref<4x128x128xbf16, #tpu.memory_space<vmem>>, vector<1x128x128xbf16>
    %317 = vector.shape_cast %316 : vector<1x128x128xbf16> to vector<128x128xbf16>
    %318 = arith.truncf %1 : vector<8x128xf32> to vector<8x128xbf16>
    %cst_128 = arith.constant dense<0.000000e+00> : vector<8x384xf32>
    %319 = tpu.matmul %318, %315, %cst_128 {dimension_numbers = #tpu.dot_dimension_numbers<[1], [0], [0], [1], [0, 0, 1, 1], [], []>} : vector<8x128xbf16>, vector<128x384xbf16>, vector<8x384xf32> -> vector<8x384xf32>
    %320 = vector.extract_strided_slice %319 {offsets = [0, 0], sizes = [8, 128], strides = [1, 1]} : vector<8x384xf32> to vector<8x128xf32>
    %321 = vector.extract_strided_slice %319 {offsets = [0, 128], sizes = [8, 128], strides = [1, 1]} : vector<8x384xf32> to vector<8x128xf32>
    %322 = vector.extract_strided_slice %319 {offsets = [0, 256], sizes = [8, 128], strides = [1, 1]} : vector<8x384xf32> to vector<8x128xf32>
    %323 = vector.extract_strided_slice %320 {offsets = [0, 0], sizes = [8, 32], strides = [1, 1]} : vector<8x128xf32> to vector<8x32xf32>
    %324 = vector.extract_strided_slice %322 {offsets = [0, 0], sizes = [8, 32], strides = [1, 1]} : vector<8x128xf32> to vector<8x32xf32>
    %325 = vector.extract_strided_slice %321 {offsets = [0, 0], sizes = [8, 32], strides = [1, 1]} : vector<8x128xf32> to vector<8x32xf32>
    %326 = arith.truncf %323 : vector<8x32xf32> to vector<8x32xbf16>
    %327 = arith.truncf %324 : vector<8x32xf32> to vector<8x32xbf16>
    %cst_129 = arith.constant dense<0.000000e+00> : vector<8x8xf32>
    %328 = tpu.matmul %326, %327, %cst_129 {dimension_numbers = #tpu.dot_dimension_numbers<[1], [1], [0], [0], [0, 0, 1, 0], [], []>} : vector<8x32xbf16>, vector<8x32xbf16>, vector<8x8xf32> -> vector<8x8xf32>
    %cst_130 = arith.constant dense<0xFF800000> : vector<8xf32>
    %329 = vector.multi_reduction <maximumf>, %328, %cst_130 [1] : vector<8x8xf32> to vector<8xf32>
    %330 = vector.shape_cast %329 : vector<8xf32> to vector<8x1xf32>
    %331 = vector.broadcast %330 : vector<8x1xf32> to vector<8x8xf32>
    %332 = arith.subf %328, %331 : vector<8x8xf32>
    %333 = math.exp %332 : vector<8x8xf32>
    %cst_131 = arith.constant dense<0.000000e+00> : vector<8xf32>
    %334 = vector.multi_reduction <add>, %333, %cst_131 [1] : vector<8x8xf32> to vector<8xf32>
    %335 = vector.shape_cast %334 : vector<8xf32> to vector<8x1xf32>
    %336 = tpu.reciprocal %335 {approx = true} : vector<8x1xf32> -> vector<8x1xf32>
    %337 = vector.broadcast %336 : vector<8x1xf32> to vector<8x8xf32>
    %338 = arith.mulf %333, %337 : vector<8x8xf32>
    %339 = arith.truncf %338 : vector<8x8xf32> to vector<8x8xbf16>
    %340 = arith.truncf %325 : vector<8x32xf32> to vector<8x32xbf16>
    %cst_132 = arith.constant dense<0.000000e+00> : vector<8x32xf32>
    %341 = tpu.matmul %339, %340, %cst_132 {dimension_numbers = #tpu.dot_dimension_numbers<[1], [0], [0], [1], [0, 0, 1, 1], [], []>} : vector<8x8xbf16>, vector<8x32xbf16>, vector<8x32xf32> -> vector<8x32xf32>
    %342 = vector.extract_strided_slice %320 {offsets = [0, 32], sizes = [8, 32], strides = [1, 1]} : vector<8x128xf32> to vector<8x32xf32>
    %343 = vector.extract_strided_slice %322 {offsets = [0, 32], sizes = [8, 32], strides = [1, 1]} : vector<8x128xf32> to vector<8x32xf32>
    %344 = vector.extract_strided_slice %321 {offsets = [0, 32], sizes = [8, 32], strides = [1, 1]} : vector<8x128xf32> to vector<8x32xf32>
    %345 = arith.truncf %342 : vector<8x32xf32> to vector<8x32xbf16>
    %346 = arith.truncf %343 : vector<8x32xf32> to vector<8x32xbf16>
    %cst_133 = arith.constant dense<0.000000e+00> : vector<8x8xf32>
    %347 = tpu.matmul %345, %346, %cst_133 {dimension_numbers = #tpu.dot_dimension_numbers<[1], [1], [0], [0], [0, 0, 1, 0], [], []>} : vector<8x32xbf16>, vector<8x32xbf16>, vector<8x8xf32> -> vector<8x8xf32>
    %cst_134 = arith.constant dense<0xFF800000> : vector<8xf32>
    %348 = vector.multi_reduction <maximumf>, %347, %cst_134 [1] : vector<8x8xf32> to vector<8xf32>
    %349 = vector.shape_cast %348 : vector<8xf32> to vector<8x1xf32>
    %350 = vector.broadcast %349 : vector<8x1xf32> to vector<8x8xf32>
    %351 = arith.subf %347, %350 : vector<8x8xf32>
    %352 = math.exp %351 : vector<8x8xf32>
    %cst_135 = arith.constant dense<0.000000e+00> : vector<8xf32>
    %353 = vector.multi_reduction <add>, %352, %cst_135 [1] : vector<8x8xf32> to vector<8xf32>
    %354 = vector.shape_cast %353 : vector<8xf32> to vector<8x1xf32>
    %355 = tpu.reciprocal %354 {approx = true} : vector<8x1xf32> -> vector<8x1xf32>
    %356 = vector.broadcast %355 : vector<8x1xf32> to vector<8x8xf32>
    %357 = arith.mulf %352, %356 : vector<8x8xf32>
    %358 = arith.truncf %357 : vector<8x8xf32> to vector<8x8xbf16>
    %359 = arith.truncf %344 : vector<8x32xf32> to vector<8x32xbf16>
    %cst_136 = arith.constant dense<0.000000e+00> : vector<8x32xf32>
    %360 = tpu.matmul %358, %359, %cst_136 {dimension_numbers = #tpu.dot_dimension_numbers<[1], [0], [0], [1], [0, 0, 1, 1], [], []>} : vector<8x8xbf16>, vector<8x32xbf16>, vector<8x32xf32> -> vector<8x32xf32>
    %361 = vector.extract_strided_slice %320 {offsets = [0, 64], sizes = [8, 32], strides = [1, 1]} : vector<8x128xf32> to vector<8x32xf32>
    %362 = vector.extract_strided_slice %322 {offsets = [0, 64], sizes = [8, 32], strides = [1, 1]} : vector<8x128xf32> to vector<8x32xf32>
    %363 = vector.extract_strided_slice %321 {offsets = [0, 64], sizes = [8, 32], strides = [1, 1]} : vector<8x128xf32> to vector<8x32xf32>
    %364 = arith.truncf %361 : vector<8x32xf32> to vector<8x32xbf16>
    %365 = arith.truncf %362 : vector<8x32xf32> to vector<8x32xbf16>
    %cst_137 = arith.constant dense<0.000000e+00> : vector<8x8xf32>
    %366 = tpu.matmul %364, %365, %cst_137 {dimension_numbers = #tpu.dot_dimension_numbers<[1], [1], [0], [0], [0, 0, 1, 0], [], []>} : vector<8x32xbf16>, vector<8x32xbf16>, vector<8x8xf32> -> vector<8x8xf32>
    %cst_138 = arith.constant dense<0xFF800000> : vector<8xf32>
    %367 = vector.multi_reduction <maximumf>, %366, %cst_138 [1] : vector<8x8xf32> to vector<8xf32>
    %368 = vector.shape_cast %367 : vector<8xf32> to vector<8x1xf32>
    %369 = vector.broadcast %368 : vector<8x1xf32> to vector<8x8xf32>
    %370 = arith.subf %366, %369 : vector<8x8xf32>
    %371 = math.exp %370 : vector<8x8xf32>
    %cst_139 = arith.constant dense<0.000000e+00> : vector<8xf32>
    %372 = vector.multi_reduction <add>, %371, %cst_139 [1] : vector<8x8xf32> to vector<8xf32>
    %373 = vector.shape_cast %372 : vector<8xf32> to vector<8x1xf32>
    %374 = tpu.reciprocal %373 {approx = true} : vector<8x1xf32> -> vector<8x1xf32>
    %375 = vector.broadcast %374 : vector<8x1xf32> to vector<8x8xf32>
    %376 = arith.mulf %371, %375 : vector<8x8xf32>
    %377 = arith.truncf %376 : vector<8x8xf32> to vector<8x8xbf16>
    %378 = arith.truncf %363 : vector<8x32xf32> to vector<8x32xbf16>
    %cst_140 = arith.constant dense<0.000000e+00> : vector<8x32xf32>
    %379 = tpu.matmul %377, %378, %cst_140 {dimension_numbers = #tpu.dot_dimension_numbers<[1], [0], [0], [1], [0, 0, 1, 1], [], []>} : vector<8x8xbf16>, vector<8x32xbf16>, vector<8x32xf32> -> vector<8x32xf32>
    %380 = vector.extract_strided_slice %320 {offsets = [0, 96], sizes = [8, 32], strides = [1, 1]} : vector<8x128xf32> to vector<8x32xf32>
    %381 = vector.extract_strided_slice %322 {offsets = [0, 96], sizes = [8, 32], strides = [1, 1]} : vector<8x128xf32> to vector<8x32xf32>
    %382 = vector.extract_strided_slice %321 {offsets = [0, 96], sizes = [8, 32], strides = [1, 1]} : vector<8x128xf32> to vector<8x32xf32>
    %383 = arith.truncf %380 : vector<8x32xf32> to vector<8x32xbf16>
    %384 = arith.truncf %381 : vector<8x32xf32> to vector<8x32xbf16>
    %cst_141 = arith.constant dense<0.000000e+00> : vector<8x8xf32>
    %385 = tpu.matmul %383, %384, %cst_141 {dimension_numbers = #tpu.dot_dimension_numbers<[1], [1], [0], [0], [0, 0, 1, 0], [], []>} : vector<8x32xbf16>, vector<8x32xbf16>, vector<8x8xf32> -> vector<8x8xf32>
    %cst_142 = arith.constant dense<0xFF800000> : vector<8xf32>
    %386 = vector.multi_reduction <maximumf>, %385, %cst_142 [1] : vector<8x8xf32> to vector<8xf32>
    %387 = vector.shape_cast %386 : vector<8xf32> to vector<8x1xf32>
    %388 = vector.broadcast %387 : vector<8x1xf32> to vector<8x8xf32>
    %389 = arith.subf %385, %388 : vector<8x8xf32>
    %390 = math.exp %389 : vector<8x8xf32>
    %cst_143 = arith.constant dense<0.000000e+00> : vector<8xf32>
    %391 = vector.multi_reduction <add>, %390, %cst_143 [1] : vector<8x8xf32> to vector<8xf32>
    %392 = vector.shape_cast %391 : vector<8xf32> to vector<8x1xf32>
    %393 = tpu.reciprocal %392 {approx = true} : vector<8x1xf32> -> vector<8x1xf32>
    %394 = vector.broadcast %393 : vector<8x1xf32> to vector<8x8xf32>
    %395 = arith.mulf %390, %394 : vector<8x8xf32>
    %396 = arith.truncf %395 : vector<8x8xf32> to vector<8x8xbf16>
    %397 = arith.truncf %382 : vector<8x32xf32> to vector<8x32xbf16>
    %cst_144 = arith.constant dense<0.000000e+00> : vector<8x32xf32>
    %398 = tpu.matmul %396, %397, %cst_144 {dimension_numbers = #tpu.dot_dimension_numbers<[1], [0], [0], [1], [0, 0, 1, 1], [], []>} : vector<8x8xbf16>, vector<8x32xbf16>, vector<8x32xf32> -> vector<8x32xf32>
    %399 = tpu.concatenate %341, %360, %379, %398 in 1 : vector<8x32xf32>, vector<8x32xf32>, vector<8x32xf32>, vector<8x32xf32> -> vector<8x128xf32>
    %400 = arith.truncf %399 : vector<8x128xf32> to vector<8x128xbf16>
    %cst_145 = arith.constant dense<0.000000e+00> : vector<8x128xf32>
    %401 = tpu.matmul %400, %317, %cst_145 {dimension_numbers = #tpu.dot_dimension_numbers<[1], [0], [0], [1], [0, 0, 1, 1], [], []>} : vector<8x128xbf16>, vector<128x128xbf16>, vector<8x128xf32> -> vector<8x128xf32>
    %402 = arith.addf %1, %401 : vector<8x128xf32>
    %cst_146 = arith.constant dense<0.000000e+00> : vector<8xf32>
    %403 = vector.multi_reduction <add>, %402, %cst_146 [1] : vector<8x128xf32> to vector<8xf32>
    %404 = vector.shape_cast %403 : vector<8xf32> to vector<8x1xf32>
    %cst_147 = arith.constant 1.280000e+02 : f32
    %405 = vector.broadcast %cst_147 : f32 to vector<8x1xf32>
    %406 = arith.divf %404, %405 : vector<8x1xf32>
    %407 = vector.broadcast %406 : vector<8x1xf32> to vector<8x128xf32>
    %408 = arith.subf %402, %407 : vector<8x128xf32>
    %409 = arith.mulf %408, %408 : vector<8x128xf32>
    %cst_148 = arith.constant dense<0.000000e+00> : vector<8xf32>
    %410 = vector.multi_reduction <add>, %409, %cst_148 [1] : vector<8x128xf32> to vector<8xf32>
    %411 = vector.shape_cast %410 : vector<8xf32> to vector<8x1xf32>
    %cst_149 = arith.constant 1.280000e+02 : f32
    %412 = vector.broadcast %cst_149 : f32 to vector<8x1xf32>
    %413 = arith.divf %411, %412 : vector<8x1xf32>
    %cst_150 = arith.constant 9.99999974E-6 : f32
    %414 = vector.broadcast %cst_150 : f32 to vector<8x1xf32>
    %415 = arith.addf %413, %414 : vector<8x1xf32>
    %416 = math.rsqrt %415 : vector<8x1xf32>
    %417 = vector.broadcast %416 : vector<8x1xf32> to vector<8x128xf32>
    %418 = arith.mulf %408, %417 : vector<8x128xf32>
    %c2_151 = arith.constant 2 : index
    %c0_152 = arith.constant 0 : index
    %c0_153 = arith.constant 0 : index
    %419 = vector.load %arg8[%c2_151, %c0_152, %c0_153] : memref<4x1x128xf32, #tpu.memory_space<vmem>>, vector<1x1x128xf32>
    %420 = vector.shape_cast %419 : vector<1x1x128xf32> to vector<1x128xf32>
    %421 = vector.broadcast %420 : vector<1x128xf32> to vector<8x128xf32>
    %422 = arith.mulf %418, %421 : vector<8x128xf32>
    %c2_154 = arith.constant 2 : index
    %c0_155 = arith.constant 0 : index
    %c0_156 = arith.constant 0 : index
    %423 = vector.load %arg9[%c2_154, %c0_155, %c0_156] : memref<4x1x128xf32, #tpu.memory_space<vmem>>, vector<1x1x128xf32>
    %424 = vector.shape_cast %423 : vector<1x1x128xf32> to vector<1x128xf32>
    %425 = vector.broadcast %424 : vector<1x128xf32> to vector<8x128xf32>
    %426 = arith.addf %422, %425 : vector<8x128xf32>
    %c2_157 = arith.constant 2 : index
    %c0_158 = arith.constant 0 : index
    %c0_159 = arith.constant 0 : index
    %427 = vector.load %arg2[%c2_157, %c0_158, %c0_159] : memref<4x128x384xbf16, #tpu.memory_space<vmem>>, vector<1x128x384xbf16>
    %428 = vector.shape_cast %427 : vector<1x128x384xbf16> to vector<128x384xbf16>
    %c2_160 = arith.constant 2 : index
    %c0_161 = arith.constant 0 : index
    %c0_162 = arith.constant 0 : index
    %429 = vector.load %arg3[%c2_160, %c0_161, %c0_162] : memref<4x128x128xbf16, #tpu.memory_space<vmem>>, vector<1x128x128xbf16>
    %430 = vector.shape_cast %429 : vector<1x128x128xbf16> to vector<128x128xbf16>
    %431 = arith.truncf %313 : vector<8x128xf32> to vector<8x128xbf16>
    %432 = vector.extract_strided_slice %428 {offsets = [0, 0], sizes = [128, 256], strides = [1, 1]} : vector<128x384xbf16> to vector<128x256xbf16>
    %cst_163 = arith.constant dense<0.000000e+00> : vector<8x256xf32>
    %433 = tpu.matmul %431, %432, %cst_163 {dimension_numbers = #tpu.dot_dimension_numbers<[1], [0], [0], [1], [0, 0, 1, 1], [], []>} : vector<8x128xbf16>, vector<128x256xbf16>, vector<8x256xf32> -> vector<8x256xf32>
    %434 = vector.extract_strided_slice %433 {offsets = [0, 0], sizes = [8, 128], strides = [1, 1]} : vector<8x256xf32> to vector<8x128xf32>
    %435 = vector.extract_strided_slice %433 {offsets = [0, 128], sizes = [8, 128], strides = [1, 1]} : vector<8x256xf32> to vector<8x128xf32>
    %436 = arith.truncf %426 : vector<8x128xf32> to vector<8x128xbf16>
    %437 = vector.extract_strided_slice %428 {offsets = [0, 256], sizes = [128, 128], strides = [1, 1]} : vector<128x384xbf16> to vector<128x128xbf16>
    %cst_164 = arith.constant dense<0.000000e+00> : vector<8x128xf32>
    %438 = tpu.matmul %436, %437, %cst_164 {dimension_numbers = #tpu.dot_dimension_numbers<[1], [0], [0], [1], [0, 0, 1, 1], [], []>} : vector<8x128xbf16>, vector<128x128xbf16>, vector<8x128xf32> -> vector<8x128xf32>
    %439 = vector.extract_strided_slice %434 {offsets = [0, 0], sizes = [8, 32], strides = [1, 1]} : vector<8x128xf32> to vector<8x32xf32>
    %440 = vector.extract_strided_slice %438 {offsets = [0, 0], sizes = [8, 32], strides = [1, 1]} : vector<8x128xf32> to vector<8x32xf32>
    %441 = vector.extract_strided_slice %435 {offsets = [0, 0], sizes = [8, 32], strides = [1, 1]} : vector<8x128xf32> to vector<8x32xf32>
    %442 = arith.truncf %439 : vector<8x32xf32> to vector<8x32xbf16>
    %443 = arith.truncf %440 : vector<8x32xf32> to vector<8x32xbf16>
    %cst_165 = arith.constant dense<0.000000e+00> : vector<8x8xf32>
    %444 = tpu.matmul %442, %443, %cst_165 {dimension_numbers = #tpu.dot_dimension_numbers<[1], [1], [0], [0], [0, 0, 1, 0], [], []>} : vector<8x32xbf16>, vector<8x32xbf16>, vector<8x8xf32> -> vector<8x8xf32>
    %cst_166 = arith.constant dense<0xFF800000> : vector<8xf32>
    %445 = vector.multi_reduction <maximumf>, %444, %cst_166 [1] : vector<8x8xf32> to vector<8xf32>
    %446 = vector.shape_cast %445 : vector<8xf32> to vector<8x1xf32>
    %447 = vector.broadcast %446 : vector<8x1xf32> to vector<8x8xf32>
    %448 = arith.subf %444, %447 : vector<8x8xf32>
    %449 = math.exp %448 : vector<8x8xf32>
    %cst_167 = arith.constant dense<0.000000e+00> : vector<8xf32>
    %450 = vector.multi_reduction <add>, %449, %cst_167 [1] : vector<8x8xf32> to vector<8xf32>
    %451 = vector.shape_cast %450 : vector<8xf32> to vector<8x1xf32>
    %452 = tpu.reciprocal %451 {approx = true} : vector<8x1xf32> -> vector<8x1xf32>
    %453 = vector.broadcast %452 : vector<8x1xf32> to vector<8x8xf32>
    %454 = arith.mulf %449, %453 : vector<8x8xf32>
    %455 = arith.truncf %454 : vector<8x8xf32> to vector<8x8xbf16>
    %456 = arith.truncf %441 : vector<8x32xf32> to vector<8x32xbf16>
    %cst_168 = arith.constant dense<0.000000e+00> : vector<8x32xf32>
    %457 = tpu.matmul %455, %456, %cst_168 {dimension_numbers = #tpu.dot_dimension_numbers<[1], [0], [0], [1], [0, 0, 1, 1], [], []>} : vector<8x8xbf16>, vector<8x32xbf16>, vector<8x32xf32> -> vector<8x32xf32>
    %458 = vector.extract_strided_slice %434 {offsets = [0, 32], sizes = [8, 32], strides = [1, 1]} : vector<8x128xf32> to vector<8x32xf32>
    %459 = vector.extract_strided_slice %438 {offsets = [0, 32], sizes = [8, 32], strides = [1, 1]} : vector<8x128xf32> to vector<8x32xf32>
    %460 = vector.extract_strided_slice %435 {offsets = [0, 32], sizes = [8, 32], strides = [1, 1]} : vector<8x128xf32> to vector<8x32xf32>
    %461 = arith.truncf %458 : vector<8x32xf32> to vector<8x32xbf16>
    %462 = arith.truncf %459 : vector<8x32xf32> to vector<8x32xbf16>
    %cst_169 = arith.constant dense<0.000000e+00> : vector<8x8xf32>
    %463 = tpu.matmul %461, %462, %cst_169 {dimension_numbers = #tpu.dot_dimension_numbers<[1], [1], [0], [0], [0, 0, 1, 0], [], []>} : vector<8x32xbf16>, vector<8x32xbf16>, vector<8x8xf32> -> vector<8x8xf32>
    %cst_170 = arith.constant dense<0xFF800000> : vector<8xf32>
    %464 = vector.multi_reduction <maximumf>, %463, %cst_170 [1] : vector<8x8xf32> to vector<8xf32>
    %465 = vector.shape_cast %464 : vector<8xf32> to vector<8x1xf32>
    %466 = vector.broadcast %465 : vector<8x1xf32> to vector<8x8xf32>
    %467 = arith.subf %463, %466 : vector<8x8xf32>
    %468 = math.exp %467 : vector<8x8xf32>
    %cst_171 = arith.constant dense<0.000000e+00> : vector<8xf32>
    %469 = vector.multi_reduction <add>, %468, %cst_171 [1] : vector<8x8xf32> to vector<8xf32>
    %470 = vector.shape_cast %469 : vector<8xf32> to vector<8x1xf32>
    %471 = tpu.reciprocal %470 {approx = true} : vector<8x1xf32> -> vector<8x1xf32>
    %472 = vector.broadcast %471 : vector<8x1xf32> to vector<8x8xf32>
    %473 = arith.mulf %468, %472 : vector<8x8xf32>
    %474 = arith.truncf %473 : vector<8x8xf32> to vector<8x8xbf16>
    %475 = arith.truncf %460 : vector<8x32xf32> to vector<8x32xbf16>
    %cst_172 = arith.constant dense<0.000000e+00> : vector<8x32xf32>
    %476 = tpu.matmul %474, %475, %cst_172 {dimension_numbers = #tpu.dot_dimension_numbers<[1], [0], [0], [1], [0, 0, 1, 1], [], []>} : vector<8x8xbf16>, vector<8x32xbf16>, vector<8x32xf32> -> vector<8x32xf32>
    %477 = vector.extract_strided_slice %434 {offsets = [0, 64], sizes = [8, 32], strides = [1, 1]} : vector<8x128xf32> to vector<8x32xf32>
    %478 = vector.extract_strided_slice %438 {offsets = [0, 64], sizes = [8, 32], strides = [1, 1]} : vector<8x128xf32> to vector<8x32xf32>
    %479 = vector.extract_strided_slice %435 {offsets = [0, 64], sizes = [8, 32], strides = [1, 1]} : vector<8x128xf32> to vector<8x32xf32>
    %480 = arith.truncf %477 : vector<8x32xf32> to vector<8x32xbf16>
    %481 = arith.truncf %478 : vector<8x32xf32> to vector<8x32xbf16>
    %cst_173 = arith.constant dense<0.000000e+00> : vector<8x8xf32>
    %482 = tpu.matmul %480, %481, %cst_173 {dimension_numbers = #tpu.dot_dimension_numbers<[1], [1], [0], [0], [0, 0, 1, 0], [], []>} : vector<8x32xbf16>, vector<8x32xbf16>, vector<8x8xf32> -> vector<8x8xf32>
    %cst_174 = arith.constant dense<0xFF800000> : vector<8xf32>
    %483 = vector.multi_reduction <maximumf>, %482, %cst_174 [1] : vector<8x8xf32> to vector<8xf32>
    %484 = vector.shape_cast %483 : vector<8xf32> to vector<8x1xf32>
    %485 = vector.broadcast %484 : vector<8x1xf32> to vector<8x8xf32>
    %486 = arith.subf %482, %485 : vector<8x8xf32>
    %487 = math.exp %486 : vector<8x8xf32>
    %cst_175 = arith.constant dense<0.000000e+00> : vector<8xf32>
    %488 = vector.multi_reduction <add>, %487, %cst_175 [1] : vector<8x8xf32> to vector<8xf32>
    %489 = vector.shape_cast %488 : vector<8xf32> to vector<8x1xf32>
    %490 = tpu.reciprocal %489 {approx = true} : vector<8x1xf32> -> vector<8x1xf32>
    %491 = vector.broadcast %490 : vector<8x1xf32> to vector<8x8xf32>
    %492 = arith.mulf %487, %491 : vector<8x8xf32>
    %493 = arith.truncf %492 : vector<8x8xf32> to vector<8x8xbf16>
    %494 = arith.truncf %479 : vector<8x32xf32> to vector<8x32xbf16>
    %cst_176 = arith.constant dense<0.000000e+00> : vector<8x32xf32>
    %495 = tpu.matmul %493, %494, %cst_176 {dimension_numbers = #tpu.dot_dimension_numbers<[1], [0], [0], [1], [0, 0, 1, 1], [], []>} : vector<8x8xbf16>, vector<8x32xbf16>, vector<8x32xf32> -> vector<8x32xf32>
    %496 = vector.extract_strided_slice %434 {offsets = [0, 96], sizes = [8, 32], strides = [1, 1]} : vector<8x128xf32> to vector<8x32xf32>
    %497 = vector.extract_strided_slice %438 {offsets = [0, 96], sizes = [8, 32], strides = [1, 1]} : vector<8x128xf32> to vector<8x32xf32>
    %498 = vector.extract_strided_slice %435 {offsets = [0, 96], sizes = [8, 32], strides = [1, 1]} : vector<8x128xf32> to vector<8x32xf32>
    %499 = arith.truncf %496 : vector<8x32xf32> to vector<8x32xbf16>
    %500 = arith.truncf %497 : vector<8x32xf32> to vector<8x32xbf16>
    %cst_177 = arith.constant dense<0.000000e+00> : vector<8x8xf32>
    %501 = tpu.matmul %499, %500, %cst_177 {dimension_numbers = #tpu.dot_dimension_numbers<[1], [1], [0], [0], [0, 0, 1, 0], [], []>} : vector<8x32xbf16>, vector<8x32xbf16>, vector<8x8xf32> -> vector<8x8xf32>
    %cst_178 = arith.constant dense<0xFF800000> : vector<8xf32>
    %502 = vector.multi_reduction <maximumf>, %501, %cst_178 [1] : vector<8x8xf32> to vector<8xf32>
    %503 = vector.shape_cast %502 : vector<8xf32> to vector<8x1xf32>
    %504 = vector.broadcast %503 : vector<8x1xf32> to vector<8x8xf32>
    %505 = arith.subf %501, %504 : vector<8x8xf32>
    %506 = math.exp %505 : vector<8x8xf32>
    %cst_179 = arith.constant dense<0.000000e+00> : vector<8xf32>
    %507 = vector.multi_reduction <add>, %506, %cst_179 [1] : vector<8x8xf32> to vector<8xf32>
    %508 = vector.shape_cast %507 : vector<8xf32> to vector<8x1xf32>
    %509 = tpu.reciprocal %508 {approx = true} : vector<8x1xf32> -> vector<8x1xf32>
    %510 = vector.broadcast %509 : vector<8x1xf32> to vector<8x8xf32>
    %511 = arith.mulf %506, %510 : vector<8x8xf32>
    %512 = arith.truncf %511 : vector<8x8xf32> to vector<8x8xbf16>
    %513 = arith.truncf %498 : vector<8x32xf32> to vector<8x32xbf16>
    %cst_180 = arith.constant dense<0.000000e+00> : vector<8x32xf32>
    %514 = tpu.matmul %512, %513, %cst_180 {dimension_numbers = #tpu.dot_dimension_numbers<[1], [0], [0], [1], [0, 0, 1, 1], [], []>} : vector<8x8xbf16>, vector<8x32xbf16>, vector<8x32xf32> -> vector<8x32xf32>
    %515 = tpu.concatenate %457, %476, %495, %514 in 1 : vector<8x32xf32>, vector<8x32xf32>, vector<8x32xf32>, vector<8x32xf32> -> vector<8x128xf32>
    %516 = arith.truncf %515 : vector<8x128xf32> to vector<8x128xbf16>
    %cst_181 = arith.constant dense<0.000000e+00> : vector<8x128xf32>
    %517 = tpu.matmul %516, %430, %cst_181 {dimension_numbers = #tpu.dot_dimension_numbers<[1], [0], [0], [1], [0, 0, 1, 1], [], []>} : vector<8x128xbf16>, vector<128x128xbf16>, vector<8x128xf32> -> vector<8x128xf32>
    %518 = arith.addf %426, %517 : vector<8x128xf32>
    %cst_182 = arith.constant dense<0.000000e+00> : vector<8xf32>
    %519 = vector.multi_reduction <add>, %518, %cst_182 [1] : vector<8x128xf32> to vector<8xf32>
    %520 = vector.shape_cast %519 : vector<8xf32> to vector<8x1xf32>
    %cst_183 = arith.constant 1.280000e+02 : f32
    %521 = vector.broadcast %cst_183 : f32 to vector<8x1xf32>
    %522 = arith.divf %520, %521 : vector<8x1xf32>
    %523 = vector.broadcast %522 : vector<8x1xf32> to vector<8x128xf32>
    %524 = arith.subf %518, %523 : vector<8x128xf32>
    %525 = arith.mulf %524, %524 : vector<8x128xf32>
    %cst_184 = arith.constant dense<0.000000e+00> : vector<8xf32>
    %526 = vector.multi_reduction <add>, %525, %cst_184 [1] : vector<8x128xf32> to vector<8xf32>
    %527 = vector.shape_cast %526 : vector<8xf32> to vector<8x1xf32>
    %cst_185 = arith.constant 1.280000e+02 : f32
    %528 = vector.broadcast %cst_185 : f32 to vector<8x1xf32>
    %529 = arith.divf %527, %528 : vector<8x1xf32>
    %cst_186 = arith.constant 9.99999974E-6 : f32
    %530 = vector.broadcast %cst_186 : f32 to vector<8x1xf32>
    %531 = arith.addf %529, %530 : vector<8x1xf32>
    %532 = math.rsqrt %531 : vector<8x1xf32>
    %533 = vector.broadcast %532 : vector<8x1xf32> to vector<8x128xf32>
    %534 = arith.mulf %524, %533 : vector<8x128xf32>
    %c2_187 = arith.constant 2 : index
    %c0_188 = arith.constant 0 : index
    %c0_189 = arith.constant 0 : index
    %535 = vector.load %arg8[%c2_187, %c0_188, %c0_189] : memref<4x1x128xf32, #tpu.memory_space<vmem>>, vector<1x1x128xf32>
    %536 = vector.shape_cast %535 : vector<1x1x128xf32> to vector<1x128xf32>
    %537 = vector.broadcast %536 : vector<1x128xf32> to vector<8x128xf32>
    %538 = arith.mulf %534, %537 : vector<8x128xf32>
    %c2_190 = arith.constant 2 : index
    %c0_191 = arith.constant 0 : index
    %c0_192 = arith.constant 0 : index
    %539 = vector.load %arg9[%c2_190, %c0_191, %c0_192] : memref<4x1x128xf32, #tpu.memory_space<vmem>>, vector<1x1x128xf32>
    %540 = vector.shape_cast %539 : vector<1x1x128xf32> to vector<1x128xf32>
    %541 = vector.broadcast %540 : vector<1x128xf32> to vector<8x128xf32>
    %542 = arith.addf %538, %541 : vector<8x128xf32>
    %543 = arith.truncf %542 : vector<8x128xf32> to vector<8x128xbf16>
    %c2_193 = arith.constant 2 : index
    %c0_194 = arith.constant 0 : index
    %c0_195 = arith.constant 0 : index
    %544 = vector.load %arg4[%c2_193, %c0_194, %c0_195] : memref<4x128x256xbf16, #tpu.memory_space<vmem>>, vector<1x128x256xbf16>
    %545 = vector.shape_cast %544 : vector<1x128x256xbf16> to vector<128x256xbf16>
    %cst_196 = arith.constant dense<0.000000e+00> : vector<8x256xf32>
    %546 = tpu.matmul %543, %545, %cst_196 {dimension_numbers = #tpu.dot_dimension_numbers<[1], [0], [0], [1], [0, 0, 1, 1], [], []>} : vector<8x128xbf16>, vector<128x256xbf16>, vector<8x256xf32> -> vector<8x256xf32>
    %c2_197 = arith.constant 2 : index
    %c0_198 = arith.constant 0 : index
    %c0_199 = arith.constant 0 : index
    %547 = vector.load %arg5[%c2_197, %c0_198, %c0_199] : memref<4x1x256xf32, #tpu.memory_space<vmem>>, vector<1x1x256xf32>
    %548 = vector.shape_cast %547 : vector<1x1x256xf32> to vector<1x256xf32>
    %549 = vector.broadcast %548 : vector<1x256xf32> to vector<8x256xf32>
    %550 = arith.addf %546, %549 : vector<8x256xf32>
    %cst_200 = arith.constant 0.000000e+00 : f32
    %551 = vector.broadcast %cst_200 : f32 to vector<8x256xf32>
    %552 = arith.maximumf %550, %551 : vector<8x256xf32>
    %553 = arith.truncf %552 : vector<8x256xf32> to vector<8x256xbf16>
    %c2_201 = arith.constant 2 : index
    %c0_202 = arith.constant 0 : index
    %c0_203 = arith.constant 0 : index
    %554 = vector.load %arg6[%c2_201, %c0_202, %c0_203] : memref<4x256x128xbf16, #tpu.memory_space<vmem>>, vector<1x256x128xbf16>
    %555 = vector.shape_cast %554 : vector<1x256x128xbf16> to vector<256x128xbf16>
    %cst_204 = arith.constant dense<0.000000e+00> : vector<8x128xf32>
    %556 = tpu.matmul %553, %555, %cst_204 {dimension_numbers = #tpu.dot_dimension_numbers<[1], [0], [0], [1], [0, 0, 1, 1], [], []>} : vector<8x256xbf16>, vector<256x128xbf16>, vector<8x128xf32> -> vector<8x128xf32>
    %c2_205 = arith.constant 2 : index
    %c0_206 = arith.constant 0 : index
    %c0_207 = arith.constant 0 : index
    %557 = vector.load %arg7[%c2_205, %c0_206, %c0_207] : memref<4x1x128xf32, #tpu.memory_space<vmem>>, vector<1x1x128xf32>
    %558 = vector.shape_cast %557 : vector<1x1x128xf32> to vector<1x128xf32>
    %559 = vector.broadcast %558 : vector<1x128xf32> to vector<8x128xf32>
    %560 = arith.addf %556, %559 : vector<8x128xf32>
    %561 = arith.addf %542, %560 : vector<8x128xf32>
    %cst_208 = arith.constant dense<0.000000e+00> : vector<8xf32>
    %562 = vector.multi_reduction <add>, %561, %cst_208 [1] : vector<8x128xf32> to vector<8xf32>
    %563 = vector.shape_cast %562 : vector<8xf32> to vector<8x1xf32>
    %cst_209 = arith.constant 1.280000e+02 : f32
    %564 = vector.broadcast %cst_209 : f32 to vector<8x1xf32>
    %565 = arith.divf %563, %564 : vector<8x1xf32>
    %566 = vector.broadcast %565 : vector<8x1xf32> to vector<8x128xf32>
    %567 = arith.subf %561, %566 : vector<8x128xf32>
    %568 = arith.mulf %567, %567 : vector<8x128xf32>
    %cst_210 = arith.constant dense<0.000000e+00> : vector<8xf32>
    %569 = vector.multi_reduction <add>, %568, %cst_210 [1] : vector<8x128xf32> to vector<8xf32>
    %570 = vector.shape_cast %569 : vector<8xf32> to vector<8x1xf32>
    %cst_211 = arith.constant 1.280000e+02 : f32
    %571 = vector.broadcast %cst_211 : f32 to vector<8x1xf32>
    %572 = arith.divf %570, %571 : vector<8x1xf32>
    %cst_212 = arith.constant 9.99999974E-6 : f32
    %573 = vector.broadcast %cst_212 : f32 to vector<8x1xf32>
    %574 = arith.addf %572, %573 : vector<8x1xf32>
    %575 = math.rsqrt %574 : vector<8x1xf32>
    %576 = vector.broadcast %575 : vector<8x1xf32> to vector<8x128xf32>
    %577 = arith.mulf %567, %576 : vector<8x128xf32>
    %c2_213 = arith.constant 2 : index
    %c0_214 = arith.constant 0 : index
    %c0_215 = arith.constant 0 : index
    %578 = vector.load %arg8[%c2_213, %c0_214, %c0_215] : memref<4x1x128xf32, #tpu.memory_space<vmem>>, vector<1x1x128xf32>
    %579 = vector.shape_cast %578 : vector<1x1x128xf32> to vector<1x128xf32>
    %580 = vector.broadcast %579 : vector<1x128xf32> to vector<8x128xf32>
    %581 = arith.mulf %577, %580 : vector<8x128xf32>
    %c2_216 = arith.constant 2 : index
    %c0_217 = arith.constant 0 : index
    %c0_218 = arith.constant 0 : index
    %582 = vector.load %arg9[%c2_216, %c0_217, %c0_218] : memref<4x1x128xf32, #tpu.memory_space<vmem>>, vector<1x1x128xf32>
    %583 = vector.shape_cast %582 : vector<1x1x128xf32> to vector<1x128xf32>
    %584 = vector.broadcast %583 : vector<1x128xf32> to vector<8x128xf32>
    %585 = arith.addf %581, %584 : vector<8x128xf32>
    %c3 = arith.constant 3 : index
    %c0_219 = arith.constant 0 : index
    %c0_220 = arith.constant 0 : index
    %586 = vector.load %arg2[%c3, %c0_219, %c0_220] : memref<4x128x384xbf16, #tpu.memory_space<vmem>>, vector<1x128x384xbf16>
    %587 = vector.shape_cast %586 : vector<1x128x384xbf16> to vector<128x384xbf16>
    %c3_221 = arith.constant 3 : index
    %c0_222 = arith.constant 0 : index
    %c0_223 = arith.constant 0 : index
    %588 = vector.load %arg3[%c3_221, %c0_222, %c0_223] : memref<4x128x128xbf16, #tpu.memory_space<vmem>>, vector<1x128x128xbf16>
    %589 = vector.shape_cast %588 : vector<1x128x128xbf16> to vector<128x128xbf16>
    %590 = arith.truncf %1 : vector<8x128xf32> to vector<8x128xbf16>
    %cst_224 = arith.constant dense<0.000000e+00> : vector<8x384xf32>
    %591 = tpu.matmul %590, %587, %cst_224 {dimension_numbers = #tpu.dot_dimension_numbers<[1], [0], [0], [1], [0, 0, 1, 1], [], []>} : vector<8x128xbf16>, vector<128x384xbf16>, vector<8x384xf32> -> vector<8x384xf32>
    %592 = vector.extract_strided_slice %591 {offsets = [0, 0], sizes = [8, 128], strides = [1, 1]} : vector<8x384xf32> to vector<8x128xf32>
    %593 = vector.extract_strided_slice %591 {offsets = [0, 128], sizes = [8, 128], strides = [1, 1]} : vector<8x384xf32> to vector<8x128xf32>
    %594 = vector.extract_strided_slice %591 {offsets = [0, 256], sizes = [8, 128], strides = [1, 1]} : vector<8x384xf32> to vector<8x128xf32>
    %595 = vector.extract_strided_slice %592 {offsets = [0, 0], sizes = [8, 32], strides = [1, 1]} : vector<8x128xf32> to vector<8x32xf32>
    %596 = vector.extract_strided_slice %594 {offsets = [0, 0], sizes = [8, 32], strides = [1, 1]} : vector<8x128xf32> to vector<8x32xf32>
    %597 = vector.extract_strided_slice %593 {offsets = [0, 0], sizes = [8, 32], strides = [1, 1]} : vector<8x128xf32> to vector<8x32xf32>
    %598 = arith.truncf %595 : vector<8x32xf32> to vector<8x32xbf16>
    %599 = arith.truncf %596 : vector<8x32xf32> to vector<8x32xbf16>
    %cst_225 = arith.constant dense<0.000000e+00> : vector<8x8xf32>
    %600 = tpu.matmul %598, %599, %cst_225 {dimension_numbers = #tpu.dot_dimension_numbers<[1], [1], [0], [0], [0, 0, 1, 0], [], []>} : vector<8x32xbf16>, vector<8x32xbf16>, vector<8x8xf32> -> vector<8x8xf32>
    %cst_226 = arith.constant dense<0xFF800000> : vector<8xf32>
    %601 = vector.multi_reduction <maximumf>, %600, %cst_226 [1] : vector<8x8xf32> to vector<8xf32>
    %602 = vector.shape_cast %601 : vector<8xf32> to vector<8x1xf32>
    %603 = vector.broadcast %602 : vector<8x1xf32> to vector<8x8xf32>
    %604 = arith.subf %600, %603 : vector<8x8xf32>
    %605 = math.exp %604 : vector<8x8xf32>
    %cst_227 = arith.constant dense<0.000000e+00> : vector<8xf32>
    %606 = vector.multi_reduction <add>, %605, %cst_227 [1] : vector<8x8xf32> to vector<8xf32>
    %607 = vector.shape_cast %606 : vector<8xf32> to vector<8x1xf32>
    %608 = tpu.reciprocal %607 {approx = true} : vector<8x1xf32> -> vector<8x1xf32>
    %609 = vector.broadcast %608 : vector<8x1xf32> to vector<8x8xf32>
    %610 = arith.mulf %605, %609 : vector<8x8xf32>
    %611 = arith.truncf %610 : vector<8x8xf32> to vector<8x8xbf16>
    %612 = arith.truncf %597 : vector<8x32xf32> to vector<8x32xbf16>
    %cst_228 = arith.constant dense<0.000000e+00> : vector<8x32xf32>
    %613 = tpu.matmul %611, %612, %cst_228 {dimension_numbers = #tpu.dot_dimension_numbers<[1], [0], [0], [1], [0, 0, 1, 1], [], []>} : vector<8x8xbf16>, vector<8x32xbf16>, vector<8x32xf32> -> vector<8x32xf32>
    %614 = vector.extract_strided_slice %592 {offsets = [0, 32], sizes = [8, 32], strides = [1, 1]} : vector<8x128xf32> to vector<8x32xf32>
    %615 = vector.extract_strided_slice %594 {offsets = [0, 32], sizes = [8, 32], strides = [1, 1]} : vector<8x128xf32> to vector<8x32xf32>
    %616 = vector.extract_strided_slice %593 {offsets = [0, 32], sizes = [8, 32], strides = [1, 1]} : vector<8x128xf32> to vector<8x32xf32>
    %617 = arith.truncf %614 : vector<8x32xf32> to vector<8x32xbf16>
    %618 = arith.truncf %615 : vector<8x32xf32> to vector<8x32xbf16>
    %cst_229 = arith.constant dense<0.000000e+00> : vector<8x8xf32>
    %619 = tpu.matmul %617, %618, %cst_229 {dimension_numbers = #tpu.dot_dimension_numbers<[1], [1], [0], [0], [0, 0, 1, 0], [], []>} : vector<8x32xbf16>, vector<8x32xbf16>, vector<8x8xf32> -> vector<8x8xf32>
    %cst_230 = arith.constant dense<0xFF800000> : vector<8xf32>
    %620 = vector.multi_reduction <maximumf>, %619, %cst_230 [1] : vector<8x8xf32> to vector<8xf32>
    %621 = vector.shape_cast %620 : vector<8xf32> to vector<8x1xf32>
    %622 = vector.broadcast %621 : vector<8x1xf32> to vector<8x8xf32>
    %623 = arith.subf %619, %622 : vector<8x8xf32>
    %624 = math.exp %623 : vector<8x8xf32>
    %cst_231 = arith.constant dense<0.000000e+00> : vector<8xf32>
    %625 = vector.multi_reduction <add>, %624, %cst_231 [1] : vector<8x8xf32> to vector<8xf32>
    %626 = vector.shape_cast %625 : vector<8xf32> to vector<8x1xf32>
    %627 = tpu.reciprocal %626 {approx = true} : vector<8x1xf32> -> vector<8x1xf32>
    %628 = vector.broadcast %627 : vector<8x1xf32> to vector<8x8xf32>
    %629 = arith.mulf %624, %628 : vector<8x8xf32>
    %630 = arith.truncf %629 : vector<8x8xf32> to vector<8x8xbf16>
    %631 = arith.truncf %616 : vector<8x32xf32> to vector<8x32xbf16>
    %cst_232 = arith.constant dense<0.000000e+00> : vector<8x32xf32>
    %632 = tpu.matmul %630, %631, %cst_232 {dimension_numbers = #tpu.dot_dimension_numbers<[1], [0], [0], [1], [0, 0, 1, 1], [], []>} : vector<8x8xbf16>, vector<8x32xbf16>, vector<8x32xf32> -> vector<8x32xf32>
    %633 = vector.extract_strided_slice %592 {offsets = [0, 64], sizes = [8, 32], strides = [1, 1]} : vector<8x128xf32> to vector<8x32xf32>
    %634 = vector.extract_strided_slice %594 {offsets = [0, 64], sizes = [8, 32], strides = [1, 1]} : vector<8x128xf32> to vector<8x32xf32>
    %635 = vector.extract_strided_slice %593 {offsets = [0, 64], sizes = [8, 32], strides = [1, 1]} : vector<8x128xf32> to vector<8x32xf32>
    %636 = arith.truncf %633 : vector<8x32xf32> to vector<8x32xbf16>
    %637 = arith.truncf %634 : vector<8x32xf32> to vector<8x32xbf16>
    %cst_233 = arith.constant dense<0.000000e+00> : vector<8x8xf32>
    %638 = tpu.matmul %636, %637, %cst_233 {dimension_numbers = #tpu.dot_dimension_numbers<[1], [1], [0], [0], [0, 0, 1, 0], [], []>} : vector<8x32xbf16>, vector<8x32xbf16>, vector<8x8xf32> -> vector<8x8xf32>
    %cst_234 = arith.constant dense<0xFF800000> : vector<8xf32>
    %639 = vector.multi_reduction <maximumf>, %638, %cst_234 [1] : vector<8x8xf32> to vector<8xf32>
    %640 = vector.shape_cast %639 : vector<8xf32> to vector<8x1xf32>
    %641 = vector.broadcast %640 : vector<8x1xf32> to vector<8x8xf32>
    %642 = arith.subf %638, %641 : vector<8x8xf32>
    %643 = math.exp %642 : vector<8x8xf32>
    %cst_235 = arith.constant dense<0.000000e+00> : vector<8xf32>
    %644 = vector.multi_reduction <add>, %643, %cst_235 [1] : vector<8x8xf32> to vector<8xf32>
    %645 = vector.shape_cast %644 : vector<8xf32> to vector<8x1xf32>
    %646 = tpu.reciprocal %645 {approx = true} : vector<8x1xf32> -> vector<8x1xf32>
    %647 = vector.broadcast %646 : vector<8x1xf32> to vector<8x8xf32>
    %648 = arith.mulf %643, %647 : vector<8x8xf32>
    %649 = arith.truncf %648 : vector<8x8xf32> to vector<8x8xbf16>
    %650 = arith.truncf %635 : vector<8x32xf32> to vector<8x32xbf16>
    %cst_236 = arith.constant dense<0.000000e+00> : vector<8x32xf32>
    %651 = tpu.matmul %649, %650, %cst_236 {dimension_numbers = #tpu.dot_dimension_numbers<[1], [0], [0], [1], [0, 0, 1, 1], [], []>} : vector<8x8xbf16>, vector<8x32xbf16>, vector<8x32xf32> -> vector<8x32xf32>
    %652 = vector.extract_strided_slice %592 {offsets = [0, 96], sizes = [8, 32], strides = [1, 1]} : vector<8x128xf32> to vector<8x32xf32>
    %653 = vector.extract_strided_slice %594 {offsets = [0, 96], sizes = [8, 32], strides = [1, 1]} : vector<8x128xf32> to vector<8x32xf32>
    %654 = vector.extract_strided_slice %593 {offsets = [0, 96], sizes = [8, 32], strides = [1, 1]} : vector<8x128xf32> to vector<8x32xf32>
    %655 = arith.truncf %652 : vector<8x32xf32> to vector<8x32xbf16>
    %656 = arith.truncf %653 : vector<8x32xf32> to vector<8x32xbf16>
    %cst_237 = arith.constant dense<0.000000e+00> : vector<8x8xf32>
    %657 = tpu.matmul %655, %656, %cst_237 {dimension_numbers = #tpu.dot_dimension_numbers<[1], [1], [0], [0], [0, 0, 1, 0], [], []>} : vector<8x32xbf16>, vector<8x32xbf16>, vector<8x8xf32> -> vector<8x8xf32>
    %cst_238 = arith.constant dense<0xFF800000> : vector<8xf32>
    %658 = vector.multi_reduction <maximumf>, %657, %cst_238 [1] : vector<8x8xf32> to vector<8xf32>
    %659 = vector.shape_cast %658 : vector<8xf32> to vector<8x1xf32>
    %660 = vector.broadcast %659 : vector<8x1xf32> to vector<8x8xf32>
    %661 = arith.subf %657, %660 : vector<8x8xf32>
    %662 = math.exp %661 : vector<8x8xf32>
    %cst_239 = arith.constant dense<0.000000e+00> : vector<8xf32>
    %663 = vector.multi_reduction <add>, %662, %cst_239 [1] : vector<8x8xf32> to vector<8xf32>
    %664 = vector.shape_cast %663 : vector<8xf32> to vector<8x1xf32>
    %665 = tpu.reciprocal %664 {approx = true} : vector<8x1xf32> -> vector<8x1xf32>
    %666 = vector.broadcast %665 : vector<8x1xf32> to vector<8x8xf32>
    %667 = arith.mulf %662, %666 : vector<8x8xf32>
    %668 = arith.truncf %667 : vector<8x8xf32> to vector<8x8xbf16>
    %669 = arith.truncf %654 : vector<8x32xf32> to vector<8x32xbf16>
    %cst_240 = arith.constant dense<0.000000e+00> : vector<8x32xf32>
    %670 = tpu.matmul %668, %669, %cst_240 {dimension_numbers = #tpu.dot_dimension_numbers<[1], [0], [0], [1], [0, 0, 1, 1], [], []>} : vector<8x8xbf16>, vector<8x32xbf16>, vector<8x32xf32> -> vector<8x32xf32>
    %671 = tpu.concatenate %613, %632, %651, %670 in 1 : vector<8x32xf32>, vector<8x32xf32>, vector<8x32xf32>, vector<8x32xf32> -> vector<8x128xf32>
    %672 = arith.truncf %671 : vector<8x128xf32> to vector<8x128xbf16>
    %cst_241 = arith.constant dense<0.000000e+00> : vector<8x128xf32>
    %673 = tpu.matmul %672, %589, %cst_241 {dimension_numbers = #tpu.dot_dimension_numbers<[1], [0], [0], [1], [0, 0, 1, 1], [], []>} : vector<8x128xbf16>, vector<128x128xbf16>, vector<8x128xf32> -> vector<8x128xf32>
    %674 = arith.addf %1, %673 : vector<8x128xf32>
    %cst_242 = arith.constant dense<0.000000e+00> : vector<8xf32>
    %675 = vector.multi_reduction <add>, %674, %cst_242 [1] : vector<8x128xf32> to vector<8xf32>
    %676 = vector.shape_cast %675 : vector<8xf32> to vector<8x1xf32>
    %cst_243 = arith.constant 1.280000e+02 : f32
    %677 = vector.broadcast %cst_243 : f32 to vector<8x1xf32>
    %678 = arith.divf %676, %677 : vector<8x1xf32>
    %679 = vector.broadcast %678 : vector<8x1xf32> to vector<8x128xf32>
    %680 = arith.subf %674, %679 : vector<8x128xf32>
    %681 = arith.mulf %680, %680 : vector<8x128xf32>
    %cst_244 = arith.constant dense<0.000000e+00> : vector<8xf32>
    %682 = vector.multi_reduction <add>, %681, %cst_244 [1] : vector<8x128xf32> to vector<8xf32>
    %683 = vector.shape_cast %682 : vector<8xf32> to vector<8x1xf32>
    %cst_245 = arith.constant 1.280000e+02 : f32
    %684 = vector.broadcast %cst_245 : f32 to vector<8x1xf32>
    %685 = arith.divf %683, %684 : vector<8x1xf32>
    %cst_246 = arith.constant 9.99999974E-6 : f32
    %686 = vector.broadcast %cst_246 : f32 to vector<8x1xf32>
    %687 = arith.addf %685, %686 : vector<8x1xf32>
    %688 = math.rsqrt %687 : vector<8x1xf32>
    %689 = vector.broadcast %688 : vector<8x1xf32> to vector<8x128xf32>
    %690 = arith.mulf %680, %689 : vector<8x128xf32>
    %c3_247 = arith.constant 3 : index
    %c0_248 = arith.constant 0 : index
    %c0_249 = arith.constant 0 : index
    %691 = vector.load %arg8[%c3_247, %c0_248, %c0_249] : memref<4x1x128xf32, #tpu.memory_space<vmem>>, vector<1x1x128xf32>
    %692 = vector.shape_cast %691 : vector<1x1x128xf32> to vector<1x128xf32>
    %693 = vector.broadcast %692 : vector<1x128xf32> to vector<8x128xf32>
    %694 = arith.mulf %690, %693 : vector<8x128xf32>
    %c3_250 = arith.constant 3 : index
    %c0_251 = arith.constant 0 : index
    %c0_252 = arith.constant 0 : index
    %695 = vector.load %arg9[%c3_250, %c0_251, %c0_252] : memref<4x1x128xf32, #tpu.memory_space<vmem>>, vector<1x1x128xf32>
    %696 = vector.shape_cast %695 : vector<1x1x128xf32> to vector<1x128xf32>
    %697 = vector.broadcast %696 : vector<1x128xf32> to vector<8x128xf32>
    %698 = arith.addf %694, %697 : vector<8x128xf32>
    %c3_253 = arith.constant 3 : index
    %c0_254 = arith.constant 0 : index
    %c0_255 = arith.constant 0 : index
    %699 = vector.load %arg2[%c3_253, %c0_254, %c0_255] : memref<4x128x384xbf16, #tpu.memory_space<vmem>>, vector<1x128x384xbf16>
    %700 = vector.shape_cast %699 : vector<1x128x384xbf16> to vector<128x384xbf16>
    %c3_256 = arith.constant 3 : index
    %c0_257 = arith.constant 0 : index
    %c0_258 = arith.constant 0 : index
    %701 = vector.load %arg3[%c3_256, %c0_257, %c0_258] : memref<4x128x128xbf16, #tpu.memory_space<vmem>>, vector<1x128x128xbf16>
    %702 = vector.shape_cast %701 : vector<1x128x128xbf16> to vector<128x128xbf16>
    %703 = arith.truncf %585 : vector<8x128xf32> to vector<8x128xbf16>
    %704 = vector.extract_strided_slice %700 {offsets = [0, 0], sizes = [128, 256], strides = [1, 1]} : vector<128x384xbf16> to vector<128x256xbf16>
    %cst_259 = arith.constant dense<0.000000e+00> : vector<8x256xf32>
    %705 = tpu.matmul %703, %704, %cst_259 {dimension_numbers = #tpu.dot_dimension_numbers<[1], [0], [0], [1], [0, 0, 1, 1], [], []>} : vector<8x128xbf16>, vector<128x256xbf16>, vector<8x256xf32> -> vector<8x256xf32>
    %706 = vector.extract_strided_slice %705 {offsets = [0, 0], sizes = [8, 128], strides = [1, 1]} : vector<8x256xf32> to vector<8x128xf32>
    %707 = vector.extract_strided_slice %705 {offsets = [0, 128], sizes = [8, 128], strides = [1, 1]} : vector<8x256xf32> to vector<8x128xf32>
    %708 = arith.truncf %698 : vector<8x128xf32> to vector<8x128xbf16>
    %709 = vector.extract_strided_slice %700 {offsets = [0, 256], sizes = [128, 128], strides = [1, 1]} : vector<128x384xbf16> to vector<128x128xbf16>
    %cst_260 = arith.constant dense<0.000000e+00> : vector<8x128xf32>
    %710 = tpu.matmul %708, %709, %cst_260 {dimension_numbers = #tpu.dot_dimension_numbers<[1], [0], [0], [1], [0, 0, 1, 1], [], []>} : vector<8x128xbf16>, vector<128x128xbf16>, vector<8x128xf32> -> vector<8x128xf32>
    %711 = vector.extract_strided_slice %706 {offsets = [0, 0], sizes = [8, 32], strides = [1, 1]} : vector<8x128xf32> to vector<8x32xf32>
    %712 = vector.extract_strided_slice %710 {offsets = [0, 0], sizes = [8, 32], strides = [1, 1]} : vector<8x128xf32> to vector<8x32xf32>
    %713 = vector.extract_strided_slice %707 {offsets = [0, 0], sizes = [8, 32], strides = [1, 1]} : vector<8x128xf32> to vector<8x32xf32>
    %714 = arith.truncf %711 : vector<8x32xf32> to vector<8x32xbf16>
    %715 = arith.truncf %712 : vector<8x32xf32> to vector<8x32xbf16>
    %cst_261 = arith.constant dense<0.000000e+00> : vector<8x8xf32>
    %716 = tpu.matmul %714, %715, %cst_261 {dimension_numbers = #tpu.dot_dimension_numbers<[1], [1], [0], [0], [0, 0, 1, 0], [], []>} : vector<8x32xbf16>, vector<8x32xbf16>, vector<8x8xf32> -> vector<8x8xf32>
    %cst_262 = arith.constant dense<0xFF800000> : vector<8xf32>
    %717 = vector.multi_reduction <maximumf>, %716, %cst_262 [1] : vector<8x8xf32> to vector<8xf32>
    %718 = vector.shape_cast %717 : vector<8xf32> to vector<8x1xf32>
    %719 = vector.broadcast %718 : vector<8x1xf32> to vector<8x8xf32>
    %720 = arith.subf %716, %719 : vector<8x8xf32>
    %721 = math.exp %720 : vector<8x8xf32>
    %cst_263 = arith.constant dense<0.000000e+00> : vector<8xf32>
    %722 = vector.multi_reduction <add>, %721, %cst_263 [1] : vector<8x8xf32> to vector<8xf32>
    %723 = vector.shape_cast %722 : vector<8xf32> to vector<8x1xf32>
    %724 = tpu.reciprocal %723 {approx = true} : vector<8x1xf32> -> vector<8x1xf32>
    %725 = vector.broadcast %724 : vector<8x1xf32> to vector<8x8xf32>
    %726 = arith.mulf %721, %725 : vector<8x8xf32>
    %727 = arith.truncf %726 : vector<8x8xf32> to vector<8x8xbf16>
    %728 = arith.truncf %713 : vector<8x32xf32> to vector<8x32xbf16>
    %cst_264 = arith.constant dense<0.000000e+00> : vector<8x32xf32>
    %729 = tpu.matmul %727, %728, %cst_264 {dimension_numbers = #tpu.dot_dimension_numbers<[1], [0], [0], [1], [0, 0, 1, 1], [], []>} : vector<8x8xbf16>, vector<8x32xbf16>, vector<8x32xf32> -> vector<8x32xf32>
    %730 = vector.extract_strided_slice %706 {offsets = [0, 32], sizes = [8, 32], strides = [1, 1]} : vector<8x128xf32> to vector<8x32xf32>
    %731 = vector.extract_strided_slice %710 {offsets = [0, 32], sizes = [8, 32], strides = [1, 1]} : vector<8x128xf32> to vector<8x32xf32>
    %732 = vector.extract_strided_slice %707 {offsets = [0, 32], sizes = [8, 32], strides = [1, 1]} : vector<8x128xf32> to vector<8x32xf32>
    %733 = arith.truncf %730 : vector<8x32xf32> to vector<8x32xbf16>
    %734 = arith.truncf %731 : vector<8x32xf32> to vector<8x32xbf16>
    %cst_265 = arith.constant dense<0.000000e+00> : vector<8x8xf32>
    %735 = tpu.matmul %733, %734, %cst_265 {dimension_numbers = #tpu.dot_dimension_numbers<[1], [1], [0], [0], [0, 0, 1, 0], [], []>} : vector<8x32xbf16>, vector<8x32xbf16>, vector<8x8xf32> -> vector<8x8xf32>
    %cst_266 = arith.constant dense<0xFF800000> : vector<8xf32>
    %736 = vector.multi_reduction <maximumf>, %735, %cst_266 [1] : vector<8x8xf32> to vector<8xf32>
    %737 = vector.shape_cast %736 : vector<8xf32> to vector<8x1xf32>
    %738 = vector.broadcast %737 : vector<8x1xf32> to vector<8x8xf32>
    %739 = arith.subf %735, %738 : vector<8x8xf32>
    %740 = math.exp %739 : vector<8x8xf32>
    %cst_267 = arith.constant dense<0.000000e+00> : vector<8xf32>
    %741 = vector.multi_reduction <add>, %740, %cst_267 [1] : vector<8x8xf32> to vector<8xf32>
    %742 = vector.shape_cast %741 : vector<8xf32> to vector<8x1xf32>
    %743 = tpu.reciprocal %742 {approx = true} : vector<8x1xf32> -> vector<8x1xf32>
    %744 = vector.broadcast %743 : vector<8x1xf32> to vector<8x8xf32>
    %745 = arith.mulf %740, %744 : vector<8x8xf32>
    %746 = arith.truncf %745 : vector<8x8xf32> to vector<8x8xbf16>
    %747 = arith.truncf %732 : vector<8x32xf32> to vector<8x32xbf16>
    %cst_268 = arith.constant dense<0.000000e+00> : vector<8x32xf32>
    %748 = tpu.matmul %746, %747, %cst_268 {dimension_numbers = #tpu.dot_dimension_numbers<[1], [0], [0], [1], [0, 0, 1, 1], [], []>} : vector<8x8xbf16>, vector<8x32xbf16>, vector<8x32xf32> -> vector<8x32xf32>
    %749 = vector.extract_strided_slice %706 {offsets = [0, 64], sizes = [8, 32], strides = [1, 1]} : vector<8x128xf32> to vector<8x32xf32>
    %750 = vector.extract_strided_slice %710 {offsets = [0, 64], sizes = [8, 32], strides = [1, 1]} : vector<8x128xf32> to vector<8x32xf32>
    %751 = vector.extract_strided_slice %707 {offsets = [0, 64], sizes = [8, 32], strides = [1, 1]} : vector<8x128xf32> to vector<8x32xf32>
    %752 = arith.truncf %749 : vector<8x32xf32> to vector<8x32xbf16>
    %753 = arith.truncf %750 : vector<8x32xf32> to vector<8x32xbf16>
    %cst_269 = arith.constant dense<0.000000e+00> : vector<8x8xf32>
    %754 = tpu.matmul %752, %753, %cst_269 {dimension_numbers = #tpu.dot_dimension_numbers<[1], [1], [0], [0], [0, 0, 1, 0], [], []>} : vector<8x32xbf16>, vector<8x32xbf16>, vector<8x8xf32> -> vector<8x8xf32>
    %cst_270 = arith.constant dense<0xFF800000> : vector<8xf32>
    %755 = vector.multi_reduction <maximumf>, %754, %cst_270 [1] : vector<8x8xf32> to vector<8xf32>
    %756 = vector.shape_cast %755 : vector<8xf32> to vector<8x1xf32>
    %757 = vector.broadcast %756 : vector<8x1xf32> to vector<8x8xf32>
    %758 = arith.subf %754, %757 : vector<8x8xf32>
    %759 = math.exp %758 : vector<8x8xf32>
    %cst_271 = arith.constant dense<0.000000e+00> : vector<8xf32>
    %760 = vector.multi_reduction <add>, %759, %cst_271 [1] : vector<8x8xf32> to vector<8xf32>
    %761 = vector.shape_cast %760 : vector<8xf32> to vector<8x1xf32>
    %762 = tpu.reciprocal %761 {approx = true} : vector<8x1xf32> -> vector<8x1xf32>
    %763 = vector.broadcast %762 : vector<8x1xf32> to vector<8x8xf32>
    %764 = arith.mulf %759, %763 : vector<8x8xf32>
    %765 = arith.truncf %764 : vector<8x8xf32> to vector<8x8xbf16>
    %766 = arith.truncf %751 : vector<8x32xf32> to vector<8x32xbf16>
    %cst_272 = arith.constant dense<0.000000e+00> : vector<8x32xf32>
    %767 = tpu.matmul %765, %766, %cst_272 {dimension_numbers = #tpu.dot_dimension_numbers<[1], [0], [0], [1], [0, 0, 1, 1], [], []>} : vector<8x8xbf16>, vector<8x32xbf16>, vector<8x32xf32> -> vector<8x32xf32>
    %768 = vector.extract_strided_slice %706 {offsets = [0, 96], sizes = [8, 32], strides = [1, 1]} : vector<8x128xf32> to vector<8x32xf32>
    %769 = vector.extract_strided_slice %710 {offsets = [0, 96], sizes = [8, 32], strides = [1, 1]} : vector<8x128xf32> to vector<8x32xf32>
    %770 = vector.extract_strided_slice %707 {offsets = [0, 96], sizes = [8, 32], strides = [1, 1]} : vector<8x128xf32> to vector<8x32xf32>
    %771 = arith.truncf %768 : vector<8x32xf32> to vector<8x32xbf16>
    %772 = arith.truncf %769 : vector<8x32xf32> to vector<8x32xbf16>
    %cst_273 = arith.constant dense<0.000000e+00> : vector<8x8xf32>
    %773 = tpu.matmul %771, %772, %cst_273 {dimension_numbers = #tpu.dot_dimension_numbers<[1], [1], [0], [0], [0, 0, 1, 0], [], []>} : vector<8x32xbf16>, vector<8x32xbf16>, vector<8x8xf32> -> vector<8x8xf32>
    %cst_274 = arith.constant dense<0xFF800000> : vector<8xf32>
    %774 = vector.multi_reduction <maximumf>, %773, %cst_274 [1] : vector<8x8xf32> to vector<8xf32>
    %775 = vector.shape_cast %774 : vector<8xf32> to vector<8x1xf32>
    %776 = vector.broadcast %775 : vector<8x1xf32> to vector<8x8xf32>
    %777 = arith.subf %773, %776 : vector<8x8xf32>
    %778 = math.exp %777 : vector<8x8xf32>
    %cst_275 = arith.constant dense<0.000000e+00> : vector<8xf32>
    %779 = vector.multi_reduction <add>, %778, %cst_275 [1] : vector<8x8xf32> to vector<8xf32>
    %780 = vector.shape_cast %779 : vector<8xf32> to vector<8x1xf32>
    %781 = tpu.reciprocal %780 {approx = true} : vector<8x1xf32> -> vector<8x1xf32>
    %782 = vector.broadcast %781 : vector<8x1xf32> to vector<8x8xf32>
    %783 = arith.mulf %778, %782 : vector<8x8xf32>
    %784 = arith.truncf %783 : vector<8x8xf32> to vector<8x8xbf16>
    %785 = arith.truncf %770 : vector<8x32xf32> to vector<8x32xbf16>
    %cst_276 = arith.constant dense<0.000000e+00> : vector<8x32xf32>
    %786 = tpu.matmul %784, %785, %cst_276 {dimension_numbers = #tpu.dot_dimension_numbers<[1], [0], [0], [1], [0, 0, 1, 1], [], []>} : vector<8x8xbf16>, vector<8x32xbf16>, vector<8x32xf32> -> vector<8x32xf32>
    %787 = tpu.concatenate %729, %748, %767, %786 in 1 : vector<8x32xf32>, vector<8x32xf32>, vector<8x32xf32>, vector<8x32xf32> -> vector<8x128xf32>
    %788 = arith.truncf %787 : vector<8x128xf32> to vector<8x128xbf16>
    %cst_277 = arith.constant dense<0.000000e+00> : vector<8x128xf32>
    %789 = tpu.matmul %788, %702, %cst_277 {dimension_numbers = #tpu.dot_dimension_numbers<[1], [0], [0], [1], [0, 0, 1, 1], [], []>} : vector<8x128xbf16>, vector<128x128xbf16>, vector<8x128xf32> -> vector<8x128xf32>
    %790 = arith.addf %698, %789 : vector<8x128xf32>
    %cst_278 = arith.constant dense<0.000000e+00> : vector<8xf32>
    %791 = vector.multi_reduction <add>, %790, %cst_278 [1] : vector<8x128xf32> to vector<8xf32>
    %792 = vector.shape_cast %791 : vector<8xf32> to vector<8x1xf32>
    %cst_279 = arith.constant 1.280000e+02 : f32
    %793 = vector.broadcast %cst_279 : f32 to vector<8x1xf32>
    %794 = arith.divf %792, %793 : vector<8x1xf32>
    %795 = vector.broadcast %794 : vector<8x1xf32> to vector<8x128xf32>
    %796 = arith.subf %790, %795 : vector<8x128xf32>
    %797 = arith.mulf %796, %796 : vector<8x128xf32>
    %cst_280 = arith.constant dense<0.000000e+00> : vector<8xf32>
    %798 = vector.multi_reduction <add>, %797, %cst_280 [1] : vector<8x128xf32> to vector<8xf32>
    %799 = vector.shape_cast %798 : vector<8xf32> to vector<8x1xf32>
    %cst_281 = arith.constant 1.280000e+02 : f32
    %800 = vector.broadcast %cst_281 : f32 to vector<8x1xf32>
    %801 = arith.divf %799, %800 : vector<8x1xf32>
    %cst_282 = arith.constant 9.99999974E-6 : f32
    %802 = vector.broadcast %cst_282 : f32 to vector<8x1xf32>
    %803 = arith.addf %801, %802 : vector<8x1xf32>
    %804 = math.rsqrt %803 : vector<8x1xf32>
    %805 = vector.broadcast %804 : vector<8x1xf32> to vector<8x128xf32>
    %806 = arith.mulf %796, %805 : vector<8x128xf32>
    %c3_283 = arith.constant 3 : index
    %c0_284 = arith.constant 0 : index
    %c0_285 = arith.constant 0 : index
    %807 = vector.load %arg8[%c3_283, %c0_284, %c0_285] : memref<4x1x128xf32, #tpu.memory_space<vmem>>, vector<1x1x128xf32>
    %808 = vector.shape_cast %807 : vector<1x1x128xf32> to vector<1x128xf32>
    %809 = vector.broadcast %808 : vector<1x128xf32> to vector<8x128xf32>
    %810 = arith.mulf %806, %809 : vector<8x128xf32>
    %c3_286 = arith.constant 3 : index
    %c0_287 = arith.constant 0 : index
    %c0_288 = arith.constant 0 : index
    %811 = vector.load %arg9[%c3_286, %c0_287, %c0_288] : memref<4x1x128xf32, #tpu.memory_space<vmem>>, vector<1x1x128xf32>
    %812 = vector.shape_cast %811 : vector<1x1x128xf32> to vector<1x128xf32>
    %813 = vector.broadcast %812 : vector<1x128xf32> to vector<8x128xf32>
    %814 = arith.addf %810, %813 : vector<8x128xf32>
    %815 = arith.truncf %814 : vector<8x128xf32> to vector<8x128xbf16>
    %c3_289 = arith.constant 3 : index
    %c0_290 = arith.constant 0 : index
    %c0_291 = arith.constant 0 : index
    %816 = vector.load %arg4[%c3_289, %c0_290, %c0_291] : memref<4x128x256xbf16, #tpu.memory_space<vmem>>, vector<1x128x256xbf16>
    %817 = vector.shape_cast %816 : vector<1x128x256xbf16> to vector<128x256xbf16>
    %cst_292 = arith.constant dense<0.000000e+00> : vector<8x256xf32>
    %818 = tpu.matmul %815, %817, %cst_292 {dimension_numbers = #tpu.dot_dimension_numbers<[1], [0], [0], [1], [0, 0, 1, 1], [], []>} : vector<8x128xbf16>, vector<128x256xbf16>, vector<8x256xf32> -> vector<8x256xf32>
    %c3_293 = arith.constant 3 : index
    %c0_294 = arith.constant 0 : index
    %c0_295 = arith.constant 0 : index
    %819 = vector.load %arg5[%c3_293, %c0_294, %c0_295] : memref<4x1x256xf32, #tpu.memory_space<vmem>>, vector<1x1x256xf32>
    %820 = vector.shape_cast %819 : vector<1x1x256xf32> to vector<1x256xf32>
    %821 = vector.broadcast %820 : vector<1x256xf32> to vector<8x256xf32>
    %822 = arith.addf %818, %821 : vector<8x256xf32>
    %cst_296 = arith.constant 0.000000e+00 : f32
    %823 = vector.broadcast %cst_296 : f32 to vector<8x256xf32>
    %824 = arith.maximumf %822, %823 : vector<8x256xf32>
    %825 = arith.truncf %824 : vector<8x256xf32> to vector<8x256xbf16>
    %c3_297 = arith.constant 3 : index
    %c0_298 = arith.constant 0 : index
    %c0_299 = arith.constant 0 : index
    %826 = vector.load %arg6[%c3_297, %c0_298, %c0_299] : memref<4x256x128xbf16, #tpu.memory_space<vmem>>, vector<1x256x128xbf16>
    %827 = vector.shape_cast %826 : vector<1x256x128xbf16> to vector<256x128xbf16>
    %cst_300 = arith.constant dense<0.000000e+00> : vector<8x128xf32>
    %828 = tpu.matmul %825, %827, %cst_300 {dimension_numbers = #tpu.dot_dimension_numbers<[1], [0], [0], [1], [0, 0, 1, 1], [], []>} : vector<8x256xbf16>, vector<256x128xbf16>, vector<8x128xf32> -> vector<8x128xf32>
    %c3_301 = arith.constant 3 : index
    %c0_302 = arith.constant 0 : index
    %c0_303 = arith.constant 0 : index
    %829 = vector.load %arg7[%c3_301, %c0_302, %c0_303] : memref<4x1x128xf32, #tpu.memory_space<vmem>>, vector<1x1x128xf32>
    %830 = vector.shape_cast %829 : vector<1x1x128xf32> to vector<1x128xf32>
    %831 = vector.broadcast %830 : vector<1x128xf32> to vector<8x128xf32>
    %832 = arith.addf %828, %831 : vector<8x128xf32>
    %833 = arith.addf %814, %832 : vector<8x128xf32>
    %cst_304 = arith.constant dense<0.000000e+00> : vector<8xf32>
    %834 = vector.multi_reduction <add>, %833, %cst_304 [1] : vector<8x128xf32> to vector<8xf32>
    %835 = vector.shape_cast %834 : vector<8xf32> to vector<8x1xf32>
    %cst_305 = arith.constant 1.280000e+02 : f32
    %836 = vector.broadcast %cst_305 : f32 to vector<8x1xf32>
    %837 = arith.divf %835, %836 : vector<8x1xf32>
    %838 = vector.broadcast %837 : vector<8x1xf32> to vector<8x128xf32>
    %839 = arith.subf %833, %838 : vector<8x128xf32>
    %840 = arith.mulf %839, %839 : vector<8x128xf32>
    %cst_306 = arith.constant dense<0.000000e+00> : vector<8xf32>
    %841 = vector.multi_reduction <add>, %840, %cst_306 [1] : vector<8x128xf32> to vector<8xf32>
    %842 = vector.shape_cast %841 : vector<8xf32> to vector<8x1xf32>
    %cst_307 = arith.constant 1.280000e+02 : f32
    %843 = vector.broadcast %cst_307 : f32 to vector<8x1xf32>
    %844 = arith.divf %842, %843 : vector<8x1xf32>
    %cst_308 = arith.constant 9.99999974E-6 : f32
    %845 = vector.broadcast %cst_308 : f32 to vector<8x1xf32>
    %846 = arith.addf %844, %845 : vector<8x1xf32>
    %847 = math.rsqrt %846 : vector<8x1xf32>
    %848 = vector.broadcast %847 : vector<8x1xf32> to vector<8x128xf32>
    %849 = arith.mulf %839, %848 : vector<8x128xf32>
    %c3_309 = arith.constant 3 : index
    %c0_310 = arith.constant 0 : index
    %c0_311 = arith.constant 0 : index
    %850 = vector.load %arg8[%c3_309, %c0_310, %c0_311] : memref<4x1x128xf32, #tpu.memory_space<vmem>>, vector<1x1x128xf32>
    %851 = vector.shape_cast %850 : vector<1x1x128xf32> to vector<1x128xf32>
    %852 = vector.broadcast %851 : vector<1x128xf32> to vector<8x128xf32>
    %853 = arith.mulf %849, %852 : vector<8x128xf32>
    %c3_312 = arith.constant 3 : index
    %c0_313 = arith.constant 0 : index
    %c0_314 = arith.constant 0 : index
    %854 = vector.load %arg9[%c3_312, %c0_313, %c0_314] : memref<4x1x128xf32, #tpu.memory_space<vmem>>, vector<1x1x128xf32>
    %855 = vector.shape_cast %854 : vector<1x1x128xf32> to vector<1x128xf32>
    %856 = vector.broadcast %855 : vector<1x128xf32> to vector<8x128xf32>
    %857 = arith.addf %853, %856 : vector<8x128xf32>
    %c0_315 = arith.constant 0 : index
    %c0_316 = arith.constant 0 : index
    %858 = vector.load %arg10[%c0_315, %c0_316] : memref<8x128xf32, #tpu.memory_space<vmem>>, vector<8x128xf32>
    tpu.vector_store %arg10[%c0_315, %c0_316], %857 {strides = array<i32>} : memref<8x128xf32, #tpu.memory_space<vmem>>, vector<8x128xf32>,
    return
  }
}

</mosaic_0001>

<llo_original>
// kernel: transformer_forward.1
$region0: #{transformer_forward.1}
  #allocation0 [shape = 'u32[]', space=smem, size = 0x4, offset = 0x4, fixed_abs, tag = 'smem constant byte address 0x4 - core index']
  #allocation1 [shape = 'u32[144,128]{1,0:T(1,128)}', space=vmem, size = 0x12000, scoped, tag = 'internal scratch']
  %s0 = inlined_call_operand.hbm [shape: f32[8,128], index: 0, kind: input, shape index: {}]
  %s1 = inlined_call_operand.hbm [shape: f32[8,128], index: 1, kind: input, shape index: {}]
  %s2 = inlined_call_operand.hbm [shape: bf16[4,128,384], index: 2, kind: input, shape index: {}]
  %s3 = inlined_call_operand.hbm [shape: bf16[4,128,128], index: 3, kind: input, shape index: {}]
  %s4 = inlined_call_operand.hbm [shape: bf16[4,128,256], index: 4, kind: input, shape index: {}]
  %s5 = inlined_call_operand.hbm [shape: f32[4,1,256], index: 5, kind: input, shape index: {}]
  %s6 = inlined_call_operand.hbm [shape: bf16[4,256,128], index: 6, kind: input, shape index: {}]
  %s7 = inlined_call_operand.vmem [shape: f32[4,1,128], index: 7, kind: input, shape index: {}]
  %s8 = inlined_call_operand.vmem [shape: f32[4,1,128], index: 8, kind: input, shape index: {}]
  %s9 = inlined_call_operand.hbm [shape: f32[4,1,128], index: 9, kind: input, shape index: {}]
  %s10 = inlined_call_operand.hbm [shape: f32[8,128], index: 10, kind: output, shape index: {}]
  %s11 = sld [smem:[#allocation0]]
  $region82: #{transformer_forward.1} parent=0
    _
  %s13 = ssub.s32 1, %s11
  %s14 = scalar_select 0, %s13, %s11
  $region1: #{transformer_forward.1} parent=0
    #allocation2 [shape = 'u8[4096]{0}', space=vmem, size = 0x1000, scoped, tag = 'input window, operand 0, single buffered']
    #allocation3 [shape = 's32[1]{0}', space=sflag, size = 0x4, scoped, tag = 'scoped memory for transformer_forward.1']
    #allocation4 [shape = 's32[1]{0}', space=sflag, size = 0x4, scoped, tag = 'scoped memory for transformer_forward.1']
    #allocation5 [shape = 'u8[4096]{0}', space=vmem, size = 0x1000, scoped, tag = 'input window, operand 1, single buffered']
    #allocation6 [shape = 's32[1]{0}', space=sflag, size = 0x4, scoped, tag = 'scoped memory for transformer_forward.1']
    #allocation7 [shape = 'u8[393216]{0}', space=vmem, size = 0x60000, scoped, tag = 'input window, operand 2, single buffered']
    #allocation8 [shape = 'u8[131072]{0}', space=vmem, size = 0x20000, scoped, tag = 'input window, operand 3, single buffered']
    #allocation9 [shape = 's32[1]{0}', space=sflag, size = 0x4, scoped, tag = 'scoped memory for transformer_forward.1']
    #allocation10 [shape = 'u8[262144]{0}', space=vmem, size = 0x40000, scoped, tag = 'input window, operand 4, single buffered']
    #allocation11 [shape = 'u8[4096]{0}', space=vmem, size = 0x1000, scoped, tag = 'input window, operand 5, single buffered']
    #allocation12 [shape = 's32[1]{0}', space=sflag, size = 0x4, scoped, tag = 'scoped memory for transformer_forward.1']
    #allocation13 [shape = 'u8[262144]{0}', space=vmem, size = 0x40000, scoped, tag = 'input window, operand 6, single buffered']
    #allocation14 [shape = 'u8[2048]{0}', space=vmem, size = 0x800, scoped, tag = 'input window, operand 9, single buffered']
    #allocation15 [shape = 's32[1]{0}', space=sflag, size = 0x4, scoped, tag = 'scoped memory for transformer_forward.1']
    #allocation16 [shape = 'u8[4096]{0}', space=vmem, size = 0x1000, scoped, tag = 'output window, operand 0, single buffered']
    %15 = vsyncpa [#allocation3], 0
    %16 = vsyncpa [#allocation6], 0
    %17 = vsyncpa [#allocation9], 0
    %18 = vsyncpa [#allocation12], 0
    %19 = vsyncpa [#allocation15], 0
    %20 = vsyncpa [#allocation4], 0
    // Predicated region
    $region2: #{transformer_forward.1} parent=1 // pred_check
      _
    $region3: #{transformer_forward.1} parent=1 // pred_check_branch
      %22 = sbr.rel (0) target = $region5
    $region4: #{transformer_forward.1} parent=1 // pred_region
      %s24 = ssub.s32 128, 128
      %25 = vsyncadd [#allocation3], %s24
      %s27 = sshll.u32 [#allocation2], 4
      %s28 = int_to_ptr.vmem [resolvable:$true] %s27
      %30 = dma.hbm_to_vmem [thread:$0]  %s0, 128, %s28, [#allocation3]
    $region5: #{transformer_forward.1} parent=1 // pred_fallthru
      _
    // Predicated region
    $region6: #{transformer_forward.1} parent=1 // pred_check
      _
    $region7: #{transformer_forward.1} parent=1 // pred_check_branch
      %32 = sbr.rel (0) target = $region9
    $region8: #{transformer_forward.1} parent=1 // pred_region
      %s34 = ssub.s32 128, 128
      %35 = vsyncadd [#allocation6], %s34
      %s37 = sshll.u32 [#allocation5], 4
      %s38 = int_to_ptr.vmem [resolvable:$true] %s37
      %40 = dma.hbm_to_vmem [thread:$0]  %s1, 128, %s38, [#allocation6]
    $region9: #{transformer_forward.1} parent=1 // pred_fallthru
      _
    // Predicated region
    $region10: #{transformer_forward.1} parent=1 // pred_check
      _
    $region11: #{transformer_forward.1} parent=1 // pred_check_branch
      %42 = sbr.rel (0) target = $region13
    $region12: #{transformer_forward.1} parent=1 // pred_region
      %s44 = ssub.s32 12288, 12288
      %45 = vsyncadd [#allocation6], %s44
      %s46 = sshll.u32 [#allocation7], 4
      %s47 = int_to_ptr.vmem [resolvable:$true] %s46
      %52 = dma.hbm_to_vmem [thread:$0]  %s2, 12288, %s47, [#allocation6], 192, 192, 12
    $region13: #{transformer_forward.1} parent=1 // pred_fallthru
      _
    // Predicated region
    $region14: #{transformer_forward.1} parent=1 // pred_check
      _
    $region15: #{transformer_forward.1} parent=1 // pred_check_branch
      %54 = sbr.rel (0) target = $region17
    $region16: #{transformer_forward.1} parent=1 // pred_region
      %s56 = ssub.s32 4096, 4096
      %57 = vsyncadd [#allocation9], %s56
      %s58 = sshll.u32 [#allocation8], 4
      %s59 = int_to_ptr.vmem [resolvable:$true] %s58
      %64 = dma.hbm_to_vmem [thread:$0]  %s3, 4096, %s59, [#allocation9], 64, 64, 4
    $region17: #{transformer_forward.1} parent=1 // pred_fallthru
      _
    // Predicated region
    $region18: #{transformer_forward.1} parent=1 // pred_check
      _
    $region19: #{transformer_forward.1} parent=1 // pred_check_branch
      %66 = sbr.rel (0) target = $region21
    $region20: #{transformer_forward.1} parent=1 // pred_region
      %s68 = ssub.s32 8192, 8192
      %69 = vsyncadd [#allocation9], %s68
      %s70 = sshll.u32 [#allocation10], 4
      %s71 = int_to_ptr.vmem [resolvable:$true] %s70
      %76 = dma.hbm_to_vmem [thread:$0]  %s4, 8192, %s71, [#allocation9], 128, 128, 8
    $region21: #{transformer_forward.1} parent=1 // pred_fallthru
      _
    // Predicated region
    $region22: #{transformer_forward.1} parent=1 // pred_check
      _
    $region23: #{transformer_forward.1} parent=1 // pred_check_branch
      %78 = sbr.rel (0) target = $region25
    $region24: #{transformer_forward.1} parent=1 // pred_region
      %s80 = ssub.s32 128, 128
      %81 = vsyncadd [#allocation12], %s80
      %s82 = sshll.u32 [#allocation11], 4
      %s83 = int_to_ptr.vmem [resolvable:$true] %s82
      %88 = dma.hbm_to_vmem [thread:$0]  %s5, 128, %s83, [#allocation12], 32, 32, 2
    $region25: #{transformer_forward.1} parent=1 // pred_fallthru
      _
    // Predicated region
    $region26: #{transformer_forward.1} parent=1 // pred_check
      _
    $region27: #{transformer_forward.1} parent=1 // pred_check_branch
      %90 = sbr.rel (0) target = $region29
    $region28: #{transformer_forward.1} parent=1 // pred_region
      %s92 = ssub.s32 8192, 8192
      %93 = vsyncadd [#allocation12], %s92
      %s94 = sshll.u32 [#allocation13], 4
      %s95 = int_to_ptr.vmem [resolvable:$true] %s94
      %100 = dma.hbm_to_vmem [thread:$0]  %s6, 8192, %s95, [#allocation12], 64, 64, 4
    $region29: #{transformer_forward.1} parent=1 // pred_fallthru
      _
    // Predicated region
    $region30: #{transformer_forward.1} parent=1 // pred_check
      _
    $region31: #{transformer_forward.1} parent=1 // pred_check_branch
      %102 = sbr.rel (0) target = $region33
    $region32: #{transformer_forward.1} parent=1 // pred_region
      _
    $region33: #{transformer_forward.1} parent=1 // pred_fallthru
      _
    // Predicated region
    $region34: #{transformer_forward.1} parent=1 // pred_check
      _
    $region35: #{transformer_forward.1} parent=1 // pred_check_branch
      %104 = sbr.rel (0) target = $region37
    $region36: #{transformer_forward.1} parent=1 // pred_region
      _
    $region37: #{transformer_forward.1} parent=1 // pred_fallthru
      _
    // Predicated region
    $region38: #{transformer_forward.1} parent=1 // pred_check
      _
    $region39: #{transformer_forward.1} parent=1 // pred_check_branch
      %106 = sbr.rel (0) target = $region41
    $region40: #{transformer_forward.1} parent=1 // pred_region
      %s108 = ssub.s32 64, 64
      %109 = vsyncadd [#allocation15], %s108
      %s110 = sshll.u32 [#allocation14], 4
      %s111 = int_to_ptr.vmem [resolvable:$true] %s110
      %116 = dma.hbm_to_vmem [thread:$0]  %s9, 64, %s111, [#allocation15], 16, 16, 1
    $region41: #{transformer_forward.1} parent=1 // pred_fallthru
      _
    // Predicated region
    $region42: #{transformer_forward.1} parent=1 // pred_check
      _
    $region43: #{transformer_forward.1} parent=1 // pred_check_branch
      %118 = sbr.rel (0) target = $region45
    $region44: #{transformer_forward.1} parent=1 // pred_region
      %119 = dma.done [#allocation3], 128
    $region45: #{transformer_forward.1} parent=1 // pred_fallthru
      _
    // Predicated region
    $region46: #{transformer_forward.1} parent=1 // pred_check
      _
    $region47: #{transformer_forward.1} parent=1 // pred_check_branch
      %121 = sbr.rel (0) target = $region49
    $region48: #{transformer_forward.1} parent=1 // pred_region
      %122 = dma.done [#allocation6], 128
    $region49: #{transformer_forward.1} parent=1 // pred_fallthru
      _
    // Predicated region
    $region50: #{transformer_forward.1} parent=1 // pred_check
      _
    $region51: #{transformer_forward.1} parent=1 // pred_check_branch
      %124 = sbr.rel (0) target = $region53
    $region52: #{transformer_forward.1} parent=1 // pred_region
      %125 = dma.done [#allocation6], 12288
    $region53: #{transformer_forward.1} parent=1 // pred_fallthru
      _
    // Predicated region
    $region54: #{transformer_forward.1} parent=1 // pred_check
      _
    $region55: #{transformer_forward.1} parent=1 // pred_check_branch
      %127 = sbr.rel (0) target = $region57
    $region56: #{transformer_forward.1} parent=1 // pred_region
      %128 = dma.done [#allocation9], 4096
    $region57: #{transformer_forward.1} parent=1 // pred_fallthru
      _
    // Predicated region
    $region58: #{transformer_forward.1} parent=1 // pred_check
      _
    $region59: #{transformer_forward.1} parent=1 // pred_check_branch
      %130 = sbr.rel (0) target = $region61
    $region60: #{transformer_forward.1} parent=1 // pred_region
      %131 = dma.done [#allocation9], 8192
    $region61: #{transformer_forward.1} parent=1 // pred_fallthru
      _
    // Predicated region
    $region62: #{transformer_forward.1} parent=1 // pred_check
      _
    $region63: #{transformer_forward.1} parent=1 // pred_check_branch
      %133 = sbr.rel (0) target = $region65
    $region64: #{transformer_forward.1} parent=1 // pred_region
      %134 = dma.done [#allocation12], 128
    $region65: #{transformer_forward.1} parent=1 // pred_fallthru
      _
    // Predicated region
    $region66: #{transformer_forward.1} parent=1 // pred_check
      _
    $region67: #{transformer_forward.1} parent=1 // pred_check_branch
      %136 = sbr.rel (0) target = $region69
    $region68: #{transformer_forward.1} parent=1 // pred_region
      %137 = dma.done [#allocation12], 8192
    $region69: #{transformer_forward.1} parent=1 // pred_fallthru
      _
    // Predicated region
    $region70: #{transformer_forward.1} parent=1 // pred_check
      _
    $region71: #{transformer_forward.1} parent=1 // pred_check_branch
      %139 = sbr.rel (0) target = $region73
    $region72: #{transformer_forward.1} parent=1 // pred_region
      %140 = dma.done [#allocation15], 64
    $region73: #{transformer_forward.1} parent=1 // pred_fallthru
      _
    %v142 = vld [vmem:[#allocation2] sm:$0xff]
    %v143 = vld [vmem:[#allocation5] sm:$0xff]
    %v144 = vld [vmem:[#allocation7] sm:$0xff]
    %v145 = vld [vmem:[#allocation7 + $0x8] sm:$0xf]
    %v146 = vld [vmem:[#allocation7 + $0xc] sm:$0xff]
    %v147 = vld [vmem:[#allocation7 + $0x14] sm:$0xf]
    %v148 = vld [vmem:[#allocation7 + $0x18] sm:$0xff]
    %v149 = vld [vmem:[#allocation7 + $0x20] sm:$0xf]
    %v150 = vld [vmem:[#allocation7 + $0x24] sm:$0xff]
    %v151 = vld [vmem:[#allocation7 + $0x2c] sm:$0xf]
    %v152 = vld [vmem:[#allocation7 + $0x30] sm:$0xff]
    %v153 = vld [vmem:[#allocation7 + $0x38] sm:$0xf]
    %v154 = vld [vmem:[#allocation7 + $0x3c] sm:$0xff]
    %v155 = vld [vmem:[#allocation7 + $0x44] sm:$0xf]
    %v156 = vld [vmem:[#allocation7 + $0x48] sm:$0xff]
    %v157 = vld [vmem:[#allocation7 + $0x50] sm:$0xf]
    %v158 = vld [vmem:[#allocation7 + $0x54] sm:$0xff]
    %v159 = vld [vmem:[#allocation7 + $0x5c] sm:$0xf]
    %v160 = vld [vmem:[#allocation7 + $0x60] sm:$0xff]
    %v161 = vld [vmem:[#allocation7 + $0x68] sm:$0xf]
    %v162 = vld [vmem:[#allocation7 + $0x6c] sm:$0xff]
    %v163 = vld [vmem:[#allocation7 + $0x74] sm:$0xf]
    %v164 = vld [vmem:[#allocation7 + $0x78] sm:$0xff]
    %v165 = vld [vmem:[#allocation7 + $0x80] sm:$0xf]
    %v166 = vld [vmem:[#allocation7 + $0x84] sm:$0xff]
    %v167 = vld [vmem:[#allocation7 + $0x8c] sm:$0xf]
    %v168 = vld [vmem:[#allocation7 + $0x90] sm:$0xff]
    %v169 = vld [vmem:[#allocation7 + $0x98] sm:$0xf]
    %v170 = vld [vmem:[#allocation7 + $0x9c] sm:$0xff]
    %v171 = vld [vmem:[#allocation7 + $0xa4] sm:$0xf]
    %v172 = vld [vmem:[#allocation7 + $0xa8] sm:$0xff]
    %v173 = vld [vmem:[#allocation7 + $0xb0] sm:$0xf]
    %v174 = vld [vmem:[#allocation7 + $0xb4] sm:$0xff]
    %v175 = vld [vmem:[#allocation7 + $0xbc] sm:$0xf]
    %v176 = vld [vmem:[#allocation8] sm:$0xf]
    %v177 = vld [vmem:[#allocation8 + $0x4] sm:$0xf]
    %v178 = vld [vmem:[#allocation8 + $0x8] sm:$0xf]
    %v179 = vld [vmem:[#allocation8 + $0xc] sm:$0xf]
    %v180 = vld [vmem:[#allocation8 + $0x10] sm:$0xf]
    %v181 = vld [vmem:[#allocation8 + $0x14] sm:$0xf]
    %v182 = vld [vmem:[#allocation8 + $0x18] sm:$0xf]
    %v183 = vld [vmem:[#allocation8 + $0x1c] sm:$0xf]
    %v184 = vld [vmem:[#allocation8 + $0x20] sm:$0xf]
    %v185 = vld [vmem:[#allocation8 + $0x24] sm:$0xf]
    %v186 = vld [vmem:[#allocation8 + $0x28] sm:$0xf]
    %v187 = vld [vmem:[#allocation8 + $0x2c] sm:$0xf]
    %v188 = vld [vmem:[#allocation8 + $0x30] sm:$0xf]
    %v189 = vld [vmem:[#allocation8 + $0x34] sm:$0xf]
    %v190 = vld [vmem:[#allocation8 + $0x38] sm:$0xf]
    %v191 = vld [vmem:[#allocation8 + $0x3c] sm:$0xf]
    %v192 = vpack.c.bf16 %v142, %v142
    %v225 = vunpack.c.l.b16 %v144
    %v226 = vunpack.c.h.b16 %v144
    %v227 = vunpack.c.l.b16 %v145
    %v228 = vunpack.c.l.b16 %v146
    %v229 = vunpack.c.h.b16 %v146
    %v230 = vunpack.c.l.b16 %v147
    %v231 = vunpack.c.l.b16 %v148
    %v232 = vunpack.c.h.b16 %v148
    %v233 = vunpack.c.l.b16 %v149
    %v234 = vunpack.c.l.b16 %v150
    %v235 = vunpack.c.h.b16 %v150
    %v236 = vunpack.c.l.b16 %v151
    %v237 = vunpack.c.l.b16 %v152
    %v238 = vunpack.c.h.b16 %v152
    %v239 = vunpack.c.l.b16 %v153
    %v240 = vunpack.c.l.b16 %v154
    %v241 = vunpack.c.h.b16 %v154
    %v242 = vunpack.c.l.b16 %v155
    %v243 = vunpack.c.l.b16 %v156
    %v244 = vunpack.c.h.b16 %v156
    %v245 = vunpack.c.l.b16 %v157
    %v246 = vunpack.c.l.b16 %v158
    %v247 = vunpack.c.h.b16 %v158
    %v248 = vunpack.c.l.b16 %v159
    %v249 = vunpack.c.l.b16 %v160
    %v250 = vunpack.c.h.b16 %v160
    %v251 = vunpack.c.l.b16 %v161
    %v252 = vunpack.c.l.b16 %v162
    %v253 = vunpack.c.h.b16 %v162
    %v254 = vunpack.c.l.b16 %v163
    %v255 = vunpack.c.l.b16 %v164
    %v256 = vunpack.c.h.b16 %v164
    %v257 = vunpack.c.l.b16 %v165
    %v258 = vunpack.c.l.b16 %v166
    %v259 = vunpack.c.h.b16 %v166
    %v260 = vunpack.c.l.b16 %v167
    %v261 = vunpack.c.l.b16 %v168
    %v262 = vunpack.c.h.b16 %v168
    %v263 = vunpack.c.l.b16 %v169
    %v264 = vunpack.c.l.b16 %v170
    %v265 = vunpack.c.h.b16 %v170
    %v266 = vunpack.c.l.b16 %v171
    %v267 = vunpack.c.l.b16 %v172
    %v268 = vunpack.c.h.b16 %v172
    %v269 = vunpack.c.l.b16 %v173
    %v270 = vunpack.c.l.b16 %v174
    %v271 = vunpack.c.h.b16 %v174
    %v272 = vunpack.c.l.b16 %v175
    %v273 = vpack.c.b16 %v228, %v225
    %v274 = vpack.c.b16 %v229, %v226
    %v275 = vpack.c.b16 %v230, %v227
    %v276 = vpack.c.b16 %v234, %v231
    %v277 = vpack.c.b16 %v235, %v232
    %v278 = vpack.c.b16 %v236, %v233
    %v279 = vpack.c.b16 %v240, %v237
    %v280 = vpack.c.b16 %v241, %v238
    %v281 = vpack.c.b16 %v242, %v239
    %v282 = vpack.c.b16 %v246, %v243
    %v283 = vpack.c.b16 %v247, %v244
    %v284 = vpack.c.b16 %v248, %v245
    %v285 = vpack.c.b16 %v252, %v249
    %v286 = vpack.c.b16 %v253, %v250
    %v287 = vpack.c.b16 %v254, %v251
    %v288 = vpack.c.b16 %v258, %v255
    %v289 = vpack.c.b16 %v259, %v256
    %v290 = vpack.c.b16 %v260, %v257
    %v291 = vpack.c.b16 %v264, %v261
    %v292 = vpack.c.b16 %v265, %v262
    %v293 = vpack.c.b16 %v266, %v263
    %v294 = vpack.c.b16 %v270, %v267
    %v295 = vpack.c.b16 %v271, %v268
    %v296 = vpack.c.b16 %v272, %v269
    %321 = vmatprep.subr.bf16.mxu0 %v295
    %322 = vmatpush1.bf16.msra.mxu0 %v294
    %323 = vmatprep.subr.bf16.mxu0 %v292
    %324 = vmatpush1.bf16.msra.mxu0 %v291
    %325 = vmatprep.subr.bf16.mxu0 %v289
    %326 = vmatpush1.bf16.msra.mxu0 %v288
    %327 = vmatprep.subr.bf16.mxu0 %v286
    %328 = vmatpush1.bf16.msra.mxu0 %v285
    %329 = vmatprep.subr.bf16.mxu0 %v283
    %330 = vmatpush1.bf16.msra.mxu0 %v282
    %331 = vmatprep.subr.bf16.mxu0 %v280
    %332 = vmatpush1.bf16.msra.mxu0 %v279
    %333 = vmatprep.subr.bf16.mxu0 %v277
    %334 = vmatpush1.bf16.msra.mxu0 %v276
    %335 = vmatprep.subr.bf16.mxu0 %v274
    %336 = vmatpush1.bf16.msra.mxu0 %v273
    %337 = vmatprep.subr.bf16.mxu0 0
    %338 = vmatpush2.bf16.msra.mxu0 0
    %339 = vmatprep.subr.bf16.mxu0 0
    %340 = vmatpush2.bf16.msra.mxu0 0
    %341 = vmatprep.subr.bf16.mxu0 0
    %342 = vmatpush2.bf16.msra.mxu0 0
    %343 = vmatprep.subr.bf16.mxu0 0
    %344 = vmatpush2.bf16.msra.mxu0 0
    %345 = vmatprep.subr.bf16.mxu0 0
    %346 = vmatpush2.bf16.msra.mxu0 0
    %347 = vmatprep.subr.bf16.mxu0 0
    %348 = vmatpush2.bf16.msra.mxu0 0
    %349 = vmatprep.subr.bf16.mxu0 0
    %350 = vmatpush2.bf16.msra.mxu0 0
    %351 = vmatprep.subr.bf16.mxu0 0
    %352 = vmatpush2.bf16.msra.mxu0 0
    %353 = vmatprep.mubr.bf16.mxu0 0
    %354 = vmatmul.mubr.bf16.gmra.mxu0 %v192
    %v355 = vpop.f32.mrf.mxu0
    %v356 = vadd.f32 0.0, %v355
    %v357 = vpop.f32.mrf.mxu0
    %v358 = vadd.f32 0.0, %v357
    %v359 = vpop.f32.mrf.mxu0
    %v360 = vpop.f32.mrf.mxu0
    %361 = vdwg.mxu0
    %362 = vmatprep.subr.bf16.mxu0 0
    %363 = vmatpush1.bf16.msra.mxu0 %v296
    %364 = vmatprep.subr.bf16.mxu0 0
    %365 = vmatpush1.bf16.msra.mxu0 %v293
    %366 = vmatprep.subr.bf16.mxu0 0
    %367 = vmatpush1.bf16.msra.mxu0 %v290
    %368 = vmatprep.subr.bf16.mxu0 0
    %369 = vmatpush1.bf16.msra.mxu0 %v287
    %370 = vmatprep.subr.bf16.mxu0 0
    %371 = vmatpush1.bf16.msra.mxu0 %v284
    %372 = vmatprep.subr.bf16.mxu0 0
    %373 = vmatpush1.bf16.msra.mxu0 %v281
    %374 = vmatprep.subr.bf16.mxu0 0
    %375 = vmatpush1.bf16.msra.mxu0 %v278
    %376 = vmatprep.subr.bf16.mxu0 0
    %377 = vmatpush1.bf16.msra.mxu0 %v275
    %378 = vmatprep.subr.bf16.mxu0 0
    %379 = vmatpush2.bf16.msra.mxu0 0
    %380 = vmatprep.subr.bf16.mxu0 0
    %381 = vmatpush2.bf16.msra.mxu0 0
    %382 = vmatprep.subr.bf16.mxu0 0
    %383 = vmatpush2.bf16.msra.mxu0 0
    %384 = vmatprep.subr.bf16.mxu0 0
    %385 = vmatpush2.bf16.msra.mxu0 0
    %386 = vmatprep.subr.bf16.mxu0 0
    %387 = vmatpush2.bf16.msra.mxu0 0
    %388 = vmatprep.subr.bf16.mxu0 0
    %389 = vmatpush2.bf16.msra.mxu0 0
    %390 = vmatprep.subr.bf16.mxu0 0
    %391 = vmatpush2.bf16.msra.mxu0 0
    %392 = vmatprep.subr.bf16.mxu0 0
    %393 = vmatpush2.bf16.msra.mxu0 0
    %394 = vmatprep.mubr.bf16.mxu0 0
    %395 = vmatmul.mubr.bf16.gmra.mxu0 %v192
    %v396 = vpop.f32.mrf.mxu0
    %v397 = vadd.f32 0.0, %v396
    %v398 = vpop.f32.mrf.mxu0
    %v399 = vpop.f32.mrf.mxu0
    %v400 = vpop.f32.mrf.mxu0
    %401 = vdwg.mxu0
    %v402 = vpack.c.bf16 %v356, %v356
    %v403 = vpack.c.bf16 %v397, %v397
    %vm404 = vcmask 261120
    %v406 = vsel %vm404, %v402, 0
    %v409 = vsel %vm404, %v403, 0
    %411 = vmatprep.subr.bf16.mxu0 0
    %412 = vmatpush1.bf16.xpose.msra.mxu0 0
    %413 = vmatprep.subr.bf16.mxu0 0
    %414 = vmatpush1.bf16.xpose.msra.mxu0 0
    %415 = vmatprep.subr.bf16.mxu0 0
    %416 = vmatpush1.bf16.xpose.msra.mxu0 0
    %417 = vmatprep.subr.bf16.mxu0 0
    %418 = vmatpush1.bf16.xpose.msra.mxu0 0
    %419 = vmatprep.subr.bf16.mxu0 0
    %420 = vmatpush1.bf16.xpose.msra.mxu0 0
    %421 = vmatprep.subr.bf16.mxu0 0
    %422 = vmatpush1.bf16.xpose.msra.mxu0 0
    %423 = vmatprep.subr.bf16.mxu0 0
    %424 = vmatpush1.bf16.xpose.msra.mxu0 0
    %425 = vmatprep.subr.bf16.mxu0 0
    %426 = vmatpush1.bf16.xpose.msra.mxu0 %v409
    %427 = vmatprep.subr.bf16.mxu0 0
    %428 = vmatpush2.bf16.xpose.msra.mxu0 0
    %429 = vmatprep.subr.bf16.mxu0 0
    %430 = vmatpush2.bf16.xpose.msra.mxu0 0
    %431 = vmatprep.subr.bf16.mxu0 0
    %432 = vmatpush2.bf16.xpose.msra.mxu0 0
    %433 = vmatprep.subr.bf16.mxu0 0
    %434 = vmatpush2.bf16.xpose.msra.mxu0 0
    %435 = vmatprep.subr.bf16.mxu0 0
    %436 = vmatpush2.bf16.xpose.msra.mxu0 0
    %437 = vmatprep.subr.bf16.mxu0 0
    %438 = vmatpush2.bf16.xpose.msra.mxu0 0
    %439 = vmatprep.subr.bf16.mxu0 0
    %440 = vmatpush2.bf16.xpose.msra.mxu0 0
    %441 = vmatprep.subr.bf16.mxu0 0
    %442 = vmatpush2.bf16.xpose.msra.mxu0 0
    %443 = vmatprep.mubr.bf16.mxu0 0
    %444 = vmatmul.mubr.bf16.gmra.mxu0 %v406
    %v445 = vpop.f32.mrf.mxu0
    %v446 = vadd.f32 0.0, %v445
    %v447 = vpop.f32.mrf.mxu0
    %v448 = vpop.f32.mrf.mxu0
    %v449 = vpop.f32.mrf.mxu0
    %450 = vdwg.mxu0
    %vm451 = vcmask 64512
    %v452 = vsel %vm451, %v446, -inf
    %453 = vmax.xlane.f32.xlu0 %v452
    %v454 = vpop.xlane.xlu0 %453
    %v455 = vsub.f32 %v446, %v454
    %v456 = vmul.f32 %v455, 1.442695
    %v457 = vpow.pop %v456
    %v458 = vsel %vm451, %v457, 0.0
    %459 = vadd.xlane.f32.xlu0 %v458
    %v460 = vpop.xlane.xlu0 %459
    %v461 = vrcp.pop %v460
    %v462 = vmul.f32 %v457, %v461
    %v463 = vpack.c.bf16 %v462, %v462
    %v464 = vpack.c.bf16 %v358, %v358
    %v466 = vsel %vm451, %v463, 0
    %vm468 = vcmask 1043456
    %v470 = vsel %vm468, %v464, 0
    %472 = vmatprep.subr.bf16.mxu0 0
    %473 = vmatpush1.bf16.msra.mxu0 0
    %474 = vmatprep.subr.bf16.mxu0 0
    %475 = vmatpush1.bf16.msra.mxu0 0
    %476 = vmatprep.subr.bf16.mxu0 0
    %477 = vmatpush1.bf16.msra.mxu0 0
    %478 = vmatprep.subr.bf16.mxu0 0
    %479 = vmatpush1.bf16.msra.mxu0 0
    %480 = vmatprep.subr.bf16.mxu0 0
    %481 = vmatpush1.bf16.msra.mxu0 0
    %482 = vmatprep.subr.bf16.mxu0 0
    %483 = vmatpush1.bf16.msra.mxu0 0
    %484 = vmatprep.subr.bf16.mxu0 0
    %485 = vmatpush1.bf16.msra.mxu0 0
    %486 = vmatprep.subr.bf16.mxu0 0
    %487 = vmatpush1.bf16.msra.mxu0 %v470
    %488 = vmatprep.subr.bf16.mxu0 0
    %489 = vmatpush2.bf16.msra.mxu0 0
    %490 = vmatprep.subr.bf16.mxu0 0
    %491 = vmatpush2.bf16.msra.mxu0 0
    %492 = vmatprep.subr.bf16.mxu0 0
    %493 = vmatpush2.bf16.msra.mxu0 0
    %494 = vmatprep.subr.bf16.mxu0 0
    %495 = vmatpush2.bf16.msra.mxu0 0
    %496 = vmatprep.subr.bf16.mxu0 0
    %497 = vmatpush2.bf16.msra.mxu0 0
    %498 = vmatprep.subr.bf16.mxu0 0
    %499 = vmatpush2.bf16.msra.mxu0 0
    %500 = vmatprep.subr.bf16.mxu0 0
    %501 = vmatpush2.bf16.msra.mxu0 0
    %502 = vmatprep.subr.bf16.mxu0 0
    %503 = vmatpush2.bf16.msra.mxu0 0
    %504 = vmatprep.mubr.bf16.mxu0 0
    %505 = vmatmul.mubr.bf16.gmra.mxu0 %v466
    %v506 = vpop.f32.mrf.mxu0
    %v507 = vadd.f32 0.0, %v506
    %v508 = vpop.f32.mrf.mxu0
    %v509 = vpop.f32.mrf.mxu0
    %v510 = vpop.f32.mrf.mxu0
    %511 = vdwg.mxu0
    %513 = vrot.lane.b32.xlu0 %v402, 96
    %v514 = vpop.permute.xlu0 %513
    %516 = vrot.lane.b32.xlu0 %v403, 96
    %v517 = vpop.permute.xlu0 %516
    %v519 = vsel %vm404, %v514, 0
    %v522 = vsel %vm404, %v517, 0
    %524 = vmatprep.subr.bf16.mxu0 0
    %525 = vmatpush1.bf16.xpose.msra.mxu0 0
    %526 = vmatprep.subr.bf16.mxu0 0
    %527 = vmatpush1.bf16.xpose.msra.mxu0 0
    %528 = vmatprep.subr.bf16.mxu0 0
    %529 = vmatpush1.bf16.xpose.msra.mxu0 0
    %530 = vmatprep.subr.bf16.mxu0 0
    %531 = vmatpush1.bf16.xpose.msra.mxu0 0
    %532 = vmatprep.subr.bf16.mxu0 0
    %533 = vmatpush1.bf16.xpose.msra.mxu0 0
    %534 = vmatprep.subr.bf16.mxu0 0
    %535 = vmatpush1.bf16.xpose.msra.mxu0 0
    %536 = vmatprep.subr.bf16.mxu0 0
    %537 = vmatpush1.bf16.xpose.msra.mxu0 0
    %538 = vmatprep.subr.bf16.mxu0 0
    %539 = vmatpush1.bf16.xpose.msra.mxu0 %v522
    %540 = vmatprep.subr.bf16.mxu0 0
    %541 = vmatpush2.bf16.xpose.msra.mxu0 0
    %542 = vmatprep.subr.bf16.mxu0 0
    %543 = vmatpush2.bf16.xpose.msra.mxu0 0
    %544 = vmatprep.subr.bf16.mxu0 0
    %545 = vmatpush2.bf16.xpose.msra.mxu0 0
    %546 = vmatprep.subr.bf16.mxu0 0
    %547 = vmatpush2.bf16.xpose.msra.mxu0 0
    %548 = vmatprep.subr.bf16.mxu0 0
    %549 = vmatpush2.bf16.xpose.msra.mxu0 0
    %550 = vmatprep.subr.bf16.mxu0 0
    %551 = vmatpush2.bf16.xpose.msra.mxu0 0
    %552 = vmatprep.subr.bf16.mxu0 0
    %553 = vmatpush2.bf16.xpose.msra.mxu0 0
    %554 = vmatprep.subr.bf16.mxu0 0
    %555 = vmatpush2.bf16.xpose.msra.mxu0 0
    %556 = vmatprep.mubr.bf16.mxu0 0
    %557 = vmatmul.mubr.bf16.gmra.mxu0 %v519
    %v558 = vpop.f32.mrf.mxu0
    %v559 = vadd.f32 0.0, %v558
    %v560 = vpop.f32.mrf.mxu0
    %v561 = vpop.f32.mrf.mxu0
    %v562 = vpop.f32.mrf.mxu0
    %563 = vdwg.mxu0
    %v564 = vsel %vm451, %v559, -inf
    %565 = vmax.xlane.f32.xlu0 %v564
    %v566 = vpop.xlane.xlu0 %565
    %v567 = vsub.f32 %v559, %v566
    %v568 = vmul.f32 %v567, 1.442695
    %v569 = vpow.pop %v568
    %v570 = vsel %vm451, %v569, 0.0
    %571 = vadd.xlane.f32.xlu0 %v570
    %v572 = vpop.xlane.xlu0 %571
    %v573 = vrcp.pop %v572
    %v574 = vmul.f32 %v569, %v573
    %v575 = vpack.c.bf16 %v574, %v574
    %577 = vrot.lane.b32.xlu0 %v464, 96
    %v578 = vpop.permute.xlu0 %577
    %v580 = vsel %vm451, %v575, 0
    %v583 = vsel %vm468, %v578, 0
    %585 = vmatprep.subr.bf16.mxu0 0
    %586 = vmatpush1.bf16.msra.mxu0 0
    %587 = vmatprep.subr.bf16.mxu0 0
    %588 = vmatpush1.bf16.msra.mxu0 0
    %589 = vmatprep.subr.bf16.mxu0 0
    %590 = vmatpush1.bf16.msra.mxu0 0
    %591 = vmatprep.subr.bf16.mxu0 0
    %592 = vmatpush1.bf16.msra.mxu0 0
    %593 = vmatprep.subr.bf16.mxu0 0
    %594 = vmatpush1.bf16.msra.mxu0 0
    %595 = vmatprep.subr.bf16.mxu0 0
    %596 = vmatpush1.bf16.msra.mxu0 0
    %597 = vmatprep.subr.bf16.mxu0 0
    %598 = vmatpush1.bf16.msra.mxu0 0
    %599 = vmatprep.subr.bf16.mxu0 0
    %600 = vmatpush1.bf16.msra.mxu0 %v583
    %601 = vmatprep.subr.bf16.mxu0 0
    %602 = vmatpush2.bf16.msra.mxu0 0
    %603 = vmatprep.subr.bf16.mxu0 0
    %604 = vmatpush2.bf16.msra.mxu0 0
    %605 = vmatprep.subr.bf16.mxu0 0
    %606 = vmatpush2.bf16.msra.mxu0 0
    %607 = vmatprep.subr.bf16.mxu0 0
    %608 = vmatpush2.bf16.msra.mxu0 0
    %609 = vmatprep.subr.bf16.mxu0 0
    %610 = vmatpush2.bf16.msra.mxu0 0
    %611 = vmatprep.subr.bf16.mxu0 0
    %612 = vmatpush2.bf16.msra.mxu0 0
    %613 = vmatprep.subr.bf16.mxu0 0
    %614 = vmatpush2.bf16.msra.mxu0 0
    %615 = vmatprep.subr.bf16.mxu0 0
    %616 = vmatpush2.bf16.msra.mxu0 0
    %617 = vmatprep.mubr.bf16.mxu0 0
    %618 = vmatmul.mubr.bf16.gmra.mxu0 %v580
    %v619 = vpop.f32.mrf.mxu0
    %v620 = vadd.f32 0.0, %v619
    %v621 = vpop.f32.mrf.mxu0
    %v622 = vpop.f32.mrf.mxu0
    %v623 = vpop.f32.mrf.mxu0
    %624 = vdwg.mxu0
    %625 = vrot.lane.b32.xlu0 %v402, 64
    %v626 = vpop.permute.xlu0 %625
    %627 = vrot.lane.b32.xlu0 %v403, 64
    %v628 = vpop.permute.xlu0 %627
    %v630 = vsel %vm404, %v626, 0
    %v633 = vsel %vm404, %v628, 0
    %635 = vmatprep.subr.bf16.mxu0 0
    %636 = vmatpush1.bf16.xpose.msra.mxu0 0
    %637 = vmatprep.subr.bf16.mxu0 0
    %638 = vmatpush1.bf16.xpose.msra.mxu0 0
    %639 = vmatprep.subr.bf16.mxu0 0
    %640 = vmatpush1.bf16.xpose.msra.mxu0 0
    %641 = vmatprep.subr.bf16.mxu0 0
    %642 = vmatpush1.bf16.xpose.msra.mxu0 0
    %643 = vmatprep.subr.bf16.mxu0 0
    %644 = vmatpush1.bf16.xpose.msra.mxu0 0
    %645 = vmatprep.subr.bf16.mxu0 0
    %646 = vmatpush1.bf16.xpose.msra.mxu0 0
    %647 = vmatprep.subr.bf16.mxu0 0
    %648 = vmatpush1.bf16.xpose.msra.mxu0 0
    %649 = vmatprep.subr.bf16.mxu0 0
    %650 = vmatpush1.bf16.xpose.msra.mxu0 %v633
    %651 = vmatprep.subr.bf16.mxu0 0
    %652 = vmatpush2.bf16.xpose.msra.mxu0 0
    %653 = vmatprep.subr.bf16.mxu0 0
    %654 = vmatpush2.bf16.xpose.msra.mxu0 0
    %655 = vmatprep.subr.bf16.mxu0 0
    %656 = vmatpush2.bf16.xpose.msra.mxu0 0
    %657 = vmatprep.subr.bf16.mxu0 0
    %658 = vmatpush2.bf16.xpose.msra.mxu0 0
    %659 = vmatprep.subr.bf16.mxu0 0
    %660 = vmatpush2.bf16.xpose.msra.mxu0 0
    %661 = vmatprep.subr.bf16.mxu0 0
    %662 = vmatpush2.bf16.xpose.msra.mxu0 0
    %663 = vmatprep.subr.bf16.mxu0 0
    %664 = vmatpush2.bf16.xpose.msra.mxu0 0
    %665 = vmatprep.subr.bf16.mxu0 0
    %666 = vmatpush2.bf16.xpose.msra.mxu0 0
    %667 = vmatprep.mubr.bf16.mxu0 0
    %668 = vmatmul.mubr.bf16.gmra.mxu0 %v630
    %v669 = vpop.f32.mrf.mxu0
    %v670 = vadd.f32 0.0, %v669
    %v671 = vpop.f32.mrf.mxu0
    %v672 = vpop.f32.mrf.mxu0
    %v673 = vpop.f32.mrf.mxu0
    %674 = vdwg.mxu0
    %v675 = vsel %vm451, %v670, -inf
    %676 = vmax.xlane.f32.xlu0 %v675
    %v677 = vpop.xlane.xlu0 %676
    %v678 = vsub.f32 %v670, %v677
    %v679 = vmul.f32 %v678, 1.442695
    %v680 = vpow.pop %v679
    %v681 = vsel %vm451, %v680, 0.0
    %682 = vadd.xlane.f32.xlu0 %v681
    %v683 = vpop.xlane.xlu0 %682
    %v684 = vrcp.pop %v683
    %v685 = vmul.f32 %v680, %v684
    %v686 = vpack.c.bf16 %v685, %v685
    %687 = vrot.lane.b32.xlu0 %v464, 64
    %v688 = vpop.permute.xlu0 %687
    %v690 = vsel %vm451, %v686, 0
    %v693 = vsel %vm468, %v688, 0
    %695 = vmatprep.subr.bf16.mxu0 0
    %696 = vmatpush1.bf16.msra.mxu0 0
    %697 = vmatprep.subr.bf16.mxu0 0
    %698 = vmatpush1.bf16.msra.mxu0 0
    %699 = vmatprep.subr.bf16.mxu0 0
    %700 = vmatpush1.bf16.msra.mxu0 0
    %701 = vmatprep.subr.bf16.mxu0 0
    %702 = vmatpush1.bf16.msra.mxu0 0
    %703 = vmatprep.subr.bf16.mxu0 0
    %704 = vmatpush1.bf16.msra.mxu0 0
    %705 = vmatprep.subr.bf16.mxu0 0
    %706 = vmatpush1.bf16.msra.mxu0 0
    %707 = vmatprep.subr.bf16.mxu0 0
    %708 = vmatpush1.bf16.msra.mxu0 0
    %709 = vmatprep.subr.bf16.mxu0 0
    %710 = vmatpush1.bf16.msra.mxu0 %v693
    %711 = vmatprep.subr.bf16.mxu0 0
    %712 = vmatpush2.bf16.msra.mxu0 0
    %713 = vmatprep.subr.bf16.mxu0 0
    %714 = vmatpush2.bf16.msra.mxu0 0
    %715 = vmatprep.subr.bf16.mxu0 0
    %716 = vmatpush2.bf16.msra.mxu0 0
    %717 = vmatprep.subr.bf16.mxu0 0
    %718 = vmatpush2.bf16.msra.mxu0 0
    %719 = vmatprep.subr.bf16.mxu0 0
    %720 = vmatpush2.bf16.msra.mxu0 0
    %721 = vmatprep.subr.bf16.mxu0 0
    %722 = vmatpush2.bf16.msra.mxu0 0
    %723 = vmatprep.subr.bf16.mxu0 0
    %724 = vmatpush2.bf16.msra.mxu0 0
    %725 = vmatprep.subr.bf16.mxu0 0
    %726 = vmatpush2.bf16.msra.mxu0 0
    %727 = vmatprep.mubr.bf16.mxu0 0
    %728 = vmatmul.mubr.bf16.gmra.mxu0 %v690
    %v729 = vpop.f32.mrf.mxu0
    %v730 = vadd.f32 0.0, %v729
    %v731 = vpop.f32.mrf.mxu0
    %v732 = vpop.f32.mrf.mxu0
    %v733 = vpop.f32.mrf.mxu0
    %734 = vdwg.mxu0
    %735 = vrot.lane.b32.xlu0 %v402, 32
    %v736 = vpop.permute.xlu0 %735
    %737 = vrot.lane.b32.xlu0 %v403, 32
    %v738 = vpop.permute.xlu0 %737
    %v740 = vsel %vm404, %v736, 0
    %v743 = vsel %vm404, %v738, 0
    %745 = vmatprep.subr.bf16.mxu0 0
    %746 = vmatpush1.bf16.xpose.msra.mxu0 0
    %747 = vmatprep.subr.bf16.mxu0 0
    %748 = vmatpush1.bf16.xpose.msra.mxu0 0
    %749 = vmatprep.subr.bf16.mxu0 0
    %750 = vmatpush1.bf16.xpose.msra.mxu0 0
    %751 = vmatprep.subr.bf16.mxu0 0
    %752 = vmatpush1.bf16.xpose.msra.mxu0 0
    %753 = vmatprep.subr.bf16.mxu0 0
    %754 = vmatpush1.bf16.xpose.msra.mxu0 0
    %755 = vmatprep.subr.bf16.mxu0 0
    %756 = vmatpush1.bf16.xpose.msra.mxu0 0
    %757 = vmatprep.subr.bf16.mxu0 0
    %758 = vmatpush1.bf16.xpose.msra.mxu0 0
    %759 = vmatprep.subr.bf16.mxu0 0
    %760 = vmatpush1.bf16.xpose.msra.mxu0 %v743
    %761 = vmatprep.subr.bf16.mxu0 0
    %762 = vmatpush2.bf16.xpose.msra.mxu0 0
    %763 = vmatprep.subr.bf16.mxu0 0
    %764 = vmatpush2.bf16.xpose.msra.mxu0 0
    %765 = vmatprep.subr.bf16.mxu0 0
    %766 = vmatpush2.bf16.xpose.msra.mxu0 0
    %767 = vmatprep.subr.bf16.mxu0 0
    %768 = vmatpush2.bf16.xpose.msra.mxu0 0
    %769 = vmatprep.subr.bf16.mxu0 0
    %770 = vmatpush2.bf16.xpose.msra.mxu0 0
    %771 = vmatprep.subr.bf16.mxu0 0
    %772 = vmatpush2.bf16.xpose.msra.mxu0 0
    %773 = vmatprep.subr.bf16.mxu0 0
    %774 = vmatpush2.bf16.xpose.msra.mxu0 0
    %775 = vmatprep.subr.bf16.mxu0 0
    %776 = vmatpush2.bf16.xpose.msra.mxu0 0
    %777 = vmatprep.mubr.bf16.mxu0 0
    %778 = vmatmul.mubr.bf16.gmra.mxu0 %v740
    %v779 = vpop.f32.mrf.mxu0
    %v780 = vadd.f32 0.0, %v779
    %v781 = vpop.f32.mrf.mxu0
    %v782 = vpop.f32.mrf.mxu0
    %v783 = vpop.f32.mrf.mxu0
    %784 = vdwg.mxu0
    %v785 = vsel %vm451, %v780, -inf
    %786 = vmax.xlane.f32.xlu0 %v785
    %v787 = vpop.xlane.xlu0 %786
    %v788 = vsub.f32 %v780, %v787
    %v789 = vmul.f32 %v788, 1.442695
    %v790 = vpow.pop %v789
    %v791 = vsel %vm451, %v790, 0.0
    %792 = vadd.xlane.f32.xlu0 %v791
    %v793 = vpop.xlane.xlu0 %792
    %v794 = vrcp.pop %v793
    %v795 = vmul.f32 %v790, %v794
    %v796 = vpack.c.bf16 %v795, %v795
    %797 = vrot.lane.b32.xlu0 %v464, 32
    %v798 = vpop.permute.xlu0 %797
    %v800 = vsel %vm451, %v796, 0
    %v803 = vsel %vm468, %v798, 0
    %805 = vmatprep.subr.bf16.mxu0 0
    %806 = vmatpush1.bf16.msra.mxu0 0
    %807 = vmatprep.subr.bf16.mxu0 0
    %808 = vmatpush1.bf16.msra.mxu0 0
    %809 = vmatprep.subr.bf16.mxu0 0
    %810 = vmatpush1.bf16.msra.mxu0 0
    %811 = vmatprep.subr.bf16.mxu0 0
    %812 = vmatpush1.bf16.msra.mxu0 0
    %813 = vmatprep.subr.bf16.mxu0 0
    %814 = vmatpush1.bf16.msra.mxu0 0
    %815 = vmatprep.subr.bf16.mxu0 0
    %816 = vmatpush1.bf16.msra.mxu0 0
    %817 = vmatprep.subr.bf16.mxu0 0
    %818 = vmatpush1.bf16.msra.mxu0 0
    %819 = vmatprep.subr.bf16.mxu0 0
    %820 = vmatpush1.bf16.msra.mxu0 %v803
    %821 = vmatprep.subr.bf16.mxu0 0
    %822 = vmatpush2.bf16.msra.mxu0 0
    %823 = vmatprep.subr.bf16.mxu0 0
    %824 = vmatpush2.bf16.msra.mxu0 0
    %825 = vmatprep.subr.bf16.mxu0 0
    %826 = vmatpush2.bf16.msra.mxu0 0
    %827 = vmatprep.subr.bf16.mxu0 0
    %828 = vmatpush2.bf16.msra.mxu0 0
    %829 = vmatprep.subr.bf16.mxu0 0
    %830 = vmatpush2.bf16.msra.mxu0 0
    %831 = vmatprep.subr.bf16.mxu0 0
    %832 = vmatpush2.bf16.msra.mxu0 0
    %833 = vmatprep.subr.bf16.mxu0 0
    %834 = vmatpush2.bf16.msra.mxu0 0
    %835 = vmatprep.subr.bf16.mxu0 0
    %836 = vmatpush2.bf16.msra.mxu0 0
    %837 = vmatprep.mubr.bf16.mxu0 0
    %838 = vmatmul.mubr.bf16.gmra.mxu0 %v800
    %v839 = vpop.f32.mrf.mxu0
    %v840 = vadd.f32 0.0, %v839
    %v841 = vpop.f32.mrf.mxu0
    %v842 = vpop.f32.mrf.mxu0
    %v843 = vpop.f32.mrf.mxu0
    %844 = vdwg.mxu0
    %846 = vrot.lane.b32.xlu0 %v620, 32
    %v847 = vpop.permute.xlu0 %846
    %850 = vrot.lane.b32.xlu0 %v730, 64
    %v851 = vpop.permute.xlu0 %850
    %854 = vrot.lane.b32.xlu0 %v840, 96
    %v855 = vpop.permute.xlu0 %854
    %v857 = vsel %vm404, %v507, %v847
    %vm858 = vcmask 523264
    %v859 = vsel %vm858, %v857, %v851
    %vm860 = vcmask 785408
    %v861 = vsel %vm860, %v859, %v855
    %v862 = vpack.c.bf16 %v861, %v861
    %v879 = vunpack.c.l.b16 %v176
    %v880 = vunpack.c.l.b16 %v177
    %v881 = vunpack.c.l.b16 %v178
    %v882 = vunpack.c.l.b16 %v179
    %v883 = vunpack.c.l.b16 %v180
    %v884 = vunpack.c.l.b16 %v181
    %v885 = vunpack.c.l.b16 %v182
    %v886 = vunpack.c.l.b16 %v183
    %v887 = vunpack.c.l.b16 %v184
    %v888 = vunpack.c.l.b16 %v185
    %v889 = vunpack.c.l.b16 %v186
    %v890 = vunpack.c.l.b16 %v187
    %v891 = vunpack.c.l.b16 %v188
    %v892 = vunpack.c.l.b16 %v189
    %v893 = vunpack.c.l.b16 %v190
    %v894 = vunpack.c.l.b16 %v191
    %v895 = vpack.c.b16 %v880, %v879
    %v896 = vpack.c.b16 %v882, %v881
    %v897 = vpack.c.b16 %v884, %v883
    %v898 = vpack.c.b16 %v886, %v885
    %v899 = vpack.c.b16 %v888, %v887
    %v900 = vpack.c.b16 %v890, %v889
    %v901 = vpack.c.b16 %v892, %v891
    %v902 = vpack.c.b16 %v894, %v893
    %911 = vmatprep.subr.bf16.mxu0 0
    %912 = vmatpush1.bf16.msra.mxu0 %v902
    %913 = vmatprep.subr.bf16.mxu0 0
    %914 = vmatpush1.bf16.msra.mxu0 %v901
    %915 = vmatprep.subr.bf16.mxu0 0
    %916 = vmatpush1.bf16.msra.mxu0 %v900
    %917 = vmatprep.subr.bf16.mxu0 0
    %918 = vmatpush1.bf16.msra.mxu0 %v899
    %919 = vmatprep.subr.bf16.mxu0 0
    %920 = vmatpush1.bf16.msra.mxu0 %v898
    %921 = vmatprep.subr.bf16.mxu0 0
    %922 = vmatpush1.bf16.msra.mxu0 %v897
    %923 = vmatprep.subr.bf16.mxu0 0
    %924 = vmatpush1.bf16.msra.mxu0 %v896
    %925 = vmatprep.subr.bf16.mxu0 0
    %926 = vmatpush1.bf16.msra.mxu0 %v895
    %927 = vmatprep.subr.bf16.mxu0 0
    %928 = vmatpush2.bf16.msra.mxu0 0
    %929 = vmatprep.subr.bf16.mxu0 0
    %930 = vmatpush2.bf16.msra.mxu0 0
    %931 = vmatprep.subr.bf16.mxu0 0
    %932 = vmatpush2.bf16.msra.mxu0 0
    %933 = vmatprep.subr.bf16.mxu0 0
    %934 = vmatpush2.bf16.msra.mxu0 0
    %935 = vmatprep.subr.bf16.mxu0 0
    %936 = vmatpush2.bf16.msra.mxu0 0
    %937 = vmatprep.subr.bf16.mxu0 0
    %938 = vmatpush2.bf16.msra.mxu0 0
    %939 = vmatprep.subr.bf16.mxu0 0
    %940 = vmatpush2.bf16.msra.mxu0 0
    %941 = vmatprep.subr.bf16.mxu0 0
    %942 = vmatpush2.bf16.msra.mxu0 0
    %943 = vmatprep.mubr.bf16.mxu0 0
    %944 = vmatmul.mubr.bf16.gmra.mxu0 %v862
    %v945 = vpop.f32.mrf.mxu0
    %v946 = vadd.f32 0.0, %v945
    %v947 = vpop.f32.mrf.mxu0
    %v948 = vpop.f32.mrf.mxu0
    %v949 = vpop.f32.mrf.mxu0
    %950 = vdwg.mxu0
    %v951 = vadd.f32 %v142, %v946
    %952 = vadd.xlane.f32.xlu0 %v951
    %v953 = vpop.xlane.xlu0 %952
    %v954 = vrcp.pop 128.0
    %v955 = vmul.f32 %v953, %v954
    %v956 = vsub.f32 %v951, %v955
    %v957 = vmul.f32 %v956, %v956
    %958 = vadd.xlane.f32.xlu0 %v957
    %v959 = vpop.xlane.xlu0 %958
    %v960 = vmul.f32 %v959, %v954
    %v961 = vadd.f32 %v960, 1e-05
    %v962 = vrsqrt.pop %v961
    %v963 = vmul.f32 %v956, %v962
    %v964 = vld [vmem:[%s8] sm:$0x1]
    %v966 = vlaneseq
    %v967 = vshrl.u32 %v966, 7
    %v968 = vsub.s32 0, %v967
    %v969 = vrot.slane %v964, %v968
    %v971 = vmul.f32 %v963, %v969
    %v972 = vld [vmem:[#allocation14] sm:$0x1]
    %v974 = vlaneseq
    %v975 = vshrl.u32 %v974, 7
    %v976 = vsub.s32 0, %v975
    %v977 = vrot.slane %v972, %v976
    %v979 = vadd.f32 %v971, %v977
    %v980 = vpack.c.bf16 %v979, %v979
    %v981 = vld [vmem:[#allocation10] sm:$0xff]
    %v982 = vld [vmem:[#allocation10 + $0x8] sm:$0xff]
    %v983 = vld [vmem:[#allocation10 + $0x10] sm:$0xff]
    %v984 = vld [vmem:[#allocation10 + $0x18] sm:$0xff]
    %v985 = vld [vmem:[#allocation10 + $0x20] sm:$0xff]
    %v986 = vld [vmem:[#allocation10 + $0x28] sm:$0xff]
    %v987 = vld [vmem:[#allocation10 + $0x30] sm:$0xff]
    %v988 = vld [vmem:[#allocation10 + $0x38] sm:$0xff]
    %v989 = vld [vmem:[#allocation10 + $0x40] sm:$0xff]
    %v990 = vld [vmem:[#allocation10 + $0x48] sm:$0xff]
    %v991 = vld [vmem:[#allocation10 + $0x50] sm:$0xff]
    %v992 = vld [vmem:[#allocation10 + $0x58] sm:$0xff]
    %v993 = vld [vmem:[#allocation10 + $0x60] sm:$0xff]
    %v994 = vld [vmem:[#allocation10 + $0x68] sm:$0xff]
    %v995 = vld [vmem:[#allocation10 + $0x70] sm:$0xff]
    %v996 = vld [vmem:[#allocation10 + $0x78] sm:$0xff]
    %v997 = vld [vmem:[#allocation11] sm:$0x3]
    %v999 = vlaneseq
    %v1000 = vshrl.u32 %v999, 7
    %v1001 = vsub.s32 0, %v1000
    %v1002 = vrot.slane %v997, %v1001
    %v1003 = vlaneseq
    %v1004 = vshrl.u32 %v1003, 7
    %v1005 = vsub.s32 1, %v1004
    %v1006 = vrot.slane %v997, %v1005
    %v1025 = vunpack.c.l.b16 %v981
    %v1026 = vunpack.c.h.b16 %v981
    %v1027 = vunpack.c.l.b16 %v982
    %v1028 = vunpack.c.h.b16 %v982
    %v1029 = vunpack.c.l.b16 %v983
    %v1030 = vunpack.c.h.b16 %v983
    %v1031 = vunpack.c.l.b16 %v984
    %v1032 = vunpack.c.h.b16 %v984
    %v1033 = vunpack.c.l.b16 %v985
    %v1034 = vunpack.c.h.b16 %v985
    %v1035 = vunpack.c.l.b16 %v986
    %v1036 = vunpack.c.h.b16 %v986
    %v1037 = vunpack.c.l.b16 %v987
    %v1038 = vunpack.c.h.b16 %v987
    %v1039 = vunpack.c.l.b16 %v988
    %v1040 = vunpack.c.h.b16 %v988
    %v1041 = vunpack.c.l.b16 %v989
    %v1042 = vunpack.c.h.b16 %v989
    %v1043 = vunpack.c.l.b16 %v990
    %v1044 = vunpack.c.h.b16 %v990
    %v1045 = vunpack.c.l.b16 %v991
    %v1046 = vunpack.c.h.b16 %v991
    %v1047 = vunpack.c.l.b16 %v992
    %v1048 = vunpack.c.h.b16 %v992
    %v1049 = vunpack.c.l.b16 %v993
    %v1050 = vunpack.c.h.b16 %v993
    %v1051 = vunpack.c.l.b16 %v994
    %v1052 = vunpack.c.h.b16 %v994
    %v1053 = vunpack.c.l.b16 %v995
    %v1054 = vunpack.c.h.b16 %v995
    %v1055 = vunpack.c.l.b16 %v996
    %v1056 = vunpack.c.h.b16 %v996
    %v1057 = vpack.c.b16 %v1027, %v1025
    %v1058 = vpack.c.b16 %v1028, %v1026
    %v1059 = vpack.c.b16 %v1031, %v1029
    %v1060 = vpack.c.b16 %v1032, %v1030
    %v1061 = vpack.c.b16 %v1035, %v1033
    %v1062 = vpack.c.b16 %v1036, %v1034
    %v1063 = vpack.c.b16 %v1039, %v1037
    %v1064 = vpack.c.b16 %v1040, %v1038
    %v1065 = vpack.c.b16 %v1043, %v1041
    %v1066 = vpack.c.b16 %v1044, %v1042
    %v1067 = vpack.c.b16 %v1047, %v1045
    %v1068 = vpack.c.b16 %v1048, %v1046
    %v1069 = vpack.c.b16 %v1051, %v1049
    %v1070 = vpack.c.b16 %v1052, %v1050
    %v1071 = vpack.c.b16 %v1055, %v1053
    %v1072 = vpack.c.b16 %v1056, %v1054
    %1089 = vmatprep.subr.bf16.mxu0 %v1072
    %1090 = vmatpush1.bf16.msra.mxu0 %v1071
    %1091 = vmatprep.subr.bf16.mxu0 %v1070
    %1092 = vmatpush1.bf16.msra.mxu0 %v1069
    %1093 = vmatprep.subr.bf16.mxu0 %v1068
    %1094 = vmatpush1.bf16.msra.mxu0 %v1067
    %1095 = vmatprep.subr.bf16.mxu0 %v1066
    %1096 = vmatpush1.bf16.msra.mxu0 %v1065
    %1097 = vmatprep.subr.bf16.mxu0 %v1064
    %1098 = vmatpush1.bf16.msra.mxu0 %v1063
    %1099 = vmatprep.subr.bf16.mxu0 %v1062
    %1100 = vmatpush1.bf16.msra.mxu0 %v1061
    %1101 = vmatprep.subr.bf16.mxu0 %v1060
    %1102 = vmatpush1.bf16.msra.mxu0 %v1059
    %1103 = vmatprep.subr.bf16.mxu0 %v1058
    %1104 = vmatpush1.bf16.msra.mxu0 %v1057
    %1105 = vmatprep.subr.bf16.mxu0 0
    %1106 = vmatpush2.bf16.msra.mxu0 0
    %1107 = vmatprep.subr.bf16.mxu0 0
    %1108 = vmatpush2.bf16.msra.mxu0 0
    %1109 = vmatprep.subr.bf16.mxu0 0
    %1110 = vmatpush2.bf16.msra.mxu0 0
    %1111 = vmatprep.subr.bf16.mxu0 0
    %1112 = vmatpush2.bf16.msra.mxu0 0
    %1113 = vmatprep.subr.bf16.mxu0 0
    %1114 = vmatpush2.bf16.msra.mxu0 0
    %1115 = vmatprep.subr.bf16.mxu0 0
    %1116 = vmatpush2.bf16.msra.mxu0 0
    %1117 = vmatprep.subr.bf16.mxu0 0
    %1118 = vmatpush2.bf16.msra.mxu0 0
    %1119 = vmatprep.subr.bf16.mxu0 0
    %1120 = vmatpush2.bf16.msra.mxu0 0
    %1121 = vmatprep.mubr.bf16.mxu0 0
    %1122 = vmatmul.mubr.bf16.gmra.mxu0 %v980
    %v1123 = vpop.f32.mrf.mxu0
    %v1124 = vadd.f32 %v1002, %v1123
    %v1125 = vpop.f32.mrf.mxu0
    %v1126 = vadd.f32 %v1006, %v1125
    %v1127 = vpop.f32.mrf.mxu0
    %v1128 = vpop.f32.mrf.mxu0
    %1129 = vdwg.mxu0
    %v1130 = vmax.f32 %v1124, 0.0
    %v1131 = vmax.f32 %v1126, 0.0
    %v1132 = vpack.c.bf16 %v1130, %v1130
    %v1133 = vpack.c.bf16 %v1131, %v1131
    %v1134 = vld [vmem:[#allocation13] sm:$0xf]
    %v1135 = vld [vmem:[#allocation13 + $0x4] sm:$0xf]
    %v1136 = vld [vmem:[#allocation13 + $0x8] sm:$0xf]
    %v1137 = vld [vmem:[#allocation13 + $0xc] sm:$0xf]
    %v1138 = vld [vmem:[#allocation13 + $0x10] sm:$0xf]
    %v1139 = vld [vmem:[#allocation13 + $0x14] sm:$0xf]
    %v1140 = vld [vmem:[#allocation13 + $0x18] sm:$0xf]
    %v1141 = vld [vmem:[#allocation13 + $0x1c] sm:$0xf]
    %v1142 = vld [vmem:[#allocation13 + $0x20] sm:$0xf]
    %v1143 = vld [vmem:[#allocation13 + $0x24] sm:$0xf]
    %v1144 = vld [vmem:[#allocation13 + $0x28] sm:$0xf]
    %v1145 = vld [vmem:[#allocation13 + $0x2c] sm:$0xf]
    %v1146 = vld [vmem:[#allocation13 + $0x30] sm:$0xf]
    %v1147 = vld [vmem:[#allocation13 + $0x34] sm:$0xf]
    %v1148 = vld [vmem:[#allocation13 + $0x38] sm:$0xf]
    %v1149 = vld [vmem:[#allocation13 + $0x3c] sm:$0xf]
    %v1150 = vld [vmem:[#allocation13 + $0x40] sm:$0xf]
    %v1151 = vld [vmem:[#allocation13 + $0x44] sm:$0xf]
    %v1152 = vld [vmem:[#allocation13 + $0x48] sm:$0xf]
    %v1153 = vld [vmem:[#allocation13 + $0x4c] sm:$0xf]
    %v1154 = vld [vmem:[#allocation13 + $0x50] sm:$0xf]
    %v1155 = vld [vmem:[#allocation13 + $0x54] sm:$0xf]
    %v1156 = vld [vmem:[#allocation13 + $0x58] sm:$0xf]
    %v1157 = vld [vmem:[#allocation13 + $0x5c] sm:$0xf]
    %v1158 = vld [vmem:[#allocation13 + $0x60] sm:$0xf]
    %v1159 = vld [vmem:[#allocation13 + $0x64] sm:$0xf]
    %v1160 = vld [vmem:[#allocation13 + $0x68] sm:$0xf]
    %v1161 = vld [vmem:[#allocation13 + $0x6c] sm:$0xf]
    %v1162 = vld [vmem:[#allocation13 + $0x70] sm:$0xf]
    %v1163 = vld [vmem:[#allocation13 + $0x74] sm:$0xf]
    %v1164 = vld [vmem:[#allocation13 + $0x78] sm:$0xf]
    %v1165 = vld [vmem:[#allocation13 + $0x7c] sm:$0xf]
    %v1166 = vld [vmem:[%s7] sm:$0x1]
    %v1168 = vlaneseq
    %v1169 = vshrl.u32 %v1168, 7
    %v1170 = vsub.s32 0, %v1169
    %v1171 = vrot.slane %v1166, %v1170
    %v1205 = vunpack.c.l.b16 %v1134
    %v1206 = vunpack.c.l.b16 %v1135
    %v1207 = vunpack.c.l.b16 %v1136
    %v1208 = vunpack.c.l.b16 %v1137
    %v1209 = vunpack.c.l.b16 %v1138
    %v1210 = vunpack.c.l.b16 %v1139
    %v1211 = vunpack.c.l.b16 %v1140
    %v1212 = vunpack.c.l.b16 %v1141
    %v1213 = vunpack.c.l.b16 %v1142
    %v1214 = vunpack.c.l.b16 %v1143
    %v1215 = vunpack.c.l.b16 %v1144
    %v1216 = vunpack.c.l.b16 %v1145
    %v1217 = vunpack.c.l.b16 %v1146
    %v1218 = vunpack.c.l.b16 %v1147
    %v1219 = vunpack.c.l.b16 %v1148
    %v1220 = vunpack.c.l.b16 %v1149
    %v1221 = vunpack.c.l.b16 %v1150
    %v1222 = vunpack.c.l.b16 %v1151
    %v1223 = vunpack.c.l.b16 %v1152
    %v1224 = vunpack.c.l.b16 %v1153
    %v1225 = vunpack.c.l.b16 %v1154
    %v1226 = vunpack.c.l.b16 %v1155
    %v1227 = vunpack.c.l.b16 %v1156
    %v1228 = vunpack.c.l.b16 %v1157
    %v1229 = vunpack.c.l.b16 %v1158
    %v1230 = vunpack.c.l.b16 %v1159
    %v1231 = vunpack.c.l.b16 %v1160
    %v1232 = vunpack.c.l.b16 %v1161
    %v1233 = vunpack.c.l.b16 %v1162
    %v1234 = vunpack.c.l.b16 %v1163
    %v1235 = vunpack.c.l.b16 %v1164
    %v1236 = vunpack.c.l.b16 %v1165
    %v1237 = vpack.c.b16 %v1206, %v1205
    %v1238 = vpack.c.b16 %v1208, %v1207
    %v1239 = vpack.c.b16 %v1210, %v1209
    %v1240 = vpack.c.b16 %v1212, %v1211
    %v1241 = vpack.c.b16 %v1214, %v1213
    %v1242 = vpack.c.b16 %v1216, %v1215
    %v1243 = vpack.c.b16 %v1218, %v1217
    %v1244 = vpack.c.b16 %v1220, %v1219
    %v1245 = vpack.c.b16 %v1222, %v1221
    %v1246 = vpack.c.b16 %v1224, %v1223
    %v1247 = vpack.c.b16 %v1226, %v1225
    %v1248 = vpack.c.b16 %v1228, %v1227
    %v1249 = vpack.c.b16 %v1230, %v1229
    %v1250 = vpack.c.b16 %v1232, %v1231
    %v1251 = vpack.c.b16 %v1234, %v1233
    %v1252 = vpack.c.b16 %v1236, %v1235
    %1269 = vmatprep.subr.bf16.mxu0 0
    %1270 = vmatpush1.bf16.msra.mxu0 %v1244
    %1271 = vmatprep.subr.bf16.mxu0 0
    %1272 = vmatpush1.bf16.msra.mxu0 %v1243
    %1273 = vmatprep.subr.bf16.mxu0 0
    %1274 = vmatpush1.bf16.msra.mxu0 %v1242
    %1275 = vmatprep.subr.bf16.mxu0 0
    %1276 = vmatpush1.bf16.msra.mxu0 %v1241
    %1277 = vmatprep.subr.bf16.mxu0 0
    %1278 = vmatpush1.bf16.msra.mxu0 %v1240
    %1279 = vmatprep.subr.bf16.mxu0 0
    %1280 = vmatpush1.bf16.msra.mxu0 %v1239
    %1281 = vmatprep.subr.bf16.mxu0 0
    %1282 = vmatpush1.bf16.msra.mxu0 %v1238
    %1283 = vmatprep.subr.bf16.mxu0 0
    %1284 = vmatpush1.bf16.msra.mxu0 %v1237
    %1285 = vmatprep.subr.bf16.mxu0 0
    %1286 = vmatpush2.bf16.msra.mxu0 %v1252
    %1287 = vmatprep.subr.bf16.mxu0 0
    %1288 = vmatpush2.bf16.msra.mxu0 %v1251
    %1289 = vmatprep.subr.bf16.mxu0 0
    %1290 = vmatpush2.bf16.msra.mxu0 %v1250
    %1291 = vmatprep.subr.bf16.mxu0 0
    %1292 = vmatpush2.bf16.msra.mxu0 %v1249
    %1293 = vmatprep.subr.bf16.mxu0 0
    %1294 = vmatpush2.bf16.msra.mxu0 %v1248
    %1295 = vmatprep.subr.bf16.mxu0 0
    %1296 = vmatpush2.bf16.msra.mxu0 %v1247
    %1297 = vmatprep.subr.bf16.mxu0 0
    %1298 = vmatpush2.bf16.msra.mxu0 %v1246
    %1299 = vmatprep.subr.bf16.mxu0 0
    %1300 = vmatpush2.bf16.msra.mxu0 %v1245
    %1301 = vmatprep.mubr.bf16.mxu0 %v1133
    %1302 = vmatmul.mubr.bf16.gmra.mxu0 %v1132
    %v1303 = vpop.f32.mrf.mxu0
    %v1304 = vadd.f32 %v1171, %v1303
    %v1305 = vpop.f32.mrf.mxu0
    %v1306 = vpop.f32.mrf.mxu0
    %v1307 = vpop.f32.mrf.mxu0
    %1308 = vdwg.mxu0
    %v1309 = vadd.f32 %v979, %v1304
    %1310 = vadd.xlane.f32.xlu0 %v1309
    %v1311 = vpop.xlane.xlu0 %1310
    %v1312 = vmul.f32 %v1311, %v954
    %v1313 = vsub.f32 %v1309, %v1312
    %v1314 = vmul.f32 %v1313, %v1313
    %1315 = vadd.xlane.f32.xlu0 %v1314
    %v1316 = vpop.xlane.xlu0 %1315
    %v1317 = vmul.f32 %v1316, %v954
    %v1318 = vadd.f32 %v1317, 1e-05
    %v1319 = vrsqrt.pop %v1318
    %v1320 = vmul.f32 %v1313, %v1319
    %v1321 = vmul.f32 %v1320, %v969
    %v1322 = vadd.f32 %v1321, %v977
    %s1323 = scalar_lea.vmem [#allocation7], 192
    %v1324 = vld [vmem:[%s1323] sm:$0xff]
    %v1325 = vld [vmem:[%s1323 + $0x8] sm:$0xf]
    %v1326 = vld [vmem:[%s1323 + $0xc] sm:$0xff]
    %v1327 = vld [vmem:[%s1323 + $0x14] sm:$0xf]
    %v1328 = vld [vmem:[%s1323 + $0x18] sm:$0xff]
    %v1329 = vld [vmem:[%s1323 + $0x20] sm:$0xf]
    %v1330 = vld [vmem:[%s1323 + $0x24] sm:$0xff]
    %v1331 = vld [vmem:[%s1323 + $0x2c] sm:$0xf]
    %v1332 = vld [vmem:[%s1323 + $0x30] sm:$0xff]
    %v1333 = vld [vmem:[%s1323 + $0x38] sm:$0xf]
    %v1334 = vld [vmem:[%s1323 + $0x3c] sm:$0xff]
    %v1335 = vld [vmem:[%s1323 + $0x44] sm:$0xf]
    %v1336 = vld [vmem:[%s1323 + $0x48] sm:$0xff]
    %v1337 = vld [vmem:[%s1323 + $0x50] sm:$0xf]
    %v1338 = vld [vmem:[%s1323 + $0x54] sm:$0xff]
    %v1339 = vld [vmem:[%s1323 + $0x5c] sm:$0xf]
    %v1340 = vld [vmem:[%s1323 + $0x60] sm:$0xff]
    %v1341 = vld [vmem:[%s1323 + $0x68] sm:$0xf]
    %v1342 = vld [vmem:[%s1323 + $0x6c] sm:$0xff]
    %v1343 = vld [vmem:[%s1323 + $0x74] sm:$0xf]
    %v1344 = vld [vmem:[%s1323 + $0x78] sm:$0xff]
    %v1345 = vld [vmem:[%s1323 + $0x80] sm:$0xf]
    %v1346 = vld [vmem:[%s1323 + $0x84] sm:$0xff]
    %v1347 = vld [vmem:[%s1323 + $0x8c] sm:$0xf]
    %v1348 = vld [vmem:[%s1323 + $0x90] sm:$0xff]
    %v1349 = vld [vmem:[%s1323 + $0x98] sm:$0xf]
    %v1350 = vld [vmem:[%s1323 + $0x9c] sm:$0xff]
    %v1351 = vld [vmem:[%s1323 + $0xa4] sm:$0xf]
    %v1352 = vld [vmem:[%s1323 + $0xa8] sm:$0xff]
    %v1353 = vld [vmem:[%s1323 + $0xb0] sm:$0xf]
    %v1354 = vld [vmem:[%s1323 + $0xb4] sm:$0xff]
    %v1355 = vld [vmem:[%s1323 + $0xbc] sm:$0xf]
    %s1356 = scalar_lea.vmem [#allocation8], 64
    %v1357 = vld [vmem:[%s1356] sm:$0xf]
    %v1358 = vld [vmem:[%s1356 + $0x4] sm:$0xf]
    %v1359 = vld [vmem:[%s1356 + $0x8] sm:$0xf]
    %v1360 = vld [vmem:[%s1356 + $0xc] sm:$0xf]
    %v1361 = vld [vmem:[%s1356 + $0x10] sm:$0xf]
    %v1362 = vld [vmem:[%s1356 + $0x14] sm:$0xf]
    %v1363 = vld [vmem:[%s1356 + $0x18] sm:$0xf]
    %v1364 = vld [vmem:[%s1356 + $0x1c] sm:$0xf]
    %v1365 = vld [vmem:[%s1356 + $0x20] sm:$0xf]
    %v1366 = vld [vmem:[%s1356 + $0x24] sm:$0xf]
    %v1367 = vld [vmem:[%s1356 + $0x28] sm:$0xf]
    %v1368 = vld [vmem:[%s1356 + $0x2c] sm:$0xf]
    %v1369 = vld [vmem:[%s1356 + $0x30] sm:$0xf]
    %v1370 = vld [vmem:[%s1356 + $0x34] sm:$0xf]
    %v1371 = vld [vmem:[%s1356 + $0x38] sm:$0xf]
    %v1372 = vld [vmem:[%s1356 + $0x3c] sm:$0xf]
    %v1373 = vpack.c.bf16 %v1322, %v1322
    %v1406 = vunpack.c.l.b16 %v1324
    %v1407 = vunpack.c.h.b16 %v1324
    %v1408 = vunpack.c.l.b16 %v1325
    %v1409 = vunpack.c.l.b16 %v1326
    %v1410 = vunpack.c.h.b16 %v1326
    %v1411 = vunpack.c.l.b16 %v1327
    %v1412 = vunpack.c.l.b16 %v1328
    %v1413 = vunpack.c.h.b16 %v1328
    %v1414 = vunpack.c.l.b16 %v1329
    %v1415 = vunpack.c.l.b16 %v1330
    %v1416 = vunpack.c.h.b16 %v1330
    %v1417 = vunpack.c.l.b16 %v1331
    %v1418 = vunpack.c.l.b16 %v1332
    %v1419 = vunpack.c.h.b16 %v1332
    %v1420 = vunpack.c.l.b16 %v1333
    %v1421 = vunpack.c.l.b16 %v1334
    %v1422 = vunpack.c.h.b16 %v1334
    %v1423 = vunpack.c.l.b16 %v1335
    %v1424 = vunpack.c.l.b16 %v1336
    %v1425 = vunpack.c.h.b16 %v1336
    %v1426 = vunpack.c.l.b16 %v1337
    %v1427 = vunpack.c.l.b16 %v1338
    %v1428 = vunpack.c.h.b16 %v1338
    %v1429 = vunpack.c.l.b16 %v1339
    %v1430 = vunpack.c.l.b16 %v1340
    %v1431 = vunpack.c.h.b16 %v1340
    %v1432 = vunpack.c.l.b16 %v1341
    %v1433 = vunpack.c.l.b16 %v1342
    %v1434 = vunpack.c.h.b16 %v1342
    %v1435 = vunpack.c.l.b16 %v1343
    %v1436 = vunpack.c.l.b16 %v1344
    %v1437 = vunpack.c.h.b16 %v1344
    %v1438 = vunpack.c.l.b16 %v1345
    %v1439 = vunpack.c.l.b16 %v1346
    %v1440 = vunpack.c.h.b16 %v1346
    %v1441 = vunpack.c.l.b16 %v1347
    %v1442 = vunpack.c.l.b16 %v1348
    %v1443 = vunpack.c.h.b16 %v1348
    %v1444 = vunpack.c.l.b16 %v1349
    %v1445 = vunpack.c.l.b16 %v1350
    %v1446 = vunpack.c.h.b16 %v1350
    %v1447 = vunpack.c.l.b16 %v1351
    %v1448 = vunpack.c.l.b16 %v1352
    %v1449 = vunpack.c.h.b16 %v1352
    %v1450 = vunpack.c.l.b16 %v1353
    %v1451 = vunpack.c.l.b16 %v1354
    %v1452 = vunpack.c.h.b16 %v1354
    %v1453 = vunpack.c.l.b16 %v1355
    %v1454 = vpack.c.b16 %v1409, %v1406
    %v1455 = vpack.c.b16 %v1410, %v1407
    %v1456 = vpack.c.b16 %v1411, %v1408
    %v1457 = vpack.c.b16 %v1415, %v1412
    %v1458 = vpack.c.b16 %v1416, %v1413
    %v1459 = vpack.c.b16 %v1417, %v1414
    %v1460 = vpack.c.b16 %v1421, %v1418
    %v1461 = vpack.c.b16 %v1422, %v1419
    %v1462 = vpack.c.b16 %v1423, %v1420
    %v1463 = vpack.c.b16 %v1427, %v1424
    %v1464 = vpack.c.b16 %v1428, %v1425
    %v1465 = vpack.c.b16 %v1429, %v1426
    %v1466 = vpack.c.b16 %v1433, %v1430
    %v1467 = vpack.c.b16 %v1434, %v1431
    %v1468 = vpack.c.b16 %v1435, %v1432
    %v1469 = vpack.c.b16 %v1439, %v1436
    %v1470 = vpack.c.b16 %v1440, %v1437
    %v1471 = vpack.c.b16 %v1441, %v1438
    %v1472 = vpack.c.b16 %v1445, %v1442
    %v1473 = vpack.c.b16 %v1446, %v1443
    %v1474 = vpack.c.b16 %v1447, %v1444
    %v1475 = vpack.c.b16 %v1451, %v1448
    %v1476 = vpack.c.b16 %v1452, %v1449
    %v1477 = vpack.c.b16 %v1453, %v1450
    %1502 = vmatprep.subr.bf16.mxu0 %v1476
    %1503 = vmatpush1.bf16.msra.mxu0 %v1475
    %1504 = vmatprep.subr.bf16.mxu0 %v1473
    %1505 = vmatpush1.bf16.msra.mxu0 %v1472
    %1506 = vmatprep.subr.bf16.mxu0 %v1470
    %1507 = vmatpush1.bf16.msra.mxu0 %v1469
    %1508 = vmatprep.subr.bf16.mxu0 %v1467
    %1509 = vmatpush1.bf16.msra.mxu0 %v1466
    %1510 = vmatprep.subr.bf16.mxu0 %v1464
    %1511 = vmatpush1.bf16.msra.mxu0 %v1463
    %1512 = vmatprep.subr.bf16.mxu0 %v1461
    %1513 = vmatpush1.bf16.msra.mxu0 %v1460
    %1514 = vmatprep.subr.bf16.mxu0 %v1458
    %1515 = vmatpush1.bf16.msra.mxu0 %v1457
    %1516 = vmatprep.subr.bf16.mxu0 %v1455
    %1517 = vmatpush1.bf16.msra.mxu0 %v1454
    %1518 = vmatprep.subr.bf16.mxu0 0
    %1519 = vmatpush2.bf16.msra.mxu0 0
    %1520 = vmatprep.subr.bf16.mxu0 0
    %1521 = vmatpush2.bf16.msra.mxu0 0
    %1522 = vmatprep.subr.bf16.mxu0 0
    %1523 = vmatpush2.bf16.msra.mxu0 0
    %1524 = vmatprep.subr.bf16.mxu0 0
    %1525 = vmatpush2.bf16.msra.mxu0 0
    %1526 = vmatprep.subr.bf16.mxu0 0
    %1527 = vmatpush2.bf16.msra.mxu0 0
    %1528 = vmatprep.subr.bf16.mxu0 0
    %1529 = vmatpush2.bf16.msra.mxu0 0
    %1530 = vmatprep.subr.bf16.mxu0 0
    %1531 = vmatpush2.bf16.msra.mxu0 0
    %1532 = vmatprep.subr.bf16.mxu0 0
    %1533 = vmatpush2.bf16.msra.mxu0 0
    %1534 = vmatprep.mubr.bf16.mxu0 0
    %1535 = vmatmul.mubr.bf16.gmra.mxu0 %v1373
    %v1536 = vpop.f32.mrf.mxu0
    %v1537 = vadd.f32 0.0, %v1536
    %v1538 = vpop.f32.mrf.mxu0
    %v1539 = vadd.f32 0.0, %v1538
    %v1540 = vpop.f32.mrf.mxu0
    %v1541 = vpop.f32.mrf.mxu0
    %1542 = vdwg.mxu0
    %1543 = vmatprep.subr.bf16.mxu0 0
    %1544 = vmatpush1.bf16.msra.mxu0 %v1477
    %1545 = vmatprep.subr.bf16.mxu0 0
    %1546 = vmatpush1.bf16.msra.mxu0 %v1474
    %1547 = vmatprep.subr.bf16.mxu0 0
    %1548 = vmatpush1.bf16.msra.mxu0 %v1471
    %1549 = vmatprep.subr.bf16.mxu0 0
    %1550 = vmatpush1.bf16.msra.mxu0 %v1468
    %1551 = vmatprep.subr.bf16.mxu0 0
    %1552 = vmatpush1.bf16.msra.mxu0 %v1465
    %1553 = vmatprep.subr.bf16.mxu0 0
    %1554 = vmatpush1.bf16.msra.mxu0 %v1462
    %1555 = vmatprep.subr.bf16.mxu0 0
    %1556 = vmatpush1.bf16.msra.mxu0 %v1459
    %1557 = vmatprep.subr.bf16.mxu0 0
    %1558 = vmatpush1.bf16.msra.mxu0 %v1456
    %1559 = vmatprep.subr.bf16.mxu0 0
    %1560 = vmatpush2.bf16.msra.mxu0 0
    %1561 = vmatprep.subr.bf16.mxu0 0
    %1562 = vmatpush2.bf16.msra.mxu0 0
    %1563 = vmatprep.subr.bf16.mxu0 0
    %1564 = vmatpush2.bf16.msra.mxu0 0
    %1565 = vmatprep.subr.bf16.mxu0 0
    %1566 = vmatpush2.bf16.msra.mxu0 0
    %1567 = vmatprep.subr.bf16.mxu0 0
    %1568 = vmatpush2.bf16.msra.mxu0 0
    %1569 = vmatprep.subr.bf16.mxu0 0
    %1570 = vmatpush2.bf16.msra.mxu0 0
    %1571 = vmatprep.subr.bf16.mxu0 0
    %1572 = vmatpush2.bf16.msra.mxu0 0
    %1573 = vmatprep.subr.bf16.mxu0 0
    %1574 = vmatpush2.bf16.msra.mxu0 0
    %1575 = vmatprep.mubr.bf16.mxu0 0
    %1576 = vmatmul.mubr.bf16.gmra.mxu0 %v1373
    %v1577 = vpop.f32.mrf.mxu0
    %v1578 = vadd.f32 0.0, %v1577
    %v1579 = vpop.f32.mrf.mxu0
    %v1580 = vpop.f32.mrf.mxu0
    %v1581 = vpop.f32.mrf.mxu0
    %1582 = vdwg.mxu0
    %v1583 = vpack.c.bf16 %v1537, %v1537
    %v1584 = vpack.c.bf16 %v1578, %v1578
    %v1586 = vsel %vm404, %v1583, 0
    %v1589 = vsel %vm404, %v1584, 0
    %1591 = vmatprep.subr.bf16.mxu0 0
    %1592 = vmatpush1.bf16.xpose.msra.mxu0 0
    %1593 = vmatprep.subr.bf16.mxu0 0
    %1594 = vmatpush1.bf16.xpose.msra.mxu0 0
    %1595 = vmatprep.subr.bf16.mxu0 0
    %1596 = vmatpush1.bf16.xpose.msra.mxu0 0
    %1597 = vmatprep.subr.bf16.mxu0 0
    %1598 = vmatpush1.bf16.xpose.msra.mxu0 0
    %1599 = vmatprep.subr.bf16.mxu0 0
    %1600 = vmatpush1.bf16.xpose.msra.mxu0 0
    %1601 = vmatprep.subr.bf16.mxu0 0
    %1602 = vmatpush1.bf16.xpose.msra.mxu0 0
    %1603 = vmatprep.subr.bf16.mxu0 0
    %1604 = vmatpush1.bf16.xpose.msra.mxu0 0
    %1605 = vmatprep.subr.bf16.mxu0 0
    %1606 = vmatpush1.bf16.xpose.msra.mxu0 %v1589
    %1607 = vmatprep.subr.bf16.mxu0 0
    %1608 = vmatpush2.bf16.xpose.msra.mxu0 0
    %1609 = vmatprep.subr.bf16.mxu0 0
    %1610 = vmatpush2.bf16.xpose.msra.mxu0 0
    %1611 = vmatprep.subr.bf16.mxu0 0
    %1612 = vmatpush2.bf16.xpose.msra.mxu0 0
    %1613 = vmatprep.subr.bf16.mxu0 0
    %1614 = vmatpush2.bf16.xpose.msra.mxu0 0
    %1615 = vmatprep.subr.bf16.mxu0 0
    %1616 = vmatpush2.bf16.xpose.msra.mxu0 0
    %1617 = vmatprep.subr.bf16.mxu0 0
    %1618 = vmatpush2.bf16.xpose.msra.mxu0 0
    %1619 = vmatprep.subr.bf16.mxu0 0
    %1620 = vmatpush2.bf16.xpose.msra.mxu0 0
    %1621 = vmatprep.subr.bf16.mxu0 0
    %1622 = vmatpush2.bf16.xpose.msra.mxu0 0
    %1623 = vmatprep.mubr.bf16.mxu0 0
    %1624 = vmatmul.mubr.bf16.gmra.mxu0 %v1586
    %v1625 = vpop.f32.mrf.mxu0
    %v1626 = vadd.f32 0.0, %v1625
    %v1627 = vpop.f32.mrf.mxu0
    %v1628 = vpop.f32.mrf.mxu0
    %v1629 = vpop.f32.mrf.mxu0
    %1630 = vdwg.mxu0
    %v1631 = vsel %vm451, %v1626, -inf
    %1632 = vmax.xlane.f32.xlu0 %v1631
    %v1633 = vpop.xlane.xlu0 %1632
    %v1634 = vsub.f32 %v1626, %v1633
    %v1635 = vmul.f32 %v1634, 1.442695
    %v1636 = vpow.pop %v1635
    %v1637 = vsel %vm451, %v1636, 0.0
    %1638 = vadd.xlane.f32.xlu0 %v1637
    %v1639 = vpop.xlane.xlu0 %1638
    %v1640 = vrcp.pop %v1639
    %v1641 = vmul.f32 %v1636, %v1640
    %v1642 = vpack.c.bf16 %v1641, %v1641
    %v1643 = vpack.c.bf16 %v1539, %v1539
    %v1645 = vsel %vm451, %v1642, 0
    %v1648 = vsel %vm468, %v1643, 0
    %1650 = vmatprep.subr.bf16.mxu0 0
    %1651 = vmatpush1.bf16.msra.mxu0 0
    %1652 = vmatprep.subr.bf16.mxu0 0
    %1653 = vmatpush1.bf16.msra.mxu0 0
    %1654 = vmatprep.subr.bf16.mxu0 0
    %1655 = vmatpush1.bf16.msra.mxu0 0
    %1656 = vmatprep.subr.bf16.mxu0 0
    %1657 = vmatpush1.bf16.msra.mxu0 0
    %1658 = vmatprep.subr.bf16.mxu0 0
    %1659 = vmatpush1.bf16.msra.mxu0 0
    %1660 = vmatprep.subr.bf16.mxu0 0
    %1661 = vmatpush1.bf16.msra.mxu0 0
    %1662 = vmatprep.subr.bf16.mxu0 0
    %1663 = vmatpush1.bf16.msra.mxu0 0
    %1664 = vmatprep.subr.bf16.mxu0 0
    %1665 = vmatpush1.bf16.msra.mxu0 %v1648
    %1666 = vmatprep.subr.bf16.mxu0 0
    %1667 = vmatpush2.bf16.msra.mxu0 0
    %1668 = vmatprep.subr.bf16.mxu0 0
    %1669 = vmatpush2.bf16.msra.mxu0 0
    %1670 = vmatprep.subr.bf16.mxu0 0
    %1671 = vmatpush2.bf16.msra.mxu0 0
    %1672 = vmatprep.subr.bf16.mxu0 0
    %1673 = vmatpush2.bf16.msra.mxu0 0
    %1674 = vmatprep.subr.bf16.mxu0 0
    %1675 = vmatpush2.bf16.msra.mxu0 0
    %1676 = vmatprep.subr.bf16.mxu0 0
    %1677 = vmatpush2.bf16.msra.mxu0 0
    %1678 = vmatprep.subr.bf16.mxu0 0
    %1679 = vmatpush2.bf16.msra.mxu0 0
    %1680 = vmatprep.subr.bf16.mxu0 0
    %1681 = vmatpush2.bf16.msra.mxu0 0
    %1682 = vmatprep.mubr.bf16.mxu0 0
    %1683 = vmatmul.mubr.bf16.gmra.mxu0 %v1645
    %v1684 = vpop.f32.mrf.mxu0
    %v1685 = vadd.f32 0.0, %v1684
    %v1686 = vpop.f32.mrf.mxu0
    %v1687 = vpop.f32.mrf.mxu0
    %v1688 = vpop.f32.mrf.mxu0
    %1689 = vdwg.mxu0
    %1691 = vrot.lane.b32.xlu0 %v1583, 96
    %v1692 = vpop.permute.xlu0 %1691
    %1694 = vrot.lane.b32.xlu0 %v1584, 96
    %v1695 = vpop.permute.xlu0 %1694
    %v1697 = vsel %vm404, %v1692, 0
    %v1700 = vsel %vm404, %v1695, 0
    %1702 = vmatprep.subr.bf16.mxu0 0
    %1703 = vmatpush1.bf16.xpose.msra.mxu0 0
    %1704 = vmatprep.subr.bf16.mxu0 0
    %1705 = vmatpush1.bf16.xpose.msra.mxu0 0
    %1706 = vmatprep.subr.bf16.mxu0 0
    %1707 = vmatpush1.bf16.xpose.msra.mxu0 0
    %1708 = vmatprep.subr.bf16.mxu0 0
    %1709 = vmatpush1.bf16.xpose.msra.mxu0 0
    %1710 = vmatprep.subr.bf16.mxu0 0
    %1711 = vmatpush1.bf16.xpose.msra.mxu0 0
    %1712 = vmatprep.subr.bf16.mxu0 0
    %1713 = vmatpush1.bf16.xpose.msra.mxu0 0
    %1714 = vmatprep.subr.bf16.mxu0 0
    %1715 = vmatpush1.bf16.xpose.msra.mxu0 0
    %1716 = vmatprep.subr.bf16.mxu0 0
    %1717 = vmatpush1.bf16.xpose.msra.mxu0 %v1700
    %1718 = vmatprep.subr.bf16.mxu0 0
    %1719 = vmatpush2.bf16.xpose.msra.mxu0 0
    %1720 = vmatprep.subr.bf16.mxu0 0
    %1721 = vmatpush2.bf16.xpose.msra.mxu0 0
    %1722 = vmatprep.subr.bf16.mxu0 0
    %1723 = vmatpush2.bf16.xpose.msra.mxu0 0
    %1724 = vmatprep.subr.bf16.mxu0 0
    %1725 = vmatpush2.bf16.xpose.msra.mxu0 0
    %1726 = vmatprep.subr.bf16.mxu0 0
    %1727 = vmatpush2.bf16.xpose.msra.mxu0 0
    %1728 = vmatprep.subr.bf16.mxu0 0
    %1729 = vmatpush2.bf16.xpose.msra.mxu0 0
    %1730 = vmatprep.subr.bf16.mxu0 0
    %1731 = vmatpush2.bf16.xpose.msra.mxu0 0
    %1732 = vmatprep.subr.bf16.mxu0 0
    %1733 = vmatpush2.bf16.xpose.msra.mxu0 0
    %1734 = vmatprep.mubr.bf16.mxu0 0
    %1735 = vmatmul.mubr.bf16.gmra.mxu0 %v1697
    %v1736 = vpop.f32.mrf.mxu0
    %v1737 = vadd.f32 0.0, %v1736
    %v1738 = vpop.f32.mrf.mxu0
    %v1739 = vpop.f32.mrf.mxu0
    %v1740 = vpop.f32.mrf.mxu0
    %1741 = vdwg.mxu0
    %v1742 = vsel %vm451, %v1737, -inf
    %1743 = vmax.xlane.f32.xlu0 %v1742
    %v1744 = vpop.xlane.xlu0 %1743
    %v1745 = vsub.f32 %v1737, %v1744
    %v1746 = vmul.f32 %v1745, 1.442695
    %v1747 = vpow.pop %v1746
    %v1748 = vsel %vm451, %v1747, 0.0
    %1749 = vadd.xlane.f32.xlu0 %v1748
    %v1750 = vpop.xlane.xlu0 %1749
    %v1751 = vrcp.pop %v1750
    %v1752 = vmul.f32 %v1747, %v1751
    %v1753 = vpack.c.bf16 %v1752, %v1752
    %1755 = vrot.lane.b32.xlu0 %v1643, 96
    %v1756 = vpop.permute.xlu0 %1755
    %v1758 = vsel %vm451, %v1753, 0
    %v1761 = vsel %vm468, %v1756, 0
    %1763 = vmatprep.subr.bf16.mxu0 0
    %1764 = vmatpush1.bf16.msra.mxu0 0
    %1765 = vmatprep.subr.bf16.mxu0 0
    %1766 = vmatpush1.bf16.msra.mxu0 0
    %1767 = vmatprep.subr.bf16.mxu0 0
    %1768 = vmatpush1.bf16.msra.mxu0 0
    %1769 = vmatprep.subr.bf16.mxu0 0
    %1770 = vmatpush1.bf16.msra.mxu0 0
    %1771 = vmatprep.subr.bf16.mxu0 0
    %1772 = vmatpush1.bf16.msra.mxu0 0
    %1773 = vmatprep.subr.bf16.mxu0 0
    %1774 = vmatpush1.bf16.msra.mxu0 0
    %1775 = vmatprep.subr.bf16.mxu0 0
    %1776 = vmatpush1.bf16.msra.mxu0 0
    %1777 = vmatprep.subr.bf16.mxu0 0
    %1778 = vmatpush1.bf16.msra.mxu0 %v1761
    %1779 = vmatprep.subr.bf16.mxu0 0
    %1780 = vmatpush2.bf16.msra.mxu0 0
    %1781 = vmatprep.subr.bf16.mxu0 0
    %1782 = vmatpush2.bf16.msra.mxu0 0
    %1783 = vmatprep.subr.bf16.mxu0 0
    %1784 = vmatpush2.bf16.msra.mxu0 0
    %1785 = vmatprep.subr.bf16.mxu0 0
    %1786 = vmatpush2.bf16.msra.mxu0 0
    %1787 = vmatprep.subr.bf16.mxu0 0
    %1788 = vmatpush2.bf16.msra.mxu0 0
    %1789 = vmatprep.subr.bf16.mxu0 0
    %1790 = vmatpush2.bf16.msra.mxu0 0
    %1791 = vmatprep.subr.bf16.mxu0 0
    %1792 = vmatpush2.bf16.msra.mxu0 0
    %1793 = vmatprep.subr.bf16.mxu0 0
    %1794 = vmatpush2.bf16.msra.mxu0 0
    %1795 = vmatprep.mubr.bf16.mxu0 0
    %1796 = vmatmul.mubr.bf16.gmra.mxu0 %v1758
    %v1797 = vpop.f32.mrf.mxu0
    %v1798 = vadd.f32 0.0, %v1797
    %v1799 = vpop.f32.mrf.mxu0
    %v1800 = vpop.f32.mrf.mxu0
    %v1801 = vpop.f32.mrf.mxu0
    %1802 = vdwg.mxu0
    %1803 = vrot.lane.b32.xlu0 %v1583, 64
    %v1804 = vpop.permute.xlu0 %1803
    %1805 = vrot.lane.b32.xlu0 %v1584, 64
    %v1806 = vpop.permute.xlu0 %1805
    %v1808 = vsel %vm404, %v1804, 0
    %v1811 = vsel %vm404, %v1806, 0
    %1813 = vmatprep.subr.bf16.mxu0 0
    %1814 = vmatpush1.bf16.xpose.msra.mxu0 0
    %1815 = vmatprep.subr.bf16.mxu0 0
    %1816 = vmatpush1.bf16.xpose.msra.mxu0 0
    %1817 = vmatprep.subr.bf16.mxu0 0
    %1818 = vmatpush1.bf16.xpose.msra.mxu0 0
    %1819 = vmatprep.subr.bf16.mxu0 0
    %1820 = vmatpush1.bf16.xpose.msra.mxu0 0
    %1821 = vmatprep.subr.bf16.mxu0 0
    %1822 = vmatpush1.bf16.xpose.msra.mxu0 0
    %1823 = vmatprep.subr.bf16.mxu0 0
    %1824 = vmatpush1.bf16.xpose.msra.mxu0 0
    %1825 = vmatprep.subr.bf16.mxu0 0
    %1826 = vmatpush1.bf16.xpose.msra.mxu0 0
    %1827 = vmatprep.subr.bf16.mxu0 0
    %1828 = vmatpush1.bf16.xpose.msra.mxu0 %v1811
    %1829 = vmatprep.subr.bf16.mxu0 0
    %1830 = vmatpush2.bf16.xpose.msra.mxu0 0
    %1831 = vmatprep.subr.bf16.mxu0 0
    %1832 = vmatpush2.bf16.xpose.msra.mxu0 0
    %1833 = vmatprep.subr.bf16.mxu0 0
    %1834 = vmatpush2.bf16.xpose.msra.mxu0 0
    %1835 = vmatprep.subr.bf16.mxu0 0
    %1836 = vmatpush2.bf16.xpose.msra.mxu0 0
    %1837 = vmatprep.subr.bf16.mxu0 0
    %1838 = vmatpush2.bf16.xpose.msra.mxu0 0
    %1839 = vmatprep.subr.bf16.mxu0 0
    %1840 = vmatpush2.bf16.xpose.msra.mxu0 0
    %1841 = vmatprep.subr.bf16.mxu0 0
    %1842 = vmatpush2.bf16.xpose.msra.mxu0 0
    %1843 = vmatprep.subr.bf16.mxu0 0
    %1844 = vmatpush2.bf16.xpose.msra.mxu0 0
    %1845 = vmatprep.mubr.bf16.mxu0 0
    %1846 = vmatmul.mubr.bf16.gmra.mxu0 %v1808
    %v1847 = vpop.f32.mrf.mxu0
    %v1848 = vadd.f32 0.0, %v1847
    %v1849 = vpop.f32.mrf.mxu0
    %v1850 = vpop.f32.mrf.mxu0
    %v1851 = vpop.f32.mrf.mxu0
    %1852 = vdwg.mxu0
    %v1853 = vsel %vm451, %v1848, -inf
    %1854 = vmax.xlane.f32.xlu0 %v1853
    %v1855 = vpop.xlane.xlu0 %1854
    %v1856 = vsub.f32 %v1848, %v1855
    %v1857 = vmul.f32 %v1856, 1.442695
    %v1858 = vpow.pop %v1857
    %v1859 = vsel %vm451, %v1858, 0.0
    %1860 = vadd.xlane.f32.xlu0 %v1859
    %v1861 = vpop.xlane.xlu0 %1860
    %v1862 = vrcp.pop %v1861
    %v1863 = vmul.f32 %v1858, %v1862
    %v1864 = vpack.c.bf16 %v1863, %v1863
    %1865 = vrot.lane.b32.xlu0 %v1643, 64
    %v1866 = vpop.permute.xlu0 %1865
    %v1868 = vsel %vm451, %v1864, 0
    %v1871 = vsel %vm468, %v1866, 0
    %1873 = vmatprep.subr.bf16.mxu0 0
    %1874 = vmatpush1.bf16.msra.mxu0 0
    %1875 = vmatprep.subr.bf16.mxu0 0
    %1876 = vmatpush1.bf16.msra.mxu0 0
    %1877 = vmatprep.subr.bf16.mxu0 0
    %1878 = vmatpush1.bf16.msra.mxu0 0
    %1879 = vmatprep.subr.bf16.mxu0 0
    %1880 = vmatpush1.bf16.msra.mxu0 0
    %1881 = vmatprep.subr.bf16.mxu0 0
    %1882 = vmatpush1.bf16.msra.mxu0 0
    %1883 = vmatprep.subr.bf16.mxu0 0
    %1884 = vmatpush1.bf16.msra.mxu0 0
    %1885 = vmatprep.subr.bf16.mxu0 0
    %1886 = vmatpush1.bf16.msra.mxu0 0
    %1887 = vmatprep.subr.bf16.mxu0 0
    %1888 = vmatpush1.bf16.msra.mxu0 %v1871
    %1889 = vmatprep.subr.bf16.mxu0 0
    %1890 = vmatpush2.bf16.msra.mxu0 0
    %1891 = vmatprep.subr.bf16.mxu0 0
    %1892 = vmatpush2.bf16.msra.mxu0 0
    %1893 = vmatprep.subr.bf16.mxu0 0
    %1894 = vmatpush2.bf16.msra.mxu0 0
    %1895 = vmatprep.subr.bf16.mxu0 0
    %1896 = vmatpush2.bf16.msra.mxu0 0
    %1897 = vmatprep.subr.bf16.mxu0 0
    %1898 = vmatpush2.bf16.msra.mxu0 0
    %1899 = vmatprep.subr.bf16.mxu0 0
    %1900 = vmatpush2.bf16.msra.mxu0 0
    %1901 = vmatprep.subr.bf16.mxu0 0
    %1902 = vmatpush2.bf16.msra.mxu0 0
    %1903 = vmatprep.subr.bf16.mxu0 0
    %1904 = vmatpush2.bf16.msra.mxu0 0
    %1905 = vmatprep.mubr.bf16.mxu0 0
    %1906 = vmatmul.mubr.bf16.gmra.mxu0 %v1868
    %v1907 = vpop.f32.mrf.mxu0
    %v1908 = vadd.f32 0.0, %v1907
    %v1909 = vpop.f32.mrf.mxu0
    %v1910 = vpop.f32.mrf.mxu0
    %v1911 = vpop.f32.mrf.mxu0
    %1912 = vdwg.mxu0
    %1913 = vrot.lane.b32.xlu0 %v1583, 32
    %v1914 = vpop.permute.xlu0 %1913
    %1915 = vrot.lane.b32.xlu0 %v1584, 32
    %v1916 = vpop.permute.xlu0 %1915
    %v1918 = vsel %vm404, %v1914, 0
    %v1921 = vsel %vm404, %v1916, 0
    %1923 = vmatprep.subr.bf16.mxu0 0
    %1924 = vmatpush1.bf16.xpose.msra.mxu0 0
    %1925 = vmatprep.subr.bf16.mxu0 0
    %1926 = vmatpush1.bf16.xpose.msra.mxu0 0
    %1927 = vmatprep.subr.bf16.mxu0 0
    %1928 = vmatpush1.bf16.xpose.msra.mxu0 0
    %1929 = vmatprep.subr.bf16.mxu0 0
    %1930 = vmatpush1.bf16.xpose.msra.mxu0 0
    %1931 = vmatprep.subr.bf16.mxu0 0
    %1932 = vmatpush1.bf16.xpose.msra.mxu0 0
    %1933 = vmatprep.subr.bf16.mxu0 0
    %1934 = vmatpush1.bf16.xpose.msra.mxu0 0
    %1935 = vmatprep.subr.bf16.mxu0 0
    %1936 = vmatpush1.bf16.xpose.msra.mxu0 0
    %1937 = vmatprep.subr.bf16.mxu0 0
    %1938 = vmatpush1.bf16.xpose.msra.mxu0 %v1921
    %1939 = vmatprep.subr.bf16.mxu0 0
    %1940 = vmatpush2.bf16.xpose.msra.mxu0 0
    %1941 = vmatprep.subr.bf16.mxu0 0
    %1942 = vmatpush2.bf16.xpose.msra.mxu0 0
    %1943 = vmatprep.subr.bf16.mxu0 0
    %1944 = vmatpush2.bf16.xpose.msra.mxu0 0
    %1945 = vmatprep.subr.bf16.mxu0 0
    %1946 = vmatpush2.bf16.xpose.msra.mxu0 0
    %1947 = vmatprep.subr.bf16.mxu0 0
    %1948 = vmatpush2.bf16.xpose.msra.mxu0 0
    %1949 = vmatprep.subr.bf16.mxu0 0
    %1950 = vmatpush2.bf16.xpose.msra.mxu0 0
    %1951 = vmatprep.subr.bf16.mxu0 0
    %1952 = vmatpush2.bf16.xpose.msra.mxu0 0
    %1953 = vmatprep.subr.bf16.mxu0 0
    %1954 = vmatpush2.bf16.xpose.msra.mxu0 0
    %1955 = vmatprep.mubr.bf16.mxu0 0
    %1956 = vmatmul.mubr.bf16.gmra.mxu0 %v1918
    %v1957 = vpop.f32.mrf.mxu0
    %v1958 = vadd.f32 0.0, %v1957
    %v1959 = vpop.f32.mrf.mxu0
    %v1960 = vpop.f32.mrf.mxu0
    %v1961 = vpop.f32.mrf.mxu0
    %1962 = vdwg.mxu0
    %v1963 = vsel %vm451, %v1958, -inf
    %1964 = vmax.xlane.f32.xlu0 %v1963
    %v1965 = vpop.xlane.xlu0 %1964
    %v1966 = vsub.f32 %v1958, %v1965
    %v1967 = vmul.f32 %v1966, 1.442695
    %v1968 = vpow.pop %v1967
    %v1969 = vsel %vm451, %v1968, 0.0
    %1970 = vadd.xlane.f32.xlu0 %v1969
    %v1971 = vpop.xlane.xlu0 %1970
    %v1972 = vrcp.pop %v1971
    %v1973 = vmul.f32 %v1968, %v1972
    %v1974 = vpack.c.bf16 %v1973, %v1973
    %1975 = vrot.lane.b32.xlu0 %v1643, 32
    %v1976 = vpop.permute.xlu0 %1975
    %v1978 = vsel %vm451, %v1974, 0
    %v1981 = vsel %vm468, %v1976, 0
    %1983 = vmatprep.subr.bf16.mxu0 0
    %1984 = vmatpush1.bf16.msra.mxu0 0
    %1985 = vmatprep.subr.bf16.mxu0 0
    %1986 = vmatpush1.bf16.msra.mxu0 0
    %1987 = vmatprep.subr.bf16.mxu0 0
    %1988 = vmatpush1.bf16.msra.mxu0 0
    %1989 = vmatprep.subr.bf16.mxu0 0
    %1990 = vmatpush1.bf16.msra.mxu0 0
    %1991 = vmatprep.subr.bf16.mxu0 0
    %1992 = vmatpush1.bf16.msra.mxu0 0
    %1993 = vmatprep.subr.bf16.mxu0 0
    %1994 = vmatpush1.bf16.msra.mxu0 0
    %1995 = vmatprep.subr.bf16.mxu0 0
    %1996 = vmatpush1.bf16.msra.mxu0 0
    %1997 = vmatprep.subr.bf16.mxu0 0
    %1998 = vmatpush1.bf16.msra.mxu0 %v1981
    %1999 = vmatprep.subr.bf16.mxu0 0
    %2000 = vmatpush2.bf16.msra.mxu0 0
    %2001 = vmatprep.subr.bf16.mxu0 0
    %2002 = vmatpush2.bf16.msra.mxu0 0
    %2003 = vmatprep.subr.bf16.mxu0 0
    %2004 = vmatpush2.bf16.msra.mxu0 0
    %2005 = vmatprep.subr.bf16.mxu0 0
    %2006 = vmatpush2.bf16.msra.mxu0 0
    %2007 = vmatprep.subr.bf16.mxu0 0
    %2008 = vmatpush2.bf16.msra.mxu0 0
    %2009 = vmatprep.subr.bf16.mxu0 0
    %2010 = vmatpush2.bf16.msra.mxu0 0
    %2011 = vmatprep.subr.bf16.mxu0 0
    %2012 = vmatpush2.bf16.msra.mxu0 0
    %2013 = vmatprep.subr.bf16.mxu0 0
    %2014 = vmatpush2.bf16.msra.mxu0 0
    %2015 = vmatprep.mubr.bf16.mxu0 0
    %2016 = vmatmul.mubr.bf16.gmra.mxu0 %v1978
    %v2017 = vpop.f32.mrf.mxu0
    %v2018 = vadd.f32 0.0, %v2017
    %v2019 = vpop.f32.mrf.mxu0
    %v2020 = vpop.f32.mrf.mxu0
    %v2021 = vpop.f32.mrf.mxu0
    %2022 = vdwg.mxu0
    %2024 = vrot.lane.b32.xlu0 %v1798, 32
    %v2025 = vpop.permute.xlu0 %2024
    %2028 = vrot.lane.b32.xlu0 %v1908, 64
    %v2029 = vpop.permute.xlu0 %2028
    %2032 = vrot.lane.b32.xlu0 %v2018, 96
    %v2033 = vpop.permute.xlu0 %2032
    %v2035 = vsel %vm404, %v1685, %v2025
    %v2036 = vsel %vm858, %v2035, %v2029
    %v2037 = vsel %vm860, %v2036, %v2033
    %v2038 = vpack.c.bf16 %v2037, %v2037
    %v2055 = vunpack.c.l.b16 %v1357
    %v2056 = vunpack.c.l.b16 %v1358
    %v2057 = vunpack.c.l.b16 %v1359
    %v2058 = vunpack.c.l.b16 %v1360
    %v2059 = vunpack.c.l.b16 %v1361
    %v2060 = vunpack.c.l.b16 %v1362
    %v2061 = vunpack.c.l.b16 %v1363
    %v2062 = vunpack.c.l.b16 %v1364
    %v2063 = vunpack.c.l.b16 %v1365
    %v2064 = vunpack.c.l.b16 %v1366
    %v2065 = vunpack.c.l.b16 %v1367
    %v2066 = vunpack.c.l.b16 %v1368
    %v2067 = vunpack.c.l.b16 %v1369
    %v2068 = vunpack.c.l.b16 %v1370
    %v2069 = vunpack.c.l.b16 %v1371
    %v2070 = vunpack.c.l.b16 %v1372
    %v2071 = vpack.c.b16 %v2056, %v2055
    %v2072 = vpack.c.b16 %v2058, %v2057
    %v2073 = vpack.c.b16 %v2060, %v2059
    %v2074 = vpack.c.b16 %v2062, %v2061
    %v2075 = vpack.c.b16 %v2064, %v2063
    %v2076 = vpack.c.b16 %v2066, %v2065
    %v2077 = vpack.c.b16 %v2068, %v2067
    %v2078 = vpack.c.b16 %v2070, %v2069
    %2087 = vmatprep.subr.bf16.mxu0 0
    %2088 = vmatpush1.bf16.msra.mxu0 %v2078
    %2089 = vmatprep.subr.bf16.mxu0 0
    %2090 = vmatpush1.bf16.msra.mxu0 %v2077
    %2091 = vmatprep.subr.bf16.mxu0 0
    %2092 = vmatpush1.bf16.msra.mxu0 %v2076
    %2093 = vmatprep.subr.bf16.mxu0 0
    %2094 = vmatpush1.bf16.msra.mxu0 %v2075
    %2095 = vmatprep.subr.bf16.mxu0 0
    %2096 = vmatpush1.bf16.msra.mxu0 %v2074
    %2097 = vmatprep.subr.bf16.mxu0 0
    %2098 = vmatpush1.bf16.msra.mxu0 %v2073
    %2099 = vmatprep.subr.bf16.mxu0 0
    %2100 = vmatpush1.bf16.msra.mxu0 %v2072
    %2101 = vmatprep.subr.bf16.mxu0 0
    %2102 = vmatpush1.bf16.msra.mxu0 %v2071
    %2103 = vmatprep.subr.bf16.mxu0 0
    %2104 = vmatpush2.bf16.msra.mxu0 0
    %2105 = vmatprep.subr.bf16.mxu0 0
    %2106 = vmatpush2.bf16.msra.mxu0 0
    %2107 = vmatprep.subr.bf16.mxu0 0
    %2108 = vmatpush2.bf16.msra.mxu0 0
    %2109 = vmatprep.subr.bf16.mxu0 0
    %2110 = vmatpush2.bf16.msra.mxu0 0
    %2111 = vmatprep.subr.bf16.mxu0 0
    %2112 = vmatpush2.bf16.msra.mxu0 0
    %2113 = vmatprep.subr.bf16.mxu0 0
    %2114 = vmatpush2.bf16.msra.mxu0 0
    %2115 = vmatprep.subr.bf16.mxu0 0
    %2116 = vmatpush2.bf16.msra.mxu0 0
    %2117 = vmatprep.subr.bf16.mxu0 0
    %2118 = vmatpush2.bf16.msra.mxu0 0
    %2119 = vmatprep.mubr.bf16.mxu0 0
    %2120 = vmatmul.mubr.bf16.gmra.mxu0 %v2038
    %v2121 = vpop.f32.mrf.mxu0
    %v2122 = vadd.f32 0.0, %v2121
    %v2123 = vpop.f32.mrf.mxu0
    %v2124 = vpop.f32.mrf.mxu0
    %v2125 = vpop.f32.mrf.mxu0
    %2126 = vdwg.mxu0
    %v2127 = vadd.f32 %v1322, %v2122
    %2128 = vadd.xlane.f32.xlu0 %v2127
    %v2129 = vpop.xlane.xlu0 %2128
    %v2130 = vmul.f32 %v2129, %v954
    %v2131 = vsub.f32 %v2127, %v2130
    %v2132 = vmul.f32 %v2131, %v2131
    %2133 = vadd.xlane.f32.xlu0 %v2132
    %v2134 = vpop.xlane.xlu0 %2133
    %v2135 = vmul.f32 %v2134, %v954
    %v2136 = vadd.f32 %v2135, 1e-05
    %v2137 = vrsqrt.pop %v2136
    %v2138 = vmul.f32 %v2131, %v2137
    %s2139 = scalar_lea.vmem %s8, 1
    %v2140 = vld [vmem:[%s2139] sm:$0x1]
    %v2142 = vlaneseq
    %v2143 = vshrl.u32 %v2142, 7
    %v2144 = vsub.s32 0, %v2143
    %v2145 = vrot.slane %v2140, %v2144
    %v2147 = vmul.f32 %v2138, %v2145
    %s2148 = scalar_lea.vmem [#allocation14], 1
    %v2149 = vld [vmem:[%s2148] sm:$0x1]
    %v2151 = vlaneseq
    %v2152 = vshrl.u32 %v2151, 7
    %v2153 = vsub.s32 0, %v2152
    %v2154 = vrot.slane %v2149, %v2153
    %v2156 = vadd.f32 %v2147, %v2154
    %v2157 = vpack.c.bf16 %v2156, %v2156
    %s2158 = scalar_lea.vmem [#allocation10], 128
    %v2159 = vld [vmem:[%s2158] sm:$0xff]
    %v2160 = vld [vmem:[%s2158 + $0x8] sm:$0xff]
    %v2161 = vld [vmem:[%s2158 + $0x10] sm:$0xff]
    %v2162 = vld [vmem:[%s2158 + $0x18] sm:$0xff]
    %v2163 = vld [vmem:[%s2158 + $0x20] sm:$0xff]
    %v2164 = vld [vmem:[%s2158 + $0x28] sm:$0xff]
    %v2165 = vld [vmem:[%s2158 + $0x30] sm:$0xff]
    %v2166 = vld [vmem:[%s2158 + $0x38] sm:$0xff]
    %v2167 = vld [vmem:[%s2158 + $0x40] sm:$0xff]
    %v2168 = vld [vmem:[%s2158 + $0x48] sm:$0xff]
    %v2169 = vld [vmem:[%s2158 + $0x50] sm:$0xff]
    %v2170 = vld [vmem:[%s2158 + $0x58] sm:$0xff]
    %v2171 = vld [vmem:[%s2158 + $0x60] sm:$0xff]
    %v2172 = vld [vmem:[%s2158 + $0x68] sm:$0xff]
    %v2173 = vld [vmem:[%s2158 + $0x70] sm:$0xff]
    %v2174 = vld [vmem:[%s2158 + $0x78] sm:$0xff]
    %s2175 = scalar_lea.vmem [#allocation11], 2
    %v2176 = vld [vmem:[%s2175] sm:$0x3]
    %v2178 = vlaneseq
    %v2179 = vshrl.u32 %v2178, 7
    %v2180 = vsub.s32 0, %v2179
    %v2181 = vrot.slane %v2176, %v2180
    %v2182 = vlaneseq
    %v2183 = vshrl.u32 %v2182, 7
    %v2184 = vsub.s32 1, %v2183
    %v2185 = vrot.slane %v2176, %v2184
    %v2204 = vunpack.c.l.b16 %v2159
    %v2205 = vunpack.c.h.b16 %v2159
    %v2206 = vunpack.c.l.b16 %v2160
    %v2207 = vunpack.c.h.b16 %v2160
    %v2208 = vunpack.c.l.b16 %v2161
    %v2209 = vunpack.c.h.b16 %v2161
    %v2210 = vunpack.c.l.b16 %v2162
    %v2211 = vunpack.c.h.b16 %v2162
    %v2212 = vunpack.c.l.b16 %v2163
    %v2213 = vunpack.c.h.b16 %v2163
    %v2214 = vunpack.c.l.b16 %v2164
    %v2215 = vunpack.c.h.b16 %v2164
    %v2216 = vunpack.c.l.b16 %v2165
    %v2217 = vunpack.c.h.b16 %v2165
    %v2218 = vunpack.c.l.b16 %v2166
    %v2219 = vunpack.c.h.b16 %v2166
    %v2220 = vunpack.c.l.b16 %v2167
    %v2221 = vunpack.c.h.b16 %v2167
    %v2222 = vunpack.c.l.b16 %v2168
    %v2223 = vunpack.c.h.b16 %v2168
    %v2224 = vunpack.c.l.b16 %v2169
    %v2225 = vunpack.c.h.b16 %v2169
    %v2226 = vunpack.c.l.b16 %v2170
    %v2227 = vunpack.c.h.b16 %v2170
    %v2228 = vunpack.c.l.b16 %v2171
    %v2229 = vunpack.c.h.b16 %v2171
    %v2230 = vunpack.c.l.b16 %v2172
    %v2231 = vunpack.c.h.b16 %v2172
    %v2232 = vunpack.c.l.b16 %v2173
    %v2233 = vunpack.c.h.b16 %v2173
    %v2234 = vunpack.c.l.b16 %v2174
    %v2235 = vunpack.c.h.b16 %v2174
    %v2236 = vpack.c.b16 %v2206, %v2204
    %v2237 = vpack.c.b16 %v2207, %v2205
    %v2238 = vpack.c.b16 %v2210, %v2208
    %v2239 = vpack.c.b16 %v2211, %v2209
    %v2240 = vpack.c.b16 %v2214, %v2212
    %v2241 = vpack.c.b16 %v2215, %v2213
    %v2242 = vpack.c.b16 %v2218, %v2216
    %v2243 = vpack.c.b16 %v2219, %v2217
    %v2244 = vpack.c.b16 %v2222, %v2220
    %v2245 = vpack.c.b16 %v2223, %v2221
    %v2246 = vpack.c.b16 %v2226, %v2224
    %v2247 = vpack.c.b16 %v2227, %v2225
    %v2248 = vpack.c.b16 %v2230, %v2228
    %v2249 = vpack.c.b16 %v2231, %v2229
    %v2250 = vpack.c.b16 %v2234, %v2232
    %v2251 = vpack.c.b16 %v2235, %v2233
    %2268 = vmatprep.subr.bf16.mxu0 %v2251
    %2269 = vmatpush1.bf16.msra.mxu0 %v2250
    %2270 = vmatprep.subr.bf16.mxu0 %v2249
    %2271 = vmatpush1.bf16.msra.mxu0 %v2248
    %2272 = vmatprep.subr.bf16.mxu0 %v2247
    %2273 = vmatpush1.bf16.msra.mxu0 %v2246
    %2274 = vmatprep.subr.bf16.mxu0 %v2245
    %2275 = vmatpush1.bf16.msra.mxu0 %v2244
    %2276 = vmatprep.subr.bf16.mxu0 %v2243
    %2277 = vmatpush1.bf16.msra.mxu0 %v2242
    %2278 = vmatprep.subr.bf16.mxu0 %v2241
    %2279 = vmatpush1.bf16.msra.mxu0 %v2240
    %2280 = vmatprep.subr.bf16.mxu0 %v2239
    %2281 = vmatpush1.bf16.msra.mxu0 %v2238
    %2282 = vmatprep.subr.bf16.mxu0 %v2237
    %2283 = vmatpush1.bf16.msra.mxu0 %v2236
    %2284 = vmatprep.subr.bf16.mxu0 0
    %2285 = vmatpush2.bf16.msra.mxu0 0
    %2286 = vmatprep.subr.bf16.mxu0 0
    %2287 = vmatpush2.bf16.msra.mxu0 0
    %2288 = vmatprep.subr.bf16.mxu0 0
    %2289 = vmatpush2.bf16.msra.mxu0 0
    %2290 = vmatprep.subr.bf16.mxu0 0
    %2291 = vmatpush2.bf16.msra.mxu0 0
    %2292 = vmatprep.subr.bf16.mxu0 0
    %2293 = vmatpush2.bf16.msra.mxu0 0
    %2294 = vmatprep.subr.bf16.mxu0 0
    %2295 = vmatpush2.bf16.msra.mxu0 0
    %2296 = vmatprep.subr.bf16.mxu0 0
    %2297 = vmatpush2.bf16.msra.mxu0 0
    %2298 = vmatprep.subr.bf16.mxu0 0
    %2299 = vmatpush2.bf16.msra.mxu0 0
    %2300 = vmatprep.mubr.bf16.mxu0 0
    %2301 = vmatmul.mubr.bf16.gmra.mxu0 %v2157
    %v2302 = vpop.f32.mrf.mxu0
    %v2303 = vadd.f32 %v2181, %v2302
    %v2304 = vpop.f32.mrf.mxu0
    %v2305 = vadd.f32 %v2185, %v2304
    %v2306 = vpop.f32.mrf.mxu0
    %v2307 = vpop.f32.mrf.mxu0
    %2308 = vdwg.mxu0
    %v2309 = vmax.f32 %v2303, 0.0
    %v2310 = vmax.f32 %v2305, 0.0
    %v2311 = vpack.c.bf16 %v2309, %v2309
    %v2312 = vpack.c.bf16 %v2310, %v2310
    %s2313 = scalar_lea.vmem [#allocation13], 128
    %v2314 = vld [vmem:[%s2313] sm:$0xf]
    %v2315 = vld [vmem:[%s2313 + $0x4] sm:$0xf]
    %v2316 = vld [vmem:[%s2313 + $0x8] sm:$0xf]
    %v2317 = vld [vmem:[%s2313 + $0xc] sm:$0xf]
    %v2318 = vld [vmem:[%s2313 + $0x10] sm:$0xf]
    %v2319 = vld [vmem:[%s2313 + $0x14] sm:$0xf]
    %v2320 = vld [vmem:[%s2313 + $0x18] sm:$0xf]
    %v2321 = vld [vmem:[%s2313 + $0x1c] sm:$0xf]
    %v2322 = vld [vmem:[%s2313 + $0x20] sm:$0xf]
    %v2323 = vld [vmem:[%s2313 + $0x24] sm:$0xf]
    %v2324 = vld [vmem:[%s2313 + $0x28] sm:$0xf]
    %v2325 = vld [vmem:[%s2313 + $0x2c] sm:$0xf]
    %v2326 = vld [vmem:[%s2313 + $0x30] sm:$0xf]
    %v2327 = vld [vmem:[%s2313 + $0x34] sm:$0xf]
    %v2328 = vld [vmem:[%s2313 + $0x38] sm:$0xf]
    %v2329 = vld [vmem:[%s2313 + $0x3c] sm:$0xf]
    %v2330 = vld [vmem:[%s2313 + $0x40] sm:$0xf]
    %v2331 = vld [vmem:[%s2313 + $0x44] sm:$0xf]
    %v2332 = vld [vmem:[%s2313 + $0x48] sm:$0xf]
    %v2333 = vld [vmem:[%s2313 + $0x4c] sm:$0xf]
    %v2334 = vld [vmem:[%s2313 + $0x50] sm:$0xf]
    %v2335 = vld [vmem:[%s2313 + $0x54] sm:$0xf]
    %v2336 = vld [vmem:[%s2313 + $0x58] sm:$0xf]
    %v2337 = vld [vmem:[%s2313 + $0x5c] sm:$0xf]
    %v2338 = vld [vmem:[%s2313 + $0x60] sm:$0xf]
    %v2339 = vld [vmem:[%s2313 + $0x64] sm:$0xf]
    %v2340 = vld [vmem:[%s2313 + $0x68] sm:$0xf]
    %v2341 = vld [vmem:[%s2313 + $0x6c] sm:$0xf]
    %v2342 = vld [vmem:[%s2313 + $0x70] sm:$0xf]
    %v2343 = vld [vmem:[%s2313 + $0x74] sm:$0xf]
    %v2344 = vld [vmem:[%s2313 + $0x78] sm:$0xf]
    %v2345 = vld [vmem:[%s2313 + $0x7c] sm:$0xf]
    %s2346 = scalar_lea.vmem %s7, 1
    %v2347 = vld [vmem:[%s2346] sm:$0x1]
    %v2349 = vlaneseq
    %v2350 = vshrl.u32 %v2349, 7
    %v2351 = vsub.s32 0, %v2350
    %v2352 = vrot.slane %v2347, %v2351
    %v2386 = vunpack.c.l.b16 %v2314
    %v2387 = vunpack.c.l.b16 %v2315
    %v2388 = vunpack.c.l.b16 %v2316
    %v2389 = vunpack.c.l.b16 %v2317
    %v2390 = vunpack.c.l.b16 %v2318
    %v2391 = vunpack.c.l.b16 %v2319
    %v2392 = vunpack.c.l.b16 %v2320
    %v2393 = vunpack.c.l.b16 %v2321
    %v2394 = vunpack.c.l.b16 %v2322
    %v2395 = vunpack.c.l.b16 %v2323
    %v2396 = vunpack.c.l.b16 %v2324
    %v2397 = vunpack.c.l.b16 %v2325
    %v2398 = vunpack.c.l.b16 %v2326
    %v2399 = vunpack.c.l.b16 %v2327
    %v2400 = vunpack.c.l.b16 %v2328
    %v2401 = vunpack.c.l.b16 %v2329
    %v2402 = vunpack.c.l.b16 %v2330
    %v2403 = vunpack.c.l.b16 %v2331
    %v2404 = vunpack.c.l.b16 %v2332
    %v2405 = vunpack.c.l.b16 %v2333
    %v2406 = vunpack.c.l.b16 %v2334
    %v2407 = vunpack.c.l.b16 %v2335
    %v2408 = vunpack.c.l.b16 %v2336
    %v2409 = vunpack.c.l.b16 %v2337
    %v2410 = vunpack.c.l.b16 %v2338
    %v2411 = vunpack.c.l.b16 %v2339
    %v2412 = vunpack.c.l.b16 %v2340
    %v2413 = vunpack.c.l.b16 %v2341
    %v2414 = vunpack.c.l.b16 %v2342
    %v2415 = vunpack.c.l.b16 %v2343
    %v2416 = vunpack.c.l.b16 %v2344
    %v2417 = vunpack.c.l.b16 %v2345
    %v2418 = vpack.c.b16 %v2387, %v2386
    %v2419 = vpack.c.b16 %v2389, %v2388
    %v2420 = vpack.c.b16 %v2391, %v2390
    %v2421 = vpack.c.b16 %v2393, %v2392
    %v2422 = vpack.c.b16 %v2395, %v2394
    %v2423 = vpack.c.b16 %v2397, %v2396
    %v2424 = vpack.c.b16 %v2399, %v2398
    %v2425 = vpack.c.b16 %v2401, %v2400
    %v2426 = vpack.c.b16 %v2403, %v2402
    %v2427 = vpack.c.b16 %v2405, %v2404
    %v2428 = vpack.c.b16 %v2407, %v2406
    %v2429 = vpack.c.b16 %v2409, %v2408
    %v2430 = vpack.c.b16 %v2411, %v2410
    %v2431 = vpack.c.b16 %v2413, %v2412
    %v2432 = vpack.c.b16 %v2415, %v2414
    %v2433 = vpack.c.b16 %v2417, %v2416
    %2450 = vmatprep.subr.bf16.mxu0 0
    %2451 = vmatpush1.bf16.msra.mxu0 %v2425
    %2452 = vmatprep.subr.bf16.mxu0 0
    %2453 = vmatpush1.bf16.msra.mxu0 %v2424
    %2454 = vmatprep.subr.bf16.mxu0 0
    %2455 = vmatpush1.bf16.msra.mxu0 %v2423
    %2456 = vmatprep.subr.bf16.mxu0 0
    %2457 = vmatpush1.bf16.msra.mxu0 %v2422
    %2458 = vmatprep.subr.bf16.mxu0 0
    %2459 = vmatpush1.bf16.msra.mxu0 %v2421
    %2460 = vmatprep.subr.bf16.mxu0 0
    %2461 = vmatpush1.bf16.msra.mxu0 %v2420
    %2462 = vmatprep.subr.bf16.mxu0 0
    %2463 = vmatpush1.bf16.msra.mxu0 %v2419
    %2464 = vmatprep.subr.bf16.mxu0 0
    %2465 = vmatpush1.bf16.msra.mxu0 %v2418
    %2466 = vmatprep.subr.bf16.mxu0 0
    %2467 = vmatpush2.bf16.msra.mxu0 %v2433
    %2468 = vmatprep.subr.bf16.mxu0 0
    %2469 = vmatpush2.bf16.msra.mxu0 %v2432
    %2470 = vmatprep.subr.bf16.mxu0 0
    %2471 = vmatpush2.bf16.msra.mxu0 %v2431
    %2472 = vmatprep.subr.bf16.mxu0 0
    %2473 = vmatpush2.bf16.msra.mxu0 %v2430
    %2474 = vmatprep.subr.bf16.mxu0 0
    %2475 = vmatpush2.bf16.msra.mxu0 %v2429
    %2476 = vmatprep.subr.bf16.mxu0 0
    %2477 = vmatpush2.bf16.msra.mxu0 %v2428
    %2478 = vmatprep.subr.bf16.mxu0 0
    %2479 = vmatpush2.bf16.msra.mxu0 %v2427
    %2480 = vmatprep.subr.bf16.mxu0 0
    %2481 = vmatpush2.bf16.msra.mxu0 %v2426
    %2482 = vmatprep.mubr.bf16.mxu0 %v2312
    %2483 = vmatmul.mubr.bf16.gmra.mxu0 %v2311
    %v2484 = vpop.f32.mrf.mxu0
    %v2485 = vadd.f32 %v2352, %v2484
    %v2486 = vpop.f32.mrf.mxu0
    %v2487 = vpop.f32.mrf.mxu0
    %v2488 = vpop.f32.mrf.mxu0
    %2489 = vdwg.mxu0
    %v2490 = vadd.f32 %v2156, %v2485
    %2491 = vadd.xlane.f32.xlu0 %v2490
    %v2492 = vpop.xlane.xlu0 %2491
    %v2493 = vmul.f32 %v2492, %v954
    %v2494 = vsub.f32 %v2490, %v2493
    %v2495 = vmul.f32 %v2494, %v2494
    %2496 = vadd.xlane.f32.xlu0 %v2495
    %v2497 = vpop.xlane.xlu0 %2496
    %v2498 = vmul.f32 %v2497, %v954
    %v2499 = vadd.f32 %v2498, 1e-05
    %v2500 = vrsqrt.pop %v2499
    %v2501 = vmul.f32 %v2494, %v2500
    %v2502 = vmul.f32 %v2501, %v2145
    %v2503 = vadd.f32 %v2502, %v2154
    %s2504 = scalar_lea.vmem [#allocation7], 384
    %v2505 = vld [vmem:[%s2504] sm:$0xff]
    %v2506 = vld [vmem:[%s2504 + $0x8] sm:$0xf]
    %v2507 = vld [vmem:[%s2504 + $0xc] sm:$0xff]
    %v2508 = vld [vmem:[%s2504 + $0x14] sm:$0xf]
    %v2509 = vld [vmem:[%s2504 + $0x18] sm:$0xff]
    %v2510 = vld [vmem:[%s2504 + $0x20] sm:$0xf]
    %v2511 = vld [vmem:[%s2504 + $0x24] sm:$0xff]
    %v2512 = vld [vmem:[%s2504 + $0x2c] sm:$0xf]
    %v2513 = vld [vmem:[%s2504 + $0x30] sm:$0xff]
    %v2514 = vld [vmem:[%s2504 + $0x38] sm:$0xf]
    %v2515 = vld [vmem:[%s2504 + $0x3c] sm:$0xff]
    %v2516 = vld [vmem:[%s2504 + $0x44] sm:$0xf]
    %v2517 = vld [vmem:[%s2504 + $0x48] sm:$0xff]
    %v2518 = vld [vmem:[%s2504 + $0x50] sm:$0xf]
    %v2519 = vld [vmem:[%s2504 + $0x54] sm:$0xff]
    %v2520 = vld [vmem:[%s2504 + $0x5c] sm:$0xf]
    %v2521 = vld [vmem:[%s2504 + $0x60] sm:$0xff]
    %v2522 = vld [vmem:[%s2504 + $0x68] sm:$0xf]
    %v2523 = vld [vmem:[%s2504 + $0x6c] sm:$0xff]
    %v2524 = vld [vmem:[%s2504 + $0x74] sm:$0xf]
    %v2525 = vld [vmem:[%s2504 + $0x78] sm:$0xff]
    %v2526 = vld [vmem:[%s2504 + $0x80] sm:$0xf]
    %v2527 = vld [vmem:[%s2504 + $0x84] sm:$0xff]
    %v2528 = vld [vmem:[%s2504 + $0x8c] sm:$0xf]
    %v2529 = vld [vmem:[%s2504 + $0x90] sm:$0xff]
    %v2530 = vld [vmem:[%s2504 + $0x98] sm:$0xf]
    %v2531 = vld [vmem:[%s2504 + $0x9c] sm:$0xff]
    %v2532 = vld [vmem:[%s2504 + $0xa4] sm:$0xf]
    %v2533 = vld [vmem:[%s2504 + $0xa8] sm:$0xff]
    %v2534 = vld [vmem:[%s2504 + $0xb0] sm:$0xf]
    %v2535 = vld [vmem:[%s2504 + $0xb4] sm:$0xff]
    %v2536 = vld [vmem:[%s2504 + $0xbc] sm:$0xf]
    %s2537 = scalar_lea.vmem [#allocation8], 128
    %v2538 = vld [vmem:[%s2537] sm:$0xf]
    %v2539 = vld [vmem:[%s2537 + $0x4] sm:$0xf]
    %v2540 = vld [vmem:[%s2537 + $0x8] sm:$0xf]
    %v2541 = vld [vmem:[%s2537 + $0xc] sm:$0xf]
    %v2542 = vld [vmem:[%s2537 + $0x10] sm:$0xf]
    %v2543 = vld [vmem:[%s2537 + $0x14] sm:$0xf]
    %v2544 = vld [vmem:[%s2537 + $0x18] sm:$0xf]
    %v2545 = vld [vmem:[%s2537 + $0x1c] sm:$0xf]
    %v2546 = vld [vmem:[%s2537 + $0x20] sm:$0xf]
    %v2547 = vld [vmem:[%s2537 + $0x24] sm:$0xf]
    %v2548 = vld [vmem:[%s2537 + $0x28] sm:$0xf]
    %v2549 = vld [vmem:[%s2537 + $0x2c] sm:$0xf]
    %v2550 = vld [vmem:[%s2537 + $0x30] sm:$0xf]
    %v2551 = vld [vmem:[%s2537 + $0x34] sm:$0xf]
    %v2552 = vld [vmem:[%s2537 + $0x38] sm:$0xf]
    %v2553 = vld [vmem:[%s2537 + $0x3c] sm:$0xf]
    %v2554 = vpack.c.bf16 %v143, %v143
    %v2587 = vunpack.c.l.b16 %v2505
    %v2588 = vunpack.c.h.b16 %v2505
    %v2589 = vunpack.c.l.b16 %v2506
    %v2590 = vunpack.c.l.b16 %v2507
    %v2591 = vunpack.c.h.b16 %v2507
    %v2592 = vunpack.c.l.b16 %v2508
    %v2593 = vunpack.c.l.b16 %v2509
    %v2594 = vunpack.c.h.b16 %v2509
    %v2595 = vunpack.c.l.b16 %v2510
    %v2596 = vunpack.c.l.b16 %v2511
    %v2597 = vunpack.c.h.b16 %v2511
    %v2598 = vunpack.c.l.b16 %v2512
    %v2599 = vunpack.c.l.b16 %v2513
    %v2600 = vunpack.c.h.b16 %v2513
    %v2601 = vunpack.c.l.b16 %v2514
    %v2602 = vunpack.c.l.b16 %v2515
    %v2603 = vunpack.c.h.b16 %v2515
    %v2604 = vunpack.c.l.b16 %v2516
    %v2605 = vunpack.c.l.b16 %v2517
    %v2606 = vunpack.c.h.b16 %v2517
    %v2607 = vunpack.c.l.b16 %v2518
    %v2608 = vunpack.c.l.b16 %v2519
    %v2609 = vunpack.c.h.b16 %v2519
    %v2610 = vunpack.c.l.b16 %v2520
    %v2611 = vunpack.c.l.b16 %v2521
    %v2612 = vunpack.c.h.b16 %v2521
    %v2613 = vunpack.c.l.b16 %v2522
    %v2614 = vunpack.c.l.b16 %v2523
    %v2615 = vunpack.c.h.b16 %v2523
    %v2616 = vunpack.c.l.b16 %v2524
    %v2617 = vunpack.c.l.b16 %v2525
    %v2618 = vunpack.c.h.b16 %v2525
    %v2619 = vunpack.c.l.b16 %v2526
    %v2620 = vunpack.c.l.b16 %v2527
    %v2621 = vunpack.c.h.b16 %v2527
    %v2622 = vunpack.c.l.b16 %v2528
    %v2623 = vunpack.c.l.b16 %v2529
    %v2624 = vunpack.c.h.b16 %v2529
    %v2625 = vunpack.c.l.b16 %v2530
    %v2626 = vunpack.c.l.b16 %v2531
    %v2627 = vunpack.c.h.b16 %v2531
    %v2628 = vunpack.c.l.b16 %v2532
    %v2629 = vunpack.c.l.b16 %v2533
    %v2630 = vunpack.c.h.b16 %v2533
    %v2631 = vunpack.c.l.b16 %v2534
    %v2632 = vunpack.c.l.b16 %v2535
    %v2633 = vunpack.c.h.b16 %v2535
    %v2634 = vunpack.c.l.b16 %v2536
    %v2635 = vpack.c.b16 %v2590, %v2587
    %v2636 = vpack.c.b16 %v2591, %v2588
    %v2637 = vpack.c.b16 %v2592, %v2589
    %v2638 = vpack.c.b16 %v2596, %v2593
    %v2639 = vpack.c.b16 %v2597, %v2594
    %v2640 = vpack.c.b16 %v2598, %v2595
    %v2641 = vpack.c.b16 %v2602, %v2599
    %v2642 = vpack.c.b16 %v2603, %v2600
    %v2643 = vpack.c.b16 %v2604, %v2601
    %v2644 = vpack.c.b16 %v2608, %v2605
    %v2645 = vpack.c.b16 %v2609, %v2606
    %v2646 = vpack.c.b16 %v2610, %v2607
    %v2647 = vpack.c.b16 %v2614, %v2611
    %v2648 = vpack.c.b16 %v2615, %v2612
    %v2649 = vpack.c.b16 %v2616, %v2613
    %v2650 = vpack.c.b16 %v2620, %v2617
    %v2651 = vpack.c.b16 %v2621, %v2618
    %v2652 = vpack.c.b16 %v2622, %v2619
    %v2653 = vpack.c.b16 %v2626, %v2623
    %v2654 = vpack.c.b16 %v2627, %v2624
    %v2655 = vpack.c.b16 %v2628, %v2625
    %v2656 = vpack.c.b16 %v2632, %v2629
    %v2657 = vpack.c.b16 %v2633, %v2630
    %v2658 = vpack.c.b16 %v2634, %v2631
    %2683 = vmatprep.subr.bf16.mxu0 %v2657
    %2684 = vmatpush1.bf16.msra.mxu0 %v2656
    %2685 = vmatprep.subr.bf16.mxu0 %v2654
    %2686 = vmatpush1.bf16.msra.mxu0 %v2653
    %2687 = vmatprep.subr.bf16.mxu0 %v2651
    %2688 = vmatpush1.bf16.msra.mxu0 %v2650
    %2689 = vmatprep.subr.bf16.mxu0 %v2648
    %2690 = vmatpush1.bf16.msra.mxu0 %v2647
    %2691 = vmatprep.subr.bf16.mxu0 %v2645
    %2692 = vmatpush1.bf16.msra.mxu0 %v2644
    %2693 = vmatprep.subr.bf16.mxu0 %v2642
    %2694 = vmatpush1.bf16.msra.mxu0 %v2641
    %2695 = vmatprep.subr.bf16.mxu0 %v2639
    %2696 = vmatpush1.bf16.msra.mxu0 %v2638
    %2697 = vmatprep.subr.bf16.mxu0 %v2636
    %2698 = vmatpush1.bf16.msra.mxu0 %v2635
    %2699 = vmatprep.subr.bf16.mxu0 0
    %2700 = vmatpush2.bf16.msra.mxu0 0
    %2701 = vmatprep.subr.bf16.mxu0 0
    %2702 = vmatpush2.bf16.msra.mxu0 0
    %2703 = vmatprep.subr.bf16.mxu0 0
    %2704 = vmatpush2.bf16.msra.mxu0 0
    %2705 = vmatprep.subr.bf16.mxu0 0
    %2706 = vmatpush2.bf16.msra.mxu0 0
    %2707 = vmatprep.subr.bf16.mxu0 0
    %2708 = vmatpush2.bf16.msra.mxu0 0
    %2709 = vmatprep.subr.bf16.mxu0 0
    %2710 = vmatpush2.bf16.msra.mxu0 0
    %2711 = vmatprep.subr.bf16.mxu0 0
    %2712 = vmatpush2.bf16.msra.mxu0 0
    %2713 = vmatprep.subr.bf16.mxu0 0
    %2714 = vmatpush2.bf16.msra.mxu0 0
    %2715 = vmatprep.mubr.bf16.mxu0 0
    %2716 = vmatmul.mubr.bf16.gmra.mxu0 %v2554
    %v2717 = vpop.f32.mrf.mxu0
    %v2718 = vadd.f32 0.0, %v2717
    %v2719 = vpop.f32.mrf.mxu0
    %v2720 = vadd.f32 0.0, %v2719
    %v2721 = vpop.f32.mrf.mxu0
    %v2722 = vpop.f32.mrf.mxu0
    %2723 = vdwg.mxu0
    %2724 = vmatprep.subr.bf16.mxu0 0
    %2725 = vmatpush1.bf16.msra.mxu0 %v2658
    %2726 = vmatprep.subr.bf16.mxu0 0
    %2727 = vmatpush1.bf16.msra.mxu0 %v2655
    %2728 = vmatprep.subr.bf16.mxu0 0
    %2729 = vmatpush1.bf16.msra.mxu0 %v2652
    %2730 = vmatprep.subr.bf16.mxu0 0
    %2731 = vmatpush1.bf16.msra.mxu0 %v2649
    %2732 = vmatprep.subr.bf16.mxu0 0
    %2733 = vmatpush1.bf16.msra.mxu0 %v2646
    %2734 = vmatprep.subr.bf16.mxu0 0
    %2735 = vmatpush1.bf16.msra.mxu0 %v2643
    %2736 = vmatprep.subr.bf16.mxu0 0
    %2737 = vmatpush1.bf16.msra.mxu0 %v2640
    %2738 = vmatprep.subr.bf16.mxu0 0
    %2739 = vmatpush1.bf16.msra.mxu0 %v2637
    %2740 = vmatprep.subr.bf16.mxu0 0
    %2741 = vmatpush2.bf16.msra.mxu0 0
    %2742 = vmatprep.subr.bf16.mxu0 0
    %2743 = vmatpush2.bf16.msra.mxu0 0
    %2744 = vmatprep.subr.bf16.mxu0 0
    %2745 = vmatpush2.bf16.msra.mxu0 0
    %2746 = vmatprep.subr.bf16.mxu0 0
    %2747 = vmatpush2.bf16.msra.mxu0 0
    %2748 = vmatprep.subr.bf16.mxu0 0
    %2749 = vmatpush2.bf16.msra.mxu0 0
    %2750 = vmatprep.subr.bf16.mxu0 0
    %2751 = vmatpush2.bf16.msra.mxu0 0
    %2752 = vmatprep.subr.bf16.mxu0 0
    %2753 = vmatpush2.bf16.msra.mxu0 0
    %2754 = vmatprep.subr.bf16.mxu0 0
    %2755 = vmatpush2.bf16.msra.mxu0 0
    %2756 = vmatprep.mubr.bf16.mxu0 0
    %2757 = vmatmul.mubr.bf16.gmra.mxu0 %v2554
    %v2758 = vpop.f32.mrf.mxu0
    %v2759 = vadd.f32 0.0, %v2758
    %v2760 = vpop.f32.mrf.mxu0
    %v2761 = vpop.f32.mrf.mxu0
    %v2762 = vpop.f32.mrf.mxu0
    %2763 = vdwg.mxu0
    %v2764 = vpack.c.bf16 %v2718, %v2718
    %v2765 = vpack.c.bf16 %v2759, %v2759
    %v2767 = vsel %vm404, %v2764, 0
    %v2770 = vsel %vm404, %v2765, 0
    %2772 = vmatprep.subr.bf16.mxu0 0
    %2773 = vmatpush1.bf16.xpose.msra.mxu0 0
    %2774 = vmatprep.subr.bf16.mxu0 0
    %2775 = vmatpush1.bf16.xpose.msra.mxu0 0
    %2776 = vmatprep.subr.bf16.mxu0 0
    %2777 = vmatpush1.bf16.xpose.msra.mxu0 0
    %2778 = vmatprep.subr.bf16.mxu0 0
    %2779 = vmatpush1.bf16.xpose.msra.mxu0 0
    %2780 = vmatprep.subr.bf16.mxu0 0
    %2781 = vmatpush1.bf16.xpose.msra.mxu0 0
    %2782 = vmatprep.subr.bf16.mxu0 0
    %2783 = vmatpush1.bf16.xpose.msra.mxu0 0
    %2784 = vmatprep.subr.bf16.mxu0 0
    %2785 = vmatpush1.bf16.xpose.msra.mxu0 0
    %2786 = vmatprep.subr.bf16.mxu0 0
    %2787 = vmatpush1.bf16.xpose.msra.mxu0 %v2770
    %2788 = vmatprep.subr.bf16.mxu0 0
    %2789 = vmatpush2.bf16.xpose.msra.mxu0 0
    %2790 = vmatprep.subr.bf16.mxu0 0
    %2791 = vmatpush2.bf16.xpose.msra.mxu0 0
    %2792 = vmatprep.subr.bf16.mxu0 0
    %2793 = vmatpush2.bf16.xpose.msra.mxu0 0
    %2794 = vmatprep.subr.bf16.mxu0 0
    %2795 = vmatpush2.bf16.xpose.msra.mxu0 0
    %2796 = vmatprep.subr.bf16.mxu0 0
    %2797 = vmatpush2.bf16.xpose.msra.mxu0 0
    %2798 = vmatprep.subr.bf16.mxu0 0
    %2799 = vmatpush2.bf16.xpose.msra.mxu0 0
    %2800 = vmatprep.subr.bf16.mxu0 0
    %2801 = vmatpush2.bf16.xpose.msra.mxu0 0
    %2802 = vmatprep.subr.bf16.mxu0 0
    %2803 = vmatpush2.bf16.xpose.msra.mxu0 0
    %2804 = vmatprep.mubr.bf16.mxu0 0
    %2805 = vmatmul.mubr.bf16.gmra.mxu0 %v2767
    %v2806 = vpop.f32.mrf.mxu0
    %v2807 = vadd.f32 0.0, %v2806
    %v2808 = vpop.f32.mrf.mxu0
    %v2809 = vpop.f32.mrf.mxu0
    %v2810 = vpop.f32.mrf.mxu0
    %2811 = vdwg.mxu0
    %v2812 = vsel %vm451, %v2807, -inf
    %2813 = vmax.xlane.f32.xlu0 %v2812
    %v2814 = vpop.xlane.xlu0 %2813
    %v2815 = vsub.f32 %v2807, %v2814
    %v2816 = vmul.f32 %v2815, 1.442695
    %v2817 = vpow.pop %v2816
    %v2818 = vsel %vm451, %v2817, 0.0
    %2819 = vadd.xlane.f32.xlu0 %v2818
    %v2820 = vpop.xlane.xlu0 %2819
    %v2821 = vrcp.pop %v2820
    %v2822 = vmul.f32 %v2817, %v2821
    %v2823 = vpack.c.bf16 %v2822, %v2822
    %v2824 = vpack.c.bf16 %v2720, %v2720
    %v2826 = vsel %vm451, %v2823, 0
    %v2829 = vsel %vm468, %v2824, 0
    %2831 = vmatprep.subr.bf16.mxu0 0
    %2832 = vmatpush1.bf16.msra.mxu0 0
    %2833 = vmatprep.subr.bf16.mxu0 0
    %2834 = vmatpush1.bf16.msra.mxu0 0
    %2835 = vmatprep.subr.bf16.mxu0 0
    %2836 = vmatpush1.bf16.msra.mxu0 0
    %2837 = vmatprep.subr.bf16.mxu0 0
    %2838 = vmatpush1.bf16.msra.mxu0 0
    %2839 = vmatprep.subr.bf16.mxu0 0
    %2840 = vmatpush1.bf16.msra.mxu0 0
    %2841 = vmatprep.subr.bf16.mxu0 0
    %2842 = vmatpush1.bf16.msra.mxu0 0
    %2843 = vmatprep.subr.bf16.mxu0 0
    %2844 = vmatpush1.bf16.msra.mxu0 0
    %2845 = vmatprep.subr.bf16.mxu0 0
    %2846 = vmatpush1.bf16.msra.mxu0 %v2829
    %2847 = vmatprep.subr.bf16.mxu0 0
    %2848 = vmatpush2.bf16.msra.mxu0 0
    %2849 = vmatprep.subr.bf16.mxu0 0
    %2850 = vmatpush2.bf16.msra.mxu0 0
    %2851 = vmatprep.subr.bf16.mxu0 0
    %2852 = vmatpush2.bf16.msra.mxu0 0
    %2853 = vmatprep.subr.bf16.mxu0 0
    %2854 = vmatpush2.bf16.msra.mxu0 0
    %2855 = vmatprep.subr.bf16.mxu0 0
    %2856 = vmatpush2.bf16.msra.mxu0 0
    %2857 = vmatprep.subr.bf16.mxu0 0
    %2858 = vmatpush2.bf16.msra.mxu0 0
    %2859 = vmatprep.subr.bf16.mxu0 0
    %2860 = vmatpush2.bf16.msra.mxu0 0
    %2861 = vmatprep.subr.bf16.mxu0 0
    %2862 = vmatpush2.bf16.msra.mxu0 0
    %2863 = vmatprep.mubr.bf16.mxu0 0
    %2864 = vmatmul.mubr.bf16.gmra.mxu0 %v2826
    %v2865 = vpop.f32.mrf.mxu0
    %v2866 = vadd.f32 0.0, %v2865
    %v2867 = vpop.f32.mrf.mxu0
    %v2868 = vpop.f32.mrf.mxu0
    %v2869 = vpop.f32.mrf.mxu0
    %2870 = vdwg.mxu0
    %2872 = vrot.lane.b32.xlu0 %v2764, 96
    %v2873 = vpop.permute.xlu0 %2872
    %2875 = vrot.lane.b32.xlu0 %v2765, 96
    %v2876 = vpop.permute.xlu0 %2875
    %v2878 = vsel %vm404, %v2873, 0
    %v2881 = vsel %vm404, %v2876, 0
    %2883 = vmatprep.subr.bf16.mxu0 0
    %2884 = vmatpush1.bf16.xpose.msra.mxu0 0
    %2885 = vmatprep.subr.bf16.mxu0 0
    %2886 = vmatpush1.bf16.xpose.msra.mxu0 0
    %2887 = vmatprep.subr.bf16.mxu0 0
    %2888 = vmatpush1.bf16.xpose.msra.mxu0 0
    %2889 = vmatprep.subr.bf16.mxu0 0
    %2890 = vmatpush1.bf16.xpose.msra.mxu0 0
    %2891 = vmatprep.subr.bf16.mxu0 0
    %2892 = vmatpush1.bf16.xpose.msra.mxu0 0
    %2893 = vmatprep.subr.bf16.mxu0 0
    %2894 = vmatpush1.bf16.xpose.msra.mxu0 0
    %2895 = vmatprep.subr.bf16.mxu0 0
    %2896 = vmatpush1.bf16.xpose.msra.mxu0 0
    %2897 = vmatprep.subr.bf16.mxu0 0
    %2898 = vmatpush1.bf16.xpose.msra.mxu0 %v2881
    %2899 = vmatprep.subr.bf16.mxu0 0
    %2900 = vmatpush2.bf16.xpose.msra.mxu0 0
    %2901 = vmatprep.subr.bf16.mxu0 0
    %2902 = vmatpush2.bf16.xpose.msra.mxu0 0
    %2903 = vmatprep.subr.bf16.mxu0 0
    %2904 = vmatpush2.bf16.xpose.msra.mxu0 0
    %2905 = vmatprep.subr.bf16.mxu0 0
    %2906 = vmatpush2.bf16.xpose.msra.mxu0 0
    %2907 = vmatprep.subr.bf16.mxu0 0
    %2908 = vmatpush2.bf16.xpose.msra.mxu0 0
    %2909 = vmatprep.subr.bf16.mxu0 0
    %2910 = vmatpush2.bf16.xpose.msra.mxu0 0
    %2911 = vmatprep.subr.bf16.mxu0 0
    %2912 = vmatpush2.bf16.xpose.msra.mxu0 0
    %2913 = vmatprep.subr.bf16.mxu0 0
    %2914 = vmatpush2.bf16.xpose.msra.mxu0 0
    %2915 = vmatprep.mubr.bf16.mxu0 0
    %2916 = vmatmul.mubr.bf16.gmra.mxu0 %v2878
    %v2917 = vpop.f32.mrf.mxu0
    %v2918 = vadd.f32 0.0, %v2917
    %v2919 = vpop.f32.mrf.mxu0
    %v2920 = vpop.f32.mrf.mxu0
    %v2921 = vpop.f32.mrf.mxu0
    %2922 = vdwg.mxu0
    %v2923 = vsel %vm451, %v2918, -inf
    %2924 = vmax.xlane.f32.xlu0 %v2923
    %v2925 = vpop.xlane.xlu0 %2924
    %v2926 = vsub.f32 %v2918, %v2925
    %v2927 = vmul.f32 %v2926, 1.442695
    %v2928 = vpow.pop %v2927
    %v2929 = vsel %vm451, %v2928, 0.0
    %2930 = vadd.xlane.f32.xlu0 %v2929
    %v2931 = vpop.xlane.xlu0 %2930
    %v2932 = vrcp.pop %v2931
    %v2933 = vmul.f32 %v2928, %v2932
    %v2934 = vpack.c.bf16 %v2933, %v2933
    %2936 = vrot.lane.b32.xlu0 %v2824, 96
    %v2937 = vpop.permute.xlu0 %2936
    %v2939 = vsel %vm451, %v2934, 0
    %v2942 = vsel %vm468, %v2937, 0
    %2944 = vmatprep.subr.bf16.mxu0 0
    %2945 = vmatpush1.bf16.msra.mxu0 0
    %2946 = vmatprep.subr.bf16.mxu0 0
    %2947 = vmatpush1.bf16.msra.mxu0 0
    %2948 = vmatprep.subr.bf16.mxu0 0
    %2949 = vmatpush1.bf16.msra.mxu0 0
    %2950 = vmatprep.subr.bf16.mxu0 0
    %2951 = vmatpush1.bf16.msra.mxu0 0
    %2952 = vmatprep.subr.bf16.mxu0 0
    %2953 = vmatpush1.bf16.msra.mxu0 0
    %2954 = vmatprep.subr.bf16.mxu0 0
    %2955 = vmatpush1.bf16.msra.mxu0 0
    %2956 = vmatprep.subr.bf16.mxu0 0
    %2957 = vmatpush1.bf16.msra.mxu0 0
    %2958 = vmatprep.subr.bf16.mxu0 0
    %2959 = vmatpush1.bf16.msra.mxu0 %v2942
    %2960 = vmatprep.subr.bf16.mxu0 0
    %2961 = vmatpush2.bf16.msra.mxu0 0
    %2962 = vmatprep.subr.bf16.mxu0 0
    %2963 = vmatpush2.bf16.msra.mxu0 0
    %2964 = vmatprep.subr.bf16.mxu0 0
    %2965 = vmatpush2.bf16.msra.mxu0 0
    %2966 = vmatprep.subr.bf16.mxu0 0
    %2967 = vmatpush2.bf16.msra.mxu0 0
    %2968 = vmatprep.subr.bf16.mxu0 0
    %2969 = vmatpush2.bf16.msra.mxu0 0
    %2970 = vmatprep.subr.bf16.mxu0 0
    %2971 = vmatpush2.bf16.msra.mxu0 0
    %2972 = vmatprep.subr.bf16.mxu0 0
    %2973 = vmatpush2.bf16.msra.mxu0 0
    %2974 = vmatprep.subr.bf16.mxu0 0
    %2975 = vmatpush2.bf16.msra.mxu0 0
    %2976 = vmatprep.mubr.bf16.mxu0 0
    %2977 = vmatmul.mubr.bf16.gmra.mxu0 %v2939
    %v2978 = vpop.f32.mrf.mxu0
    %v2979 = vadd.f32 0.0, %v2978
    %v2980 = vpop.f32.mrf.mxu0
    %v2981 = vpop.f32.mrf.mxu0
    %v2982 = vpop.f32.mrf.mxu0
    %2983 = vdwg.mxu0
    %2984 = vrot.lane.b32.xlu0 %v2764, 64
    %v2985 = vpop.permute.xlu0 %2984
    %2986 = vrot.lane.b32.xlu0 %v2765, 64
    %v2987 = vpop.permute.xlu0 %2986
    %v2989 = vsel %vm404, %v2985, 0
    %v2992 = vsel %vm404, %v2987, 0
    %2994 = vmatprep.subr.bf16.mxu0 0
    %2995 = vmatpush1.bf16.xpose.msra.mxu0 0
    %2996 = vmatprep.subr.bf16.mxu0 0
    %2997 = vmatpush1.bf16.xpose.msra.mxu0 0
    %2998 = vmatprep.subr.bf16.mxu0 0
    %2999 = vmatpush1.bf16.xpose.msra.mxu0 0
    %3000 = vmatprep.subr.bf16.mxu0 0
    %3001 = vmatpush1.bf16.xpose.msra.mxu0 0
    %3002 = vmatprep.subr.bf16.mxu0 0
    %3003 = vmatpush1.bf16.xpose.msra.mxu0 0
    %3004 = vmatprep.subr.bf16.mxu0 0
    %3005 = vmatpush1.bf16.xpose.msra.mxu0 0
    %3006 = vmatprep.subr.bf16.mxu0 0
    %3007 = vmatpush1.bf16.xpose.msra.mxu0 0
    %3008 = vmatprep.subr.bf16.mxu0 0
    %3009 = vmatpush1.bf16.xpose.msra.mxu0 %v2992
    %3010 = vmatprep.subr.bf16.mxu0 0
    %3011 = vmatpush2.bf16.xpose.msra.mxu0 0
    %3012 = vmatprep.subr.bf16.mxu0 0
    %3013 = vmatpush2.bf16.xpose.msra.mxu0 0
    %3014 = vmatprep.subr.bf16.mxu0 0
    %3015 = vmatpush2.bf16.xpose.msra.mxu0 0
    %3016 = vmatprep.subr.bf16.mxu0 0
    %3017 = vmatpush2.bf16.xpose.msra.mxu0 0
    %3018 = vmatprep.subr.bf16.mxu0 0
    %3019 = vmatpush2.bf16.xpose.msra.mxu0 0
    %3020 = vmatprep.subr.bf16.mxu0 0
    %3021 = vmatpush2.bf16.xpose.msra.mxu0 0
    %3022 = vmatprep.subr.bf16.mxu0 0
    %3023 = vmatpush2.bf16.xpose.msra.mxu0 0
    %3024 = vmatprep.subr.bf16.mxu0 0
    %3025 = vmatpush2.bf16.xpose.msra.mxu0 0
    %3026 = vmatprep.mubr.bf16.mxu0 0
    %3027 = vmatmul.mubr.bf16.gmra.mxu0 %v2989
    %v3028 = vpop.f32.mrf.mxu0
    %v3029 = vadd.f32 0.0, %v3028
    %v3030 = vpop.f32.mrf.mxu0
    %v3031 = vpop.f32.mrf.mxu0
    %v3032 = vpop.f32.mrf.mxu0
    %3033 = vdwg.mxu0
    %v3034 = vsel %vm451, %v3029, -inf
    %3035 = vmax.xlane.f32.xlu0 %v3034
    %v3036 = vpop.xlane.xlu0 %3035
    %v3037 = vsub.f32 %v3029, %v3036
    %v3038 = vmul.f32 %v3037, 1.442695
    %v3039 = vpow.pop %v3038
    %v3040 = vsel %vm451, %v3039, 0.0
    %3041 = vadd.xlane.f32.xlu0 %v3040
    %v3042 = vpop.xlane.xlu0 %3041
    %v3043 = vrcp.pop %v3042
    %v3044 = vmul.f32 %v3039, %v3043
    %v3045 = vpack.c.bf16 %v3044, %v3044
    %3046 = vrot.lane.b32.xlu0 %v2824, 64
    %v3047 = vpop.permute.xlu0 %3046
    %v3049 = vsel %vm451, %v3045, 0
    %v3052 = vsel %vm468, %v3047, 0
    %3054 = vmatprep.subr.bf16.mxu0 0
    %3055 = vmatpush1.bf16.msra.mxu0 0
    %3056 = vmatprep.subr.bf16.mxu0 0
    %3057 = vmatpush1.bf16.msra.mxu0 0
    %3058 = vmatprep.subr.bf16.mxu0 0
    %3059 = vmatpush1.bf16.msra.mxu0 0
    %3060 = vmatprep.subr.bf16.mxu0 0
    %3061 = vmatpush1.bf16.msra.mxu0 0
    %3062 = vmatprep.subr.bf16.mxu0 0
    %3063 = vmatpush1.bf16.msra.mxu0 0
    %3064 = vmatprep.subr.bf16.mxu0 0
    %3065 = vmatpush1.bf16.msra.mxu0 0
    %3066 = vmatprep.subr.bf16.mxu0 0
    %3067 = vmatpush1.bf16.msra.mxu0 0
    %3068 = vmatprep.subr.bf16.mxu0 0
    %3069 = vmatpush1.bf16.msra.mxu0 %v3052
    %3070 = vmatprep.subr.bf16.mxu0 0
    %3071 = vmatpush2.bf16.msra.mxu0 0
    %3072 = vmatprep.subr.bf16.mxu0 0
    %3073 = vmatpush2.bf16.msra.mxu0 0
    %3074 = vmatprep.subr.bf16.mxu0 0
    %3075 = vmatpush2.bf16.msra.mxu0 0
    %3076 = vmatprep.subr.bf16.mxu0 0
    %3077 = vmatpush2.bf16.msra.mxu0 0
    %3078 = vmatprep.subr.bf16.mxu0 0
    %3079 = vmatpush2.bf16.msra.mxu0 0
    %3080 = vmatprep.subr.bf16.mxu0 0
    %3081 = vmatpush2.bf16.msra.mxu0 0
    %3082 = vmatprep.subr.bf16.mxu0 0
    %3083 = vmatpush2.bf16.msra.mxu0 0
    %3084 = vmatprep.subr.bf16.mxu0 0
    %3085 = vmatpush2.bf16.msra.mxu0 0
    %3086 = vmatprep.mubr.bf16.mxu0 0
    %3087 = vmatmul.mubr.bf16.gmra.mxu0 %v3049
    %v3088 = vpop.f32.mrf.mxu0
    %v3089 = vadd.f32 0.0, %v3088
    %v3090 = vpop.f32.mrf.mxu0
    %v3091 = vpop.f32.mrf.mxu0
    %v3092 = vpop.f32.mrf.mxu0
    %3093 = vdwg.mxu0
    %3094 = vrot.lane.b32.xlu0 %v2764, 32
    %v3095 = vpop.permute.xlu0 %3094
    %3096 = vrot.lane.b32.xlu0 %v2765, 32
    %v3097 = vpop.permute.xlu0 %3096
    %v3099 = vsel %vm404, %v3095, 0
    %v3102 = vsel %vm404, %v3097, 0
    %3104 = vmatprep.subr.bf16.mxu0 0
    %3105 = vmatpush1.bf16.xpose.msra.mxu0 0
    %3106 = vmatprep.subr.bf16.mxu0 0
    %3107 = vmatpush1.bf16.xpose.msra.mxu0 0
    %3108 = vmatprep.subr.bf16.mxu0 0
    %3109 = vmatpush1.bf16.xpose.msra.mxu0 0
    %3110 = vmatprep.subr.bf16.mxu0 0
    %3111 = vmatpush1.bf16.xpose.msra.mxu0 0
    %3112 = vmatprep.subr.bf16.mxu0 0
    %3113 = vmatpush1.bf16.xpose.msra.mxu0 0
    %3114 = vmatprep.subr.bf16.mxu0 0
    %3115 = vmatpush1.bf16.xpose.msra.mxu0 0
    %3116 = vmatprep.subr.bf16.mxu0 0
    %3117 = vmatpush1.bf16.xpose.msra.mxu0 0
    %3118 = vmatprep.subr.bf16.mxu0 0
    %3119 = vmatpush1.bf16.xpose.msra.mxu0 %v3102
    %3120 = vmatprep.subr.bf16.mxu0 0
    %3121 = vmatpush2.bf16.xpose.msra.mxu0 0
    %3122 = vmatprep.subr.bf16.mxu0 0
    %3123 = vmatpush2.bf16.xpose.msra.mxu0 0
    %3124 = vmatprep.subr.bf16.mxu0 0
    %3125 = vmatpush2.bf16.xpose.msra.mxu0 0
    %3126 = vmatprep.subr.bf16.mxu0 0
    %3127 = vmatpush2.bf16.xpose.msra.mxu0 0
    %3128 = vmatprep.subr.bf16.mxu0 0
    %3129 = vmatpush2.bf16.xpose.msra.mxu0 0
    %3130 = vmatprep.subr.bf16.mxu0 0
    %3131 = vmatpush2.bf16.xpose.msra.mxu0 0
    %3132 = vmatprep.subr.bf16.mxu0 0
    %3133 = vmatpush2.bf16.xpose.msra.mxu0 0
    %3134 = vmatprep.subr.bf16.mxu0 0
    %3135 = vmatpush2.bf16.xpose.msra.mxu0 0
    %3136 = vmatprep.mubr.bf16.mxu0 0
    %3137 = vmatmul.mubr.bf16.gmra.mxu0 %v3099
    %v3138 = vpop.f32.mrf.mxu0
    %v3139 = vadd.f32 0.0, %v3138
    %v3140 = vpop.f32.mrf.mxu0
    %v3141 = vpop.f32.mrf.mxu0
    %v3142 = vpop.f32.mrf.mxu0
    %3143 = vdwg.mxu0
    %v3144 = vsel %vm451, %v3139, -inf
    %3145 = vmax.xlane.f32.xlu0 %v3144
    %v3146 = vpop.xlane.xlu0 %3145
    %v3147 = vsub.f32 %v3139, %v3146
    %v3148 = vmul.f32 %v3147, 1.442695
    %v3149 = vpow.pop %v3148
    %v3150 = vsel %vm451, %v3149, 0.0
    %3151 = vadd.xlane.f32.xlu0 %v3150
    %v3152 = vpop.xlane.xlu0 %3151
    %v3153 = vrcp.pop %v3152
    %v3154 = vmul.f32 %v3149, %v3153
    %v3155 = vpack.c.bf16 %v3154, %v3154
    %3156 = vrot.lane.b32.xlu0 %v2824, 32
    %v3157 = vpop.permute.xlu0 %3156
    %v3159 = vsel %vm451, %v3155, 0
    %v3162 = vsel %vm468, %v3157, 0
    %3164 = vmatprep.subr.bf16.mxu0 0
    %3165 = vmatpush1.bf16.msra.mxu0 0
    %3166 = vmatprep.subr.bf16.mxu0 0
    %3167 = vmatpush1.bf16.msra.mxu0 0
    %3168 = vmatprep.subr.bf16.mxu0 0
    %3169 = vmatpush1.bf16.msra.mxu0 0
    %3170 = vmatprep.subr.bf16.mxu0 0
    %3171 = vmatpush1.bf16.msra.mxu0 0
    %3172 = vmatprep.subr.bf16.mxu0 0
    %3173 = vmatpush1.bf16.msra.mxu0 0
    %3174 = vmatprep.subr.bf16.mxu0 0
    %3175 = vmatpush1.bf16.msra.mxu0 0
    %3176 = vmatprep.subr.bf16.mxu0 0
    %3177 = vmatpush1.bf16.msra.mxu0 0
    %3178 = vmatprep.subr.bf16.mxu0 0
    %3179 = vmatpush1.bf16.msra.mxu0 %v3162
    %3180 = vmatprep.subr.bf16.mxu0 0
    %3181 = vmatpush2.bf16.msra.mxu0 0
    %3182 = vmatprep.subr.bf16.mxu0 0
    %3183 = vmatpush2.bf16.msra.mxu0 0
    %3184 = vmatprep.subr.bf16.mxu0 0
    %3185 = vmatpush2.bf16.msra.mxu0 0
    %3186 = vmatprep.subr.bf16.mxu0 0
    %3187 = vmatpush2.bf16.msra.mxu0 0
    %3188 = vmatprep.subr.bf16.mxu0 0
    %3189 = vmatpush2.bf16.msra.mxu0 0
    %3190 = vmatprep.subr.bf16.mxu0 0
    %3191 = vmatpush2.bf16.msra.mxu0 0
    %3192 = vmatprep.subr.bf16.mxu0 0
    %3193 = vmatpush2.bf16.msra.mxu0 0
    %3194 = vmatprep.subr.bf16.mxu0 0
    %3195 = vmatpush2.bf16.msra.mxu0 0
    %3196 = vmatprep.mubr.bf16.mxu0 0
    %3197 = vmatmul.mubr.bf16.gmra.mxu0 %v3159
    %v3198 = vpop.f32.mrf.mxu0
    %v3199 = vadd.f32 0.0, %v3198
    %v3200 = vpop.f32.mrf.mxu0
    %v3201 = vpop.f32.mrf.mxu0
    %v3202 = vpop.f32.mrf.mxu0
    %3203 = vdwg.mxu0
    %3205 = vrot.lane.b32.xlu0 %v2979, 32
    %v3206 = vpop.permute.xlu0 %3205
    %3209 = vrot.lane.b32.xlu0 %v3089, 64
    %v3210 = vpop.permute.xlu0 %3209
    %3213 = vrot.lane.b32.xlu0 %v3199, 96
    %v3214 = vpop.permute.xlu0 %3213
    %v3216 = vsel %vm404, %v2866, %v3206
    %v3217 = vsel %vm858, %v3216, %v3210
    %v3218 = vsel %vm860, %v3217, %v3214
    %v3219 = vpack.c.bf16 %v3218, %v3218
    %v3236 = vunpack.c.l.b16 %v2538
    %v3237 = vunpack.c.l.b16 %v2539
    %v3238 = vunpack.c.l.b16 %v2540
    %v3239 = vunpack.c.l.b16 %v2541
    %v3240 = vunpack.c.l.b16 %v2542
    %v3241 = vunpack.c.l.b16 %v2543
    %v3242 = vunpack.c.l.b16 %v2544
    %v3243 = vunpack.c.l.b16 %v2545
    %v3244 = vunpack.c.l.b16 %v2546
    %v3245 = vunpack.c.l.b16 %v2547
    %v3246 = vunpack.c.l.b16 %v2548
    %v3247 = vunpack.c.l.b16 %v2549
    %v3248 = vunpack.c.l.b16 %v2550
    %v3249 = vunpack.c.l.b16 %v2551
    %v3250 = vunpack.c.l.b16 %v2552
    %v3251 = vunpack.c.l.b16 %v2553
    %v3252 = vpack.c.b16 %v3237, %v3236
    %v3253 = vpack.c.b16 %v3239, %v3238
    %v3254 = vpack.c.b16 %v3241, %v3240
    %v3255 = vpack.c.b16 %v3243, %v3242
    %v3256 = vpack.c.b16 %v3245, %v3244
    %v3257 = vpack.c.b16 %v3247, %v3246
    %v3258 = vpack.c.b16 %v3249, %v3248
    %v3259 = vpack.c.b16 %v3251, %v3250
    %3268 = vmatprep.subr.bf16.mxu0 0
    %3269 = vmatpush1.bf16.msra.mxu0 %v3259
    %3270 = vmatprep.subr.bf16.mxu0 0
    %3271 = vmatpush1.bf16.msra.mxu0 %v3258
    %3272 = vmatprep.subr.bf16.mxu0 0
    %3273 = vmatpush1.bf16.msra.mxu0 %v3257
    %3274 = vmatprep.subr.bf16.mxu0 0
    %3275 = vmatpush1.bf16.msra.mxu0 %v3256
    %3276 = vmatprep.subr.bf16.mxu0 0
    %3277 = vmatpush1.bf16.msra.mxu0 %v3255
    %3278 = vmatprep.subr.bf16.mxu0 0
    %3279 = vmatpush1.bf16.msra.mxu0 %v3254
    %3280 = vmatprep.subr.bf16.mxu0 0
    %3281 = vmatpush1.bf16.msra.mxu0 %v3253
    %3282 = vmatprep.subr.bf16.mxu0 0
    %3283 = vmatpush1.bf16.msra.mxu0 %v3252
    %3284 = vmatprep.subr.bf16.mxu0 0
    %3285 = vmatpush2.bf16.msra.mxu0 0
    %3286 = vmatprep.subr.bf16.mxu0 0
    %3287 = vmatpush2.bf16.msra.mxu0 0
    %3288 = vmatprep.subr.bf16.mxu0 0
    %3289 = vmatpush2.bf16.msra.mxu0 0
    %3290 = vmatprep.subr.bf16.mxu0 0
    %3291 = vmatpush2.bf16.msra.mxu0 0
    %3292 = vmatprep.subr.bf16.mxu0 0
    %3293 = vmatpush2.bf16.msra.mxu0 0
    %3294 = vmatprep.subr.bf16.mxu0 0
    %3295 = vmatpush2.bf16.msra.mxu0 0
    %3296 = vmatprep.subr.bf16.mxu0 0
    %3297 = vmatpush2.bf16.msra.mxu0 0
    %3298 = vmatprep.subr.bf16.mxu0 0
    %3299 = vmatpush2.bf16.msra.mxu0 0
    %3300 = vmatprep.mubr.bf16.mxu0 0
    %3301 = vmatmul.mubr.bf16.gmra.mxu0 %v3219
    %v3302 = vpop.f32.mrf.mxu0
    %v3303 = vadd.f32 0.0, %v3302
    %v3304 = vpop.f32.mrf.mxu0
    %v3305 = vpop.f32.mrf.mxu0
    %v3306 = vpop.f32.mrf.mxu0
    %3307 = vdwg.mxu0
    %v3308 = vadd.f32 %v143, %v3303
    %3309 = vadd.xlane.f32.xlu0 %v3308
    %v3310 = vpop.xlane.xlu0 %3309
    %v3311 = vmul.f32 %v3310, %v954
    %v3312 = vsub.f32 %v3308, %v3311
    %v3313 = vmul.f32 %v3312, %v3312
    %3314 = vadd.xlane.f32.xlu0 %v3313
    %v3315 = vpop.xlane.xlu0 %3314
    %v3316 = vmul.f32 %v3315, %v954
    %v3317 = vadd.f32 %v3316, 1e-05
    %v3318 = vrsqrt.pop %v3317
    %v3319 = vmul.f32 %v3312, %v3318
    %s3320 = scalar_lea.vmem %s8, 2
    %v3321 = vld [vmem:[%s3320] sm:$0x1]
    %v3323 = vlaneseq
    %v3324 = vshrl.u32 %v3323, 7
    %v3325 = vsub.s32 0, %v3324
    %v3326 = vrot.slane %v3321, %v3325
    %v3328 = vmul.f32 %v3319, %v3326
    %s3329 = scalar_lea.vmem [#allocation14], 2
    %v3330 = vld [vmem:[%s3329] sm:$0x1]
    %v3332 = vlaneseq
    %v3333 = vshrl.u32 %v3332, 7
    %v3334 = vsub.s32 0, %v3333
    %v3335 = vrot.slane %v3330, %v3334
    %v3337 = vadd.f32 %v3328, %v3335
    %v3338 = vpack.c.bf16 %v2503, %v2503
    %3339 = vmatprep.subr.bf16.mxu0 %v2657
    %3340 = vmatpush1.bf16.msra.mxu0 %v2656
    %3341 = vmatprep.subr.bf16.mxu0 %v2654
    %3342 = vmatpush1.bf16.msra.mxu0 %v2653
    %3343 = vmatprep.subr.bf16.mxu0 %v2651
    %3344 = vmatpush1.bf16.msra.mxu0 %v2650
    %3345 = vmatprep.subr.bf16.mxu0 %v2648
    %3346 = vmatpush1.bf16.msra.mxu0 %v2647
    %3347 = vmatprep.subr.bf16.mxu0 %v2645
    %3348 = vmatpush1.bf16.msra.mxu0 %v2644
    %3349 = vmatprep.subr.bf16.mxu0 %v2642
    %3350 = vmatpush1.bf16.msra.mxu0 %v2641
    %3351 = vmatprep.subr.bf16.mxu0 %v2639
    %3352 = vmatpush1.bf16.msra.mxu0 %v2638
    %3353 = vmatprep.subr.bf16.mxu0 %v2636
    %3354 = vmatpush1.bf16.msra.mxu0 %v2635
    %3355 = vmatprep.subr.bf16.mxu0 0
    %3356 = vmatpush2.bf16.msra.mxu0 0
    %3357 = vmatprep.subr.bf16.mxu0 0
    %3358 = vmatpush2.bf16.msra.mxu0 0
    %3359 = vmatprep.subr.bf16.mxu0 0
    %3360 = vmatpush2.bf16.msra.mxu0 0
    %3361 = vmatprep.subr.bf16.mxu0 0
    %3362 = vmatpush2.bf16.msra.mxu0 0
    %3363 = vmatprep.subr.bf16.mxu0 0
    %3364 = vmatpush2.bf16.msra.mxu0 0
    %3365 = vmatprep.subr.bf16.mxu0 0
    %3366 = vmatpush2.bf16.msra.mxu0 0
    %3367 = vmatprep.subr.bf16.mxu0 0
    %3368 = vmatpush2.bf16.msra.mxu0 0
    %3369 = vmatprep.subr.bf16.mxu0 0
    %3370 = vmatpush2.bf16.msra.mxu0 0
    %3371 = vmatprep.mubr.bf16.mxu0 0
    %3372 = vmatmul.mubr.bf16.gmra.mxu0 %v3338
    %v3373 = vpop.f32.mrf.mxu0
    %v3374 = vadd.f32 0.0, %v3373
    %v3375 = vpop.f32.mrf.mxu0
    %v3376 = vadd.f32 0.0, %v3375
    %v3377 = vpop.f32.mrf.mxu0
    %v3378 = vpop.f32.mrf.mxu0
    %3379 = vdwg.mxu0
    %v3380 = vpack.c.bf16 %v3337, %v3337
    %3381 = vmatprep.subr.bf16.mxu0 0
    %3382 = vmatpush1.bf16.msra.mxu0 %v2658
    %3383 = vmatprep.subr.bf16.mxu0 0
    %3384 = vmatpush1.bf16.msra.mxu0 %v2655
    %3385 = vmatprep.subr.bf16.mxu0 0
    %3386 = vmatpush1.bf16.msra.mxu0 %v2652
    %3387 = vmatprep.subr.bf16.mxu0 0
    %3388 = vmatpush1.bf16.msra.mxu0 %v2649
    %3389 = vmatprep.subr.bf16.mxu0 0
    %3390 = vmatpush1.bf16.msra.mxu0 %v2646
    %3391 = vmatprep.subr.bf16.mxu0 0
    %3392 = vmatpush1.bf16.msra.mxu0 %v2643
    %3393 = vmatprep.subr.bf16.mxu0 0
    %3394 = vmatpush1.bf16.msra.mxu0 %v2640
    %3395 = vmatprep.subr.bf16.mxu0 0
    %3396 = vmatpush1.bf16.msra.mxu0 %v2637
    %3397 = vmatprep.subr.bf16.mxu0 0
    %3398 = vmatpush2.bf16.msra.mxu0 0
    %3399 = vmatprep.subr.bf16.mxu0 0
    %3400 = vmatpush2.bf16.msra.mxu0 0
    %3401 = vmatprep.subr.bf16.mxu0 0
    %3402 = vmatpush2.bf16.msra.mxu0 0
    %3403 = vmatprep.subr.bf16.mxu0 0
    %3404 = vmatpush2.bf16.msra.mxu0 0
    %3405 = vmatprep.subr.bf16.mxu0 0
    %3406 = vmatpush2.bf16.msra.mxu0 0
    %3407 = vmatprep.subr.bf16.mxu0 0
    %3408 = vmatpush2.bf16.msra.mxu0 0
    %3409 = vmatprep.subr.bf16.mxu0 0
    %3410 = vmatpush2.bf16.msra.mxu0 0
    %3411 = vmatprep.subr.bf16.mxu0 0
    %3412 = vmatpush2.bf16.msra.mxu0 0
    %3413 = vmatprep.mubr.bf16.mxu0 0
    %3414 = vmatmul.mubr.bf16.gmra.mxu0 %v3380
    %v3415 = vpop.f32.mrf.mxu0
    %v3416 = vadd.f32 0.0, %v3415
    %v3417 = vpop.f32.mrf.mxu0
    %v3418 = vpop.f32.mrf.mxu0
    %v3419 = vpop.f32.mrf.mxu0
    %3420 = vdwg.mxu0
    %v3421 = vpack.c.bf16 %v3374, %v3374
    %v3422 = vpack.c.bf16 %v3416, %v3416
    %v3424 = vsel %vm404, %v3421, 0
    %v3427 = vsel %vm404, %v3422, 0
    %3429 = vmatprep.subr.bf16.mxu0 0
    %3430 = vmatpush1.bf16.xpose.msra.mxu0 0
    %3431 = vmatprep.subr.bf16.mxu0 0
    %3432 = vmatpush1.bf16.xpose.msra.mxu0 0
    %3433 = vmatprep.subr.bf16.mxu0 0
    %3434 = vmatpush1.bf16.xpose.msra.mxu0 0
    %3435 = vmatprep.subr.bf16.mxu0 0
    %3436 = vmatpush1.bf16.xpose.msra.mxu0 0
    %3437 = vmatprep.subr.bf16.mxu0 0
    %3438 = vmatpush1.bf16.xpose.msra.mxu0 0
    %3439 = vmatprep.subr.bf16.mxu0 0
    %3440 = vmatpush1.bf16.xpose.msra.mxu0 0
    %3441 = vmatprep.subr.bf16.mxu0 0
    %3442 = vmatpush1.bf16.xpose.msra.mxu0 0
    %3443 = vmatprep.subr.bf16.mxu0 0
    %3444 = vmatpush1.bf16.xpose.msra.mxu0 %v3427
    %3445 = vmatprep.subr.bf16.mxu0 0
    %3446 = vmatpush2.bf16.xpose.msra.mxu0 0
    %3447 = vmatprep.subr.bf16.mxu0 0
    %3448 = vmatpush2.bf16.xpose.msra.mxu0 0
    %3449 = vmatprep.subr.bf16.mxu0 0
    %3450 = vmatpush2.bf16.xpose.msra.mxu0 0
    %3451 = vmatprep.subr.bf16.mxu0 0
    %3452 = vmatpush2.bf16.xpose.msra.mxu0 0
    %3453 = vmatprep.subr.bf16.mxu0 0
    %3454 = vmatpush2.bf16.xpose.msra.mxu0 0
    %3455 = vmatprep.subr.bf16.mxu0 0
    %3456 = vmatpush2.bf16.xpose.msra.mxu0 0
    %3457 = vmatprep.subr.bf16.mxu0 0
    %3458 = vmatpush2.bf16.xpose.msra.mxu0 0
    %3459 = vmatprep.subr.bf16.mxu0 0
    %3460 = vmatpush2.bf16.xpose.msra.mxu0 0
    %3461 = vmatprep.mubr.bf16.mxu0 0
    %3462 = vmatmul.mubr.bf16.gmra.mxu0 %v3424
    %v3463 = vpop.f32.mrf.mxu0
    %v3464 = vadd.f32 0.0, %v3463
    %v3465 = vpop.f32.mrf.mxu0
    %v3466 = vpop.f32.mrf.mxu0
    %v3467 = vpop.f32.mrf.mxu0
    %3468 = vdwg.mxu0
    %v3469 = vsel %vm451, %v3464, -inf
    %3470 = vmax.xlane.f32.xlu0 %v3469
    %v3471 = vpop.xlane.xlu0 %3470
    %v3472 = vsub.f32 %v3464, %v3471
    %v3473 = vmul.f32 %v3472, 1.442695
    %v3474 = vpow.pop %v3473
    %v3475 = vsel %vm451, %v3474, 0.0
    %3476 = vadd.xlane.f32.xlu0 %v3475
    %v3477 = vpop.xlane.xlu0 %3476
    %v3478 = vrcp.pop %v3477
    %v3479 = vmul.f32 %v3474, %v3478
    %v3480 = vpack.c.bf16 %v3479, %v3479
    %v3481 = vpack.c.bf16 %v3376, %v3376
    %v3483 = vsel %vm451, %v3480, 0
    %v3486 = vsel %vm468, %v3481, 0
    %3488 = vmatprep.subr.bf16.mxu0 0
    %3489 = vmatpush1.bf16.msra.mxu0 0
    %3490 = vmatprep.subr.bf16.mxu0 0
    %3491 = vmatpush1.bf16.msra.mxu0 0
    %3492 = vmatprep.subr.bf16.mxu0 0
    %3493 = vmatpush1.bf16.msra.mxu0 0
    %3494 = vmatprep.subr.bf16.mxu0 0
    %3495 = vmatpush1.bf16.msra.mxu0 0
    %3496 = vmatprep.subr.bf16.mxu0 0
    %3497 = vmatpush1.bf16.msra.mxu0 0
    %3498 = vmatprep.subr.bf16.mxu0 0
    %3499 = vmatpush1.bf16.msra.mxu0 0
    %3500 = vmatprep.subr.bf16.mxu0 0
    %3501 = vmatpush1.bf16.msra.mxu0 0
    %3502 = vmatprep.subr.bf16.mxu0 0
    %3503 = vmatpush1.bf16.msra.mxu0 %v3486
    %3504 = vmatprep.subr.bf16.mxu0 0
    %3505 = vmatpush2.bf16.msra.mxu0 0
    %3506 = vmatprep.subr.bf16.mxu0 0
    %3507 = vmatpush2.bf16.msra.mxu0 0
    %3508 = vmatprep.subr.bf16.mxu0 0
    %3509 = vmatpush2.bf16.msra.mxu0 0
    %3510 = vmatprep.subr.bf16.mxu0 0
    %3511 = vmatpush2.bf16.msra.mxu0 0
    %3512 = vmatprep.subr.bf16.mxu0 0
    %3513 = vmatpush2.bf16.msra.mxu0 0
    %3514 = vmatprep.subr.bf16.mxu0 0
    %3515 = vmatpush2.bf16.msra.mxu0 0
    %3516 = vmatprep.subr.bf16.mxu0 0
    %3517 = vmatpush2.bf16.msra.mxu0 0
    %3518 = vmatprep.subr.bf16.mxu0 0
    %3519 = vmatpush2.bf16.msra.mxu0 0
    %3520 = vmatprep.mubr.bf16.mxu0 0
    %3521 = vmatmul.mubr.bf16.gmra.mxu0 %v3483
    %v3522 = vpop.f32.mrf.mxu0
    %v3523 = vadd.f32 0.0, %v3522
    %v3524 = vpop.f32.mrf.mxu0
    %v3525 = vpop.f32.mrf.mxu0
    %v3526 = vpop.f32.mrf.mxu0
    %3527 = vdwg.mxu0
    %3529 = vrot.lane.b32.xlu0 %v3421, 96
    %v3530 = vpop.permute.xlu0 %3529
    %3532 = vrot.lane.b32.xlu0 %v3422, 96
    %v3533 = vpop.permute.xlu0 %3532
    %v3535 = vsel %vm404, %v3530, 0
    %v3538 = vsel %vm404, %v3533, 0
    %3540 = vmatprep.subr.bf16.mxu0 0
    %3541 = vmatpush1.bf16.xpose.msra.mxu0 0
    %3542 = vmatprep.subr.bf16.mxu0 0
    %3543 = vmatpush1.bf16.xpose.msra.mxu0 0
    %3544 = vmatprep.subr.bf16.mxu0 0
    %3545 = vmatpush1.bf16.xpose.msra.mxu0 0
    %3546 = vmatprep.subr.bf16.mxu0 0
    %3547 = vmatpush1.bf16.xpose.msra.mxu0 0
    %3548 = vmatprep.subr.bf16.mxu0 0
    %3549 = vmatpush1.bf16.xpose.msra.mxu0 0
    %3550 = vmatprep.subr.bf16.mxu0 0
    %3551 = vmatpush1.bf16.xpose.msra.mxu0 0
    %3552 = vmatprep.subr.bf16.mxu0 0
    %3553 = vmatpush1.bf16.xpose.msra.mxu0 0
    %3554 = vmatprep.subr.bf16.mxu0 0
    %3555 = vmatpush1.bf16.xpose.msra.mxu0 %v3538
    %3556 = vmatprep.subr.bf16.mxu0 0
    %3557 = vmatpush2.bf16.xpose.msra.mxu0 0
    %3558 = vmatprep.subr.bf16.mxu0 0
    %3559 = vmatpush2.bf16.xpose.msra.mxu0 0
    %3560 = vmatprep.subr.bf16.mxu0 0
    %3561 = vmatpush2.bf16.xpose.msra.mxu0 0
    %3562 = vmatprep.subr.bf16.mxu0 0
    %3563 = vmatpush2.bf16.xpose.msra.mxu0 0
    %3564 = vmatprep.subr.bf16.mxu0 0
    %3565 = vmatpush2.bf16.xpose.msra.mxu0 0
    %3566 = vmatprep.subr.bf16.mxu0 0
    %3567 = vmatpush2.bf16.xpose.msra.mxu0 0
    %3568 = vmatprep.subr.bf16.mxu0 0
    %3569 = vmatpush2.bf16.xpose.msra.mxu0 0
    %3570 = vmatprep.subr.bf16.mxu0 0
    %3571 = vmatpush2.bf16.xpose.msra.mxu0 0
    %3572 = vmatprep.mubr.bf16.mxu0 0
    %3573 = vmatmul.mubr.bf16.gmra.mxu0 %v3535
    %v3574 = vpop.f32.mrf.mxu0
    %v3575 = vadd.f32 0.0, %v3574
    %v3576 = vpop.f32.mrf.mxu0
    %v3577 = vpop.f32.mrf.mxu0
    %v3578 = vpop.f32.mrf.mxu0
    %3579 = vdwg.mxu0
    %v3580 = vsel %vm451, %v3575, -inf
    %3581 = vmax.xlane.f32.xlu0 %v3580
    %v3582 = vpop.xlane.xlu0 %3581
    %v3583 = vsub.f32 %v3575, %v3582
    %v3584 = vmul.f32 %v3583, 1.442695
    %v3585 = vpow.pop %v3584
    %v3586 = vsel %vm451, %v3585, 0.0
    %3587 = vadd.xlane.f32.xlu0 %v3586
    %v3588 = vpop.xlane.xlu0 %3587
    %v3589 = vrcp.pop %v3588
    %v3590 = vmul.f32 %v3585, %v3589
    %v3591 = vpack.c.bf16 %v3590, %v3590
    %3593 = vrot.lane.b32.xlu0 %v3481, 96
    %v3594 = vpop.permute.xlu0 %3593
    %v3596 = vsel %vm451, %v3591, 0
    %v3599 = vsel %vm468, %v3594, 0
    %3601 = vmatprep.subr.bf16.mxu0 0
    %3602 = vmatpush1.bf16.msra.mxu0 0
    %3603 = vmatprep.subr.bf16.mxu0 0
    %3604 = vmatpush1.bf16.msra.mxu0 0
    %3605 = vmatprep.subr.bf16.mxu0 0
    %3606 = vmatpush1.bf16.msra.mxu0 0
    %3607 = vmatprep.subr.bf16.mxu0 0
    %3608 = vmatpush1.bf16.msra.mxu0 0
    %3609 = vmatprep.subr.bf16.mxu0 0
    %3610 = vmatpush1.bf16.msra.mxu0 0
    %3611 = vmatprep.subr.bf16.mxu0 0
    %3612 = vmatpush1.bf16.msra.mxu0 0
    %3613 = vmatprep.subr.bf16.mxu0 0
    %3614 = vmatpush1.bf16.msra.mxu0 0
    %3615 = vmatprep.subr.bf16.mxu0 0
    %3616 = vmatpush1.bf16.msra.mxu0 %v3599
    %3617 = vmatprep.subr.bf16.mxu0 0
    %3618 = vmatpush2.bf16.msra.mxu0 0
    %3619 = vmatprep.subr.bf16.mxu0 0
    %3620 = vmatpush2.bf16.msra.mxu0 0
    %3621 = vmatprep.subr.bf16.mxu0 0
    %3622 = vmatpush2.bf16.msra.mxu0 0
    %3623 = vmatprep.subr.bf16.mxu0 0
    %3624 = vmatpush2.bf16.msra.mxu0 0
    %3625 = vmatprep.subr.bf16.mxu0 0
    %3626 = vmatpush2.bf16.msra.mxu0 0
    %3627 = vmatprep.subr.bf16.mxu0 0
    %3628 = vmatpush2.bf16.msra.mxu0 0
    %3629 = vmatprep.subr.bf16.mxu0 0
    %3630 = vmatpush2.bf16.msra.mxu0 0
    %3631 = vmatprep.subr.bf16.mxu0 0
    %3632 = vmatpush2.bf16.msra.mxu0 0
    %3633 = vmatprep.mubr.bf16.mxu0 0
    %3634 = vmatmul.mubr.bf16.gmra.mxu0 %v3596
    %v3635 = vpop.f32.mrf.mxu0
    %v3636 = vadd.f32 0.0, %v3635
    %v3637 = vpop.f32.mrf.mxu0
    %v3638 = vpop.f32.mrf.mxu0
    %v3639 = vpop.f32.mrf.mxu0
    %3640 = vdwg.mxu0
    %3641 = vrot.lane.b32.xlu0 %v3421, 64
    %v3642 = vpop.permute.xlu0 %3641
    %3643 = vrot.lane.b32.xlu0 %v3422, 64
    %v3644 = vpop.permute.xlu0 %3643
    %v3646 = vsel %vm404, %v3642, 0
    %v3649 = vsel %vm404, %v3644, 0
    %3651 = vmatprep.subr.bf16.mxu0 0
    %3652 = vmatpush1.bf16.xpose.msra.mxu0 0
    %3653 = vmatprep.subr.bf16.mxu0 0
    %3654 = vmatpush1.bf16.xpose.msra.mxu0 0
    %3655 = vmatprep.subr.bf16.mxu0 0
    %3656 = vmatpush1.bf16.xpose.msra.mxu0 0
    %3657 = vmatprep.subr.bf16.mxu0 0
    %3658 = vmatpush1.bf16.xpose.msra.mxu0 0
    %3659 = vmatprep.subr.bf16.mxu0 0
    %3660 = vmatpush1.bf16.xpose.msra.mxu0 0
    %3661 = vmatprep.subr.bf16.mxu0 0
    %3662 = vmatpush1.bf16.xpose.msra.mxu0 0
    %3663 = vmatprep.subr.bf16.mxu0 0
    %3664 = vmatpush1.bf16.xpose.msra.mxu0 0
    %3665 = vmatprep.subr.bf16.mxu0 0
    %3666 = vmatpush1.bf16.xpose.msra.mxu0 %v3649
    %3667 = vmatprep.subr.bf16.mxu0 0
    %3668 = vmatpush2.bf16.xpose.msra.mxu0 0
    %3669 = vmatprep.subr.bf16.mxu0 0
    %3670 = vmatpush2.bf16.xpose.msra.mxu0 0
    %3671 = vmatprep.subr.bf16.mxu0 0
    %3672 = vmatpush2.bf16.xpose.msra.mxu0 0
    %3673 = vmatprep.subr.bf16.mxu0 0
    %3674 = vmatpush2.bf16.xpose.msra.mxu0 0
    %3675 = vmatprep.subr.bf16.mxu0 0
    %3676 = vmatpush2.bf16.xpose.msra.mxu0 0
    %3677 = vmatprep.subr.bf16.mxu0 0
    %3678 = vmatpush2.bf16.xpose.msra.mxu0 0
    %3679 = vmatprep.subr.bf16.mxu0 0
    %3680 = vmatpush2.bf16.xpose.msra.mxu0 0
    %3681 = vmatprep.subr.bf16.mxu0 0
    %3682 = vmatpush2.bf16.xpose.msra.mxu0 0
    %3683 = vmatprep.mubr.bf16.mxu0 0
    %3684 = vmatmul.mubr.bf16.gmra.mxu0 %v3646
    %v3685 = vpop.f32.mrf.mxu0
    %v3686 = vadd.f32 0.0, %v3685
    %v3687 = vpop.f32.mrf.mxu0
    %v3688 = vpop.f32.mrf.mxu0
    %v3689 = vpop.f32.mrf.mxu0
    %3690 = vdwg.mxu0
    %v3691 = vsel %vm451, %v3686, -inf
    %3692 = vmax.xlane.f32.xlu0 %v3691
    %v3693 = vpop.xlane.xlu0 %3692
    %v3694 = vsub.f32 %v3686, %v3693
    %v3695 = vmul.f32 %v3694, 1.442695
    %v3696 = vpow.pop %v3695
    %v3697 = vsel %vm451, %v3696, 0.0
    %3698 = vadd.xlane.f32.xlu0 %v3697
    %v3699 = vpop.xlane.xlu0 %3698
    %v3700 = vrcp.pop %v3699
    %v3701 = vmul.f32 %v3696, %v3700
    %v3702 = vpack.c.bf16 %v3701, %v3701
    %3703 = vrot.lane.b32.xlu0 %v3481, 64
    %v3704 = vpop.permute.xlu0 %3703
    %v3706 = vsel %vm451, %v3702, 0
    %v3709 = vsel %vm468, %v3704, 0
    %3711 = vmatprep.subr.bf16.mxu0 0
    %3712 = vmatpush1.bf16.msra.mxu0 0
    %3713 = vmatprep.subr.bf16.mxu0 0
    %3714 = vmatpush1.bf16.msra.mxu0 0
    %3715 = vmatprep.subr.bf16.mxu0 0
    %3716 = vmatpush1.bf16.msra.mxu0 0
    %3717 = vmatprep.subr.bf16.mxu0 0
    %3718 = vmatpush1.bf16.msra.mxu0 0
    %3719 = vmatprep.subr.bf16.mxu0 0
    %3720 = vmatpush1.bf16.msra.mxu0 0
    %3721 = vmatprep.subr.bf16.mxu0 0
    %3722 = vmatpush1.bf16.msra.mxu0 0
    %3723 = vmatprep.subr.bf16.mxu0 0
    %3724 = vmatpush1.bf16.msra.mxu0 0
    %3725 = vmatprep.subr.bf16.mxu0 0
    %3726 = vmatpush1.bf16.msra.mxu0 %v3709
    %3727 = vmatprep.subr.bf16.mxu0 0
    %3728 = vmatpush2.bf16.msra.mxu0 0
    %3729 = vmatprep.subr.bf16.mxu0 0
    %3730 = vmatpush2.bf16.msra.mxu0 0
    %3731 = vmatprep.subr.bf16.mxu0 0
    %3732 = vmatpush2.bf16.msra.mxu0 0
    %3733 = vmatprep.subr.bf16.mxu0 0
    %3734 = vmatpush2.bf16.msra.mxu0 0
    %3735 = vmatprep.subr.bf16.mxu0 0
    %3736 = vmatpush2.bf16.msra.mxu0 0
    %3737 = vmatprep.subr.bf16.mxu0 0
    %3738 = vmatpush2.bf16.msra.mxu0 0
    %3739 = vmatprep.subr.bf16.mxu0 0
    %3740 = vmatpush2.bf16.msra.mxu0 0
    %3741 = vmatprep.subr.bf16.mxu0 0
    %3742 = vmatpush2.bf16.msra.mxu0 0
    %3743 = vmatprep.mubr.bf16.mxu0 0
    %3744 = vmatmul.mubr.bf16.gmra.mxu0 %v3706
    %v3745 = vpop.f32.mrf.mxu0
    %v3746 = vadd.f32 0.0, %v3745
    %v3747 = vpop.f32.mrf.mxu0
    %v3748 = vpop.f32.mrf.mxu0
    %v3749 = vpop.f32.mrf.mxu0
    %3750 = vdwg.mxu0
    %3751 = vrot.lane.b32.xlu0 %v3421, 32
    %v3752 = vpop.permute.xlu0 %3751
    %3753 = vrot.lane.b32.xlu0 %v3422, 32
    %v3754 = vpop.permute.xlu0 %3753
    %v3756 = vsel %vm404, %v3752, 0
    %v3759 = vsel %vm404, %v3754, 0
    %3761 = vmatprep.subr.bf16.mxu0 0
    %3762 = vmatpush1.bf16.xpose.msra.mxu0 0
    %3763 = vmatprep.subr.bf16.mxu0 0
    %3764 = vmatpush1.bf16.xpose.msra.mxu0 0
    %3765 = vmatprep.subr.bf16.mxu0 0
    %3766 = vmatpush1.bf16.xpose.msra.mxu0 0
    %3767 = vmatprep.subr.bf16.mxu0 0
    %3768 = vmatpush1.bf16.xpose.msra.mxu0 0
    %3769 = vmatprep.subr.bf16.mxu0 0
    %3770 = vmatpush1.bf16.xpose.msra.mxu0 0
    %3771 = vmatprep.subr.bf16.mxu0 0
    %3772 = vmatpush1.bf16.xpose.msra.mxu0 0
    %3773 = vmatprep.subr.bf16.mxu0 0
    %3774 = vmatpush1.bf16.xpose.msra.mxu0 0
    %3775 = vmatprep.subr.bf16.mxu0 0
    %3776 = vmatpush1.bf16.xpose.msra.mxu0 %v3759
    %3777 = vmatprep.subr.bf16.mxu0 0
    %3778 = vmatpush2.bf16.xpose.msra.mxu0 0
    %3779 = vmatprep.subr.bf16.mxu0 0
    %3780 = vmatpush2.bf16.xpose.msra.mxu0 0
    %3781 = vmatprep.subr.bf16.mxu0 0
    %3782 = vmatpush2.bf16.xpose.msra.mxu0 0
    %3783 = vmatprep.subr.bf16.mxu0 0
    %3784 = vmatpush2.bf16.xpose.msra.mxu0 0
    %3785 = vmatprep.subr.bf16.mxu0 0
    %3786 = vmatpush2.bf16.xpose.msra.mxu0 0
    %3787 = vmatprep.subr.bf16.mxu0 0
    %3788 = vmatpush2.bf16.xpose.msra.mxu0 0
    %3789 = vmatprep.subr.bf16.mxu0 0
    %3790 = vmatpush2.bf16.xpose.msra.mxu0 0
    %3791 = vmatprep.subr.bf16.mxu0 0
    %3792 = vmatpush2.bf16.xpose.msra.mxu0 0
    %3793 = vmatprep.mubr.bf16.mxu0 0
    %3794 = vmatmul.mubr.bf16.gmra.mxu0 %v3756
    %v3795 = vpop.f32.mrf.mxu0
    %v3796 = vadd.f32 0.0, %v3795
    %v3797 = vpop.f32.mrf.mxu0
    %v3798 = vpop.f32.mrf.mxu0
    %v3799 = vpop.f32.mrf.mxu0
    %3800 = vdwg.mxu0
    %v3801 = vsel %vm451, %v3796, -inf
    %3802 = vmax.xlane.f32.xlu0 %v3801
    %v3803 = vpop.xlane.xlu0 %3802
    %v3804 = vsub.f32 %v3796, %v3803
    %v3805 = vmul.f32 %v3804, 1.442695
    %v3806 = vpow.pop %v3805
    %v3807 = vsel %vm451, %v3806, 0.0
    %3808 = vadd.xlane.f32.xlu0 %v3807
    %v3809 = vpop.xlane.xlu0 %3808
    %v3810 = vrcp.pop %v3809
    %v3811 = vmul.f32 %v3806, %v3810
    %v3812 = vpack.c.bf16 %v3811, %v3811
    %3813 = vrot.lane.b32.xlu0 %v3481, 32
    %v3814 = vpop.permute.xlu0 %3813
    %v3816 = vsel %vm451, %v3812, 0
    %v3819 = vsel %vm468, %v3814, 0
    %3821 = vmatprep.subr.bf16.mxu0 0
    %3822 = vmatpush1.bf16.msra.mxu0 0
    %3823 = vmatprep.subr.bf16.mxu0 0
    %3824 = vmatpush1.bf16.msra.mxu0 0
    %3825 = vmatprep.subr.bf16.mxu0 0
    %3826 = vmatpush1.bf16.msra.mxu0 0
    %3827 = vmatprep.subr.bf16.mxu0 0
    %3828 = vmatpush1.bf16.msra.mxu0 0
    %3829 = vmatprep.subr.bf16.mxu0 0
    %3830 = vmatpush1.bf16.msra.mxu0 0
    %3831 = vmatprep.subr.bf16.mxu0 0
    %3832 = vmatpush1.bf16.msra.mxu0 0
    %3833 = vmatprep.subr.bf16.mxu0 0
    %3834 = vmatpush1.bf16.msra.mxu0 0
    %3835 = vmatprep.subr.bf16.mxu0 0
    %3836 = vmatpush1.bf16.msra.mxu0 %v3819
    %3837 = vmatprep.subr.bf16.mxu0 0
    %3838 = vmatpush2.bf16.msra.mxu0 0
    %3839 = vmatprep.subr.bf16.mxu0 0
    %3840 = vmatpush2.bf16.msra.mxu0 0
    %3841 = vmatprep.subr.bf16.mxu0 0
    %3842 = vmatpush2.bf16.msra.mxu0 0
    %3843 = vmatprep.subr.bf16.mxu0 0
    %3844 = vmatpush2.bf16.msra.mxu0 0
    %3845 = vmatprep.subr.bf16.mxu0 0
    %3846 = vmatpush2.bf16.msra.mxu0 0
    %3847 = vmatprep.subr.bf16.mxu0 0
    %3848 = vmatpush2.bf16.msra.mxu0 0
    %3849 = vmatprep.subr.bf16.mxu0 0
    %3850 = vmatpush2.bf16.msra.mxu0 0
    %3851 = vmatprep.subr.bf16.mxu0 0
    %3852 = vmatpush2.bf16.msra.mxu0 0
    %3853 = vmatprep.mubr.bf16.mxu0 0
    %3854 = vmatmul.mubr.bf16.gmra.mxu0 %v3816
    %v3855 = vpop.f32.mrf.mxu0
    %v3856 = vadd.f32 0.0, %v3855
    %v3857 = vpop.f32.mrf.mxu0
    %v3858 = vpop.f32.mrf.mxu0
    %v3859 = vpop.f32.mrf.mxu0
    %3860 = vdwg.mxu0
    %3862 = vrot.lane.b32.xlu0 %v3636, 32
    %v3863 = vpop.permute.xlu0 %3862
    %3866 = vrot.lane.b32.xlu0 %v3746, 64
    %v3867 = vpop.permute.xlu0 %3866
    %3870 = vrot.lane.b32.xlu0 %v3856, 96
    %v3871 = vpop.permute.xlu0 %3870
    %v3873 = vsel %vm404, %v3523, %v3863
    %v3874 = vsel %vm858, %v3873, %v3867
    %v3875 = vsel %vm860, %v3874, %v3871
    %v3876 = vpack.c.bf16 %v3875, %v3875
    %3877 = vmatprep.subr.bf16.mxu0 0
    %3878 = vmatpush1.bf16.msra.mxu0 %v3259
    %3879 = vmatprep.subr.bf16.mxu0 0
    %3880 = vmatpush1.bf16.msra.mxu0 %v3258
    %3881 = vmatprep.subr.bf16.mxu0 0
    %3882 = vmatpush1.bf16.msra.mxu0 %v3257
    %3883 = vmatprep.subr.bf16.mxu0 0
    %3884 = vmatpush1.bf16.msra.mxu0 %v3256
    %3885 = vmatprep.subr.bf16.mxu0 0
    %3886 = vmatpush1.bf16.msra.mxu0 %v3255
    %3887 = vmatprep.subr.bf16.mxu0 0
    %3888 = vmatpush1.bf16.msra.mxu0 %v3254
    %3889 = vmatprep.subr.bf16.mxu0 0
    %3890 = vmatpush1.bf16.msra.mxu0 %v3253
    %3891 = vmatprep.subr.bf16.mxu0 0
    %3892 = vmatpush1.bf16.msra.mxu0 %v3252
    %3893 = vmatprep.subr.bf16.mxu0 0
    %3894 = vmatpush2.bf16.msra.mxu0 0
    %3895 = vmatprep.subr.bf16.mxu0 0
    %3896 = vmatpush2.bf16.msra.mxu0 0
    %3897 = vmatprep.subr.bf16.mxu0 0
    %3898 = vmatpush2.bf16.msra.mxu0 0
    %3899 = vmatprep.subr.bf16.mxu0 0
    %3900 = vmatpush2.bf16.msra.mxu0 0
    %3901 = vmatprep.subr.bf16.mxu0 0
    %3902 = vmatpush2.bf16.msra.mxu0 0
    %3903 = vmatprep.subr.bf16.mxu0 0
    %3904 = vmatpush2.bf16.msra.mxu0 0
    %3905 = vmatprep.subr.bf16.mxu0 0
    %3906 = vmatpush2.bf16.msra.mxu0 0
    %3907 = vmatprep.subr.bf16.mxu0 0
    %3908 = vmatpush2.bf16.msra.mxu0 0
    %3909 = vmatprep.mubr.bf16.mxu0 0
    %3910 = vmatmul.mubr.bf16.gmra.mxu0 %v3876
    %v3911 = vpop.f32.mrf.mxu0
    %v3912 = vadd.f32 0.0, %v3911
    %v3913 = vpop.f32.mrf.mxu0
    %v3914 = vpop.f32.mrf.mxu0
    %v3915 = vpop.f32.mrf.mxu0
    %3916 = vdwg.mxu0
    %v3917 = vadd.f32 %v3337, %v3912
    %3918 = vadd.xlane.f32.xlu0 %v3917
    %v3919 = vpop.xlane.xlu0 %3918
    %v3920 = vmul.f32 %v3919, %v954
    %v3921 = vsub.f32 %v3917, %v3920
    %v3922 = vmul.f32 %v3921, %v3921
    %3923 = vadd.xlane.f32.xlu0 %v3922
    %v3924 = vpop.xlane.xlu0 %3923
    %v3925 = vmul.f32 %v3924, %v954
    %v3926 = vadd.f32 %v3925, 1e-05
    %v3927 = vrsqrt.pop %v3926
    %v3928 = vmul.f32 %v3921, %v3927
    %v3929 = vmul.f32 %v3928, %v3326
    %v3930 = vadd.f32 %v3929, %v3335
    %v3931 = vpack.c.bf16 %v3930, %v3930
    %s3932 = scalar_lea.vmem [#allocation10], 256
    %v3933 = vld [vmem:[%s3932] sm:$0xff]
    %v3934 = vld [vmem:[%s3932 + $0x8] sm:$0xff]
    %v3935 = vld [vmem:[%s3932 + $0x10] sm:$0xff]
    %v3936 = vld [vmem:[%s3932 + $0x18] sm:$0xff]
    %v3937 = vld [vmem:[%s3932 + $0x20] sm:$0xff]
    %v3938 = vld [vmem:[%s3932 + $0x28] sm:$0xff]
    %v3939 = vld [vmem:[%s3932 + $0x30] sm:$0xff]
    %v3940 = vld [vmem:[%s3932 + $0x38] sm:$0xff]
    %v3941 = vld [vmem:[%s3932 + $0x40] sm:$0xff]
    %v3942 = vld [vmem:[%s3932 + $0x48] sm:$0xff]
    %v3943 = vld [vmem:[%s3932 + $0x50] sm:$0xff]
    %v3944 = vld [vmem:[%s3932 + $0x58] sm:$0xff]
    %v3945 = vld [vmem:[%s3932 + $0x60] sm:$0xff]
    %v3946 = vld [vmem:[%s3932 + $0x68] sm:$0xff]
    %v3947 = vld [vmem:[%s3932 + $0x70] sm:$0xff]
    %v3948 = vld [vmem:[%s3932 + $0x78] sm:$0xff]
    %s3949 = scalar_lea.vmem [#allocation11], 4
    %v3950 = vld [vmem:[%s3949] sm:$0x3]
    %v3952 = vlaneseq
    %v3953 = vshrl.u32 %v3952, 7
    %v3954 = vsub.s32 0, %v3953
    %v3955 = vrot.slane %v3950, %v3954
    %v3956 = vlaneseq
    %v3957 = vshrl.u32 %v3956, 7
    %v3958 = vsub.s32 1, %v3957
    %v3959 = vrot.slane %v3950, %v3958
    %v3978 = vunpack.c.l.b16 %v3933
    %v3979 = vunpack.c.h.b16 %v3933
    %v3980 = vunpack.c.l.b16 %v3934
    %v3981 = vunpack.c.h.b16 %v3934
    %v3982 = vunpack.c.l.b16 %v3935
    %v3983 = vunpack.c.h.b16 %v3935
    %v3984 = vunpack.c.l.b16 %v3936
    %v3985 = vunpack.c.h.b16 %v3936
    %v3986 = vunpack.c.l.b16 %v3937
    %v3987 = vunpack.c.h.b16 %v3937
    %v3988 = vunpack.c.l.b16 %v3938
    %v3989 = vunpack.c.h.b16 %v3938
    %v3990 = vunpack.c.l.b16 %v3939
    %v3991 = vunpack.c.h.b16 %v3939
    %v3992 = vunpack.c.l.b16 %v3940
    %v3993 = vunpack.c.h.b16 %v3940
    %v3994 = vunpack.c.l.b16 %v3941
    %v3995 = vunpack.c.h.b16 %v3941
    %v3996 = vunpack.c.l.b16 %v3942
    %v3997 = vunpack.c.h.b16 %v3942
    %v3998 = vunpack.c.l.b16 %v3943
    %v3999 = vunpack.c.h.b16 %v3943
    %v4000 = vunpack.c.l.b16 %v3944
    %v4001 = vunpack.c.h.b16 %v3944
    %v4002 = vunpack.c.l.b16 %v3945
    %v4003 = vunpack.c.h.b16 %v3945
    %v4004 = vunpack.c.l.b16 %v3946
    %v4005 = vunpack.c.h.b16 %v3946
    %v4006 = vunpack.c.l.b16 %v3947
    %v4007 = vunpack.c.h.b16 %v3947
    %v4008 = vunpack.c.l.b16 %v3948
    %v4009 = vunpack.c.h.b16 %v3948
    %v4010 = vpack.c.b16 %v3980, %v3978
    %v4011 = vpack.c.b16 %v3981, %v3979
    %v4012 = vpack.c.b16 %v3984, %v3982
    %v4013 = vpack.c.b16 %v3985, %v3983
    %v4014 = vpack.c.b16 %v3988, %v3986
    %v4015 = vpack.c.b16 %v3989, %v3987
    %v4016 = vpack.c.b16 %v3992, %v3990
    %v4017 = vpack.c.b16 %v3993, %v3991
    %v4018 = vpack.c.b16 %v3996, %v3994
    %v4019 = vpack.c.b16 %v3997, %v3995
    %v4020 = vpack.c.b16 %v4000, %v3998
    %v4021 = vpack.c.b16 %v4001, %v3999
    %v4022 = vpack.c.b16 %v4004, %v4002
    %v4023 = vpack.c.b16 %v4005, %v4003
    %v4024 = vpack.c.b16 %v4008, %v4006
    %v4025 = vpack.c.b16 %v4009, %v4007
    %4042 = vmatprep.subr.bf16.mxu0 %v4025
    %4043 = vmatpush1.bf16.msra.mxu0 %v4024
    %4044 = vmatprep.subr.bf16.mxu0 %v4023
    %4045 = vmatpush1.bf16.msra.mxu0 %v4022
    %4046 = vmatprep.subr.bf16.mxu0 %v4021
    %4047 = vmatpush1.bf16.msra.mxu0 %v4020
    %4048 = vmatprep.subr.bf16.mxu0 %v4019
    %4049 = vmatpush1.bf16.msra.mxu0 %v4018
    %4050 = vmatprep.subr.bf16.mxu0 %v4017
    %4051 = vmatpush1.bf16.msra.mxu0 %v4016
    %4052 = vmatprep.subr.bf16.mxu0 %v4015
    %4053 = vmatpush1.bf16.msra.mxu0 %v4014
    %4054 = vmatprep.subr.bf16.mxu0 %v4013
    %4055 = vmatpush1.bf16.msra.mxu0 %v4012
    %4056 = vmatprep.subr.bf16.mxu0 %v4011
    %4057 = vmatpush1.bf16.msra.mxu0 %v4010
    %4058 = vmatprep.subr.bf16.mxu0 0
    %4059 = vmatpush2.bf16.msra.mxu0 0
    %4060 = vmatprep.subr.bf16.mxu0 0
    %4061 = vmatpush2.bf16.msra.mxu0 0
    %4062 = vmatprep.subr.bf16.mxu0 0
    %4063 = vmatpush2.bf16.msra.mxu0 0
    %4064 = vmatprep.subr.bf16.mxu0 0
    %4065 = vmatpush2.bf16.msra.mxu0 0
    %4066 = vmatprep.subr.bf16.mxu0 0
    %4067 = vmatpush2.bf16.msra.mxu0 0
    %4068 = vmatprep.subr.bf16.mxu0 0
    %4069 = vmatpush2.bf16.msra.mxu0 0
    %4070 = vmatprep.subr.bf16.mxu0 0
    %4071 = vmatpush2.bf16.msra.mxu0 0
    %4072 = vmatprep.subr.bf16.mxu0 0
    %4073 = vmatpush2.bf16.msra.mxu0 0
    %4074 = vmatprep.mubr.bf16.mxu0 0
    %4075 = vmatmul.mubr.bf16.gmra.mxu0 %v3931
    %v4076 = vpop.f32.mrf.mxu0
    %v4077 = vadd.f32 %v3955, %v4076
    %v4078 = vpop.f32.mrf.mxu0
    %v4079 = vadd.f32 %v3959, %v4078
    %v4080 = vpop.f32.mrf.mxu0
    %v4081 = vpop.f32.mrf.mxu0
    %4082 = vdwg.mxu0
    %v4083 = vmax.f32 %v4077, 0.0
    %v4084 = vmax.f32 %v4079, 0.0
    %v4085 = vpack.c.bf16 %v4083, %v4083
    %v4086 = vpack.c.bf16 %v4084, %v4084
    %s4087 = scalar_lea.vmem [#allocation13], 256
    %v4088 = vld [vmem:[%s4087] sm:$0xf]
    %v4089 = vld [vmem:[%s4087 + $0x4] sm:$0xf]
    %v4090 = vld [vmem:[%s4087 + $0x8] sm:$0xf]
    %v4091 = vld [vmem:[%s4087 + $0xc] sm:$0xf]
    %v4092 = vld [vmem:[%s4087 + $0x10] sm:$0xf]
    %v4093 = vld [vmem:[%s4087 + $0x14] sm:$0xf]
    %v4094 = vld [vmem:[%s4087 + $0x18] sm:$0xf]
    %v4095 = vld [vmem:[%s4087 + $0x1c] sm:$0xf]
    %v4096 = vld [vmem:[%s4087 + $0x20] sm:$0xf]
    %v4097 = vld [vmem:[%s4087 + $0x24] sm:$0xf]
    %v4098 = vld [vmem:[%s4087 + $0x28] sm:$0xf]
    %v4099 = vld [vmem:[%s4087 + $0x2c] sm:$0xf]
    %v4100 = vld [vmem:[%s4087 + $0x30] sm:$0xf]
    %v4101 = vld [vmem:[%s4087 + $0x34] sm:$0xf]
    %v4102 = vld [vmem:[%s4087 + $0x38] sm:$0xf]
    %v4103 = vld [vmem:[%s4087 + $0x3c] sm:$0xf]
    %v4104 = vld [vmem:[%s4087 + $0x40] sm:$0xf]
    %v4105 = vld [vmem:[%s4087 + $0x44] sm:$0xf]
    %v4106 = vld [vmem:[%s4087 + $0x48] sm:$0xf]
    %v4107 = vld [vmem:[%s4087 + $0x4c] sm:$0xf]
    %v4108 = vld [vmem:[%s4087 + $0x50] sm:$0xf]
    %v4109 = vld [vmem:[%s4087 + $0x54] sm:$0xf]
    %v4110 = vld [vmem:[%s4087 + $0x58] sm:$0xf]
    %v4111 = vld [vmem:[%s4087 + $0x5c] sm:$0xf]
    %v4112 = vld [vmem:[%s4087 + $0x60] sm:$0xf]
    %v4113 = vld [vmem:[%s4087 + $0x64] sm:$0xf]
    %v4114 = vld [vmem:[%s4087 + $0x68] sm:$0xf]
    %v4115 = vld [vmem:[%s4087 + $0x6c] sm:$0xf]
    %v4116 = vld [vmem:[%s4087 + $0x70] sm:$0xf]
    %v4117 = vld [vmem:[%s4087 + $0x74] sm:$0xf]
    %v4118 = vld [vmem:[%s4087 + $0x78] sm:$0xf]
    %v4119 = vld [vmem:[%s4087 + $0x7c] sm:$0xf]
    %s4120 = scalar_lea.vmem %s7, 2
    %v4121 = vld [vmem:[%s4120] sm:$0x1]
    %v4123 = vlaneseq
    %v4124 = vshrl.u32 %v4123, 7
    %v4125 = vsub.s32 0, %v4124
    %v4126 = vrot.slane %v4121, %v4125
    %v4160 = vunpack.c.l.b16 %v4088
    %v4161 = vunpack.c.l.b16 %v4089
    %v4162 = vunpack.c.l.b16 %v4090
    %v4163 = vunpack.c.l.b16 %v4091
    %v4164 = vunpack.c.l.b16 %v4092
    %v4165 = vunpack.c.l.b16 %v4093
    %v4166 = vunpack.c.l.b16 %v4094
    %v4167 = vunpack.c.l.b16 %v4095
    %v4168 = vunpack.c.l.b16 %v4096
    %v4169 = vunpack.c.l.b16 %v4097
    %v4170 = vunpack.c.l.b16 %v4098
    %v4171 = vunpack.c.l.b16 %v4099
    %v4172 = vunpack.c.l.b16 %v4100
    %v4173 = vunpack.c.l.b16 %v4101
    %v4174 = vunpack.c.l.b16 %v4102
    %v4175 = vunpack.c.l.b16 %v4103
    %v4176 = vunpack.c.l.b16 %v4104
    %v4177 = vunpack.c.l.b16 %v4105
    %v4178 = vunpack.c.l.b16 %v4106
    %v4179 = vunpack.c.l.b16 %v4107
    %v4180 = vunpack.c.l.b16 %v4108
    %v4181 = vunpack.c.l.b16 %v4109
    %v4182 = vunpack.c.l.b16 %v4110
    %v4183 = vunpack.c.l.b16 %v4111
    %v4184 = vunpack.c.l.b16 %v4112
    %v4185 = vunpack.c.l.b16 %v4113
    %v4186 = vunpack.c.l.b16 %v4114
    %v4187 = vunpack.c.l.b16 %v4115
    %v4188 = vunpack.c.l.b16 %v4116
    %v4189 = vunpack.c.l.b16 %v4117
    %v4190 = vunpack.c.l.b16 %v4118
    %v4191 = vunpack.c.l.b16 %v4119
    %v4192 = vpack.c.b16 %v4161, %v4160
    %v4193 = vpack.c.b16 %v4163, %v4162
    %v4194 = vpack.c.b16 %v4165, %v4164
    %v4195 = vpack.c.b16 %v4167, %v4166
    %v4196 = vpack.c.b16 %v4169, %v4168
    %v4197 = vpack.c.b16 %v4171, %v4170
    %v4198 = vpack.c.b16 %v4173, %v4172
    %v4199 = vpack.c.b16 %v4175, %v4174
    %v4200 = vpack.c.b16 %v4177, %v4176
    %v4201 = vpack.c.b16 %v4179, %v4178
    %v4202 = vpack.c.b16 %v4181, %v4180
    %v4203 = vpack.c.b16 %v4183, %v4182
    %v4204 = vpack.c.b16 %v4185, %v4184
    %v4205 = vpack.c.b16 %v4187, %v4186
    %v4206 = vpack.c.b16 %v4189, %v4188
    %v4207 = vpack.c.b16 %v4191, %v4190
    %4224 = vmatprep.subr.bf16.mxu0 0
    %4225 = vmatpush1.bf16.msra.mxu0 %v4199
    %4226 = vmatprep.subr.bf16.mxu0 0
    %4227 = vmatpush1.bf16.msra.mxu0 %v4198
    %4228 = vmatprep.subr.bf16.mxu0 0
    %4229 = vmatpush1.bf16.msra.mxu0 %v4197
    %4230 = vmatprep.subr.bf16.mxu0 0
    %4231 = vmatpush1.bf16.msra.mxu0 %v4196
    %4232 = vmatprep.subr.bf16.mxu0 0
    %4233 = vmatpush1.bf16.msra.mxu0 %v4195
    %4234 = vmatprep.subr.bf16.mxu0 0
    %4235 = vmatpush1.bf16.msra.mxu0 %v4194
    %4236 = vmatprep.subr.bf16.mxu0 0
    %4237 = vmatpush1.bf16.msra.mxu0 %v4193
    %4238 = vmatprep.subr.bf16.mxu0 0
    %4239 = vmatpush1.bf16.msra.mxu0 %v4192
    %4240 = vmatprep.subr.bf16.mxu0 0
    %4241 = vmatpush2.bf16.msra.mxu0 %v4207
    %4242 = vmatprep.subr.bf16.mxu0 0
    %4243 = vmatpush2.bf16.msra.mxu0 %v4206
    %4244 = vmatprep.subr.bf16.mxu0 0
    %4245 = vmatpush2.bf16.msra.mxu0 %v4205
    %4246 = vmatprep.subr.bf16.mxu0 0
    %4247 = vmatpush2.bf16.msra.mxu0 %v4204
    %4248 = vmatprep.subr.bf16.mxu0 0
    %4249 = vmatpush2.bf16.msra.mxu0 %v4203
    %4250 = vmatprep.subr.bf16.mxu0 0
    %4251 = vmatpush2.bf16.msra.mxu0 %v4202
    %4252 = vmatprep.subr.bf16.mxu0 0
    %4253 = vmatpush2.bf16.msra.mxu0 %v4201
    %4254 = vmatprep.subr.bf16.mxu0 0
    %4255 = vmatpush2.bf16.msra.mxu0 %v4200
    %4256 = vmatprep.mubr.bf16.mxu0 %v4086
    %4257 = vmatmul.mubr.bf16.gmra.mxu0 %v4085
    %v4258 = vpop.f32.mrf.mxu0
    %v4259 = vadd.f32 %v4126, %v4258
    %v4260 = vpop.f32.mrf.mxu0
    %v4261 = vpop.f32.mrf.mxu0
    %v4262 = vpop.f32.mrf.mxu0
    %4263 = vdwg.mxu0
    %v4264 = vadd.f32 %v3930, %v4259
    %4265 = vadd.xlane.f32.xlu0 %v4264
    %v4266 = vpop.xlane.xlu0 %4265
    %v4267 = vmul.f32 %v4266, %v954
    %v4268 = vsub.f32 %v4264, %v4267
    %v4269 = vmul.f32 %v4268, %v4268
    %4270 = vadd.xlane.f32.xlu0 %v4269
    %v4271 = vpop.xlane.xlu0 %4270
    %v4272 = vmul.f32 %v4271, %v954
    %v4273 = vadd.f32 %v4272, 1e-05
    %v4274 = vrsqrt.pop %v4273
    %v4275 = vmul.f32 %v4268, %v4274
    %v4276 = vmul.f32 %v4275, %v3326
    %v4277 = vadd.f32 %v4276, %v3335
    %s4278 = scalar_lea.vmem [#allocation7], 576
    %v4279 = vld [vmem:[%s4278] sm:$0xff]
    %v4280 = vld [vmem:[%s4278 + $0x8] sm:$0xf]
    %v4281 = vld [vmem:[%s4278 + $0xc] sm:$0xff]
    %v4282 = vld [vmem:[%s4278 + $0x14] sm:$0xf]
    %v4283 = vld [vmem:[%s4278 + $0x18] sm:$0xff]
    %v4284 = vld [vmem:[%s4278 + $0x20] sm:$0xf]
    %v4285 = vld [vmem:[%s4278 + $0x24] sm:$0xff]
    %v4286 = vld [vmem:[%s4278 + $0x2c] sm:$0xf]
    %v4287 = vld [vmem:[%s4278 + $0x30] sm:$0xff]
    %v4288 = vld [vmem:[%s4278 + $0x38] sm:$0xf]
    %v4289 = vld [vmem:[%s4278 + $0x3c] sm:$0xff]
    %v4290 = vld [vmem:[%s4278 + $0x44] sm:$0xf]
    %v4291 = vld [vmem:[%s4278 + $0x48] sm:$0xff]
    %v4292 = vld [vmem:[%s4278 + $0x50] sm:$0xf]
    %v4293 = vld [vmem:[%s4278 + $0x54] sm:$0xff]
    %v4294 = vld [vmem:[%s4278 + $0x5c] sm:$0xf]
    %v4295 = vld [vmem:[%s4278 + $0x60] sm:$0xff]
    %v4296 = vld [vmem:[%s4278 + $0x68] sm:$0xf]
    %v4297 = vld [vmem:[%s4278 + $0x6c] sm:$0xff]
    %v4298 = vld [vmem:[%s4278 + $0x74] sm:$0xf]
    %v4299 = vld [vmem:[%s4278 + $0x78] sm:$0xff]
    %v4300 = vld [vmem:[%s4278 + $0x80] sm:$0xf]
    %v4301 = vld [vmem:[%s4278 + $0x84] sm:$0xff]
    %v4302 = vld [vmem:[%s4278 + $0x8c] sm:$0xf]
    %v4303 = vld [vmem:[%s4278 + $0x90] sm:$0xff]
    %v4304 = vld [vmem:[%s4278 + $0x98] sm:$0xf]
    %v4305 = vld [vmem:[%s4278 + $0x9c] sm:$0xff]
    %v4306 = vld [vmem:[%s4278 + $0xa4] sm:$0xf]
    %v4307 = vld [vmem:[%s4278 + $0xa8] sm:$0xff]
    %v4308 = vld [vmem:[%s4278 + $0xb0] sm:$0xf]
    %v4309 = vld [vmem:[%s4278 + $0xb4] sm:$0xff]
    %v4310 = vld [vmem:[%s4278 + $0xbc] sm:$0xf]
    %s4311 = scalar_lea.vmem [#allocation8], 192
    %v4312 = vld [vmem:[%s4311] sm:$0xf]
    %v4313 = vld [vmem:[%s4311 + $0x4] sm:$0xf]
    %v4314 = vld [vmem:[%s4311 + $0x8] sm:$0xf]
    %v4315 = vld [vmem:[%s4311 + $0xc] sm:$0xf]
    %v4316 = vld [vmem:[%s4311 + $0x10] sm:$0xf]
    %v4317 = vld [vmem:[%s4311 + $0x14] sm:$0xf]
    %v4318 = vld [vmem:[%s4311 + $0x18] sm:$0xf]
    %v4319 = vld [vmem:[%s4311 + $0x1c] sm:$0xf]
    %v4320 = vld [vmem:[%s4311 + $0x20] sm:$0xf]
    %v4321 = vld [vmem:[%s4311 + $0x24] sm:$0xf]
    %v4322 = vld [vmem:[%s4311 + $0x28] sm:$0xf]
    %v4323 = vld [vmem:[%s4311 + $0x2c] sm:$0xf]
    %v4324 = vld [vmem:[%s4311 + $0x30] sm:$0xf]
    %v4325 = vld [vmem:[%s4311 + $0x34] sm:$0xf]
    %v4326 = vld [vmem:[%s4311 + $0x38] sm:$0xf]
    %v4327 = vld [vmem:[%s4311 + $0x3c] sm:$0xf]
    %v4360 = vunpack.c.l.b16 %v4279
    %v4361 = vunpack.c.h.b16 %v4279
    %v4362 = vunpack.c.l.b16 %v4280
    %v4363 = vunpack.c.l.b16 %v4281
    %v4364 = vunpack.c.h.b16 %v4281
    %v4365 = vunpack.c.l.b16 %v4282
    %v4366 = vunpack.c.l.b16 %v4283
    %v4367 = vunpack.c.h.b16 %v4283
    %v4368 = vunpack.c.l.b16 %v4284
    %v4369 = vunpack.c.l.b16 %v4285
    %v4370 = vunpack.c.h.b16 %v4285
    %v4371 = vunpack.c.l.b16 %v4286
    %v4372 = vunpack.c.l.b16 %v4287
    %v4373 = vunpack.c.h.b16 %v4287
    %v4374 = vunpack.c.l.b16 %v4288
    %v4375 = vunpack.c.l.b16 %v4289
    %v4376 = vunpack.c.h.b16 %v4289
    %v4377 = vunpack.c.l.b16 %v4290
    %v4378 = vunpack.c.l.b16 %v4291
    %v4379 = vunpack.c.h.b16 %v4291
    %v4380 = vunpack.c.l.b16 %v4292
    %v4381 = vunpack.c.l.b16 %v4293
    %v4382 = vunpack.c.h.b16 %v4293
    %v4383 = vunpack.c.l.b16 %v4294
    %v4384 = vunpack.c.l.b16 %v4295
    %v4385 = vunpack.c.h.b16 %v4295
    %v4386 = vunpack.c.l.b16 %v4296
    %v4387 = vunpack.c.l.b16 %v4297
    %v4388 = vunpack.c.h.b16 %v4297
    %v4389 = vunpack.c.l.b16 %v4298
    %v4390 = vunpack.c.l.b16 %v4299
    %v4391 = vunpack.c.h.b16 %v4299
    %v4392 = vunpack.c.l.b16 %v4300
    %v4393 = vunpack.c.l.b16 %v4301
    %v4394 = vunpack.c.h.b16 %v4301
    %v4395 = vunpack.c.l.b16 %v4302
    %v4396 = vunpack.c.l.b16 %v4303
    %v4397 = vunpack.c.h.b16 %v4303
    %v4398 = vunpack.c.l.b16 %v4304
    %v4399 = vunpack.c.l.b16 %v4305
    %v4400 = vunpack.c.h.b16 %v4305
    %v4401 = vunpack.c.l.b16 %v4306
    %v4402 = vunpack.c.l.b16 %v4307
    %v4403 = vunpack.c.h.b16 %v4307
    %v4404 = vunpack.c.l.b16 %v4308
    %v4405 = vunpack.c.l.b16 %v4309
    %v4406 = vunpack.c.h.b16 %v4309
    %v4407 = vunpack.c.l.b16 %v4310
    %v4408 = vpack.c.b16 %v4363, %v4360
    %v4409 = vpack.c.b16 %v4364, %v4361
    %v4410 = vpack.c.b16 %v4365, %v4362
    %v4411 = vpack.c.b16 %v4369, %v4366
    %v4412 = vpack.c.b16 %v4370, %v4367
    %v4413 = vpack.c.b16 %v4371, %v4368
    %v4414 = vpack.c.b16 %v4375, %v4372
    %v4415 = vpack.c.b16 %v4376, %v4373
    %v4416 = vpack.c.b16 %v4377, %v4374
    %v4417 = vpack.c.b16 %v4381, %v4378
    %v4418 = vpack.c.b16 %v4382, %v4379
    %v4419 = vpack.c.b16 %v4383, %v4380
    %v4420 = vpack.c.b16 %v4387, %v4384
    %v4421 = vpack.c.b16 %v4388, %v4385
    %v4422 = vpack.c.b16 %v4389, %v4386
    %v4423 = vpack.c.b16 %v4393, %v4390
    %v4424 = vpack.c.b16 %v4394, %v4391
    %v4425 = vpack.c.b16 %v4395, %v4392
    %v4426 = vpack.c.b16 %v4399, %v4396
    %v4427 = vpack.c.b16 %v4400, %v4397
    %v4428 = vpack.c.b16 %v4401, %v4398
    %v4429 = vpack.c.b16 %v4405, %v4402
    %v4430 = vpack.c.b16 %v4406, %v4403
    %v4431 = vpack.c.b16 %v4407, %v4404
    %4456 = vmatprep.subr.bf16.mxu0 %v4430
    %4457 = vmatpush1.bf16.msra.mxu0 %v4429
    %4458 = vmatprep.subr.bf16.mxu0 %v4427
    %4459 = vmatpush1.bf16.msra.mxu0 %v4426
    %4460 = vmatprep.subr.bf16.mxu0 %v4424
    %4461 = vmatpush1.bf16.msra.mxu0 %v4423
    %4462 = vmatprep.subr.bf16.mxu0 %v4421
    %4463 = vmatpush1.bf16.msra.mxu0 %v4420
    %4464 = vmatprep.subr.bf16.mxu0 %v4418
    %4465 = vmatpush1.bf16.msra.mxu0 %v4417
    %4466 = vmatprep.subr.bf16.mxu0 %v4415
    %4467 = vmatpush1.bf16.msra.mxu0 %v4414
    %4468 = vmatprep.subr.bf16.mxu0 %v4412
    %4469 = vmatpush1.bf16.msra.mxu0 %v4411
    %4470 = vmatprep.subr.bf16.mxu0 %v4409
    %4471 = vmatpush1.bf16.msra.mxu0 %v4408
    %4472 = vmatprep.subr.bf16.mxu0 0
    %4473 = vmatpush2.bf16.msra.mxu0 0
    %4474 = vmatprep.subr.bf16.mxu0 0
    %4475 = vmatpush2.bf16.msra.mxu0 0
    %4476 = vmatprep.subr.bf16.mxu0 0
    %4477 = vmatpush2.bf16.msra.mxu0 0
    %4478 = vmatprep.subr.bf16.mxu0 0
    %4479 = vmatpush2.bf16.msra.mxu0 0
    %4480 = vmatprep.subr.bf16.mxu0 0
    %4481 = vmatpush2.bf16.msra.mxu0 0
    %4482 = vmatprep.subr.bf16.mxu0 0
    %4483 = vmatpush2.bf16.msra.mxu0 0
    %4484 = vmatprep.subr.bf16.mxu0 0
    %4485 = vmatpush2.bf16.msra.mxu0 0
    %4486 = vmatprep.subr.bf16.mxu0 0
    %4487 = vmatpush2.bf16.msra.mxu0 0
    %4488 = vmatprep.mubr.bf16.mxu0 0
    %4489 = vmatmul.mubr.bf16.gmra.mxu0 %v2554
    %v4490 = vpop.f32.mrf.mxu0
    %v4491 = vadd.f32 0.0, %v4490
    %v4492 = vpop.f32.mrf.mxu0
    %v4493 = vadd.f32 0.0, %v4492
    %v4494 = vpop.f32.mrf.mxu0
    %v4495 = vpop.f32.mrf.mxu0
    %4496 = vdwg.mxu0
    %4497 = vmatprep.subr.bf16.mxu0 0
    %4498 = vmatpush1.bf16.msra.mxu0 %v4431
    %4499 = vmatprep.subr.bf16.mxu0 0
    %4500 = vmatpush1.bf16.msra.mxu0 %v4428
    %4501 = vmatprep.subr.bf16.mxu0 0
    %4502 = vmatpush1.bf16.msra.mxu0 %v4425
    %4503 = vmatprep.subr.bf16.mxu0 0
    %4504 = vmatpush1.bf16.msra.mxu0 %v4422
    %4505 = vmatprep.subr.bf16.mxu0 0
    %4506 = vmatpush1.bf16.msra.mxu0 %v4419
    %4507 = vmatprep.subr.bf16.mxu0 0
    %4508 = vmatpush1.bf16.msra.mxu0 %v4416
    %4509 = vmatprep.subr.bf16.mxu0 0
    %4510 = vmatpush1.bf16.msra.mxu0 %v4413
    %4511 = vmatprep.subr.bf16.mxu0 0
    %4512 = vmatpush1.bf16.msra.mxu0 %v4410
    %4513 = vmatprep.subr.bf16.mxu0 0
    %4514 = vmatpush2.bf16.msra.mxu0 0
    %4515 = vmatprep.subr.bf16.mxu0 0
    %4516 = vmatpush2.bf16.msra.mxu0 0
    %4517 = vmatprep.subr.bf16.mxu0 0
    %4518 = vmatpush2.bf16.msra.mxu0 0
    %4519 = vmatprep.subr.bf16.mxu0 0
    %4520 = vmatpush2.bf16.msra.mxu0 0
    %4521 = vmatprep.subr.bf16.mxu0 0
    %4522 = vmatpush2.bf16.msra.mxu0 0
    %4523 = vmatprep.subr.bf16.mxu0 0
    %4524 = vmatpush2.bf16.msra.mxu0 0
    %4525 = vmatprep.subr.bf16.mxu0 0
    %4526 = vmatpush2.bf16.msra.mxu0 0
    %4527 = vmatprep.subr.bf16.mxu0 0
    %4528 = vmatpush2.bf16.msra.mxu0 0
    %4529 = vmatprep.mubr.bf16.mxu0 0
    %4530 = vmatmul.mubr.bf16.gmra.mxu0 %v2554
    %v4531 = vpop.f32.mrf.mxu0
    %v4532 = vadd.f32 0.0, %v4531
    %v4533 = vpop.f32.mrf.mxu0
    %v4534 = vpop.f32.mrf.mxu0
    %v4535 = vpop.f32.mrf.mxu0
    %4536 = vdwg.mxu0
    %v4537 = vpack.c.bf16 %v4491, %v4491
    %v4538 = vpack.c.bf16 %v4532, %v4532
    %v4540 = vsel %vm404, %v4537, 0
    %v4543 = vsel %vm404, %v4538, 0
    %4545 = vmatprep.subr.bf16.mxu0 0
    %4546 = vmatpush1.bf16.xpose.msra.mxu0 0
    %4547 = vmatprep.subr.bf16.mxu0 0
    %4548 = vmatpush1.bf16.xpose.msra.mxu0 0
    %4549 = vmatprep.subr.bf16.mxu0 0
    %4550 = vmatpush1.bf16.xpose.msra.mxu0 0
    %4551 = vmatprep.subr.bf16.mxu0 0
    %4552 = vmatpush1.bf16.xpose.msra.mxu0 0
    %4553 = vmatprep.subr.bf16.mxu0 0
    %4554 = vmatpush1.bf16.xpose.msra.mxu0 0
    %4555 = vmatprep.subr.bf16.mxu0 0
    %4556 = vmatpush1.bf16.xpose.msra.mxu0 0
    %4557 = vmatprep.subr.bf16.mxu0 0
    %4558 = vmatpush1.bf16.xpose.msra.mxu0 0
    %4559 = vmatprep.subr.bf16.mxu0 0
    %4560 = vmatpush1.bf16.xpose.msra.mxu0 %v4543
    %4561 = vmatprep.subr.bf16.mxu0 0
    %4562 = vmatpush2.bf16.xpose.msra.mxu0 0
    %4563 = vmatprep.subr.bf16.mxu0 0
    %4564 = vmatpush2.bf16.xpose.msra.mxu0 0
    %4565 = vmatprep.subr.bf16.mxu0 0
    %4566 = vmatpush2.bf16.xpose.msra.mxu0 0
    %4567 = vmatprep.subr.bf16.mxu0 0
    %4568 = vmatpush2.bf16.xpose.msra.mxu0 0
    %4569 = vmatprep.subr.bf16.mxu0 0
    %4570 = vmatpush2.bf16.xpose.msra.mxu0 0
    %4571 = vmatprep.subr.bf16.mxu0 0
    %4572 = vmatpush2.bf16.xpose.msra.mxu0 0
    %4573 = vmatprep.subr.bf16.mxu0 0
    %4574 = vmatpush2.bf16.xpose.msra.mxu0 0
    %4575 = vmatprep.subr.bf16.mxu0 0
    %4576 = vmatpush2.bf16.xpose.msra.mxu0 0
    %4577 = vmatprep.mubr.bf16.mxu0 0
    %4578 = vmatmul.mubr.bf16.gmra.mxu0 %v4540
    %v4579 = vpop.f32.mrf.mxu0
    %v4580 = vadd.f32 0.0, %v4579
    %v4581 = vpop.f32.mrf.mxu0
    %v4582 = vpop.f32.mrf.mxu0
    %v4583 = vpop.f32.mrf.mxu0
    %4584 = vdwg.mxu0
    %v4585 = vsel %vm451, %v4580, -inf
    %4586 = vmax.xlane.f32.xlu0 %v4585
    %v4587 = vpop.xlane.xlu0 %4586
    %v4588 = vsub.f32 %v4580, %v4587
    %v4589 = vmul.f32 %v4588, 1.442695
    %v4590 = vpow.pop %v4589
    %v4591 = vsel %vm451, %v4590, 0.0
    %4592 = vadd.xlane.f32.xlu0 %v4591
    %v4593 = vpop.xlane.xlu0 %4592
    %v4594 = vrcp.pop %v4593
    %v4595 = vmul.f32 %v4590, %v4594
    %v4596 = vpack.c.bf16 %v4595, %v4595
    %v4597 = vpack.c.bf16 %v4493, %v4493
    %v4599 = vsel %vm451, %v4596, 0
    %v4602 = vsel %vm468, %v4597, 0
    %4604 = vmatprep.subr.bf16.mxu0 0
    %4605 = vmatpush1.bf16.msra.mxu0 0
    %4606 = vmatprep.subr.bf16.mxu0 0
    %4607 = vmatpush1.bf16.msra.mxu0 0
    %4608 = vmatprep.subr.bf16.mxu0 0
    %4609 = vmatpush1.bf16.msra.mxu0 0
    %4610 = vmatprep.subr.bf16.mxu0 0
    %4611 = vmatpush1.bf16.msra.mxu0 0
    %4612 = vmatprep.subr.bf16.mxu0 0
    %4613 = vmatpush1.bf16.msra.mxu0 0
    %4614 = vmatprep.subr.bf16.mxu0 0
    %4615 = vmatpush1.bf16.msra.mxu0 0
    %4616 = vmatprep.subr.bf16.mxu0 0
    %4617 = vmatpush1.bf16.msra.mxu0 0
    %4618 = vmatprep.subr.bf16.mxu0 0
    %4619 = vmatpush1.bf16.msra.mxu0 %v4602
    %4620 = vmatprep.subr.bf16.mxu0 0
    %4621 = vmatpush2.bf16.msra.mxu0 0
    %4622 = vmatprep.subr.bf16.mxu0 0
    %4623 = vmatpush2.bf16.msra.mxu0 0
    %4624 = vmatprep.subr.bf16.mxu0 0
    %4625 = vmatpush2.bf16.msra.mxu0 0
    %4626 = vmatprep.subr.bf16.mxu0 0
    %4627 = vmatpush2.bf16.msra.mxu0 0
    %4628 = vmatprep.subr.bf16.mxu0 0
    %4629 = vmatpush2.bf16.msra.mxu0 0
    %4630 = vmatprep.subr.bf16.mxu0 0
    %4631 = vmatpush2.bf16.msra.mxu0 0
    %4632 = vmatprep.subr.bf16.mxu0 0
    %4633 = vmatpush2.bf16.msra.mxu0 0
    %4634 = vmatprep.subr.bf16.mxu0 0
    %4635 = vmatpush2.bf16.msra.mxu0 0
    %4636 = vmatprep.mubr.bf16.mxu0 0
    %4637 = vmatmul.mubr.bf16.gmra.mxu0 %v4599
    %v4638 = vpop.f32.mrf.mxu0
    %v4639 = vadd.f32 0.0, %v4638
    %v4640 = vpop.f32.mrf.mxu0
    %v4641 = vpop.f32.mrf.mxu0
    %v4642 = vpop.f32.mrf.mxu0
    %4643 = vdwg.mxu0
    %4645 = vrot.lane.b32.xlu0 %v4537, 96
    %v4646 = vpop.permute.xlu0 %4645
    %4648 = vrot.lane.b32.xlu0 %v4538, 96
    %v4649 = vpop.permute.xlu0 %4648
    %v4651 = vsel %vm404, %v4646, 0
    %v4654 = vsel %vm404, %v4649, 0
    %4656 = vmatprep.subr.bf16.mxu0 0
    %4657 = vmatpush1.bf16.xpose.msra.mxu0 0
    %4658 = vmatprep.subr.bf16.mxu0 0
    %4659 = vmatpush1.bf16.xpose.msra.mxu0 0
    %4660 = vmatprep.subr.bf16.mxu0 0
    %4661 = vmatpush1.bf16.xpose.msra.mxu0 0
    %4662 = vmatprep.subr.bf16.mxu0 0
    %4663 = vmatpush1.bf16.xpose.msra.mxu0 0
    %4664 = vmatprep.subr.bf16.mxu0 0
    %4665 = vmatpush1.bf16.xpose.msra.mxu0 0
    %4666 = vmatprep.subr.bf16.mxu0 0
    %4667 = vmatpush1.bf16.xpose.msra.mxu0 0
    %4668 = vmatprep.subr.bf16.mxu0 0
    %4669 = vmatpush1.bf16.xpose.msra.mxu0 0
    %4670 = vmatprep.subr.bf16.mxu0 0
    %4671 = vmatpush1.bf16.xpose.msra.mxu0 %v4654
    %4672 = vmatprep.subr.bf16.mxu0 0
    %4673 = vmatpush2.bf16.xpose.msra.mxu0 0
    %4674 = vmatprep.subr.bf16.mxu0 0
    %4675 = vmatpush2.bf16.xpose.msra.mxu0 0
    %4676 = vmatprep.subr.bf16.mxu0 0
    %4677 = vmatpush2.bf16.xpose.msra.mxu0 0
    %4678 = vmatprep.subr.bf16.mxu0 0
    %4679 = vmatpush2.bf16.xpose.msra.mxu0 0
    %4680 = vmatprep.subr.bf16.mxu0 0
    %4681 = vmatpush2.bf16.xpose.msra.mxu0 0
    %4682 = vmatprep.subr.bf16.mxu0 0
    %4683 = vmatpush2.bf16.xpose.msra.mxu0 0
    %4684 = vmatprep.subr.bf16.mxu0 0
    %4685 = vmatpush2.bf16.xpose.msra.mxu0 0
    %4686 = vmatprep.subr.bf16.mxu0 0
    %4687 = vmatpush2.bf16.xpose.msra.mxu0 0
    %4688 = vmatprep.mubr.bf16.mxu0 0
    %4689 = vmatmul.mubr.bf16.gmra.mxu0 %v4651
    %v4690 = vpop.f32.mrf.mxu0
    %v4691 = vadd.f32 0.0, %v4690
    %v4692 = vpop.f32.mrf.mxu0
    %v4693 = vpop.f32.mrf.mxu0
    %v4694 = vpop.f32.mrf.mxu0
    %4695 = vdwg.mxu0
    %v4696 = vsel %vm451, %v4691, -inf
    %4697 = vmax.xlane.f32.xlu0 %v4696
    %v4698 = vpop.xlane.xlu0 %4697
    %v4699 = vsub.f32 %v4691, %v4698
    %v4700 = vmul.f32 %v4699, 1.442695
    %v4701 = vpow.pop %v4700
    %v4702 = vsel %vm451, %v4701, 0.0
    %4703 = vadd.xlane.f32.xlu0 %v4702
    %v4704 = vpop.xlane.xlu0 %4703
    %v4705 = vrcp.pop %v4704
    %v4706 = vmul.f32 %v4701, %v4705
    %v4707 = vpack.c.bf16 %v4706, %v4706
    %4709 = vrot.lane.b32.xlu0 %v4597, 96
    %v4710 = vpop.permute.xlu0 %4709
    %v4712 = vsel %vm451, %v4707, 0
    %v4715 = vsel %vm468, %v4710, 0
    %4717 = vmatprep.subr.bf16.mxu0 0
    %4718 = vmatpush1.bf16.msra.mxu0 0
    %4719 = vmatprep.subr.bf16.mxu0 0
    %4720 = vmatpush1.bf16.msra.mxu0 0
    %4721 = vmatprep.subr.bf16.mxu0 0
    %4722 = vmatpush1.bf16.msra.mxu0 0
    %4723 = vmatprep.subr.bf16.mxu0 0
    %4724 = vmatpush1.bf16.msra.mxu0 0
    %4725 = vmatprep.subr.bf16.mxu0 0
    %4726 = vmatpush1.bf16.msra.mxu0 0
    %4727 = vmatprep.subr.bf16.mxu0 0
    %4728 = vmatpush1.bf16.msra.mxu0 0
    %4729 = vmatprep.subr.bf16.mxu0 0
    %4730 = vmatpush1.bf16.msra.mxu0 0
    %4731 = vmatprep.subr.bf16.mxu0 0
    %4732 = vmatpush1.bf16.msra.mxu0 %v4715
    %4733 = vmatprep.subr.bf16.mxu0 0
    %4734 = vmatpush2.bf16.msra.mxu0 0
    %4735 = vmatprep.subr.bf16.mxu0 0
    %4736 = vmatpush2.bf16.msra.mxu0 0
    %4737 = vmatprep.subr.bf16.mxu0 0
    %4738 = vmatpush2.bf16.msra.mxu0 0
    %4739 = vmatprep.subr.bf16.mxu0 0
    %4740 = vmatpush2.bf16.msra.mxu0 0
    %4741 = vmatprep.subr.bf16.mxu0 0
    %4742 = vmatpush2.bf16.msra.mxu0 0
    %4743 = vmatprep.subr.bf16.mxu0 0
    %4744 = vmatpush2.bf16.msra.mxu0 0
    %4745 = vmatprep.subr.bf16.mxu0 0
    %4746 = vmatpush2.bf16.msra.mxu0 0
    %4747 = vmatprep.subr.bf16.mxu0 0
    %4748 = vmatpush2.bf16.msra.mxu0 0
    %4749 = vmatprep.mubr.bf16.mxu0 0
    %4750 = vmatmul.mubr.bf16.gmra.mxu0 %v4712
    %v4751 = vpop.f32.mrf.mxu0
    %v4752 = vadd.f32 0.0, %v4751
    %v4753 = vpop.f32.mrf.mxu0
    %v4754 = vpop.f32.mrf.mxu0
    %v4755 = vpop.f32.mrf.mxu0
    %4756 = vdwg.mxu0
    %4757 = vrot.lane.b32.xlu0 %v4537, 64
    %v4758 = vpop.permute.xlu0 %4757
    %4759 = vrot.lane.b32.xlu0 %v4538, 64
    %v4760 = vpop.permute.xlu0 %4759
    %v4762 = vsel %vm404, %v4758, 0
    %v4765 = vsel %vm404, %v4760, 0
    %4767 = vmatprep.subr.bf16.mxu0 0
    %4768 = vmatpush1.bf16.xpose.msra.mxu0 0
    %4769 = vmatprep.subr.bf16.mxu0 0
    %4770 = vmatpush1.bf16.xpose.msra.mxu0 0
    %4771 = vmatprep.subr.bf16.mxu0 0
    %4772 = vmatpush1.bf16.xpose.msra.mxu0 0
    %4773 = vmatprep.subr.bf16.mxu0 0
    %4774 = vmatpush1.bf16.xpose.msra.mxu0 0
    %4775 = vmatprep.subr.bf16.mxu0 0
    %4776 = vmatpush1.bf16.xpose.msra.mxu0 0
    %4777 = vmatprep.subr.bf16.mxu0 0
    %4778 = vmatpush1.bf16.xpose.msra.mxu0 0
    %4779 = vmatprep.subr.bf16.mxu0 0
    %4780 = vmatpush1.bf16.xpose.msra.mxu0 0
    %4781 = vmatprep.subr.bf16.mxu0 0
    %4782 = vmatpush1.bf16.xpose.msra.mxu0 %v4765
    %4783 = vmatprep.subr.bf16.mxu0 0
    %4784 = vmatpush2.bf16.xpose.msra.mxu0 0
    %4785 = vmatprep.subr.bf16.mxu0 0
    %4786 = vmatpush2.bf16.xpose.msra.mxu0 0
    %4787 = vmatprep.subr.bf16.mxu0 0
    %4788 = vmatpush2.bf16.xpose.msra.mxu0 0
    %4789 = vmatprep.subr.bf16.mxu0 0
    %4790 = vmatpush2.bf16.xpose.msra.mxu0 0
    %4791 = vmatprep.subr.bf16.mxu0 0
    %4792 = vmatpush2.bf16.xpose.msra.mxu0 0
    %4793 = vmatprep.subr.bf16.mxu0 0
    %4794 = vmatpush2.bf16.xpose.msra.mxu0 0
    %4795 = vmatprep.subr.bf16.mxu0 0
    %4796 = vmatpush2.bf16.xpose.msra.mxu0 0
    %4797 = vmatprep.subr.bf16.mxu0 0
    %4798 = vmatpush2.bf16.xpose.msra.mxu0 0
    %4799 = vmatprep.mubr.bf16.mxu0 0
    %4800 = vmatmul.mubr.bf16.gmra.mxu0 %v4762
    %v4801 = vpop.f32.mrf.mxu0
    %v4802 = vadd.f32 0.0, %v4801
    %v4803 = vpop.f32.mrf.mxu0
    %v4804 = vpop.f32.mrf.mxu0
    %v4805 = vpop.f32.mrf.mxu0
    %4806 = vdwg.mxu0
    %v4807 = vsel %vm451, %v4802, -inf
    %4808 = vmax.xlane.f32.xlu0 %v4807
    %v4809 = vpop.xlane.xlu0 %4808
    %v4810 = vsub.f32 %v4802, %v4809
    %v4811 = vmul.f32 %v4810, 1.442695
    %v4812 = vpow.pop %v4811
    %v4813 = vsel %vm451, %v4812, 0.0
    %4814 = vadd.xlane.f32.xlu0 %v4813
    %v4815 = vpop.xlane.xlu0 %4814
    %v4816 = vrcp.pop %v4815
    %v4817 = vmul.f32 %v4812, %v4816
    %v4818 = vpack.c.bf16 %v4817, %v4817
    %4819 = vrot.lane.b32.xlu0 %v4597, 64
    %v4820 = vpop.permute.xlu0 %4819
    %v4822 = vsel %vm451, %v4818, 0
    %v4825 = vsel %vm468, %v4820, 0
    %4827 = vmatprep.subr.bf16.mxu0 0
    %4828 = vmatpush1.bf16.msra.mxu0 0
    %4829 = vmatprep.subr.bf16.mxu0 0
    %4830 = vmatpush1.bf16.msra.mxu0 0
    %4831 = vmatprep.subr.bf16.mxu0 0
    %4832 = vmatpush1.bf16.msra.mxu0 0
    %4833 = vmatprep.subr.bf16.mxu0 0
    %4834 = vmatpush1.bf16.msra.mxu0 0
    %4835 = vmatprep.subr.bf16.mxu0 0
    %4836 = vmatpush1.bf16.msra.mxu0 0
    %4837 = vmatprep.subr.bf16.mxu0 0
    %4838 = vmatpush1.bf16.msra.mxu0 0
    %4839 = vmatprep.subr.bf16.mxu0 0
    %4840 = vmatpush1.bf16.msra.mxu0 0
    %4841 = vmatprep.subr.bf16.mxu0 0
    %4842 = vmatpush1.bf16.msra.mxu0 %v4825
    %4843 = vmatprep.subr.bf16.mxu0 0
    %4844 = vmatpush2.bf16.msra.mxu0 0
    %4845 = vmatprep.subr.bf16.mxu0 0
    %4846 = vmatpush2.bf16.msra.mxu0 0
    %4847 = vmatprep.subr.bf16.mxu0 0
    %4848 = vmatpush2.bf16.msra.mxu0 0
    %4849 = vmatprep.subr.bf16.mxu0 0
    %4850 = vmatpush2.bf16.msra.mxu0 0
    %4851 = vmatprep.subr.bf16.mxu0 0
    %4852 = vmatpush2.bf16.msra.mxu0 0
    %4853 = vmatprep.subr.bf16.mxu0 0
    %4854 = vmatpush2.bf16.msra.mxu0 0
    %4855 = vmatprep.subr.bf16.mxu0 0
    %4856 = vmatpush2.bf16.msra.mxu0 0
    %4857 = vmatprep.subr.bf16.mxu0 0
    %4858 = vmatpush2.bf16.msra.mxu0 0
    %4859 = vmatprep.mubr.bf16.mxu0 0
    %4860 = vmatmul.mubr.bf16.gmra.mxu0 %v4822
    %v4861 = vpop.f32.mrf.mxu0
    %v4862 = vadd.f32 0.0, %v4861
    %v4863 = vpop.f32.mrf.mxu0
    %v4864 = vpop.f32.mrf.mxu0
    %v4865 = vpop.f32.mrf.mxu0
    %4866 = vdwg.mxu0
    %4867 = vrot.lane.b32.xlu0 %v4537, 32
    %v4868 = vpop.permute.xlu0 %4867
    %4869 = vrot.lane.b32.xlu0 %v4538, 32
    %v4870 = vpop.permute.xlu0 %4869
    %v4872 = vsel %vm404, %v4868, 0
    %v4875 = vsel %vm404, %v4870, 0
    %4877 = vmatprep.subr.bf16.mxu0 0
    %4878 = vmatpush1.bf16.xpose.msra.mxu0 0
    %4879 = vmatprep.subr.bf16.mxu0 0
    %4880 = vmatpush1.bf16.xpose.msra.mxu0 0
    %4881 = vmatprep.subr.bf16.mxu0 0
    %4882 = vmatpush1.bf16.xpose.msra.mxu0 0
    %4883 = vmatprep.subr.bf16.mxu0 0
    %4884 = vmatpush1.bf16.xpose.msra.mxu0 0
    %4885 = vmatprep.subr.bf16.mxu0 0
    %4886 = vmatpush1.bf16.xpose.msra.mxu0 0
    %4887 = vmatprep.subr.bf16.mxu0 0
    %4888 = vmatpush1.bf16.xpose.msra.mxu0 0
    %4889 = vmatprep.subr.bf16.mxu0 0
    %4890 = vmatpush1.bf16.xpose.msra.mxu0 0
    %4891 = vmatprep.subr.bf16.mxu0 0
    %4892 = vmatpush1.bf16.xpose.msra.mxu0 %v4875
    %4893 = vmatprep.subr.bf16.mxu0 0
    %4894 = vmatpush2.bf16.xpose.msra.mxu0 0
    %4895 = vmatprep.subr.bf16.mxu0 0
    %4896 = vmatpush2.bf16.xpose.msra.mxu0 0
    %4897 = vmatprep.subr.bf16.mxu0 0
    %4898 = vmatpush2.bf16.xpose.msra.mxu0 0
    %4899 = vmatprep.subr.bf16.mxu0 0
    %4900 = vmatpush2.bf16.xpose.msra.mxu0 0
    %4901 = vmatprep.subr.bf16.mxu0 0
    %4902 = vmatpush2.bf16.xpose.msra.mxu0 0
    %4903 = vmatprep.subr.bf16.mxu0 0
    %4904 = vmatpush2.bf16.xpose.msra.mxu0 0
    %4905 = vmatprep.subr.bf16.mxu0 0
    %4906 = vmatpush2.bf16.xpose.msra.mxu0 0
    %4907 = vmatprep.subr.bf16.mxu0 0
    %4908 = vmatpush2.bf16.xpose.msra.mxu0 0
    %4909 = vmatprep.mubr.bf16.mxu0 0
    %4910 = vmatmul.mubr.bf16.gmra.mxu0 %v4872
    %v4911 = vpop.f32.mrf.mxu0
    %v4912 = vadd.f32 0.0, %v4911
    %v4913 = vpop.f32.mrf.mxu0
    %v4914 = vpop.f32.mrf.mxu0
    %v4915 = vpop.f32.mrf.mxu0
    %4916 = vdwg.mxu0
    %v4917 = vsel %vm451, %v4912, -inf
    %4918 = vmax.xlane.f32.xlu0 %v4917
    %v4919 = vpop.xlane.xlu0 %4918
    %v4920 = vsub.f32 %v4912, %v4919
    %v4921 = vmul.f32 %v4920, 1.442695
    %v4922 = vpow.pop %v4921
    %v4923 = vsel %vm451, %v4922, 0.0
    %4924 = vadd.xlane.f32.xlu0 %v4923
    %v4925 = vpop.xlane.xlu0 %4924
    %v4926 = vrcp.pop %v4925
    %v4927 = vmul.f32 %v4922, %v4926
    %v4928 = vpack.c.bf16 %v4927, %v4927
    %4929 = vrot.lane.b32.xlu0 %v4597, 32
    %v4930 = vpop.permute.xlu0 %4929
    %v4932 = vsel %vm451, %v4928, 0
    %v4935 = vsel %vm468, %v4930, 0
    %4937 = vmatprep.subr.bf16.mxu0 0
    %4938 = vmatpush1.bf16.msra.mxu0 0
    %4939 = vmatprep.subr.bf16.mxu0 0
    %4940 = vmatpush1.bf16.msra.mxu0 0
    %4941 = vmatprep.subr.bf16.mxu0 0
    %4942 = vmatpush1.bf16.msra.mxu0 0
    %4943 = vmatprep.subr.bf16.mxu0 0
    %4944 = vmatpush1.bf16.msra.mxu0 0
    %4945 = vmatprep.subr.bf16.mxu0 0
    %4946 = vmatpush1.bf16.msra.mxu0 0
    %4947 = vmatprep.subr.bf16.mxu0 0
    %4948 = vmatpush1.bf16.msra.mxu0 0
    %4949 = vmatprep.subr.bf16.mxu0 0
    %4950 = vmatpush1.bf16.msra.mxu0 0
    %4951 = vmatprep.subr.bf16.mxu0 0
    %4952 = vmatpush1.bf16.msra.mxu0 %v4935
    %4953 = vmatprep.subr.bf16.mxu0 0
    %4954 = vmatpush2.bf16.msra.mxu0 0
    %4955 = vmatprep.subr.bf16.mxu0 0
    %4956 = vmatpush2.bf16.msra.mxu0 0
    %4957 = vmatprep.subr.bf16.mxu0 0
    %4958 = vmatpush2.bf16.msra.mxu0 0
    %4959 = vmatprep.subr.bf16.mxu0 0
    %4960 = vmatpush2.bf16.msra.mxu0 0
    %4961 = vmatprep.subr.bf16.mxu0 0
    %4962 = vmatpush2.bf16.msra.mxu0 0
    %4963 = vmatprep.subr.bf16.mxu0 0
    %4964 = vmatpush2.bf16.msra.mxu0 0
    %4965 = vmatprep.subr.bf16.mxu0 0
    %4966 = vmatpush2.bf16.msra.mxu0 0
    %4967 = vmatprep.subr.bf16.mxu0 0
    %4968 = vmatpush2.bf16.msra.mxu0 0
    %4969 = vmatprep.mubr.bf16.mxu0 0
    %4970 = vmatmul.mubr.bf16.gmra.mxu0 %v4932
    %v4971 = vpop.f32.mrf.mxu0
    %v4972 = vadd.f32 0.0, %v4971
    %v4973 = vpop.f32.mrf.mxu0
    %v4974 = vpop.f32.mrf.mxu0
    %v4975 = vpop.f32.mrf.mxu0
    %4976 = vdwg.mxu0
    %4978 = vrot.lane.b32.xlu0 %v4752, 32
    %v4979 = vpop.permute.xlu0 %4978
    %4982 = vrot.lane.b32.xlu0 %v4862, 64
    %v4983 = vpop.permute.xlu0 %4982
    %4986 = vrot.lane.b32.xlu0 %v4972, 96
    %v4987 = vpop.permute.xlu0 %4986
    %v4989 = vsel %vm404, %v4639, %v4979
    %v4990 = vsel %vm858, %v4989, %v4983
    %v4991 = vsel %vm860, %v4990, %v4987
    %v4992 = vpack.c.bf16 %v4991, %v4991
    %v5009 = vunpack.c.l.b16 %v4312
    %v5010 = vunpack.c.l.b16 %v4313
    %v5011 = vunpack.c.l.b16 %v4314
    %v5012 = vunpack.c.l.b16 %v4315
    %v5013 = vunpack.c.l.b16 %v4316
    %v5014 = vunpack.c.l.b16 %v4317
    %v5015 = vunpack.c.l.b16 %v4318
    %v5016 = vunpack.c.l.b16 %v4319
    %v5017 = vunpack.c.l.b16 %v4320
    %v5018 = vunpack.c.l.b16 %v4321
    %v5019 = vunpack.c.l.b16 %v4322
    %v5020 = vunpack.c.l.b16 %v4323
    %v5021 = vunpack.c.l.b16 %v4324
    %v5022 = vunpack.c.l.b16 %v4325
    %v5023 = vunpack.c.l.b16 %v4326
    %v5024 = vunpack.c.l.b16 %v4327
    %v5025 = vpack.c.b16 %v5010, %v5009
    %v5026 = vpack.c.b16 %v5012, %v5011
    %v5027 = vpack.c.b16 %v5014, %v5013
    %v5028 = vpack.c.b16 %v5016, %v5015
    %v5029 = vpack.c.b16 %v5018, %v5017
    %v5030 = vpack.c.b16 %v5020, %v5019
    %v5031 = vpack.c.b16 %v5022, %v5021
    %v5032 = vpack.c.b16 %v5024, %v5023
    %5041 = vmatprep.subr.bf16.mxu0 0
    %5042 = vmatpush1.bf16.msra.mxu0 %v5032
    %5043 = vmatprep.subr.bf16.mxu0 0
    %5044 = vmatpush1.bf16.msra.mxu0 %v5031
    %5045 = vmatprep.subr.bf16.mxu0 0
    %5046 = vmatpush1.bf16.msra.mxu0 %v5030
    %5047 = vmatprep.subr.bf16.mxu0 0
    %5048 = vmatpush1.bf16.msra.mxu0 %v5029
    %5049 = vmatprep.subr.bf16.mxu0 0
    %5050 = vmatpush1.bf16.msra.mxu0 %v5028
    %5051 = vmatprep.subr.bf16.mxu0 0
    %5052 = vmatpush1.bf16.msra.mxu0 %v5027
    %5053 = vmatprep.subr.bf16.mxu0 0
    %5054 = vmatpush1.bf16.msra.mxu0 %v5026
    %5055 = vmatprep.subr.bf16.mxu0 0
    %5056 = vmatpush1.bf16.msra.mxu0 %v5025
    %5057 = vmatprep.subr.bf16.mxu0 0
    %5058 = vmatpush2.bf16.msra.mxu0 0
    %5059 = vmatprep.subr.bf16.mxu0 0
    %5060 = vmatpush2.bf16.msra.mxu0 0
    %5061 = vmatprep.subr.bf16.mxu0 0
    %5062 = vmatpush2.bf16.msra.mxu0 0
    %5063 = vmatprep.subr.bf16.mxu0 0
    %5064 = vmatpush2.bf16.msra.mxu0 0
    %5065 = vmatprep.subr.bf16.mxu0 0
    %5066 = vmatpush2.bf16.msra.mxu0 0
    %5067 = vmatprep.subr.bf16.mxu0 0
    %5068 = vmatpush2.bf16.msra.mxu0 0
    %5069 = vmatprep.subr.bf16.mxu0 0
    %5070 = vmatpush2.bf16.msra.mxu0 0
    %5071 = vmatprep.subr.bf16.mxu0 0
    %5072 = vmatpush2.bf16.msra.mxu0 0
    %5073 = vmatprep.mubr.bf16.mxu0 0
    %5074 = vmatmul.mubr.bf16.gmra.mxu0 %v4992
    %v5075 = vpop.f32.mrf.mxu0
    %v5076 = vadd.f32 0.0, %v5075
    %v5077 = vpop.f32.mrf.mxu0
    %v5078 = vpop.f32.mrf.mxu0
    %v5079 = vpop.f32.mrf.mxu0
    %5080 = vdwg.mxu0
    %v5081 = vadd.f32 %v143, %v5076
    %5082 = vadd.xlane.f32.xlu0 %v5081
    %v5083 = vpop.xlane.xlu0 %5082
    %v5084 = vmul.f32 %v5083, %v954
    %v5085 = vsub.f32 %v5081, %v5084
    %v5086 = vmul.f32 %v5085, %v5085
    %5087 = vadd.xlane.f32.xlu0 %v5086
    %v5088 = vpop.xlane.xlu0 %5087
    %v5089 = vmul.f32 %v5088, %v954
    %v5090 = vadd.f32 %v5089, 1e-05
    %v5091 = vrsqrt.pop %v5090
    %v5092 = vmul.f32 %v5085, %v5091
    %s5093 = scalar_lea.vmem %s8, 3
    %v5094 = vld [vmem:[%s5093] sm:$0x1]
    %v5096 = vlaneseq
    %v5097 = vshrl.u32 %v5096, 7
    %v5098 = vsub.s32 0, %v5097
    %v5099 = vrot.slane %v5094, %v5098
    %v5101 = vmul.f32 %v5092, %v5099
    %s5102 = scalar_lea.vmem [#allocation14], 3
    %v5103 = vld [vmem:[%s5102] sm:$0x1]
    %v5105 = vlaneseq
    %v5106 = vshrl.u32 %v5105, 7
    %v5107 = vsub.s32 0, %v5106
    %v5108 = vrot.slane %v5103, %v5107
    %v5110 = vadd.f32 %v5101, %v5108
    %v5111 = vpack.c.bf16 %v4277, %v4277
    %5112 = vmatprep.subr.bf16.mxu0 %v4430
    %5113 = vmatpush1.bf16.msra.mxu0 %v4429
    %5114 = vmatprep.subr.bf16.mxu0 %v4427
    %5115 = vmatpush1.bf16.msra.mxu0 %v4426
    %5116 = vmatprep.subr.bf16.mxu0 %v4424
    %5117 = vmatpush1.bf16.msra.mxu0 %v4423
    %5118 = vmatprep.subr.bf16.mxu0 %v4421
    %5119 = vmatpush1.bf16.msra.mxu0 %v4420
    %5120 = vmatprep.subr.bf16.mxu0 %v4418
    %5121 = vmatpush1.bf16.msra.mxu0 %v4417
    %5122 = vmatprep.subr.bf16.mxu0 %v4415
    %5123 = vmatpush1.bf16.msra.mxu0 %v4414
    %5124 = vmatprep.subr.bf16.mxu0 %v4412
    %5125 = vmatpush1.bf16.msra.mxu0 %v4411
    %5126 = vmatprep.subr.bf16.mxu0 %v4409
    %5127 = vmatpush1.bf16.msra.mxu0 %v4408
    %5128 = vmatprep.subr.bf16.mxu0 0
    %5129 = vmatpush2.bf16.msra.mxu0 0
    %5130 = vmatprep.subr.bf16.mxu0 0
    %5131 = vmatpush2.bf16.msra.mxu0 0
    %5132 = vmatprep.subr.bf16.mxu0 0
    %5133 = vmatpush2.bf16.msra.mxu0 0
    %5134 = vmatprep.subr.bf16.mxu0 0
    %5135 = vmatpush2.bf16.msra.mxu0 0
    %5136 = vmatprep.subr.bf16.mxu0 0
    %5137 = vmatpush2.bf16.msra.mxu0 0
    %5138 = vmatprep.subr.bf16.mxu0 0
    %5139 = vmatpush2.bf16.msra.mxu0 0
    %5140 = vmatprep.subr.bf16.mxu0 0
    %5141 = vmatpush2.bf16.msra.mxu0 0
    %5142 = vmatprep.subr.bf16.mxu0 0
    %5143 = vmatpush2.bf16.msra.mxu0 0
    %5144 = vmatprep.mubr.bf16.mxu0 0
    %5145 = vmatmul.mubr.bf16.gmra.mxu0 %v5111
    %v5146 = vpop.f32.mrf.mxu0
    %v5147 = vadd.f32 0.0, %v5146
    %v5148 = vpop.f32.mrf.mxu0
    %v5149 = vadd.f32 0.0, %v5148
    %v5150 = vpop.f32.mrf.mxu0
    %v5151 = vpop.f32.mrf.mxu0
    %5152 = vdwg.mxu0
    %v5153 = vpack.c.bf16 %v5110, %v5110
    %5154 = vmatprep.subr.bf16.mxu0 0
    %5155 = vmatpush1.bf16.msra.mxu0 %v4431
    %5156 = vmatprep.subr.bf16.mxu0 0
    %5157 = vmatpush1.bf16.msra.mxu0 %v4428
    %5158 = vmatprep.subr.bf16.mxu0 0
    %5159 = vmatpush1.bf16.msra.mxu0 %v4425
    %5160 = vmatprep.subr.bf16.mxu0 0
    %5161 = vmatpush1.bf16.msra.mxu0 %v4422
    %5162 = vmatprep.subr.bf16.mxu0 0
    %5163 = vmatpush1.bf16.msra.mxu0 %v4419
    %5164 = vmatprep.subr.bf16.mxu0 0
    %5165 = vmatpush1.bf16.msra.mxu0 %v4416
    %5166 = vmatprep.subr.bf16.mxu0 0
    %5167 = vmatpush1.bf16.msra.mxu0 %v4413
    %5168 = vmatprep.subr.bf16.mxu0 0
    %5169 = vmatpush1.bf16.msra.mxu0 %v4410
    %5170 = vmatprep.subr.bf16.mxu0 0
    %5171 = vmatpush2.bf16.msra.mxu0 0
    %5172 = vmatprep.subr.bf16.mxu0 0
    %5173 = vmatpush2.bf16.msra.mxu0 0
    %5174 = vmatprep.subr.bf16.mxu0 0
    %5175 = vmatpush2.bf16.msra.mxu0 0
    %5176 = vmatprep.subr.bf16.mxu0 0
    %5177 = vmatpush2.bf16.msra.mxu0 0
    %5178 = vmatprep.subr.bf16.mxu0 0
    %5179 = vmatpush2.bf16.msra.mxu0 0
    %5180 = vmatprep.subr.bf16.mxu0 0
    %5181 = vmatpush2.bf16.msra.mxu0 0
    %5182 = vmatprep.subr.bf16.mxu0 0
    %5183 = vmatpush2.bf16.msra.mxu0 0
    %5184 = vmatprep.subr.bf16.mxu0 0
    %5185 = vmatpush2.bf16.msra.mxu0 0
    %5186 = vmatprep.mubr.bf16.mxu0 0
    %5187 = vmatmul.mubr.bf16.gmra.mxu0 %v5153
    %v5188 = vpop.f32.mrf.mxu0
    %v5189 = vadd.f32 0.0, %v5188
    %v5190 = vpop.f32.mrf.mxu0
    %v5191 = vpop.f32.mrf.mxu0
    %v5192 = vpop.f32.mrf.mxu0
    %5193 = vdwg.mxu0
    %v5194 = vpack.c.bf16 %v5147, %v5147
    %v5195 = vpack.c.bf16 %v5189, %v5189
    %v5197 = vsel %vm404, %v5194, 0
    %v5200 = vsel %vm404, %v5195, 0
    %5202 = vmatprep.subr.bf16.mxu0 0
    %5203 = vmatpush1.bf16.xpose.msra.mxu0 0
    %5204 = vmatprep.subr.bf16.mxu0 0
    %5205 = vmatpush1.bf16.xpose.msra.mxu0 0
    %5206 = vmatprep.subr.bf16.mxu0 0
    %5207 = vmatpush1.bf16.xpose.msra.mxu0 0
    %5208 = vmatprep.subr.bf16.mxu0 0
    %5209 = vmatpush1.bf16.xpose.msra.mxu0 0
    %5210 = vmatprep.subr.bf16.mxu0 0
    %5211 = vmatpush1.bf16.xpose.msra.mxu0 0
    %5212 = vmatprep.subr.bf16.mxu0 0
    %5213 = vmatpush1.bf16.xpose.msra.mxu0 0
    %5214 = vmatprep.subr.bf16.mxu0 0
    %5215 = vmatpush1.bf16.xpose.msra.mxu0 0
    %5216 = vmatprep.subr.bf16.mxu0 0
    %5217 = vmatpush1.bf16.xpose.msra.mxu0 %v5200
    %5218 = vmatprep.subr.bf16.mxu0 0
    %5219 = vmatpush2.bf16.xpose.msra.mxu0 0
    %5220 = vmatprep.subr.bf16.mxu0 0
    %5221 = vmatpush2.bf16.xpose.msra.mxu0 0
    %5222 = vmatprep.subr.bf16.mxu0 0
    %5223 = vmatpush2.bf16.xpose.msra.mxu0 0
    %5224 = vmatprep.subr.bf16.mxu0 0
    %5225 = vmatpush2.bf16.xpose.msra.mxu0 0
    %5226 = vmatprep.subr.bf16.mxu0 0
    %5227 = vmatpush2.bf16.xpose.msra.mxu0 0
    %5228 = vmatprep.subr.bf16.mxu0 0
    %5229 = vmatpush2.bf16.xpose.msra.mxu0 0
    %5230 = vmatprep.subr.bf16.mxu0 0
    %5231 = vmatpush2.bf16.xpose.msra.mxu0 0
    %5232 = vmatprep.subr.bf16.mxu0 0
    %5233 = vmatpush2.bf16.xpose.msra.mxu0 0
    %5234 = vmatprep.mubr.bf16.mxu0 0
    %5235 = vmatmul.mubr.bf16.gmra.mxu0 %v5197
    %v5236 = vpop.f32.mrf.mxu0
    %v5237 = vadd.f32 0.0, %v5236
    %v5238 = vpop.f32.mrf.mxu0
    %v5239 = vpop.f32.mrf.mxu0
    %v5240 = vpop.f32.mrf.mxu0
    %5241 = vdwg.mxu0
    %v5242 = vsel %vm451, %v5237, -inf
    %5243 = vmax.xlane.f32.xlu0 %v5242
    %v5244 = vpop.xlane.xlu0 %5243
    %v5245 = vsub.f32 %v5237, %v5244
    %v5246 = vmul.f32 %v5245, 1.442695
    %v5247 = vpow.pop %v5246
    %v5248 = vsel %vm451, %v5247, 0.0
    %5249 = vadd.xlane.f32.xlu0 %v5248
    %v5250 = vpop.xlane.xlu0 %5249
    %v5251 = vrcp.pop %v5250
    %v5252 = vmul.f32 %v5247, %v5251
    %v5253 = vpack.c.bf16 %v5252, %v5252
    %v5254 = vpack.c.bf16 %v5149, %v5149
    %v5256 = vsel %vm451, %v5253, 0
    %v5259 = vsel %vm468, %v5254, 0
    %5261 = vmatprep.subr.bf16.mxu0 0
    %5262 = vmatpush1.bf16.msra.mxu0 0
    %5263 = vmatprep.subr.bf16.mxu0 0
    %5264 = vmatpush1.bf16.msra.mxu0 0
    %5265 = vmatprep.subr.bf16.mxu0 0
    %5266 = vmatpush1.bf16.msra.mxu0 0
    %5267 = vmatprep.subr.bf16.mxu0 0
    %5268 = vmatpush1.bf16.msra.mxu0 0
    %5269 = vmatprep.subr.bf16.mxu0 0
    %5270 = vmatpush1.bf16.msra.mxu0 0
    %5271 = vmatprep.subr.bf16.mxu0 0
    %5272 = vmatpush1.bf16.msra.mxu0 0
    %5273 = vmatprep.subr.bf16.mxu0 0
    %5274 = vmatpush1.bf16.msra.mxu0 0
    %5275 = vmatprep.subr.bf16.mxu0 0
    %5276 = vmatpush1.bf16.msra.mxu0 %v5259
    %5277 = vmatprep.subr.bf16.mxu0 0
    %5278 = vmatpush2.bf16.msra.mxu0 0
    %5279 = vmatprep.subr.bf16.mxu0 0
    %5280 = vmatpush2.bf16.msra.mxu0 0
    %5281 = vmatprep.subr.bf16.mxu0 0
    %5282 = vmatpush2.bf16.msra.mxu0 0
    %5283 = vmatprep.subr.bf16.mxu0 0
    %5284 = vmatpush2.bf16.msra.mxu0 0
    %5285 = vmatprep.subr.bf16.mxu0 0
    %5286 = vmatpush2.bf16.msra.mxu0 0
    %5287 = vmatprep.subr.bf16.mxu0 0
    %5288 = vmatpush2.bf16.msra.mxu0 0
    %5289 = vmatprep.subr.bf16.mxu0 0
    %5290 = vmatpush2.bf16.msra.mxu0 0
    %5291 = vmatprep.subr.bf16.mxu0 0
    %5292 = vmatpush2.bf16.msra.mxu0 0
    %5293 = vmatprep.mubr.bf16.mxu0 0
    %5294 = vmatmul.mubr.bf16.gmra.mxu0 %v5256
    %v5295 = vpop.f32.mrf.mxu0
    %v5296 = vadd.f32 0.0, %v5295
    %v5297 = vpop.f32.mrf.mxu0
    %v5298 = vpop.f32.mrf.mxu0
    %v5299 = vpop.f32.mrf.mxu0
    %5300 = vdwg.mxu0
    %5302 = vrot.lane.b32.xlu0 %v5194, 96
    %v5303 = vpop.permute.xlu0 %5302
    %5305 = vrot.lane.b32.xlu0 %v5195, 96
    %v5306 = vpop.permute.xlu0 %5305
    %v5308 = vsel %vm404, %v5303, 0
    %v5311 = vsel %vm404, %v5306, 0
    %5313 = vmatprep.subr.bf16.mxu0 0
    %5314 = vmatpush1.bf16.xpose.msra.mxu0 0
    %5315 = vmatprep.subr.bf16.mxu0 0
    %5316 = vmatpush1.bf16.xpose.msra.mxu0 0
    %5317 = vmatprep.subr.bf16.mxu0 0
    %5318 = vmatpush1.bf16.xpose.msra.mxu0 0
    %5319 = vmatprep.subr.bf16.mxu0 0
    %5320 = vmatpush1.bf16.xpose.msra.mxu0 0
    %5321 = vmatprep.subr.bf16.mxu0 0
    %5322 = vmatpush1.bf16.xpose.msra.mxu0 0
    %5323 = vmatprep.subr.bf16.mxu0 0
    %5324 = vmatpush1.bf16.xpose.msra.mxu0 0
    %5325 = vmatprep.subr.bf16.mxu0 0
    %5326 = vmatpush1.bf16.xpose.msra.mxu0 0
    %5327 = vmatprep.subr.bf16.mxu0 0
    %5328 = vmatpush1.bf16.xpose.msra.mxu0 %v5311
    %5329 = vmatprep.subr.bf16.mxu0 0
    %5330 = vmatpush2.bf16.xpose.msra.mxu0 0
    %5331 = vmatprep.subr.bf16.mxu0 0
    %5332 = vmatpush2.bf16.xpose.msra.mxu0 0
    %5333 = vmatprep.subr.bf16.mxu0 0
    %5334 = vmatpush2.bf16.xpose.msra.mxu0 0
    %5335 = vmatprep.subr.bf16.mxu0 0
    %5336 = vmatpush2.bf16.xpose.msra.mxu0 0
    %5337 = vmatprep.subr.bf16.mxu0 0
    %5338 = vmatpush2.bf16.xpose.msra.mxu0 0
    %5339 = vmatprep.subr.bf16.mxu0 0
    %5340 = vmatpush2.bf16.xpose.msra.mxu0 0
    %5341 = vmatprep.subr.bf16.mxu0 0
    %5342 = vmatpush2.bf16.xpose.msra.mxu0 0
    %5343 = vmatprep.subr.bf16.mxu0 0
    %5344 = vmatpush2.bf16.xpose.msra.mxu0 0
    %5345 = vmatprep.mubr.bf16.mxu0 0
    %5346 = vmatmul.mubr.bf16.gmra.mxu0 %v5308
    %v5347 = vpop.f32.mrf.mxu0
    %v5348 = vadd.f32 0.0, %v5347
    %v5349 = vpop.f32.mrf.mxu0
    %v5350 = vpop.f32.mrf.mxu0
    %v5351 = vpop.f32.mrf.mxu0
    %5352 = vdwg.mxu0
    %v5353 = vsel %vm451, %v5348, -inf
    %5354 = vmax.xlane.f32.xlu0 %v5353
    %v5355 = vpop.xlane.xlu0 %5354
    %v5356 = vsub.f32 %v5348, %v5355
    %v5357 = vmul.f32 %v5356, 1.442695
    %v5358 = vpow.pop %v5357
    %v5359 = vsel %vm451, %v5358, 0.0
    %5360 = vadd.xlane.f32.xlu0 %v5359
    %v5361 = vpop.xlane.xlu0 %5360
    %v5362 = vrcp.pop %v5361
    %v5363 = vmul.f32 %v5358, %v5362
    %v5364 = vpack.c.bf16 %v5363, %v5363
    %5366 = vrot.lane.b32.xlu0 %v5254, 96
    %v5367 = vpop.permute.xlu0 %5366
    %v5369 = vsel %vm451, %v5364, 0
    %v5372 = vsel %vm468, %v5367, 0
    %5374 = vmatprep.subr.bf16.mxu0 0
    %5375 = vmatpush1.bf16.msra.mxu0 0
    %5376 = vmatprep.subr.bf16.mxu0 0
    %5377 = vmatpush1.bf16.msra.mxu0 0
    %5378 = vmatprep.subr.bf16.mxu0 0
    %5379 = vmatpush1.bf16.msra.mxu0 0
    %5380 = vmatprep.subr.bf16.mxu0 0
    %5381 = vmatpush1.bf16.msra.mxu0 0
    %5382 = vmatprep.subr.bf16.mxu0 0
    %5383 = vmatpush1.bf16.msra.mxu0 0
    %5384 = vmatprep.subr.bf16.mxu0 0
    %5385 = vmatpush1.bf16.msra.mxu0 0
    %5386 = vmatprep.subr.bf16.mxu0 0
    %5387 = vmatpush1.bf16.msra.mxu0 0
    %5388 = vmatprep.subr.bf16.mxu0 0
    %5389 = vmatpush1.bf16.msra.mxu0 %v5372
    %5390 = vmatprep.subr.bf16.mxu0 0
    %5391 = vmatpush2.bf16.msra.mxu0 0
    %5392 = vmatprep.subr.bf16.mxu0 0
    %5393 = vmatpush2.bf16.msra.mxu0 0
    %5394 = vmatprep.subr.bf16.mxu0 0
    %5395 = vmatpush2.bf16.msra.mxu0 0
    %5396 = vmatprep.subr.bf16.mxu0 0
    %5397 = vmatpush2.bf16.msra.mxu0 0
    %5398 = vmatprep.subr.bf16.mxu0 0
    %5399 = vmatpush2.bf16.msra.mxu0 0
    %5400 = vmatprep.subr.bf16.mxu0 0
    %5401 = vmatpush2.bf16.msra.mxu0 0
    %5402 = vmatprep.subr.bf16.mxu0 0
    %5403 = vmatpush2.bf16.msra.mxu0 0
    %5404 = vmatprep.subr.bf16.mxu0 0
    %5405 = vmatpush2.bf16.msra.mxu0 0
    %5406 = vmatprep.mubr.bf16.mxu0 0
    %5407 = vmatmul.mubr.bf16.gmra.mxu0 %v5369
    %v5408 = vpop.f32.mrf.mxu0
    %v5409 = vadd.f32 0.0, %v5408
    %v5410 = vpop.f32.mrf.mxu0
    %v5411 = vpop.f32.mrf.mxu0
    %v5412 = vpop.f32.mrf.mxu0
    %5413 = vdwg.mxu0
    %5414 = vrot.lane.b32.xlu0 %v5194, 64
    %v5415 = vpop.permute.xlu0 %5414
    %5416 = vrot.lane.b32.xlu0 %v5195, 64
    %v5417 = vpop.permute.xlu0 %5416
    %v5419 = vsel %vm404, %v5415, 0
    %v5422 = vsel %vm404, %v5417, 0
    %5424 = vmatprep.subr.bf16.mxu0 0
    %5425 = vmatpush1.bf16.xpose.msra.mxu0 0
    %5426 = vmatprep.subr.bf16.mxu0 0
    %5427 = vmatpush1.bf16.xpose.msra.mxu0 0
    %5428 = vmatprep.subr.bf16.mxu0 0
    %5429 = vmatpush1.bf16.xpose.msra.mxu0 0
    %5430 = vmatprep.subr.bf16.mxu0 0
    %5431 = vmatpush1.bf16.xpose.msra.mxu0 0
    %5432 = vmatprep.subr.bf16.mxu0 0
    %5433 = vmatpush1.bf16.xpose.msra.mxu0 0
    %5434 = vmatprep.subr.bf16.mxu0 0
    %5435 = vmatpush1.bf16.xpose.msra.mxu0 0
    %5436 = vmatprep.subr.bf16.mxu0 0
    %5437 = vmatpush1.bf16.xpose.msra.mxu0 0
    %5438 = vmatprep.subr.bf16.mxu0 0
    %5439 = vmatpush1.bf16.xpose.msra.mxu0 %v5422
    %5440 = vmatprep.subr.bf16.mxu0 0
    %5441 = vmatpush2.bf16.xpose.msra.mxu0 0
    %5442 = vmatprep.subr.bf16.mxu0 0
    %5443 = vmatpush2.bf16.xpose.msra.mxu0 0
    %5444 = vmatprep.subr.bf16.mxu0 0
    %5445 = vmatpush2.bf16.xpose.msra.mxu0 0
    %5446 = vmatprep.subr.bf16.mxu0 0
    %5447 = vmatpush2.bf16.xpose.msra.mxu0 0
    %5448 = vmatprep.subr.bf16.mxu0 0
    %5449 = vmatpush2.bf16.xpose.msra.mxu0 0
    %5450 = vmatprep.subr.bf16.mxu0 0
    %5451 = vmatpush2.bf16.xpose.msra.mxu0 0
    %5452 = vmatprep.subr.bf16.mxu0 0
    %5453 = vmatpush2.bf16.xpose.msra.mxu0 0
    %5454 = vmatprep.subr.bf16.mxu0 0
    %5455 = vmatpush2.bf16.xpose.msra.mxu0 0
    %5456 = vmatprep.mubr.bf16.mxu0 0
    %5457 = vmatmul.mubr.bf16.gmra.mxu0 %v5419
    %v5458 = vpop.f32.mrf.mxu0
    %v5459 = vadd.f32 0.0, %v5458
    %v5460 = vpop.f32.mrf.mxu0
    %v5461 = vpop.f32.mrf.mxu0
    %v5462 = vpop.f32.mrf.mxu0
    %5463 = vdwg.mxu0
    %v5464 = vsel %vm451, %v5459, -inf
    %5465 = vmax.xlane.f32.xlu0 %v5464
    %v5466 = vpop.xlane.xlu0 %5465
    %v5467 = vsub.f32 %v5459, %v5466
    %v5468 = vmul.f32 %v5467, 1.442695
    %v5469 = vpow.pop %v5468
    %v5470 = vsel %vm451, %v5469, 0.0
    %5471 = vadd.xlane.f32.xlu0 %v5470
    %v5472 = vpop.xlane.xlu0 %5471
    %v5473 = vrcp.pop %v5472
    %v5474 = vmul.f32 %v5469, %v5473
    %v5475 = vpack.c.bf16 %v5474, %v5474
    %5476 = vrot.lane.b32.xlu0 %v5254, 64
    %v5477 = vpop.permute.xlu0 %5476
    %v5479 = vsel %vm451, %v5475, 0
    %v5482 = vsel %vm468, %v5477, 0
    %5484 = vmatprep.subr.bf16.mxu0 0
    %5485 = vmatpush1.bf16.msra.mxu0 0
    %5486 = vmatprep.subr.bf16.mxu0 0
    %5487 = vmatpush1.bf16.msra.mxu0 0
    %5488 = vmatprep.subr.bf16.mxu0 0
    %5489 = vmatpush1.bf16.msra.mxu0 0
    %5490 = vmatprep.subr.bf16.mxu0 0
    %5491 = vmatpush1.bf16.msra.mxu0 0
    %5492 = vmatprep.subr.bf16.mxu0 0
    %5493 = vmatpush1.bf16.msra.mxu0 0
    %5494 = vmatprep.subr.bf16.mxu0 0
    %5495 = vmatpush1.bf16.msra.mxu0 0
    %5496 = vmatprep.subr.bf16.mxu0 0
    %5497 = vmatpush1.bf16.msra.mxu0 0
    %5498 = vmatprep.subr.bf16.mxu0 0
    %5499 = vmatpush1.bf16.msra.mxu0 %v5482
    %5500 = vmatprep.subr.bf16.mxu0 0
    %5501 = vmatpush2.bf16.msra.mxu0 0
    %5502 = vmatprep.subr.bf16.mxu0 0
    %5503 = vmatpush2.bf16.msra.mxu0 0
    %5504 = vmatprep.subr.bf16.mxu0 0
    %5505 = vmatpush2.bf16.msra.mxu0 0
    %5506 = vmatprep.subr.bf16.mxu0 0
    %5507 = vmatpush2.bf16.msra.mxu0 0
    %5508 = vmatprep.subr.bf16.mxu0 0
    %5509 = vmatpush2.bf16.msra.mxu0 0
    %5510 = vmatprep.subr.bf16.mxu0 0
    %5511 = vmatpush2.bf16.msra.mxu0 0
    %5512 = vmatprep.subr.bf16.mxu0 0
    %5513 = vmatpush2.bf16.msra.mxu0 0
    %5514 = vmatprep.subr.bf16.mxu0 0
    %5515 = vmatpush2.bf16.msra.mxu0 0
    %5516 = vmatprep.mubr.bf16.mxu0 0
    %5517 = vmatmul.mubr.bf16.gmra.mxu0 %v5479
    %v5518 = vpop.f32.mrf.mxu0
    %v5519 = vadd.f32 0.0, %v5518
    %v5520 = vpop.f32.mrf.mxu0
    %v5521 = vpop.f32.mrf.mxu0
    %v5522 = vpop.f32.mrf.mxu0
    %5523 = vdwg.mxu0
    %5524 = vrot.lane.b32.xlu0 %v5194, 32
    %v5525 = vpop.permute.xlu0 %5524
    %5526 = vrot.lane.b32.xlu0 %v5195, 32
    %v5527 = vpop.permute.xlu0 %5526
    %v5529 = vsel %vm404, %v5525, 0
    %v5532 = vsel %vm404, %v5527, 0
    %5534 = vmatprep.subr.bf16.mxu0 0
    %5535 = vmatpush1.bf16.xpose.msra.mxu0 0
    %5536 = vmatprep.subr.bf16.mxu0 0
    %5537 = vmatpush1.bf16.xpose.msra.mxu0 0
    %5538 = vmatprep.subr.bf16.mxu0 0
    %5539 = vmatpush1.bf16.xpose.msra.mxu0 0
    %5540 = vmatprep.subr.bf16.mxu0 0
    %5541 = vmatpush1.bf16.xpose.msra.mxu0 0
    %5542 = vmatprep.subr.bf16.mxu0 0
    %5543 = vmatpush1.bf16.xpose.msra.mxu0 0
    %5544 = vmatprep.subr.bf16.mxu0 0
    %5545 = vmatpush1.bf16.xpose.msra.mxu0 0
    %5546 = vmatprep.subr.bf16.mxu0 0
    %5547 = vmatpush1.bf16.xpose.msra.mxu0 0
    %5548 = vmatprep.subr.bf16.mxu0 0
    %5549 = vmatpush1.bf16.xpose.msra.mxu0 %v5532
    %5550 = vmatprep.subr.bf16.mxu0 0
    %5551 = vmatpush2.bf16.xpose.msra.mxu0 0
    %5552 = vmatprep.subr.bf16.mxu0 0
    %5553 = vmatpush2.bf16.xpose.msra.mxu0 0
    %5554 = vmatprep.subr.bf16.mxu0 0
    %5555 = vmatpush2.bf16.xpose.msra.mxu0 0
    %5556 = vmatprep.subr.bf16.mxu0 0
    %5557 = vmatpush2.bf16.xpose.msra.mxu0 0
    %5558 = vmatprep.subr.bf16.mxu0 0
    %5559 = vmatpush2.bf16.xpose.msra.mxu0 0
    %5560 = vmatprep.subr.bf16.mxu0 0
    %5561 = vmatpush2.bf16.xpose.msra.mxu0 0
    %5562 = vmatprep.subr.bf16.mxu0 0
    %5563 = vmatpush2.bf16.xpose.msra.mxu0 0
    %5564 = vmatprep.subr.bf16.mxu0 0
    %5565 = vmatpush2.bf16.xpose.msra.mxu0 0
    %5566 = vmatprep.mubr.bf16.mxu0 0
    %5567 = vmatmul.mubr.bf16.gmra.mxu0 %v5529
    %v5568 = vpop.f32.mrf.mxu0
    %v5569 = vadd.f32 0.0, %v5568
    %v5570 = vpop.f32.mrf.mxu0
    %v5571 = vpop.f32.mrf.mxu0
    %v5572 = vpop.f32.mrf.mxu0
    %5573 = vdwg.mxu0
    %v5574 = vsel %vm451, %v5569, -inf
    %5575 = vmax.xlane.f32.xlu0 %v5574
    %v5576 = vpop.xlane.xlu0 %5575
    %v5577 = vsub.f32 %v5569, %v5576
    %v5578 = vmul.f32 %v5577, 1.442695
    %v5579 = vpow.pop %v5578
    %v5580 = vsel %vm451, %v5579, 0.0
    %5581 = vadd.xlane.f32.xlu0 %v5580
    %v5582 = vpop.xlane.xlu0 %5581
    %v5583 = vrcp.pop %v5582
    %v5584 = vmul.f32 %v5579, %v5583
    %v5585 = vpack.c.bf16 %v5584, %v5584
    %5586 = vrot.lane.b32.xlu0 %v5254, 32
    %v5587 = vpop.permute.xlu0 %5586
    %v5589 = vsel %vm451, %v5585, 0
    %v5592 = vsel %vm468, %v5587, 0
    %5594 = vmatprep.subr.bf16.mxu0 0
    %5595 = vmatpush1.bf16.msra.mxu0 0
    %5596 = vmatprep.subr.bf16.mxu0 0
    %5597 = vmatpush1.bf16.msra.mxu0 0
    %5598 = vmatprep.subr.bf16.mxu0 0
    %5599 = vmatpush1.bf16.msra.mxu0 0
    %5600 = vmatprep.subr.bf16.mxu0 0
    %5601 = vmatpush1.bf16.msra.mxu0 0
    %5602 = vmatprep.subr.bf16.mxu0 0
    %5603 = vmatpush1.bf16.msra.mxu0 0
    %5604 = vmatprep.subr.bf16.mxu0 0
    %5605 = vmatpush1.bf16.msra.mxu0 0
    %5606 = vmatprep.subr.bf16.mxu0 0
    %5607 = vmatpush1.bf16.msra.mxu0 0
    %5608 = vmatprep.subr.bf16.mxu0 0
    %5609 = vmatpush1.bf16.msra.mxu0 %v5592
    %5610 = vmatprep.subr.bf16.mxu0 0
    %5611 = vmatpush2.bf16.msra.mxu0 0
    %5612 = vmatprep.subr.bf16.mxu0 0
    %5613 = vmatpush2.bf16.msra.mxu0 0
    %5614 = vmatprep.subr.bf16.mxu0 0
    %5615 = vmatpush2.bf16.msra.mxu0 0
    %5616 = vmatprep.subr.bf16.mxu0 0
    %5617 = vmatpush2.bf16.msra.mxu0 0
    %5618 = vmatprep.subr.bf16.mxu0 0
    %5619 = vmatpush2.bf16.msra.mxu0 0
    %5620 = vmatprep.subr.bf16.mxu0 0
    %5621 = vmatpush2.bf16.msra.mxu0 0
    %5622 = vmatprep.subr.bf16.mxu0 0
    %5623 = vmatpush2.bf16.msra.mxu0 0
    %5624 = vmatprep.subr.bf16.mxu0 0
    %5625 = vmatpush2.bf16.msra.mxu0 0
    %5626 = vmatprep.mubr.bf16.mxu0 0
    %5627 = vmatmul.mubr.bf16.gmra.mxu0 %v5589
    %v5628 = vpop.f32.mrf.mxu0
    %v5629 = vadd.f32 0.0, %v5628
    %v5630 = vpop.f32.mrf.mxu0
    %v5631 = vpop.f32.mrf.mxu0
    %v5632 = vpop.f32.mrf.mxu0
    %5633 = vdwg.mxu0
    %5635 = vrot.lane.b32.xlu0 %v5409, 32
    %v5636 = vpop.permute.xlu0 %5635
    %5639 = vrot.lane.b32.xlu0 %v5519, 64
    %v5640 = vpop.permute.xlu0 %5639
    %5643 = vrot.lane.b32.xlu0 %v5629, 96
    %v5644 = vpop.permute.xlu0 %5643
    %v5646 = vsel %vm404, %v5296, %v5636
    %v5647 = vsel %vm858, %v5646, %v5640
    %v5648 = vsel %vm860, %v5647, %v5644
    %v5649 = vpack.c.bf16 %v5648, %v5648
    %5650 = vmatprep.subr.bf16.mxu0 0
    %5651 = vmatpush1.bf16.msra.mxu0 %v5032
    %5652 = vmatprep.subr.bf16.mxu0 0
    %5653 = vmatpush1.bf16.msra.mxu0 %v5031
    %5654 = vmatprep.subr.bf16.mxu0 0
    %5655 = vmatpush1.bf16.msra.mxu0 %v5030
    %5656 = vmatprep.subr.bf16.mxu0 0
    %5657 = vmatpush1.bf16.msra.mxu0 %v5029
    %5658 = vmatprep.subr.bf16.mxu0 0
    %5659 = vmatpush1.bf16.msra.mxu0 %v5028
    %5660 = vmatprep.subr.bf16.mxu0 0
    %5661 = vmatpush1.bf16.msra.mxu0 %v5027
    %5662 = vmatprep.subr.bf16.mxu0 0
    %5663 = vmatpush1.bf16.msra.mxu0 %v5026
    %5664 = vmatprep.subr.bf16.mxu0 0
    %5665 = vmatpush1.bf16.msra.mxu0 %v5025
    %5666 = vmatprep.subr.bf16.mxu0 0
    %5667 = vmatpush2.bf16.msra.mxu0 0
    %5668 = vmatprep.subr.bf16.mxu0 0
    %5669 = vmatpush2.bf16.msra.mxu0 0
    %5670 = vmatprep.subr.bf16.mxu0 0
    %5671 = vmatpush2.bf16.msra.mxu0 0
    %5672 = vmatprep.subr.bf16.mxu0 0
    %5673 = vmatpush2.bf16.msra.mxu0 0
    %5674 = vmatprep.subr.bf16.mxu0 0
    %5675 = vmatpush2.bf16.msra.mxu0 0
    %5676 = vmatprep.subr.bf16.mxu0 0
    %5677 = vmatpush2.bf16.msra.mxu0 0
    %5678 = vmatprep.subr.bf16.mxu0 0
    %5679 = vmatpush2.bf16.msra.mxu0 0
    %5680 = vmatprep.subr.bf16.mxu0 0
    %5681 = vmatpush2.bf16.msra.mxu0 0
    %5682 = vmatprep.mubr.bf16.mxu0 0
    %5683 = vmatmul.mubr.bf16.gmra.mxu0 %v5649
    %v5684 = vpop.f32.mrf.mxu0
    %v5685 = vadd.f32 0.0, %v5684
    %v5686 = vpop.f32.mrf.mxu0
    %v5687 = vpop.f32.mrf.mxu0
    %v5688 = vpop.f32.mrf.mxu0
    %5689 = vdwg.mxu0
    %v5690 = vadd.f32 %v5110, %v5685
    %5691 = vadd.xlane.f32.xlu0 %v5690
    %v5692 = vpop.xlane.xlu0 %5691
    %v5693 = vmul.f32 %v5692, %v954
    %v5694 = vsub.f32 %v5690, %v5693
    %v5695 = vmul.f32 %v5694, %v5694
    %5696 = vadd.xlane.f32.xlu0 %v5695
    %v5697 = vpop.xlane.xlu0 %5696
    %v5698 = vmul.f32 %v5697, %v954
    %v5699 = vadd.f32 %v5698, 1e-05
    %v5700 = vrsqrt.pop %v5699
    %v5701 = vmul.f32 %v5694, %v5700
    %v5702 = vmul.f32 %v5701, %v5099
    %v5703 = vadd.f32 %v5702, %v5108
    %v5704 = vpack.c.bf16 %v5703, %v5703
    %s5705 = scalar_lea.vmem [#allocation10], 384
    %v5706 = vld [vmem:[%s5705] sm:$0xff]
    %v5707 = vld [vmem:[%s5705 + $0x8] sm:$0xff]
    %v5708 = vld [vmem:[%s5705 + $0x10] sm:$0xff]
    %v5709 = vld [vmem:[%s5705 + $0x18] sm:$0xff]
    %v5710 = vld [vmem:[%s5705 + $0x20] sm:$0xff]
    %v5711 = vld [vmem:[%s5705 + $0x28] sm:$0xff]
    %v5712 = vld [vmem:[%s5705 + $0x30] sm:$0xff]
    %v5713 = vld [vmem:[%s5705 + $0x38] sm:$0xff]
    %v5714 = vld [vmem:[%s5705 + $0x40] sm:$0xff]
    %v5715 = vld [vmem:[%s5705 + $0x48] sm:$0xff]
    %v5716 = vld [vmem:[%s5705 + $0x50] sm:$0xff]
    %v5717 = vld [vmem:[%s5705 + $0x58] sm:$0xff]
    %v5718 = vld [vmem:[%s5705 + $0x60] sm:$0xff]
    %v5719 = vld [vmem:[%s5705 + $0x68] sm:$0xff]
    %v5720 = vld [vmem:[%s5705 + $0x70] sm:$0xff]
    %v5721 = vld [vmem:[%s5705 + $0x78] sm:$0xff]
    %s5722 = scalar_lea.vmem [#allocation11], 6
    %v5723 = vld [vmem:[%s5722] sm:$0x3]
    %v5725 = vlaneseq
    %v5726 = vshrl.u32 %v5725, 7
    %v5727 = vsub.s32 0, %v5726
    %v5728 = vrot.slane %v5723, %v5727
    %v5729 = vlaneseq
    %v5730 = vshrl.u32 %v5729, 7
    %v5731 = vsub.s32 1, %v5730
    %v5732 = vrot.slane %v5723, %v5731
    %v5751 = vunpack.c.l.b16 %v5706
    %v5752 = vunpack.c.h.b16 %v5706
    %v5753 = vunpack.c.l.b16 %v5707
    %v5754 = vunpack.c.h.b16 %v5707
    %v5755 = vunpack.c.l.b16 %v5708
    %v5756 = vunpack.c.h.b16 %v5708
    %v5757 = vunpack.c.l.b16 %v5709
    %v5758 = vunpack.c.h.b16 %v5709
    %v5759 = vunpack.c.l.b16 %v5710
    %v5760 = vunpack.c.h.b16 %v5710
    %v5761 = vunpack.c.l.b16 %v5711
    %v5762 = vunpack.c.h.b16 %v5711
    %v5763 = vunpack.c.l.b16 %v5712
    %v5764 = vunpack.c.h.b16 %v5712
    %v5765 = vunpack.c.l.b16 %v5713
    %v5766 = vunpack.c.h.b16 %v5713
    %v5767 = vunpack.c.l.b16 %v5714
    %v5768 = vunpack.c.h.b16 %v5714
    %v5769 = vunpack.c.l.b16 %v5715
    %v5770 = vunpack.c.h.b16 %v5715
    %v5771 = vunpack.c.l.b16 %v5716
    %v5772 = vunpack.c.h.b16 %v5716
    %v5773 = vunpack.c.l.b16 %v5717
    %v5774 = vunpack.c.h.b16 %v5717
    %v5775 = vunpack.c.l.b16 %v5718
    %v5776 = vunpack.c.h.b16 %v5718
    %v5777 = vunpack.c.l.b16 %v5719
    %v5778 = vunpack.c.h.b16 %v5719
    %v5779 = vunpack.c.l.b16 %v5720
    %v5780 = vunpack.c.h.b16 %v5720
    %v5781 = vunpack.c.l.b16 %v5721
    %v5782 = vunpack.c.h.b16 %v5721
    %v5783 = vpack.c.b16 %v5753, %v5751
    %v5784 = vpack.c.b16 %v5754, %v5752
    %v5785 = vpack.c.b16 %v5757, %v5755
    %v5786 = vpack.c.b16 %v5758, %v5756
    %v5787 = vpack.c.b16 %v5761, %v5759
    %v5788 = vpack.c.b16 %v5762, %v5760
    %v5789 = vpack.c.b16 %v5765, %v5763
    %v5790 = vpack.c.b16 %v5766, %v5764
    %v5791 = vpack.c.b16 %v5769, %v5767
    %v5792 = vpack.c.b16 %v5770, %v5768
    %v5793 = vpack.c.b16 %v5773, %v5771
    %v5794 = vpack.c.b16 %v5774, %v5772
    %v5795 = vpack.c.b16 %v5777, %v5775
    %v5796 = vpack.c.b16 %v5778, %v5776
    %v5797 = vpack.c.b16 %v5781, %v5779
    %v5798 = vpack.c.b16 %v5782, %v5780
    %5815 = vmatprep.subr.bf16.mxu0 %v5798
    %5816 = vmatpush1.bf16.msra.mxu0 %v5797
    %5817 = vmatprep.subr.bf16.mxu0 %v5796
    %5818 = vmatpush1.bf16.msra.mxu0 %v5795
    %5819 = vmatprep.subr.bf16.mxu0 %v5794
    %5820 = vmatpush1.bf16.msra.mxu0 %v5793
    %5821 = vmatprep.subr.bf16.mxu0 %v5792
    %5822 = vmatpush1.bf16.msra.mxu0 %v5791
    %5823 = vmatprep.subr.bf16.mxu0 %v5790
    %5824 = vmatpush1.bf16.msra.mxu0 %v5789
    %5825 = vmatprep.subr.bf16.mxu0 %v5788
    %5826 = vmatpush1.bf16.msra.mxu0 %v5787
    %5827 = vmatprep.subr.bf16.mxu0 %v5786
    %5828 = vmatpush1.bf16.msra.mxu0 %v5785
    %5829 = vmatprep.subr.bf16.mxu0 %v5784
    %5830 = vmatpush1.bf16.msra.mxu0 %v5783
    %5831 = vmatprep.subr.bf16.mxu0 0
    %5832 = vmatpush2.bf16.msra.mxu0 0
    %5833 = vmatprep.subr.bf16.mxu0 0
    %5834 = vmatpush2.bf16.msra.mxu0 0
    %5835 = vmatprep.subr.bf16.mxu0 0
    %5836 = vmatpush2.bf16.msra.mxu0 0
    %5837 = vmatprep.subr.bf16.mxu0 0
    %5838 = vmatpush2.bf16.msra.mxu0 0
    %5839 = vmatprep.subr.bf16.mxu0 0
    %5840 = vmatpush2.bf16.msra.mxu0 0
    %5841 = vmatprep.subr.bf16.mxu0 0
    %5842 = vmatpush2.bf16.msra.mxu0 0
    %5843 = vmatprep.subr.bf16.mxu0 0
    %5844 = vmatpush2.bf16.msra.mxu0 0
    %5845 = vmatprep.subr.bf16.mxu0 0
    %5846 = vmatpush2.bf16.msra.mxu0 0
    %5847 = vmatprep.mubr.bf16.mxu0 0
    %5848 = vmatmul.mubr.bf16.gmra.mxu0 %v5704
    %v5849 = vpop.f32.mrf.mxu0
    %v5850 = vadd.f32 %v5728, %v5849
    %v5851 = vpop.f32.mrf.mxu0
    %v5852 = vadd.f32 %v5732, %v5851
    %v5853 = vpop.f32.mrf.mxu0
    %v5854 = vpop.f32.mrf.mxu0
    %5855 = vdwg.mxu0
    %v5856 = vmax.f32 %v5850, 0.0
    %v5857 = vmax.f32 %v5852, 0.0
    %v5858 = vpack.c.bf16 %v5856, %v5856
    %v5859 = vpack.c.bf16 %v5857, %v5857
    %s5860 = scalar_lea.vmem [#allocation13], 384
    %v5861 = vld [vmem:[%s5860] sm:$0xf]
    %v5862 = vld [vmem:[%s5860 + $0x4] sm:$0xf]
    %v5863 = vld [vmem:[%s5860 + $0x8] sm:$0xf]
    %v5864 = vld [vmem:[%s5860 + $0xc] sm:$0xf]
    %v5865 = vld [vmem:[%s5860 + $0x10] sm:$0xf]
    %v5866 = vld [vmem:[%s5860 + $0x14] sm:$0xf]
    %v5867 = vld [vmem:[%s5860 + $0x18] sm:$0xf]
    %v5868 = vld [vmem:[%s5860 + $0x1c] sm:$0xf]
    %v5869 = vld [vmem:[%s5860 + $0x20] sm:$0xf]
    %v5870 = vld [vmem:[%s5860 + $0x24] sm:$0xf]
    %v5871 = vld [vmem:[%s5860 + $0x28] sm:$0xf]
    %v5872 = vld [vmem:[%s5860 + $0x2c] sm:$0xf]
    %v5873 = vld [vmem:[%s5860 + $0x30] sm:$0xf]
    %v5874 = vld [vmem:[%s5860 + $0x34] sm:$0xf]
    %v5875 = vld [vmem:[%s5860 + $0x38] sm:$0xf]
    %v5876 = vld [vmem:[%s5860 + $0x3c] sm:$0xf]
    %v5877 = vld [vmem:[%s5860 + $0x40] sm:$0xf]
    %v5878 = vld [vmem:[%s5860 + $0x44] sm:$0xf]
    %v5879 = vld [vmem:[%s5860 + $0x48] sm:$0xf]
    %v5880 = vld [vmem:[%s5860 + $0x4c] sm:$0xf]
    %v5881 = vld [vmem:[%s5860 + $0x50] sm:$0xf]
    %v5882 = vld [vmem:[%s5860 + $0x54] sm:$0xf]
    %v5883 = vld [vmem:[%s5860 + $0x58] sm:$0xf]
    %v5884 = vld [vmem:[%s5860 + $0x5c] sm:$0xf]
    %v5885 = vld [vmem:[%s5860 + $0x60] sm:$0xf]
    %v5886 = vld [vmem:[%s5860 + $0x64] sm:$0xf]
    %v5887 = vld [vmem:[%s5860 + $0x68] sm:$0xf]
    %v5888 = vld [vmem:[%s5860 + $0x6c] sm:$0xf]
    %v5889 = vld [vmem:[%s5860 + $0x70] sm:$0xf]
    %v5890 = vld [vmem:[%s5860 + $0x74] sm:$0xf]
    %v5891 = vld [vmem:[%s5860 + $0x78] sm:$0xf]
    %v5892 = vld [vmem:[%s5860 + $0x7c] sm:$0xf]
    %s5893 = scalar_lea.vmem %s7, 3
    %v5894 = vld [vmem:[%s5893] sm:$0x1]
    %v5896 = vlaneseq
    %v5897 = vshrl.u32 %v5896, 7
    %v5898 = vsub.s32 0, %v5897
    %v5899 = vrot.slane %v5894, %v5898
    %v5933 = vunpack.c.l.b16 %v5861
    %v5934 = vunpack.c.l.b16 %v5862
    %v5935 = vunpack.c.l.b16 %v5863
    %v5936 = vunpack.c.l.b16 %v5864
    %v5937 = vunpack.c.l.b16 %v5865
    %v5938 = vunpack.c.l.b16 %v5866
    %v5939 = vunpack.c.l.b16 %v5867
    %v5940 = vunpack.c.l.b16 %v5868
    %v5941 = vunpack.c.l.b16 %v5869
    %v5942 = vunpack.c.l.b16 %v5870
    %v5943 = vunpack.c.l.b16 %v5871
    %v5944 = vunpack.c.l.b16 %v5872
    %v5945 = vunpack.c.l.b16 %v5873
    %v5946 = vunpack.c.l.b16 %v5874
    %v5947 = vunpack.c.l.b16 %v5875
    %v5948 = vunpack.c.l.b16 %v5876
    %v5949 = vunpack.c.l.b16 %v5877
    %v5950 = vunpack.c.l.b16 %v5878
    %v5951 = vunpack.c.l.b16 %v5879
    %v5952 = vunpack.c.l.b16 %v5880
    %v5953 = vunpack.c.l.b16 %v5881
    %v5954 = vunpack.c.l.b16 %v5882
    %v5955 = vunpack.c.l.b16 %v5883
    %v5956 = vunpack.c.l.b16 %v5884
    %v5957 = vunpack.c.l.b16 %v5885
    %v5958 = vunpack.c.l.b16 %v5886
    %v5959 = vunpack.c.l.b16 %v5887
    %v5960 = vunpack.c.l.b16 %v5888
    %v5961 = vunpack.c.l.b16 %v5889
    %v5962 = vunpack.c.l.b16 %v5890
    %v5963 = vunpack.c.l.b16 %v5891
    %v5964 = vunpack.c.l.b16 %v5892
    %v5965 = vpack.c.b16 %v5934, %v5933
    %v5966 = vpack.c.b16 %v5936, %v5935
    %v5967 = vpack.c.b16 %v5938, %v5937
    %v5968 = vpack.c.b16 %v5940, %v5939
    %v5969 = vpack.c.b16 %v5942, %v5941
    %v5970 = vpack.c.b16 %v5944, %v5943
    %v5971 = vpack.c.b16 %v5946, %v5945
    %v5972 = vpack.c.b16 %v5948, %v5947
    %v5973 = vpack.c.b16 %v5950, %v5949
    %v5974 = vpack.c.b16 %v5952, %v5951
    %v5975 = vpack.c.b16 %v5954, %v5953
    %v5976 = vpack.c.b16 %v5956, %v5955
    %v5977 = vpack.c.b16 %v5958, %v5957
    %v5978 = vpack.c.b16 %v5960, %v5959
    %v5979 = vpack.c.b16 %v5962, %v5961
    %v5980 = vpack.c.b16 %v5964, %v5963
    %5997 = vmatprep.subr.bf16.mxu0 0
    %5998 = vmatpush1.bf16.msra.mxu0 %v5972
    %5999 = vmatprep.subr.bf16.mxu0 0
    %6000 = vmatpush1.bf16.msra.mxu0 %v5971
    %6001 = vmatprep.subr.bf16.mxu0 0
    %6002 = vmatpush1.bf16.msra.mxu0 %v5970
    %6003 = vmatprep.subr.bf16.mxu0 0
    %6004 = vmatpush1.bf16.msra.mxu0 %v5969
    %6005 = vmatprep.subr.bf16.mxu0 0
    %6006 = vmatpush1.bf16.msra.mxu0 %v5968
    %6007 = vmatprep.subr.bf16.mxu0 0
    %6008 = vmatpush1.bf16.msra.mxu0 %v5967
    %6009 = vmatprep.subr.bf16.mxu0 0
    %6010 = vmatpush1.bf16.msra.mxu0 %v5966
    %6011 = vmatprep.subr.bf16.mxu0 0
    %6012 = vmatpush1.bf16.msra.mxu0 %v5965
    %6013 = vmatprep.subr.bf16.mxu0 0
    %6014 = vmatpush2.bf16.msra.mxu0 %v5980
    %6015 = vmatprep.subr.bf16.mxu0 0
    %6016 = vmatpush2.bf16.msra.mxu0 %v5979
    %6017 = vmatprep.subr.bf16.mxu0 0
    %6018 = vmatpush2.bf16.msra.mxu0 %v5978
    %6019 = vmatprep.subr.bf16.mxu0 0
    %6020 = vmatpush2.bf16.msra.mxu0 %v5977
    %6021 = vmatprep.subr.bf16.mxu0 0
    %6022 = vmatpush2.bf16.msra.mxu0 %v5976
    %6023 = vmatprep.subr.bf16.mxu0 0
    %6024 = vmatpush2.bf16.msra.mxu0 %v5975
    %6025 = vmatprep.subr.bf16.mxu0 0
    %6026 = vmatpush2.bf16.msra.mxu0 %v5974
    %6027 = vmatprep.subr.bf16.mxu0 0
    %6028 = vmatpush2.bf16.msra.mxu0 %v5973
    %6029 = vmatprep.mubr.bf16.mxu0 %v5859
    %6030 = vmatmul.mubr.bf16.gmra.mxu0 %v5858
    %v6031 = vpop.f32.mrf.mxu0
    %v6032 = vadd.f32 %v5899, %v6031
    %v6033 = vpop.f32.mrf.mxu0
    %v6034 = vpop.f32.mrf.mxu0
    %v6035 = vpop.f32.mrf.mxu0
    %6036 = vdwg.mxu0
    %v6037 = vadd.f32 %v5703, %v6032
    %6038 = vadd.xlane.f32.xlu0 %v6037
    %v6039 = vpop.xlane.xlu0 %6038
    %v6040 = vmul.f32 %v6039, %v954
    %v6041 = vsub.f32 %v6037, %v6040
    %v6042 = vmul.f32 %v6041, %v6041
    %6043 = vadd.xlane.f32.xlu0 %v6042
    %v6044 = vpop.xlane.xlu0 %6043
    %v6045 = vmul.f32 %v6044, %v954
    %v6046 = vadd.f32 %v6045, 1e-05
    %v6047 = vrsqrt.pop %v6046
    %v6048 = vmul.f32 %v6041, %v6047
    %v6049 = vmul.f32 %v6048, %v5099
    %v6050 = vadd.f32 %v6049, %v5108
    %6051 = vst [vmem:[#allocation16] sm:$0xff] %v6050
    // Predicated region
    $region74: #{transformer_forward.1} parent=1 // pred_check
      _
    $region75: #{transformer_forward.1} parent=1 // pred_check_branch
      %6053 = sbr.rel (0) target = $region77
    $region76: #{transformer_forward.1} parent=1 // pred_region
      %s6055 = ssub.s32 128, 128
      %6056 = vsyncadd [#allocation4], %s6055
      %s6058 = sshll.u32 [#allocation16], 4
      %s6059 = int_to_ptr.vmem [resolvable:$true] %s6058
      %6061 = dma.vmem_to_hbm [thread:$0]  %s6059, 128, %s10, [#allocation4]
    $region77: #{transformer_forward.1} parent=1 // pred_fallthru
      _
    // Predicated region
    $region78: #{transformer_forward.1} parent=1 // pred_check
      _
    $region79: #{transformer_forward.1} parent=1 // pred_check_branch
      %6063 = sbr.rel (0) target = $region81
    $region80: #{transformer_forward.1} parent=1 // pred_region
      %6064 = dma.done [#allocation4], 128
    $region81: #{transformer_forward.1} parent=1 // pred_fallthru
      _
    %6065 = vsyncpa [#allocation3], 1
    %6066 = vsyncpa [#allocation6], 1
    %6067 = vsyncpa [#allocation9], 1
    %6068 = vsyncpa [#allocation12], 1
    %6069 = vsyncpa [#allocation15], 1
    %6070 = vsyncpa [#allocation4], 1

</llo_original>
